<compile_context>
chip_gen: v5e
topology: v5e:2x2
jax: 0.10.0
libtpu: 0.0.40
codegen_flags: <defaults>
</compile_context>

<pallas_src>
import jax
import jax.numpy as jnp
from jax import lax
from jax.experimental import pallas as pl
from jax.experimental.pallas import tpu as pltpu

PAD_IDX = 1
D_MODEL = 128
NHEAD = 4
HEAD_DIM = D_MODEL // NHEAD
NUM_LAYERS = 2
NUM_CLASSES = 2
DIM_FF = 2048            # PyTorch TransformerEncoderLayer default
EPS = 1e-5               # PyTorch default layer_norm_eps
NEG_INF = -1e30
MXU_DTYPE = jnp.bfloat16  # matmul operand dtype (accumulation stays f32)

LAYER_PARAM_ORDER = ('wqkv', 'bqkv', 'wo', 'bo', 'g1', 'beta1',
                     'w1', 'b1', 'w2', 'b2', 'g2', 'beta2')
PARAMS_PER_LAYER = len(LAYER_PARAM_ORDER)


def _const_index_map(ndim):
    return lambda i: (0,) * ndim


def _weight_spec(shape):
    """Resident weight: constant block index; single-buffer to save VMEM."""
    idx = _const_index_map(len(shape))
    try:
        return pl.BlockSpec(shape, idx, pipeline_mode=pl.Buffered(1))
    except TypeError:  # older jax without pipeline_mode kwarg
        return pl.BlockSpec(shape, idx)


def _pick_tb(batch, seq, target_rows=512):
    """Sequences per grid step: fill ~target_rows MXU rows (largest divisor)."""
    cap = max(1, target_rows // max(seq, 1))
    tb = 1
    for d in range(1, batch + 1):
        if batch % d == 0 and d <= cap:
            tb = d
    return tb


def _vmem_limit_bytes():
    """Generation-aware VMEM limit: physical capacity minus ~16 MiB headroom."""
    try:
        cap = int(pltpu.get_tpu_info().vmem_capacity_bytes)
    except Exception:
        cap = 64 * 1024 * 1024
    return int(min(max(cap - 16 * 1024 * 1024, 32 * 1024 * 1024),
                   96 * 1024 * 1024))


# ----------------------------------------------------------------------------
# Fused kernel: 2x encoder layer + mean pool for one batch tile
# ----------------------------------------------------------------------------
def fused_forward_kernel(x_ref, mask_ref, *refs):
    n_lp = NUM_LAYERS * PARAMS_PER_LAYER
    layer_refs = refs[:n_lp]
    out_ref = refs[n_lp]

    x3 = x_ref[...].astype(jnp.float32)              # (TB, S, D), streamed bf16
    TB, S, D = x3.shape
    H, hd = NHEAD, HEAD_DIM
    rows = TB * S

    bias = mask_ref[...]                              # (TB, 1, S) additive key bias

    def layer_norm(y, g_ref, b_ref):
        mu = jnp.mean(y, axis=-1, keepdims=True)
        var = jnp.mean(jnp.square(y - mu), axis=-1, keepdims=True)
        return (y - mu) * lax.rsqrt(var + EPS) * g_ref[...] + b_ref[...]

    x2d = x3.reshape(rows, D)                         # f32 residual stream

    for l in range(NUM_LAYERS):                       # static unroll (2)
        (wqkv, bqkv, wo, bo, g1, beta1,
         w1, b1, w2, b2, g2, beta2) = \
            layer_refs[l * PARAMS_PER_LAYER:(l + 1) * PARAMS_PER_LAYER]

        # ---- self-attention: ONE full-width QKV matmul (rows,128)x(128,384) --
        # 1/sqrt(head_dim) is folded into the Q columns of wqkv at init.
        x_bf = x2d.astype(MXU_DTYPE)
        qkv = jnp.dot(x_bf, wqkv[...],
                      preferred_element_type=jnp.float32) + bqkv[...]  # (rows,3D)

        head_out = []
        for h in range(H):                            # per-head softmax (hd=32)
            q3 = qkv[:, h * hd:(h + 1) * hd].reshape(TB, S, hd).astype(MXU_DTYPE)
            k3 = qkv[:, D + h * hd:D + (h + 1) * hd].reshape(TB, S, hd).astype(MXU_DTYPE)
            v3 = qkv[:, 2 * D + h * hd:2 * D + (h + 1) * hd].reshape(TB, S, hd).astype(MXU_DTYPE)

            s = jnp.einsum('bqe,bke->bqk', q3, k3,
                           preferred_element_type=jnp.float32) + bias  # (TB,S,S)
            s = s - jnp.max(s, axis=-1, keepdims=True)                 # stable softmax
            p = jnp.exp(s)
            p = p * pl.reciprocal(jnp.sum(p, axis=-1, keepdims=True),
                                  approx=True)                         # EUP slot

            oh = jnp.einsum('bqk,bke->bqe', p.astype(MXU_DTYPE), v3,
                            preferred_element_type=jnp.float32)        # (TB,S,hd)
            head_out.append(oh.reshape(rows, hd))

        # concat heads -> ONE (rows,128)x(128,128) output projection
        ctx = jnp.concatenate(head_out, axis=-1)                        # (rows, D)
        attn2d = jnp.dot(ctx.astype(MXU_DTYPE), wo[...],
                         preferred_element_type=jnp.float32) + bo[...]

        # ---- residual + layernorm 1 (post-norm) ------------------------------
        x1 = layer_norm(x2d + attn2d, g1, beta1)

        # ---- feed-forward (relu), un-chunked: K=128 then K=2048 --------------
        h1 = jnp.dot(x1.astype(MXU_DTYPE), w1[...],
                     preferred_element_type=jnp.float32) + b1[...]      # (rows,2048)
        h1 = jnp.maximum(h1, 0.0)
        h2 = jnp.dot(h1.astype(MXU_DTYPE), w2[...],
                     preferred_element_type=jnp.float32) + b2[...]      # (rows, D)

        # ---- residual + layernorm 2 ------------------------------------------
        x2d = layer_norm(x1 + h2, g2, beta2)

    # ---- unmasked mean over sequence; lane-dense (TB,1,128) output -----------
    pooled = jnp.mean(x2d.reshape(TB, S, D), axis=1)                    # (TB, D)
    out_ref[...] = pooled.reshape(TB, 1, D)


# ----------------------------------------------------------------------------
# Wrapper: embedding gather (plain JAX glue) + single fused pallas_call + fc
# ----------------------------------------------------------------------------
@jax.jit
def transformer_classifier(token_ids, pad_mask, params):
    emb, layers, wfc, bfc = params
    B, S = token_ids.shape
    D = D_MODEL

    # TODO(synk): embedding lookup is a data-dependent row gather; kept in JAX.
    x = jnp.take(emb, token_ids, axis=0).astype(MXU_DTYPE)             # (B,S,D) bf16
    # True == pad -> additive -inf bias on keys (src_key_padding_mask)
    mask_bias = jnp.where(pad_mask, NEG_INF, 0.0).astype(jnp.float32)[:, None, :]

    TB = _pick_tb(B, S)
    grid = (B // TB,)

    flat_w = []
    for p in layers:
        flat_w += [p[k] for k in LAYER_PARAM_ORDER]

    in_specs = [
        pl.BlockSpec((TB, S, D), lambda i: (i, 0, 0)),     # activation tile (bf16)
        pl.BlockSpec((TB, 1, S), lambda i: (i, 0, 0)),     # key-padding bias tile
    ] + [_weight_spec(w.shape) for w in flat_w]

    pooled = pl.pallas_call(
        fused_forward_kernel,
        grid=grid,
        in_specs=in_specs,
        out_specs=pl.BlockSpec((TB, 1, D), lambda i: (i, 0, 0)),
        out_shape=jax.ShapeDtypeStruct((B, 1, D), jnp.float32),
        compiler_params=pltpu.CompilerParams(
            dimension_semantics=("parallel",),             # megacore on v7x
            vmem_limit_bytes=_vmem_limit_bytes()),
    )(x, mask_bias, *flat_w)[:, 0, :]                      # (B, D)

    # tiny 128x2 classifier head in plain JAX (keeps kernel output lane-dense)
    return pooled @ wfc + bfc                              # (B, NUM_CLASSES)


# ----------------------------------------------------------------------------
# Parameters (weights pre-transposed; QKV fused; 1/sqrt(hd) folded into Q)
# ----------------------------------------------------------------------------
def init_params(key, vocab_size):
    keys = jax.random.split(key, 1 + 4 * NUM_LAYERS + 1)

    def dense(k, shape, scale=0.02):
        return scale * jax.random.normal(k, shape, dtype=jnp.float32)

    emb = dense(keys[0], (vocab_size, D_MODEL))
    emb = emb.at[PAD_IDX].set(0.0)                         # padding_idx row is zero

    inv_sqrt_hd = 1.0 / float(HEAD_DIM) ** 0.5
    layers = []
    ki = 1
    for _ in range(NUM_LAYERS):
        # in_proj_weight.T as one (D, 3D) matrix; fold 1/sqrt(hd) into Q columns
        wqkv = dense(keys[ki + 0], (D_MODEL, 3 * D_MODEL))
        wqkv = wqkv.at[:, :D_MODEL].multiply(inv_sqrt_hd)
        bqkv = jnp.zeros((1, 3 * D_MODEL), jnp.float32)    # (fold applies to bias too)
        layers.append(dict(
            wqkv=wqkv.astype(MXU_DTYPE),
            bqkv=bqkv,
            wo=dense(keys[ki + 1], (D_MODEL, D_MODEL)).astype(MXU_DTYPE),
            bo=jnp.zeros((1, D_MODEL), jnp.float32),
            g1=jnp.ones((1, D_MODEL), jnp.float32),
            beta1=jnp.zeros((1, D_MODEL), jnp.float32),
            w1=dense(keys[ki + 2], (D_MODEL, DIM_FF)).astype(MXU_DTYPE),
            b1=jnp.zeros((1, DIM_FF), jnp.float32),
            w2=dense(keys[ki + 3], (DIM_FF, D_MODEL)).astype(MXU_DTYPE),
            b2=jnp.zeros((1, D_MODEL), jnp.float32),
            g2=jnp.ones((1, D_MODEL), jnp.float32),
            beta2=jnp.zeros((1, D_MODEL), jnp.float32),
        ))
        ki += 4
    wfc = dense(keys[ki], (D_MODEL, NUM_CLASSES))
    bfc = jnp.zeros((NUM_CLASSES,), jnp.float32)
    return emb, layers, wfc, bfc


if __name__ == "__main__":
    key = jax.random.PRNGKey(0)
    k_param, k_tok = jax.random.split(key)

    vocab_size = 50
    B, S = 2, 8

    params = init_params(k_param, vocab_size)

    tokens = jax.random.randint(k_tok, (B, S), 0, vocab_size, dtype=jnp.int32)
    # tail of sequence 0 is padding (True = pad), sequence 1 is full
    pad_mask = jnp.arange(S)[None, :] >= jnp.array([[6], [8]])   # (B, S) bool
    tokens = jnp.where(pad_mask, PAD_IDX, tokens)

    logits = transformer_classifier(tokens, pad_mask, params)
    jax.block_until_ready(logits)
    assert logits.shape == (B, NUM_CLASSES)
    print("KERNEL_OK")
</pallas_src>

<mosaic_0001>
module attributes {stable_mosaic.version = 11 : i64} {
  func.func @fused_forward_kernel(%arg0: i32, %arg1: memref<2x8x128xbf16, #tpu.memory_space<vmem>>, %arg2: memref<2x1x8xf32, #tpu.memory_space<vmem>>, %arg3: memref<128x384xbf16, #tpu.memory_space<vmem>>, %arg4: memref<1x384xf32, #tpu.memory_space<vmem>>, %arg5: memref<128x128xbf16, #tpu.memory_space<vmem>>, %arg6: memref<1x128xf32, #tpu.memory_space<vmem>>, %arg7: memref<1x128xf32, #tpu.memory_space<vmem>>, %arg8: memref<1x128xf32, #tpu.memory_space<vmem>>, %arg9: memref<128x2048xbf16, #tpu.memory_space<vmem>>, %arg10: memref<1x2048xf32, #tpu.memory_space<vmem>>, %arg11: memref<2048x128xbf16, #tpu.memory_space<vmem>>, %arg12: memref<1x128xf32, #tpu.memory_space<vmem>>, %arg13: memref<1x128xf32, #tpu.memory_space<vmem>>, %arg14: memref<1x128xf32, #tpu.memory_space<vmem>>, %arg15: memref<128x384xbf16, #tpu.memory_space<vmem>>, %arg16: memref<1x384xf32, #tpu.memory_space<vmem>>, %arg17: memref<128x128xbf16, #tpu.memory_space<vmem>>, %arg18: memref<1x128xf32, #tpu.memory_space<vmem>>, %arg19: memref<1x128xf32, #tpu.memory_space<vmem>>, %arg20: memref<1x128xf32, #tpu.memory_space<vmem>>, %arg21: memref<128x2048xbf16, #tpu.memory_space<vmem>>, %arg22: memref<1x2048xf32, #tpu.memory_space<vmem>>, %arg23: memref<2048x128xbf16, #tpu.memory_space<vmem>>, %arg24: memref<1x128xf32, #tpu.memory_space<vmem>>, %arg25: memref<1x128xf32, #tpu.memory_space<vmem>>, %arg26: memref<1x128xf32, #tpu.memory_space<vmem>>, %arg27: memref<2x1x128xf32, #tpu.memory_space<vmem>>) attributes {dimension_semantics = [#tpu.dimension_semantics<parallel>], iteration_bounds = array<i64: 1>, scalar_prefetch = 0 : i64, scratch_operands = 0 : i64, tpu.core_type = #tpu.core_type<tc>, window_params = [{transform_indices = @transform_0, window_bounds = array<i64: 2, 8, 128>}, {transform_indices = @transform_1, window_bounds = array<i64: 2, 1, 8>}, {pipeline_mode = #tpu.pipeline_mode<synchronous>, transform_indices = @transform_2, window_bounds = array<i64: 128, 384>}, {pipeline_mode = #tpu.pipeline_mode<synchronous>, transform_indices = @transform_3, window_bounds = array<i64: 1, 384>}, {pipeline_mode = #tpu.pipeline_mode<synchronous>, transform_indices = @transform_4, window_bounds = array<i64: 128, 128>}, {pipeline_mode = #tpu.pipeline_mode<synchronous>, transform_indices = @transform_5, window_bounds = array<i64: 1, 128>}, {pipeline_mode = #tpu.pipeline_mode<synchronous>, transform_indices = @transform_6, window_bounds = array<i64: 1, 128>}, {pipeline_mode = #tpu.pipeline_mode<synchronous>, transform_indices = @transform_7, window_bounds = array<i64: 1, 128>}, {pipeline_mode = #tpu.pipeline_mode<synchronous>, transform_indices = @transform_8, window_bounds = array<i64: 128, 2048>}, {pipeline_mode = #tpu.pipeline_mode<synchronous>, transform_indices = @transform_9, window_bounds = array<i64: 1, 2048>}, {pipeline_mode = #tpu.pipeline_mode<synchronous>, transform_indices = @transform_10, window_bounds = array<i64: 2048, 128>}, {pipeline_mode = #tpu.pipeline_mode<synchronous>, transform_indices = @transform_11, window_bounds = array<i64: 1, 128>}, {pipeline_mode = #tpu.pipeline_mode<synchronous>, transform_indices = @transform_12, window_bounds = array<i64: 1, 128>}, {pipeline_mode = #tpu.pipeline_mode<synchronous>, transform_indices = @transform_13, window_bounds = array<i64: 1, 128>}, {pipeline_mode = #tpu.pipeline_mode<synchronous>, transform_indices = @transform_14, window_bounds = array<i64: 128, 384>}, {pipeline_mode = #tpu.pipeline_mode<synchronous>, transform_indices = @transform_15, window_bounds = array<i64: 1, 384>}, {pipeline_mode = #tpu.pipeline_mode<synchronous>, transform_indices = @transform_16, window_bounds = array<i64: 128, 128>}, {pipeline_mode = #tpu.pipeline_mode<synchronous>, transform_indices = @transform_17, window_bounds = array<i64: 1, 128>}, {pipeline_mode = #tpu.pipeline_mode<synchronous>, transform_indices = @transform_18, window_bounds = array<i64: 1, 128>}, {pipeline_mode = #tpu.pipeline_mode<synchronous>, transform_indices = @transform_19, window_bounds = array<i64: 1, 128>}, {pipeline_mode = #tpu.pipeline_mode<synchronous>, transform_indices = @transform_20, window_bounds = array<i64: 128, 2048>}, {pipeline_mode = #tpu.pipeline_mode<synchronous>, transform_indices = @transform_21, window_bounds = array<i64: 1, 2048>}, {pipeline_mode = #tpu.pipeline_mode<synchronous>, transform_indices = @transform_22, window_bounds = array<i64: 2048, 128>}, {pipeline_mode = #tpu.pipeline_mode<synchronous>, transform_indices = @transform_23, window_bounds = array<i64: 1, 128>}, {pipeline_mode = #tpu.pipeline_mode<synchronous>, transform_indices = @transform_24, window_bounds = array<i64: 1, 128>}, {pipeline_mode = #tpu.pipeline_mode<synchronous>, transform_indices = @transform_25, window_bounds = array<i64: 1, 128>}, {transform_indices = @transform_26, window_bounds = array<i64: 2, 1, 128>}]} {
    %c0 = arith.constant 0 : index
    %c0_0 = arith.constant 0 : index
    %c0_1 = arith.constant 0 : index
    %0 = vector.load %arg1[%c0, %c0_0, %c0_1] : memref<2x8x128xbf16, #tpu.memory_space<vmem>>, vector<2x8x128xbf16>
    %1 = arith.extf %0 : vector<2x8x128xbf16> to vector<2x8x128xf32>
    %c0_2 = arith.constant 0 : index
    %c0_3 = arith.constant 0 : index
    %c0_4 = arith.constant 0 : index
    %2 = vector.load %arg2[%c0_2, %c0_3, %c0_4] : memref<2x1x8xf32, #tpu.memory_space<vmem>>, vector<2x1x8xf32>
    %3 = vector.shape_cast %1 : vector<2x8x128xf32> to vector<16x128xf32>
    %4 = arith.truncf %3 : vector<16x128xf32> to vector<16x128xbf16>
    %c0_5 = arith.constant 0 : index
    %c0_6 = arith.constant 0 : index
    %5 = vector.load %arg3[%c0_5, %c0_6] : memref<128x384xbf16, #tpu.memory_space<vmem>>, vector<128x384xbf16>
    %cst = arith.constant dense<0.000000e+00> : vector<16x384xf32>
    %6 = tpu.matmul %4, %5, %cst {dimension_numbers = #tpu.dot_dimension_numbers<[1], [0], [0], [1], [0, 0, 1, 1], [], []>} : vector<16x128xbf16>, vector<128x384xbf16>, vector<16x384xf32> -> vector<16x384xf32>
    %c0_7 = arith.constant 0 : index
    %c0_8 = arith.constant 0 : index
    %7 = vector.load %arg4[%c0_7, %c0_8] : memref<1x384xf32, #tpu.memory_space<vmem>>, vector<1x384xf32>
    %8 = vector.broadcast %7 : vector<1x384xf32> to vector<16x384xf32>
    %9 = arith.addf %6, %8 : vector<16x384xf32>
    %10 = vector.extract_strided_slice %9 {offsets = [0, 0], sizes = [16, 32], strides = [1, 1]} : vector<16x384xf32> to vector<16x32xf32>
    %11 = vector.shape_cast %10 : vector<16x32xf32> to vector<2x8x32xf32>
    %12 = arith.truncf %11 : vector<2x8x32xf32> to vector<2x8x32xbf16>
    %13 = vector.extract_strided_slice %9 {offsets = [0, 128], sizes = [16, 32], strides = [1, 1]} : vector<16x384xf32> to vector<16x32xf32>
    %14 = vector.shape_cast %13 : vector<16x32xf32> to vector<2x8x32xf32>
    %15 = arith.truncf %14 : vector<2x8x32xf32> to vector<2x8x32xbf16>
    %16 = vector.extract_strided_slice %9 {offsets = [0, 256], sizes = [16, 32], strides = [1, 1]} : vector<16x384xf32> to vector<16x32xf32>
    %17 = vector.shape_cast %16 : vector<16x32xf32> to vector<2x8x32xf32>
    %18 = arith.truncf %17 : vector<2x8x32xf32> to vector<2x8x32xbf16>
    "tpu.trace_start"() <{level = 10 : i32, message = "bqe,bke->bqk"}> : () -> ()
    %cst_9 = arith.constant dense<0.000000e+00> : vector<2x8x8xf32>
    %19 = tpu.matmul %12, %15, %cst_9 {dimension_numbers = #tpu.dot_dimension_numbers<[2], [2], [1], [1], [0, 0, 0, 1, 1, 1], [0], [0]>} : vector<2x8x32xbf16>, vector<2x8x32xbf16>, vector<2x8x8xf32> -> vector<2x8x8xf32>
    "tpu.trace_stop"() : () -> ()
    %20 = vector.broadcast %2 : vector<2x1x8xf32> to vector<2x8x8xf32>
    %21 = arith.addf %19, %20 : vector<2x8x8xf32>
    %cst_10 = arith.constant dense<0xFF800000> : vector<2x8xf32>
    %22 = vector.multi_reduction <maximumf>, %21, %cst_10 [2] : vector<2x8x8xf32> to vector<2x8xf32>
    %23 = vector.shape_cast %22 : vector<2x8xf32> to vector<2x8x1xf32>
    %24 = vector.broadcast %23 : vector<2x8x1xf32> to vector<2x8x8xf32>
    %25 = arith.subf %21, %24 : vector<2x8x8xf32>
    %26 = math.exp %25 : vector<2x8x8xf32>
    %cst_11 = arith.constant dense<0.000000e+00> : vector<2x8xf32>
    %27 = vector.multi_reduction <add>, %26, %cst_11 [2] : vector<2x8x8xf32> to vector<2x8xf32>
    %28 = vector.shape_cast %27 : vector<2x8xf32> to vector<2x8x1xf32>
    %29 = tpu.reciprocal %28 {approx = true} : vector<2x8x1xf32> -> vector<2x8x1xf32>
    %30 = vector.broadcast %29 : vector<2x8x1xf32> to vector<2x8x8xf32>
    %31 = arith.mulf %26, %30 : vector<2x8x8xf32>
    %32 = arith.truncf %31 : vector<2x8x8xf32> to vector<2x8x8xbf16>
    "tpu.trace_start"() <{level = 10 : i32, message = "bqk,bke->bqe"}> : () -> ()
    %cst_12 = arith.constant dense<0.000000e+00> : vector<2x8x32xf32>
    %33 = tpu.matmul %32, %18, %cst_12 {dimension_numbers = #tpu.dot_dimension_numbers<[2], [1], [1], [2], [0, 0, 0, 1, 1, 2], [0], [0]>} : vector<2x8x8xbf16>, vector<2x8x32xbf16>, vector<2x8x32xf32> -> vector<2x8x32xf32>
    "tpu.trace_stop"() : () -> ()
    %34 = vector.shape_cast %33 : vector<2x8x32xf32> to vector<16x32xf32>
    %35 = vector.extract_strided_slice %9 {offsets = [0, 32], sizes = [16, 32], strides = [1, 1]} : vector<16x384xf32> to vector<16x32xf32>
    %36 = vector.shape_cast %35 : vector<16x32xf32> to vector<2x8x32xf32>
    %37 = arith.truncf %36 : vector<2x8x32xf32> to vector<2x8x32xbf16>
    %38 = vector.extract_strided_slice %9 {offsets = [0, 160], sizes = [16, 32], strides = [1, 1]} : vector<16x384xf32> to vector<16x32xf32>
    %39 = vector.shape_cast %38 : vector<16x32xf32> to vector<2x8x32xf32>
    %40 = arith.truncf %39 : vector<2x8x32xf32> to vector<2x8x32xbf16>
    %41 = vector.extract_strided_slice %9 {offsets = [0, 288], sizes = [16, 32], strides = [1, 1]} : vector<16x384xf32> to vector<16x32xf32>
    %42 = vector.shape_cast %41 : vector<16x32xf32> to vector<2x8x32xf32>
    %43 = arith.truncf %42 : vector<2x8x32xf32> to vector<2x8x32xbf16>
    "tpu.trace_start"() <{level = 10 : i32, message = "bqe,bke->bqk"}> : () -> ()
    %cst_13 = arith.constant dense<0.000000e+00> : vector<2x8x8xf32>
    %44 = tpu.matmul %37, %40, %cst_13 {dimension_numbers = #tpu.dot_dimension_numbers<[2], [2], [1], [1], [0, 0, 0, 1, 1, 1], [0], [0]>} : vector<2x8x32xbf16>, vector<2x8x32xbf16>, vector<2x8x8xf32> -> vector<2x8x8xf32>
    "tpu.trace_stop"() : () -> ()
    %45 = vector.broadcast %2 : vector<2x1x8xf32> to vector<2x8x8xf32>
    %46 = arith.addf %44, %45 : vector<2x8x8xf32>
    %cst_14 = arith.constant dense<0xFF800000> : vector<2x8xf32>
    %47 = vector.multi_reduction <maximumf>, %46, %cst_14 [2] : vector<2x8x8xf32> to vector<2x8xf32>
    %48 = vector.shape_cast %47 : vector<2x8xf32> to vector<2x8x1xf32>
    %49 = vector.broadcast %48 : vector<2x8x1xf32> to vector<2x8x8xf32>
    %50 = arith.subf %46, %49 : vector<2x8x8xf32>
    %51 = math.exp %50 : vector<2x8x8xf32>
    %cst_15 = arith.constant dense<0.000000e+00> : vector<2x8xf32>
    %52 = vector.multi_reduction <add>, %51, %cst_15 [2] : vector<2x8x8xf32> to vector<2x8xf32>
    %53 = vector.shape_cast %52 : vector<2x8xf32> to vector<2x8x1xf32>
    %54 = tpu.reciprocal %53 {approx = true} : vector<2x8x1xf32> -> vector<2x8x1xf32>
    %55 = vector.broadcast %54 : vector<2x8x1xf32> to vector<2x8x8xf32>
    %56 = arith.mulf %51, %55 : vector<2x8x8xf32>
    %57 = arith.truncf %56 : vector<2x8x8xf32> to vector<2x8x8xbf16>
    "tpu.trace_start"() <{level = 10 : i32, message = "bqk,bke->bqe"}> : () -> ()
    %cst_16 = arith.constant dense<0.000000e+00> : vector<2x8x32xf32>
    %58 = tpu.matmul %57, %43, %cst_16 {dimension_numbers = #tpu.dot_dimension_numbers<[2], [1], [1], [2], [0, 0, 0, 1, 1, 2], [0], [0]>} : vector<2x8x8xbf16>, vector<2x8x32xbf16>, vector<2x8x32xf32> -> vector<2x8x32xf32>
    "tpu.trace_stop"() : () -> ()
    %59 = vector.shape_cast %58 : vector<2x8x32xf32> to vector<16x32xf32>
    %60 = vector.extract_strided_slice %9 {offsets = [0, 64], sizes = [16, 32], strides = [1, 1]} : vector<16x384xf32> to vector<16x32xf32>
    %61 = vector.shape_cast %60 : vector<16x32xf32> to vector<2x8x32xf32>
    %62 = arith.truncf %61 : vector<2x8x32xf32> to vector<2x8x32xbf16>
    %63 = vector.extract_strided_slice %9 {offsets = [0, 192], sizes = [16, 32], strides = [1, 1]} : vector<16x384xf32> to vector<16x32xf32>
    %64 = vector.shape_cast %63 : vector<16x32xf32> to vector<2x8x32xf32>
    %65 = arith.truncf %64 : vector<2x8x32xf32> to vector<2x8x32xbf16>
    %66 = vector.extract_strided_slice %9 {offsets = [0, 320], sizes = [16, 32], strides = [1, 1]} : vector<16x384xf32> to vector<16x32xf32>
    %67 = vector.shape_cast %66 : vector<16x32xf32> to vector<2x8x32xf32>
    %68 = arith.truncf %67 : vector<2x8x32xf32> to vector<2x8x32xbf16>
    "tpu.trace_start"() <{level = 10 : i32, message = "bqe,bke->bqk"}> : () -> ()
    %cst_17 = arith.constant dense<0.000000e+00> : vector<2x8x8xf32>
    %69 = tpu.matmul %62, %65, %cst_17 {dimension_numbers = #tpu.dot_dimension_numbers<[2], [2], [1], [1], [0, 0, 0, 1, 1, 1], [0], [0]>} : vector<2x8x32xbf16>, vector<2x8x32xbf16>, vector<2x8x8xf32> -> vector<2x8x8xf32>
    "tpu.trace_stop"() : () -> ()
    %70 = vector.broadcast %2 : vector<2x1x8xf32> to vector<2x8x8xf32>
    %71 = arith.addf %69, %70 : vector<2x8x8xf32>
    %cst_18 = arith.constant dense<0xFF800000> : vector<2x8xf32>
    %72 = vector.multi_reduction <maximumf>, %71, %cst_18 [2] : vector<2x8x8xf32> to vector<2x8xf32>
    %73 = vector.shape_cast %72 : vector<2x8xf32> to vector<2x8x1xf32>
    %74 = vector.broadcast %73 : vector<2x8x1xf32> to vector<2x8x8xf32>
    %75 = arith.subf %71, %74 : vector<2x8x8xf32>
    %76 = math.exp %75 : vector<2x8x8xf32>
    %cst_19 = arith.constant dense<0.000000e+00> : vector<2x8xf32>
    %77 = vector.multi_reduction <add>, %76, %cst_19 [2] : vector<2x8x8xf32> to vector<2x8xf32>
    %78 = vector.shape_cast %77 : vector<2x8xf32> to vector<2x8x1xf32>
    %79 = tpu.reciprocal %78 {approx = true} : vector<2x8x1xf32> -> vector<2x8x1xf32>
    %80 = vector.broadcast %79 : vector<2x8x1xf32> to vector<2x8x8xf32>
    %81 = arith.mulf %76, %80 : vector<2x8x8xf32>
    %82 = arith.truncf %81 : vector<2x8x8xf32> to vector<2x8x8xbf16>
    "tpu.trace_start"() <{level = 10 : i32, message = "bqk,bke->bqe"}> : () -> ()
    %cst_20 = arith.constant dense<0.000000e+00> : vector<2x8x32xf32>
    %83 = tpu.matmul %82, %68, %cst_20 {dimension_numbers = #tpu.dot_dimension_numbers<[2], [1], [1], [2], [0, 0, 0, 1, 1, 2], [0], [0]>} : vector<2x8x8xbf16>, vector<2x8x32xbf16>, vector<2x8x32xf32> -> vector<2x8x32xf32>
    "tpu.trace_stop"() : () -> ()
    %84 = vector.shape_cast %83 : vector<2x8x32xf32> to vector<16x32xf32>
    %85 = vector.extract_strided_slice %9 {offsets = [0, 96], sizes = [16, 32], strides = [1, 1]} : vector<16x384xf32> to vector<16x32xf32>
    %86 = vector.shape_cast %85 : vector<16x32xf32> to vector<2x8x32xf32>
    %87 = arith.truncf %86 : vector<2x8x32xf32> to vector<2x8x32xbf16>
    %88 = vector.extract_strided_slice %9 {offsets = [0, 224], sizes = [16, 32], strides = [1, 1]} : vector<16x384xf32> to vector<16x32xf32>
    %89 = vector.shape_cast %88 : vector<16x32xf32> to vector<2x8x32xf32>
    %90 = arith.truncf %89 : vector<2x8x32xf32> to vector<2x8x32xbf16>
    %91 = vector.extract_strided_slice %9 {offsets = [0, 352], sizes = [16, 32], strides = [1, 1]} : vector<16x384xf32> to vector<16x32xf32>
    %92 = vector.shape_cast %91 : vector<16x32xf32> to vector<2x8x32xf32>
    %93 = arith.truncf %92 : vector<2x8x32xf32> to vector<2x8x32xbf16>
    "tpu.trace_start"() <{level = 10 : i32, message = "bqe,bke->bqk"}> : () -> ()
    %cst_21 = arith.constant dense<0.000000e+00> : vector<2x8x8xf32>
    %94 = tpu.matmul %87, %90, %cst_21 {dimension_numbers = #tpu.dot_dimension_numbers<[2], [2], [1], [1], [0, 0, 0, 1, 1, 1], [0], [0]>} : vector<2x8x32xbf16>, vector<2x8x32xbf16>, vector<2x8x8xf32> -> vector<2x8x8xf32>
    "tpu.trace_stop"() : () -> ()
    %95 = vector.broadcast %2 : vector<2x1x8xf32> to vector<2x8x8xf32>
    %96 = arith.addf %94, %95 : vector<2x8x8xf32>
    %cst_22 = arith.constant dense<0xFF800000> : vector<2x8xf32>
    %97 = vector.multi_reduction <maximumf>, %96, %cst_22 [2] : vector<2x8x8xf32> to vector<2x8xf32>
    %98 = vector.shape_cast %97 : vector<2x8xf32> to vector<2x8x1xf32>
    %99 = vector.broadcast %98 : vector<2x8x1xf32> to vector<2x8x8xf32>
    %100 = arith.subf %96, %99 : vector<2x8x8xf32>
    %101 = math.exp %100 : vector<2x8x8xf32>
    %cst_23 = arith.constant dense<0.000000e+00> : vector<2x8xf32>
    %102 = vector.multi_reduction <add>, %101, %cst_23 [2] : vector<2x8x8xf32> to vector<2x8xf32>
    %103 = vector.shape_cast %102 : vector<2x8xf32> to vector<2x8x1xf32>
    %104 = tpu.reciprocal %103 {approx = true} : vector<2x8x1xf32> -> vector<2x8x1xf32>
    %105 = vector.broadcast %104 : vector<2x8x1xf32> to vector<2x8x8xf32>
    %106 = arith.mulf %101, %105 : vector<2x8x8xf32>
    %107 = arith.truncf %106 : vector<2x8x8xf32> to vector<2x8x8xbf16>
    "tpu.trace_start"() <{level = 10 : i32, message = "bqk,bke->bqe"}> : () -> ()
    %cst_24 = arith.constant dense<0.000000e+00> : vector<2x8x32xf32>
    %108 = tpu.matmul %107, %93, %cst_24 {dimension_numbers = #tpu.dot_dimension_numbers<[2], [1], [1], [2], [0, 0, 0, 1, 1, 2], [0], [0]>} : vector<2x8x8xbf16>, vector<2x8x32xbf16>, vector<2x8x32xf32> -> vector<2x8x32xf32>
    "tpu.trace_stop"() : () -> ()
    %109 = vector.shape_cast %108 : vector<2x8x32xf32> to vector<16x32xf32>
    %110 = tpu.concatenate %34, %59, %84, %109 in 1 : vector<16x32xf32>, vector<16x32xf32>, vector<16x32xf32>, vector<16x32xf32> -> vector<16x128xf32>
    %111 = arith.truncf %110 : vector<16x128xf32> to vector<16x128xbf16>
    %c0_25 = arith.constant 0 : index
    %c0_26 = arith.constant 0 : index
    %112 = vector.load %arg5[%c0_25, %c0_26] : memref<128x128xbf16, #tpu.memory_space<vmem>>, vector<128x128xbf16>
    %cst_27 = arith.constant dense<0.000000e+00> : vector<16x128xf32>
    %113 = tpu.matmul %111, %112, %cst_27 {dimension_numbers = #tpu.dot_dimension_numbers<[1], [0], [0], [1], [0, 0, 1, 1], [], []>} : vector<16x128xbf16>, vector<128x128xbf16>, vector<16x128xf32> -> vector<16x128xf32>
    %c0_28 = arith.constant 0 : index
    %c0_29 = arith.constant 0 : index
    %114 = vector.load %arg6[%c0_28, %c0_29] : memref<1x128xf32, #tpu.memory_space<vmem>>, vector<1x128xf32>
    %115 = vector.broadcast %114 : vector<1x128xf32> to vector<16x128xf32>
    %116 = arith.addf %113, %115 : vector<16x128xf32>
    %117 = arith.addf %3, %116 : vector<16x128xf32>
    %cst_30 = arith.constant dense<0.000000e+00> : vector<16xf32>
    %118 = vector.multi_reduction <add>, %117, %cst_30 [1] : vector<16x128xf32> to vector<16xf32>
    %119 = vector.shape_cast %118 : vector<16xf32> to vector<16x1xf32>
    %cst_31 = arith.constant 1.280000e+02 : f32
    %120 = vector.broadcast %cst_31 : f32 to vector<16x1xf32>
    %121 = arith.divf %119, %120 : vector<16x1xf32>
    %122 = vector.broadcast %121 : vector<16x1xf32> to vector<16x128xf32>
    %123 = arith.subf %117, %122 : vector<16x128xf32>
    %124 = arith.mulf %123, %123 : vector<16x128xf32>
    %cst_32 = arith.constant dense<0.000000e+00> : vector<16xf32>
    %125 = vector.multi_reduction <add>, %124, %cst_32 [1] : vector<16x128xf32> to vector<16xf32>
    %126 = vector.shape_cast %125 : vector<16xf32> to vector<16x1xf32>
    %cst_33 = arith.constant 1.280000e+02 : f32
    %127 = vector.broadcast %cst_33 : f32 to vector<16x1xf32>
    %128 = arith.divf %126, %127 : vector<16x1xf32>
    %129 = vector.broadcast %121 : vector<16x1xf32> to vector<16x128xf32>
    %130 = arith.subf %117, %129 : vector<16x128xf32>
    %cst_34 = arith.constant 9.99999974E-6 : f32
    %131 = vector.broadcast %cst_34 : f32 to vector<16x1xf32>
    %132 = arith.addf %128, %131 : vector<16x1xf32>
    %133 = math.rsqrt %132 : vector<16x1xf32>
    %134 = vector.broadcast %133 : vector<16x1xf32> to vector<16x128xf32>
    %135 = arith.mulf %130, %134 : vector<16x128xf32>
    %c0_35 = arith.constant 0 : index
    %c0_36 = arith.constant 0 : index
    %136 = vector.load %arg7[%c0_35, %c0_36] : memref<1x128xf32, #tpu.memory_space<vmem>>, vector<1x128xf32>
    %137 = vector.broadcast %136 : vector<1x128xf32> to vector<16x128xf32>
    %138 = arith.mulf %135, %137 : vector<16x128xf32>
    %c0_37 = arith.constant 0 : index
    %c0_38 = arith.constant 0 : index
    %139 = vector.load %arg8[%c0_37, %c0_38] : memref<1x128xf32, #tpu.memory_space<vmem>>, vector<1x128xf32>
    %140 = vector.broadcast %139 : vector<1x128xf32> to vector<16x128xf32>
    %141 = arith.addf %138, %140 : vector<16x128xf32>
    %142 = arith.truncf %141 : vector<16x128xf32> to vector<16x128xbf16>
    %c0_39 = arith.constant 0 : index
    %c0_40 = arith.constant 0 : index
    %143 = vector.load %arg9[%c0_39, %c0_40] : memref<128x2048xbf16, #tpu.memory_space<vmem>>, vector<128x2048xbf16>
    %cst_41 = arith.constant dense<0.000000e+00> : vector<16x2048xf32>
    %144 = tpu.matmul %142, %143, %cst_41 {dimension_numbers = #tpu.dot_dimension_numbers<[1], [0], [0], [1], [0, 0, 1, 1], [], []>} : vector<16x128xbf16>, vector<128x2048xbf16>, vector<16x2048xf32> -> vector<16x2048xf32>
    %c0_42 = arith.constant 0 : index
    %c0_43 = arith.constant 0 : index
    %145 = vector.load %arg10[%c0_42, %c0_43] : memref<1x2048xf32, #tpu.memory_space<vmem>>, vector<1x2048xf32>
    %146 = vector.broadcast %145 : vector<1x2048xf32> to vector<16x2048xf32>
    %147 = arith.addf %144, %146 : vector<16x2048xf32>
    %cst_44 = arith.constant 0.000000e+00 : f32
    %148 = vector.broadcast %cst_44 : f32 to vector<16x2048xf32>
    %149 = arith.maximumf %147, %148 : vector<16x2048xf32>
    %150 = arith.truncf %149 : vector<16x2048xf32> to vector<16x2048xbf16>
    %c0_45 = arith.constant 0 : index
    %c0_46 = arith.constant 0 : index
    %151 = vector.load %arg11[%c0_45, %c0_46] : memref<2048x128xbf16, #tpu.memory_space<vmem>>, vector<2048x128xbf16>
    %cst_47 = arith.constant dense<0.000000e+00> : vector<16x128xf32>
    %152 = tpu.matmul %150, %151, %cst_47 {dimension_numbers = #tpu.dot_dimension_numbers<[1], [0], [0], [1], [0, 0, 1, 1], [], []>} : vector<16x2048xbf16>, vector<2048x128xbf16>, vector<16x128xf32> -> vector<16x128xf32>
    %c0_48 = arith.constant 0 : index
    %c0_49 = arith.constant 0 : index
    %153 = vector.load %arg12[%c0_48, %c0_49] : memref<1x128xf32, #tpu.memory_space<vmem>>, vector<1x128xf32>
    %154 = vector.broadcast %153 : vector<1x128xf32> to vector<16x128xf32>
    %155 = arith.addf %152, %154 : vector<16x128xf32>
    %156 = arith.addf %141, %155 : vector<16x128xf32>
    %cst_50 = arith.constant dense<0.000000e+00> : vector<16xf32>
    %157 = vector.multi_reduction <add>, %156, %cst_50 [1] : vector<16x128xf32> to vector<16xf32>
    %158 = vector.shape_cast %157 : vector<16xf32> to vector<16x1xf32>
    %cst_51 = arith.constant 1.280000e+02 : f32
    %159 = vector.broadcast %cst_51 : f32 to vector<16x1xf32>
    %160 = arith.divf %158, %159 : vector<16x1xf32>
    %161 = vector.broadcast %160 : vector<16x1xf32> to vector<16x128xf32>
    %162 = arith.subf %156, %161 : vector<16x128xf32>
    %163 = arith.mulf %162, %162 : vector<16x128xf32>
    %cst_52 = arith.constant dense<0.000000e+00> : vector<16xf32>
    %164 = vector.multi_reduction <add>, %163, %cst_52 [1] : vector<16x128xf32> to vector<16xf32>
    %165 = vector.shape_cast %164 : vector<16xf32> to vector<16x1xf32>
    %cst_53 = arith.constant 1.280000e+02 : f32
    %166 = vector.broadcast %cst_53 : f32 to vector<16x1xf32>
    %167 = arith.divf %165, %166 : vector<16x1xf32>
    %168 = vector.broadcast %160 : vector<16x1xf32> to vector<16x128xf32>
    %169 = arith.subf %156, %168 : vector<16x128xf32>
    %cst_54 = arith.constant 9.99999974E-6 : f32
    %170 = vector.broadcast %cst_54 : f32 to vector<16x1xf32>
    %171 = arith.addf %167, %170 : vector<16x1xf32>
    %172 = math.rsqrt %171 : vector<16x1xf32>
    %173 = vector.broadcast %172 : vector<16x1xf32> to vector<16x128xf32>
    %174 = arith.mulf %169, %173 : vector<16x128xf32>
    %c0_55 = arith.constant 0 : index
    %c0_56 = arith.constant 0 : index
    %175 = vector.load %arg13[%c0_55, %c0_56] : memref<1x128xf32, #tpu.memory_space<vmem>>, vector<1x128xf32>
    %176 = vector.broadcast %175 : vector<1x128xf32> to vector<16x128xf32>
    %177 = arith.mulf %174, %176 : vector<16x128xf32>
    %c0_57 = arith.constant 0 : index
    %c0_58 = arith.constant 0 : index
    %178 = vector.load %arg14[%c0_57, %c0_58] : memref<1x128xf32, #tpu.memory_space<vmem>>, vector<1x128xf32>
    %179 = vector.broadcast %178 : vector<1x128xf32> to vector<16x128xf32>
    %180 = arith.addf %177, %179 : vector<16x128xf32>
    %181 = arith.truncf %180 : vector<16x128xf32> to vector<16x128xbf16>
    %c0_59 = arith.constant 0 : index
    %c0_60 = arith.constant 0 : index
    %182 = vector.load %arg15[%c0_59, %c0_60] : memref<128x384xbf16, #tpu.memory_space<vmem>>, vector<128x384xbf16>
    %cst_61 = arith.constant dense<0.000000e+00> : vector<16x384xf32>
    %183 = tpu.matmul %181, %182, %cst_61 {dimension_numbers = #tpu.dot_dimension_numbers<[1], [0], [0], [1], [0, 0, 1, 1], [], []>} : vector<16x128xbf16>, vector<128x384xbf16>, vector<16x384xf32> -> vector<16x384xf32>
    %c0_62 = arith.constant 0 : index
    %c0_63 = arith.constant 0 : index
    %184 = vector.load %arg16[%c0_62, %c0_63] : memref<1x384xf32, #tpu.memory_space<vmem>>, vector<1x384xf32>
    %185 = vector.broadcast %184 : vector<1x384xf32> to vector<16x384xf32>
    %186 = arith.addf %183, %185 : vector<16x384xf32>
    %187 = vector.extract_strided_slice %186 {offsets = [0, 0], sizes = [16, 32], strides = [1, 1]} : vector<16x384xf32> to vector<16x32xf32>
    %188 = vector.shape_cast %187 : vector<16x32xf32> to vector<2x8x32xf32>
    %189 = arith.truncf %188 : vector<2x8x32xf32> to vector<2x8x32xbf16>
    %190 = vector.extract_strided_slice %186 {offsets = [0, 128], sizes = [16, 32], strides = [1, 1]} : vector<16x384xf32> to vector<16x32xf32>
    %191 = vector.shape_cast %190 : vector<16x32xf32> to vector<2x8x32xf32>
    %192 = arith.truncf %191 : vector<2x8x32xf32> to vector<2x8x32xbf16>
    %193 = vector.extract_strided_slice %186 {offsets = [0, 256], sizes = [16, 32], strides = [1, 1]} : vector<16x384xf32> to vector<16x32xf32>
    %194 = vector.shape_cast %193 : vector<16x32xf32> to vector<2x8x32xf32>
    %195 = arith.truncf %194 : vector<2x8x32xf32> to vector<2x8x32xbf16>
    "tpu.trace_start"() <{level = 10 : i32, message = "bqe,bke->bqk"}> : () -> ()
    %cst_64 = arith.constant dense<0.000000e+00> : vector<2x8x8xf32>
    %196 = tpu.matmul %189, %192, %cst_64 {dimension_numbers = #tpu.dot_dimension_numbers<[2], [2], [1], [1], [0, 0, 0, 1, 1, 1], [0], [0]>} : vector<2x8x32xbf16>, vector<2x8x32xbf16>, vector<2x8x8xf32> -> vector<2x8x8xf32>
    "tpu.trace_stop"() : () -> ()
    %197 = vector.broadcast %2 : vector<2x1x8xf32> to vector<2x8x8xf32>
    %198 = arith.addf %196, %197 : vector<2x8x8xf32>
    %cst_65 = arith.constant dense<0xFF800000> : vector<2x8xf32>
    %199 = vector.multi_reduction <maximumf>, %198, %cst_65 [2] : vector<2x8x8xf32> to vector<2x8xf32>
    %200 = vector.shape_cast %199 : vector<2x8xf32> to vector<2x8x1xf32>
    %201 = vector.broadcast %200 : vector<2x8x1xf32> to vector<2x8x8xf32>
    %202 = arith.subf %198, %201 : vector<2x8x8xf32>
    %203 = math.exp %202 : vector<2x8x8xf32>
    %cst_66 = arith.constant dense<0.000000e+00> : vector<2x8xf32>
    %204 = vector.multi_reduction <add>, %203, %cst_66 [2] : vector<2x8x8xf32> to vector<2x8xf32>
    %205 = vector.shape_cast %204 : vector<2x8xf32> to vector<2x8x1xf32>
    %206 = tpu.reciprocal %205 {approx = true} : vector<2x8x1xf32> -> vector<2x8x1xf32>
    %207 = vector.broadcast %206 : vector<2x8x1xf32> to vector<2x8x8xf32>
    %208 = arith.mulf %203, %207 : vector<2x8x8xf32>
    %209 = arith.truncf %208 : vector<2x8x8xf32> to vector<2x8x8xbf16>
    "tpu.trace_start"() <{level = 10 : i32, message = "bqk,bke->bqe"}> : () -> ()
    %cst_67 = arith.constant dense<0.000000e+00> : vector<2x8x32xf32>
    %210 = tpu.matmul %209, %195, %cst_67 {dimension_numbers = #tpu.dot_dimension_numbers<[2], [1], [1], [2], [0, 0, 0, 1, 1, 2], [0], [0]>} : vector<2x8x8xbf16>, vector<2x8x32xbf16>, vector<2x8x32xf32> -> vector<2x8x32xf32>
    "tpu.trace_stop"() : () -> ()
    %211 = vector.shape_cast %210 : vector<2x8x32xf32> to vector<16x32xf32>
    %212 = vector.extract_strided_slice %186 {offsets = [0, 32], sizes = [16, 32], strides = [1, 1]} : vector<16x384xf32> to vector<16x32xf32>
    %213 = vector.shape_cast %212 : vector<16x32xf32> to vector<2x8x32xf32>
    %214 = arith.truncf %213 : vector<2x8x32xf32> to vector<2x8x32xbf16>
    %215 = vector.extract_strided_slice %186 {offsets = [0, 160], sizes = [16, 32], strides = [1, 1]} : vector<16x384xf32> to vector<16x32xf32>
    %216 = vector.shape_cast %215 : vector<16x32xf32> to vector<2x8x32xf32>
    %217 = arith.truncf %216 : vector<2x8x32xf32> to vector<2x8x32xbf16>
    %218 = vector.extract_strided_slice %186 {offsets = [0, 288], sizes = [16, 32], strides = [1, 1]} : vector<16x384xf32> to vector<16x32xf32>
    %219 = vector.shape_cast %218 : vector<16x32xf32> to vector<2x8x32xf32>
    %220 = arith.truncf %219 : vector<2x8x32xf32> to vector<2x8x32xbf16>
    "tpu.trace_start"() <{level = 10 : i32, message = "bqe,bke->bqk"}> : () -> ()
    %cst_68 = arith.constant dense<0.000000e+00> : vector<2x8x8xf32>
    %221 = tpu.matmul %214, %217, %cst_68 {dimension_numbers = #tpu.dot_dimension_numbers<[2], [2], [1], [1], [0, 0, 0, 1, 1, 1], [0], [0]>} : vector<2x8x32xbf16>, vector<2x8x32xbf16>, vector<2x8x8xf32> -> vector<2x8x8xf32>
    "tpu.trace_stop"() : () -> ()
    %222 = vector.broadcast %2 : vector<2x1x8xf32> to vector<2x8x8xf32>
    %223 = arith.addf %221, %222 : vector<2x8x8xf32>
    %cst_69 = arith.constant dense<0xFF800000> : vector<2x8xf32>
    %224 = vector.multi_reduction <maximumf>, %223, %cst_69 [2] : vector<2x8x8xf32> to vector<2x8xf32>
    %225 = vector.shape_cast %224 : vector<2x8xf32> to vector<2x8x1xf32>
    %226 = vector.broadcast %225 : vector<2x8x1xf32> to vector<2x8x8xf32>
    %227 = arith.subf %223, %226 : vector<2x8x8xf32>
    %228 = math.exp %227 : vector<2x8x8xf32>
    %cst_70 = arith.constant dense<0.000000e+00> : vector<2x8xf32>
    %229 = vector.multi_reduction <add>, %228, %cst_70 [2] : vector<2x8x8xf32> to vector<2x8xf32>
    %230 = vector.shape_cast %229 : vector<2x8xf32> to vector<2x8x1xf32>
    %231 = tpu.reciprocal %230 {approx = true} : vector<2x8x1xf32> -> vector<2x8x1xf32>
    %232 = vector.broadcast %231 : vector<2x8x1xf32> to vector<2x8x8xf32>
    %233 = arith.mulf %228, %232 : vector<2x8x8xf32>
    %234 = arith.truncf %233 : vector<2x8x8xf32> to vector<2x8x8xbf16>
    "tpu.trace_start"() <{level = 10 : i32, message = "bqk,bke->bqe"}> : () -> ()
    %cst_71 = arith.constant dense<0.000000e+00> : vector<2x8x32xf32>
    %235 = tpu.matmul %234, %220, %cst_71 {dimension_numbers = #tpu.dot_dimension_numbers<[2], [1], [1], [2], [0, 0, 0, 1, 1, 2], [0], [0]>} : vector<2x8x8xbf16>, vector<2x8x32xbf16>, vector<2x8x32xf32> -> vector<2x8x32xf32>
    "tpu.trace_stop"() : () -> ()
    %236 = vector.shape_cast %235 : vector<2x8x32xf32> to vector<16x32xf32>
    %237 = vector.extract_strided_slice %186 {offsets = [0, 64], sizes = [16, 32], strides = [1, 1]} : vector<16x384xf32> to vector<16x32xf32>
    %238 = vector.shape_cast %237 : vector<16x32xf32> to vector<2x8x32xf32>
    %239 = arith.truncf %238 : vector<2x8x32xf32> to vector<2x8x32xbf16>
    %240 = vector.extract_strided_slice %186 {offsets = [0, 192], sizes = [16, 32], strides = [1, 1]} : vector<16x384xf32> to vector<16x32xf32>
    %241 = vector.shape_cast %240 : vector<16x32xf32> to vector<2x8x32xf32>
    %242 = arith.truncf %241 : vector<2x8x32xf32> to vector<2x8x32xbf16>
    %243 = vector.extract_strided_slice %186 {offsets = [0, 320], sizes = [16, 32], strides = [1, 1]} : vector<16x384xf32> to vector<16x32xf32>
    %244 = vector.shape_cast %243 : vector<16x32xf32> to vector<2x8x32xf32>
    %245 = arith.truncf %244 : vector<2x8x32xf32> to vector<2x8x32xbf16>
    "tpu.trace_start"() <{level = 10 : i32, message = "bqe,bke->bqk"}> : () -> ()
    %cst_72 = arith.constant dense<0.000000e+00> : vector<2x8x8xf32>
    %246 = tpu.matmul %239, %242, %cst_72 {dimension_numbers = #tpu.dot_dimension_numbers<[2], [2], [1], [1], [0, 0, 0, 1, 1, 1], [0], [0]>} : vector<2x8x32xbf16>, vector<2x8x32xbf16>, vector<2x8x8xf32> -> vector<2x8x8xf32>
    "tpu.trace_stop"() : () -> ()
    %247 = vector.broadcast %2 : vector<2x1x8xf32> to vector<2x8x8xf32>
    %248 = arith.addf %246, %247 : vector<2x8x8xf32>
    %cst_73 = arith.constant dense<0xFF800000> : vector<2x8xf32>
    %249 = vector.multi_reduction <maximumf>, %248, %cst_73 [2] : vector<2x8x8xf32> to vector<2x8xf32>
    %250 = vector.shape_cast %249 : vector<2x8xf32> to vector<2x8x1xf32>
    %251 = vector.broadcast %250 : vector<2x8x1xf32> to vector<2x8x8xf32>
    %252 = arith.subf %248, %251 : vector<2x8x8xf32>
    %253 = math.exp %252 : vector<2x8x8xf32>
    %cst_74 = arith.constant dense<0.000000e+00> : vector<2x8xf32>
    %254 = vector.multi_reduction <add>, %253, %cst_74 [2] : vector<2x8x8xf32> to vector<2x8xf32>
    %255 = vector.shape_cast %254 : vector<2x8xf32> to vector<2x8x1xf32>
    %256 = tpu.reciprocal %255 {approx = true} : vector<2x8x1xf32> -> vector<2x8x1xf32>
    %257 = vector.broadcast %256 : vector<2x8x1xf32> to vector<2x8x8xf32>
    %258 = arith.mulf %253, %257 : vector<2x8x8xf32>
    %259 = arith.truncf %258 : vector<2x8x8xf32> to vector<2x8x8xbf16>
    "tpu.trace_start"() <{level = 10 : i32, message = "bqk,bke->bqe"}> : () -> ()
    %cst_75 = arith.constant dense<0.000000e+00> : vector<2x8x32xf32>
    %260 = tpu.matmul %259, %245, %cst_75 {dimension_numbers = #tpu.dot_dimension_numbers<[2], [1], [1], [2], [0, 0, 0, 1, 1, 2], [0], [0]>} : vector<2x8x8xbf16>, vector<2x8x32xbf16>, vector<2x8x32xf32> -> vector<2x8x32xf32>
    "tpu.trace_stop"() : () -> ()
    %261 = vector.shape_cast %260 : vector<2x8x32xf32> to vector<16x32xf32>
    %262 = vector.extract_strided_slice %186 {offsets = [0, 96], sizes = [16, 32], strides = [1, 1]} : vector<16x384xf32> to vector<16x32xf32>
    %263 = vector.shape_cast %262 : vector<16x32xf32> to vector<2x8x32xf32>
    %264 = arith.truncf %263 : vector<2x8x32xf32> to vector<2x8x32xbf16>
    %265 = vector.extract_strided_slice %186 {offsets = [0, 224], sizes = [16, 32], strides = [1, 1]} : vector<16x384xf32> to vector<16x32xf32>
    %266 = vector.shape_cast %265 : vector<16x32xf32> to vector<2x8x32xf32>
    %267 = arith.truncf %266 : vector<2x8x32xf32> to vector<2x8x32xbf16>
    %268 = vector.extract_strided_slice %186 {offsets = [0, 352], sizes = [16, 32], strides = [1, 1]} : vector<16x384xf32> to vector<16x32xf32>
    %269 = vector.shape_cast %268 : vector<16x32xf32> to vector<2x8x32xf32>
    %270 = arith.truncf %269 : vector<2x8x32xf32> to vector<2x8x32xbf16>
    "tpu.trace_start"() <{level = 10 : i32, message = "bqe,bke->bqk"}> : () -> ()
    %cst_76 = arith.constant dense<0.000000e+00> : vector<2x8x8xf32>
    %271 = tpu.matmul %264, %267, %cst_76 {dimension_numbers = #tpu.dot_dimension_numbers<[2], [2], [1], [1], [0, 0, 0, 1, 1, 1], [0], [0]>} : vector<2x8x32xbf16>, vector<2x8x32xbf16>, vector<2x8x8xf32> -> vector<2x8x8xf32>
    "tpu.trace_stop"() : () -> ()
    %272 = vector.broadcast %2 : vector<2x1x8xf32> to vector<2x8x8xf32>
    %273 = arith.addf %271, %272 : vector<2x8x8xf32>
    %cst_77 = arith.constant dense<0xFF800000> : vector<2x8xf32>
    %274 = vector.multi_reduction <maximumf>, %273, %cst_77 [2] : vector<2x8x8xf32> to vector<2x8xf32>
    %275 = vector.shape_cast %274 : vector<2x8xf32> to vector<2x8x1xf32>
    %276 = vector.broadcast %275 : vector<2x8x1xf32> to vector<2x8x8xf32>
    %277 = arith.subf %273, %276 : vector<2x8x8xf32>
    %278 = math.exp %277 : vector<2x8x8xf32>
    %cst_78 = arith.constant dense<0.000000e+00> : vector<2x8xf32>
    %279 = vector.multi_reduction <add>, %278, %cst_78 [2] : vector<2x8x8xf32> to vector<2x8xf32>
    %280 = vector.shape_cast %279 : vector<2x8xf32> to vector<2x8x1xf32>
    %281 = tpu.reciprocal %280 {approx = true} : vector<2x8x1xf32> -> vector<2x8x1xf32>
    %282 = vector.broadcast %281 : vector<2x8x1xf32> to vector<2x8x8xf32>
    %283 = arith.mulf %278, %282 : vector<2x8x8xf32>
    %284 = arith.truncf %283 : vector<2x8x8xf32> to vector<2x8x8xbf16>
    "tpu.trace_start"() <{level = 10 : i32, message = "bqk,bke->bqe"}> : () -> ()
    %cst_79 = arith.constant dense<0.000000e+00> : vector<2x8x32xf32>
    %285 = tpu.matmul %284, %270, %cst_79 {dimension_numbers = #tpu.dot_dimension_numbers<[2], [1], [1], [2], [0, 0, 0, 1, 1, 2], [0], [0]>} : vector<2x8x8xbf16>, vector<2x8x32xbf16>, vector<2x8x32xf32> -> vector<2x8x32xf32>
    "tpu.trace_stop"() : () -> ()
    %286 = vector.shape_cast %285 : vector<2x8x32xf32> to vector<16x32xf32>
    %287 = tpu.concatenate %211, %236, %261, %286 in 1 : vector<16x32xf32>, vector<16x32xf32>, vector<16x32xf32>, vector<16x32xf32> -> vector<16x128xf32>
    %288 = arith.truncf %287 : vector<16x128xf32> to vector<16x128xbf16>
    %c0_80 = arith.constant 0 : index
    %c0_81 = arith.constant 0 : index
    %289 = vector.load %arg17[%c0_80, %c0_81] : memref<128x128xbf16, #tpu.memory_space<vmem>>, vector<128x128xbf16>
    %cst_82 = arith.constant dense<0.000000e+00> : vector<16x128xf32>
    %290 = tpu.matmul %288, %289, %cst_82 {dimension_numbers = #tpu.dot_dimension_numbers<[1], [0], [0], [1], [0, 0, 1, 1], [], []>} : vector<16x128xbf16>, vector<128x128xbf16>, vector<16x128xf32> -> vector<16x128xf32>
    %c0_83 = arith.constant 0 : index
    %c0_84 = arith.constant 0 : index
    %291 = vector.load %arg18[%c0_83, %c0_84] : memref<1x128xf32, #tpu.memory_space<vmem>>, vector<1x128xf32>
    %292 = vector.broadcast %291 : vector<1x128xf32> to vector<16x128xf32>
    %293 = arith.addf %290, %292 : vector<16x128xf32>
    %294 = arith.addf %180, %293 : vector<16x128xf32>
    %cst_85 = arith.constant dense<0.000000e+00> : vector<16xf32>
    %295 = vector.multi_reduction <add>, %294, %cst_85 [1] : vector<16x128xf32> to vector<16xf32>
    %296 = vector.shape_cast %295 : vector<16xf32> to vector<16x1xf32>
    %cst_86 = arith.constant 1.280000e+02 : f32
    %297 = vector.broadcast %cst_86 : f32 to vector<16x1xf32>
    %298 = arith.divf %296, %297 : vector<16x1xf32>
    %299 = vector.broadcast %298 : vector<16x1xf32> to vector<16x128xf32>
    %300 = arith.subf %294, %299 : vector<16x128xf32>
    %301 = arith.mulf %300, %300 : vector<16x128xf32>
    %cst_87 = arith.constant dense<0.000000e+00> : vector<16xf32>
    %302 = vector.multi_reduction <add>, %301, %cst_87 [1] : vector<16x128xf32> to vector<16xf32>
    %303 = vector.shape_cast %302 : vector<16xf32> to vector<16x1xf32>
    %cst_88 = arith.constant 1.280000e+02 : f32
    %304 = vector.broadcast %cst_88 : f32 to vector<16x1xf32>
    %305 = arith.divf %303, %304 : vector<16x1xf32>
    %306 = vector.broadcast %298 : vector<16x1xf32> to vector<16x128xf32>
    %307 = arith.subf %294, %306 : vector<16x128xf32>
    %cst_89 = arith.constant 9.99999974E-6 : f32
    %308 = vector.broadcast %cst_89 : f32 to vector<16x1xf32>
    %309 = arith.addf %305, %308 : vector<16x1xf32>
    %310 = math.rsqrt %309 : vector<16x1xf32>
    %311 = vector.broadcast %310 : vector<16x1xf32> to vector<16x128xf32>
    %312 = arith.mulf %307, %311 : vector<16x128xf32>
    %c0_90 = arith.constant 0 : index
    %c0_91 = arith.constant 0 : index
    %313 = vector.load %arg19[%c0_90, %c0_91] : memref<1x128xf32, #tpu.memory_space<vmem>>, vector<1x128xf32>
    %314 = vector.broadcast %313 : vector<1x128xf32> to vector<16x128xf32>
    %315 = arith.mulf %312, %314 : vector<16x128xf32>
    %c0_92 = arith.constant 0 : index
    %c0_93 = arith.constant 0 : index
    %316 = vector.load %arg20[%c0_92, %c0_93] : memref<1x128xf32, #tpu.memory_space<vmem>>, vector<1x128xf32>
    %317 = vector.broadcast %316 : vector<1x128xf32> to vector<16x128xf32>
    %318 = arith.addf %315, %317 : vector<16x128xf32>
    %319 = arith.truncf %318 : vector<16x128xf32> to vector<16x128xbf16>
    %c0_94 = arith.constant 0 : index
    %c0_95 = arith.constant 0 : index
    %320 = vector.load %arg21[%c0_94, %c0_95] : memref<128x2048xbf16, #tpu.memory_space<vmem>>, vector<128x2048xbf16>
    %cst_96 = arith.constant dense<0.000000e+00> : vector<16x2048xf32>
    %321 = tpu.matmul %319, %320, %cst_96 {dimension_numbers = #tpu.dot_dimension_numbers<[1], [0], [0], [1], [0, 0, 1, 1], [], []>} : vector<16x128xbf16>, vector<128x2048xbf16>, vector<16x2048xf32> -> vector<16x2048xf32>
    %c0_97 = arith.constant 0 : index
    %c0_98 = arith.constant 0 : index
    %322 = vector.load %arg22[%c0_97, %c0_98] : memref<1x2048xf32, #tpu.memory_space<vmem>>, vector<1x2048xf32>
    %323 = vector.broadcast %322 : vector<1x2048xf32> to vector<16x2048xf32>
    %324 = arith.addf %321, %323 : vector<16x2048xf32>
    %cst_99 = arith.constant 0.000000e+00 : f32
    %325 = vector.broadcast %cst_99 : f32 to vector<16x2048xf32>
    %326 = arith.maximumf %324, %325 : vector<16x2048xf32>
    %327 = arith.truncf %326 : vector<16x2048xf32> to vector<16x2048xbf16>
    %c0_100 = arith.constant 0 : index
    %c0_101 = arith.constant 0 : index
    %328 = vector.load %arg23[%c0_100, %c0_101] : memref<2048x128xbf16, #tpu.memory_space<vmem>>, vector<2048x128xbf16>
    %cst_102 = arith.constant dense<0.000000e+00> : vector<16x128xf32>
    %329 = tpu.matmul %327, %328, %cst_102 {dimension_numbers = #tpu.dot_dimension_numbers<[1], [0], [0], [1], [0, 0, 1, 1], [], []>} : vector<16x2048xbf16>, vector<2048x128xbf16>, vector<16x128xf32> -> vector<16x128xf32>
    %c0_103 = arith.constant 0 : index
    %c0_104 = arith.constant 0 : index
    %330 = vector.load %arg24[%c0_103, %c0_104] : memref<1x128xf32, #tpu.memory_space<vmem>>, vector<1x128xf32>
    %331 = vector.broadcast %330 : vector<1x128xf32> to vector<16x128xf32>
    %332 = arith.addf %329, %331 : vector<16x128xf32>
    %333 = arith.addf %318, %332 : vector<16x128xf32>
    %cst_105 = arith.constant dense<0.000000e+00> : vector<16xf32>
    %334 = vector.multi_reduction <add>, %333, %cst_105 [1] : vector<16x128xf32> to vector<16xf32>
    %335 = vector.shape_cast %334 : vector<16xf32> to vector<16x1xf32>
    %cst_106 = arith.constant 1.280000e+02 : f32
    %336 = vector.broadcast %cst_106 : f32 to vector<16x1xf32>
    %337 = arith.divf %335, %336 : vector<16x1xf32>
    %338 = vector.broadcast %337 : vector<16x1xf32> to vector<16x128xf32>
    %339 = arith.subf %333, %338 : vector<16x128xf32>
    %340 = arith.mulf %339, %339 : vector<16x128xf32>
    %cst_107 = arith.constant dense<0.000000e+00> : vector<16xf32>
    %341 = vector.multi_reduction <add>, %340, %cst_107 [1] : vector<16x128xf32> to vector<16xf32>
    %342 = vector.shape_cast %341 : vector<16xf32> to vector<16x1xf32>
    %cst_108 = arith.constant 1.280000e+02 : f32
    %343 = vector.broadcast %cst_108 : f32 to vector<16x1xf32>
    %344 = arith.divf %342, %343 : vector<16x1xf32>
    %345 = vector.broadcast %337 : vector<16x1xf32> to vector<16x128xf32>
    %346 = arith.subf %333, %345 : vector<16x128xf32>
    %cst_109 = arith.constant 9.99999974E-6 : f32
    %347 = vector.broadcast %cst_109 : f32 to vector<16x1xf32>
    %348 = arith.addf %344, %347 : vector<16x1xf32>
    %349 = math.rsqrt %348 : vector<16x1xf32>
    %350 = vector.broadcast %349 : vector<16x1xf32> to vector<16x128xf32>
    %351 = arith.mulf %346, %350 : vector<16x128xf32>
    %c0_110 = arith.constant 0 : index
    %c0_111 = arith.constant 0 : index
    %352 = vector.load %arg25[%c0_110, %c0_111] : memref<1x128xf32, #tpu.memory_space<vmem>>, vector<1x128xf32>
    %353 = vector.broadcast %352 : vector<1x128xf32> to vector<16x128xf32>
    %354 = arith.mulf %351, %353 : vector<16x128xf32>
    %c0_112 = arith.constant 0 : index
    %c0_113 = arith.constant 0 : index
    %355 = vector.load %arg26[%c0_112, %c0_113] : memref<1x128xf32, #tpu.memory_space<vmem>>, vector<1x128xf32>
    %356 = vector.broadcast %355 : vector<1x128xf32> to vector<16x128xf32>
    %357 = arith.addf %354, %356 : vector<16x128xf32>
    %358 = vector.shape_cast %357 : vector<16x128xf32> to vector<2x8x128xf32>
    %cst_114 = arith.constant dense<0.000000e+00> : vector<2x128xf32>
    %359 = vector.multi_reduction <add>, %358, %cst_114 [1] : vector<2x8x128xf32> to vector<2x128xf32>
    %cst_115 = arith.constant 8.000000e+00 : f32
    %360 = vector.broadcast %cst_115 : f32 to vector<2x128xf32>
    %361 = arith.divf %359, %360 : vector<2x128xf32>
    %362 = vector.shape_cast %361 : vector<2x128xf32> to vector<2x1x128xf32>
    %c0_116 = arith.constant 0 : index
    %c0_117 = arith.constant 0 : index
    %c0_118 = arith.constant 0 : index
    %363 = vector.load %arg27[%c0_116, %c0_117, %c0_118] : memref<2x1x128xf32, #tpu.memory_space<vmem>>, vector<2x1x128xf32>
    tpu.vector_store %arg27[%c0_116, %c0_117, %c0_118], %362 {strides = array<i32>} : memref<2x1x128xf32, #tpu.memory_space<vmem>>, vector<2x1x128xf32>,
    return
  }
  func.func @transform_0(%arg0: i32) -> (i32, i32, i32) {
    %c0_i32 = arith.constant 0 : i32
    %c0_i32_0 = arith.constant 0 : i32
    %c0_i32_1 = arith.constant 0 : i32
    return %arg0, %c0_i32, %c0_i32_0 : i32, i32, i32
  }
  func.func @transform_1(%arg0: i32) -> (i32, i32, i32) {
    %c0_i32 = arith.constant 0 : i32
    %c0_i32_0 = arith.constant 0 : i32
    %c0_i32_1 = arith.constant 0 : i32
    return %arg0, %c0_i32, %c0_i32_0 : i32, i32, i32
  }
  func.func @transform_2(%arg0: i32) -> (i32, i32) {
    %c0_i32 = arith.constant 0 : i32
    %c0_i32_0 = arith.constant 0 : i32
    %c0_i32_1 = arith.constant 0 : i32
    return %c0_i32, %c0_i32_0 : i32, i32
  }
  func.func @transform_3(%arg0: i32) -> (i32, i32) {
    %c0_i32 = arith.constant 0 : i32
    %c0_i32_0 = arith.constant 0 : i32
    %c0_i32_1 = arith.constant 0 : i32
    return %c0_i32, %c0_i32_0 : i32, i32
  }
  func.func @transform_4(%arg0: i32) -> (i32, i32) {
    %c0_i32 = arith.constant 0 : i32
    %c0_i32_0 = arith.constant 0 : i32
    %c0_i32_1 = arith.constant 0 : i32
    return %c0_i32, %c0_i32_0 : i32, i32
  }
  func.func @transform_5(%arg0: i32) -> (i32, i32) {
    %c0_i32 = arith.constant 0 : i32
    %c0_i32_0 = arith.constant 0 : i32
    %c0_i32_1 = arith.constant 0 : i32
    return %c0_i32, %c0_i32_0 : i32, i32
  }
  func.func @transform_6(%arg0: i32) -> (i32, i32) {
    %c0_i32 = arith.constant 0 : i32
    %c0_i32_0 = arith.constant 0 : i32
    %c0_i32_1 = arith.constant 0 : i32
    return %c0_i32, %c0_i32_0 : i32, i32
  }
  func.func @transform_7(%arg0: i32) -> (i32, i32) {
    %c0_i32 = arith.constant 0 : i32
    %c0_i32_0 = arith.constant 0 : i32
    %c0_i32_1 = arith.constant 0 : i32
    return %c0_i32, %c0_i32_0 : i32, i32
  }
  func.func @transform_8(%arg0: i32) -> (i32, i32) {
    %c0_i32 = arith.constant 0 : i32
    %c0_i32_0 = arith.constant 0 : i32
    %c0_i32_1 = arith.constant 0 : i32
    return %c0_i32, %c0_i32_0 : i32, i32
  }
  func.func @transform_9(%arg0: i32) -> (i32, i32) {
    %c0_i32 = arith.constant 0 : i32
    %c0_i32_0 = arith.constant 0 : i32
    %c0_i32_1 = arith.constant 0 : i32
    return %c0_i32, %c0_i32_0 : i32, i32
  }
  func.func @transform_10(%arg0: i32) -> (i32, i32) {
    %c0_i32 = arith.constant 0 : i32
    %c0_i32_0 = arith.constant 0 : i32
    %c0_i32_1 = arith.constant 0 : i32
    return %c0_i32, %c0_i32_0 : i32, i32
  }
  func.func @transform_11(%arg0: i32) -> (i32, i32) {
    %c0_i32 = arith.constant 0 : i32
    %c0_i32_0 = arith.constant 0 : i32
    %c0_i32_1 = arith.constant 0 : i32
    return %c0_i32, %c0_i32_0 : i32, i32
  }
  func.func @transform_12(%arg0: i32) -> (i32, i32) {
    %c0_i32 = arith.constant 0 : i32
    %c0_i32_0 = arith.constant 0 : i32
    %c0_i32_1 = arith.constant 0 : i32
    return %c0_i32, %c0_i32_0 : i32, i32
  }
  func.func @transform_13(%arg0: i32) -> (i32, i32) {
    %c0_i32 = arith.constant 0 : i32
    %c0_i32_0 = arith.constant 0 : i32
    %c0_i32_1 = arith.constant 0 : i32
    return %c0_i32, %c0_i32_0 : i32, i32
  }
  func.func @transform_14(%arg0: i32) -> (i32, i32) {
    %c0_i32 = arith.constant 0 : i32
    %c0_i32_0 = arith.constant 0 : i32
    %c0_i32_1 = arith.constant 0 : i32
    return %c0_i32, %c0_i32_0 : i32, i32
  }
  func.func @transform_15(%arg0: i32) -> (i32, i32) {
    %c0_i32 = arith.constant 0 : i32
    %c0_i32_0 = arith.constant 0 : i32
    %c0_i32_1 = arith.constant 0 : i32
    return %c0_i32, %c0_i32_0 : i32, i32
  }
  func.func @transform_16(%arg0: i32) -> (i32, i32) {
    %c0_i32 = arith.constant 0 : i32
    %c0_i32_0 = arith.constant 0 : i32
    %c0_i32_1 = arith.constant 0 : i32
    return %c0_i32, %c0_i32_0 : i32, i32
  }
  func.func @transform_17(%arg0: i32) -> (i32, i32) {
    %c0_i32 = arith.constant 0 : i32
    %c0_i32_0 = arith.constant 0 : i32
    %c0_i32_1 = arith.constant 0 : i32
    return %c0_i32, %c0_i32_0 : i32, i32
  }
  func.func @transform_18(%arg0: i32) -> (i32, i32) {
    %c0_i32 = arith.constant 0 : i32
    %c0_i32_0 = arith.constant 0 : i32
    %c0_i32_1 = arith.constant 0 : i32
    return %c0_i32, %c0_i32_0 : i32, i32
  }
  func.func @transform_19(%arg0: i32) -> (i32, i32) {
    %c0_i32 = arith.constant 0 : i32
    %c0_i32_0 = arith.constant 0 : i32
    %c0_i32_1 = arith.constant 0 : i32
    return %c0_i32, %c0_i32_0 : i32, i32
  }
  func.func @transform_20(%arg0: i32) -> (i32, i32) {
    %c0_i32 = arith.constant 0 : i32
    %c0_i32_0 = arith.constant 0 : i32
    %c0_i32_1 = arith.constant 0 : i32
    return %c0_i32, %c0_i32_0 : i32, i32
  }
  func.func @transform_21(%arg0: i32) -> (i32, i32) {
    %c0_i32 = arith.constant 0 : i32
    %c0_i32_0 = arith.constant 0 : i32
    %c0_i32_1 = arith.constant 0 : i32
    return %c0_i32, %c0_i32_0 : i32, i32
  }
  func.func @transform_22(%arg0: i32) -> (i32, i32) {
    %c0_i32 = arith.constant 0 : i32
    %c0_i32_0 = arith.constant 0 : i32
    %c0_i32_1 = arith.constant 0 : i32
    return %c0_i32, %c0_i32_0 : i32, i32
  }
  func.func @transform_23(%arg0: i32) -> (i32, i32) {
    %c0_i32 = arith.constant 0 : i32
    %c0_i32_0 = arith.constant 0 : i32
    %c0_i32_1 = arith.constant 0 : i32
    return %c0_i32, %c0_i32_0 : i32, i32
  }
  func.func @transform_24(%arg0: i32) -> (i32, i32) {
    %c0_i32 = arith.constant 0 : i32
    %c0_i32_0 = arith.constant 0 : i32
    %c0_i32_1 = arith.constant 0 : i32
    return %c0_i32, %c0_i32_0 : i32, i32
  }
  func.func @transform_25(%arg0: i32) -> (i32, i32) {
    %c0_i32 = arith.constant 0 : i32
    %c0_i32_0 = arith.constant 0 : i32
    %c0_i32_1 = arith.constant 0 : i32
    return %c0_i32, %c0_i32_0 : i32, i32
  }
  func.func @transform_26(%arg0: i32) -> (i32, i32, i32) {
    %c0_i32 = arith.constant 0 : i32
    %c0_i32_0 = arith.constant 0 : i32
    %c0_i32_1 = arith.constant 0 : i32
    return %arg0, %c0_i32, %c0_i32_0 : i32, i32, i32
  }
}

</mosaic_0001>

<llo_original>
// kernel: transformer_classifier.1
$region0: #{transformer_classifier.1}
  #allocation0 [shape = 'u32[]', space=smem, size = 0x4, offset = 0x4, fixed_abs, tag = 'smem constant byte address 0x4 - core index']
  #allocation1 [shape = 'u32[72,128]{1,0:T(1,128)}', space=vmem, size = 0x9000, scoped, tag = 'internal scratch']
  %s0 = inlined_call_operand.vmem [shape: bf16[2,8,128], index: 0, kind: input, shape index: {}]
  %s1 = inlined_call_operand.vmem [shape: f32[2,1,8], index: 1, kind: input, shape index: {}]
  %s2 = inlined_call_operand.hbm [shape: bf16[128,384], index: 2, kind: input, shape index: {}]
  %s3 = inlined_call_operand.vmem [shape: f32[1,384], index: 3, kind: input, shape index: {}]
  %s4 = inlined_call_operand.vmem [shape: bf16[128,128], index: 4, kind: input, shape index: {}]
  %s5 = inlined_call_operand.vmem [shape: f32[1,128], index: 5, kind: input, shape index: {}]
  %s6 = inlined_call_operand.vmem [shape: f32[1,128], index: 6, kind: input, shape index: {}]
  %s7 = inlined_call_operand.vmem [shape: f32[1,128], index: 7, kind: input, shape index: {}]
  %s8 = inlined_call_operand.hbm [shape: bf16[128,2048], index: 8, kind: input, shape index: {}]
  %s9 = inlined_call_operand.vmem [shape: f32[1,2048], index: 9, kind: input, shape index: {}]
  %s10 = inlined_call_operand.hbm [shape: bf16[2048,128], index: 10, kind: input, shape index: {}]
  %s11 = inlined_call_operand.vmem [shape: f32[1,128], index: 11, kind: input, shape index: {}]
  %s12 = inlined_call_operand.vmem [shape: f32[1,128], index: 12, kind: input, shape index: {}]
  %s13 = inlined_call_operand.vmem [shape: f32[1,128], index: 13, kind: input, shape index: {}]
  %s14 = inlined_call_operand.hbm [shape: bf16[128,384], index: 14, kind: input, shape index: {}]
  %s15 = inlined_call_operand.vmem [shape: f32[1,384], index: 15, kind: input, shape index: {}]
  %s16 = inlined_call_operand.hbm [shape: bf16[128,128], index: 16, kind: input, shape index: {}]
  %s17 = inlined_call_operand.vmem [shape: f32[1,128], index: 17, kind: input, shape index: {}]
  %s18 = inlined_call_operand.vmem [shape: f32[1,128], index: 18, kind: input, shape index: {}]
  %s19 = inlined_call_operand.vmem [shape: f32[1,128], index: 19, kind: input, shape index: {}]
  %s20 = inlined_call_operand.hbm [shape: bf16[128,2048], index: 20, kind: input, shape index: {}]
  %s21 = inlined_call_operand.vmem [shape: f32[1,2048], index: 21, kind: input, shape index: {}]
  %s22 = inlined_call_operand.hbm [shape: bf16[2048,128], index: 22, kind: input, shape index: {}]
  %s23 = inlined_call_operand.vmem [shape: f32[1,128], index: 23, kind: input, shape index: {}]
  %s24 = inlined_call_operand.vmem [shape: f32[1,128], index: 24, kind: input, shape index: {}]
  %s25 = inlined_call_operand.vmem [shape: f32[1,128], index: 25, kind: input, shape index: {}]
  %s26 = inlined_call_operand.vmem [shape: f32[2,1,128], index: 26, kind: output, shape index: {}]
  %s27 = sld [smem:[#allocation0]]
  $region142: #{transformer_classifier.1} parent=0
    _
  %s29 = ssub.s32 1, %s27
  %s30 = scalar_select 0, %s29, %s27
  $region1: #{transformer_classifier.1} parent=0
    #allocation2 [shape = 'u8[98304]{0}', space=vmem, size = 0x18000, scoped, tag = 'input window, operand 2, single buffered']
    #allocation3 [shape = 's32[1]{0}', space=sflag, size = 0x4, scoped, tag = 'scoped memory for transformer_classifier.1']
    #allocation4 [shape = 'u8[524288]{0}', space=vmem, size = 0x80000, scoped, tag = 'input window, operand 8, single buffered']
    #allocation5 [shape = 's32[1]{0}', space=sflag, size = 0x4, scoped, tag = 'scoped memory for transformer_classifier.1']
    #allocation6 [shape = 'u8[524288]{0}', space=vmem, size = 0x80000, scoped, tag = 'input window, operand 10, single buffered']
    #allocation7 [shape = 'u8[98304]{0}', space=vmem, size = 0x18000, scoped, tag = 'input window, operand 14, single buffered']
    #allocation8 [shape = 's32[1]{0}', space=sflag, size = 0x4, scoped, tag = 'scoped memory for transformer_classifier.1']
    #allocation9 [shape = 'u8[32768]{0}', space=vmem, size = 0x8000, scoped, tag = 'input window, operand 16, single buffered']
    #allocation10 [shape = 'u8[524288]{0}', space=vmem, size = 0x80000, scoped, tag = 'input window, operand 20, single buffered']
    #allocation11 [shape = 's32[1]{0}', space=sflag, size = 0x4, scoped, tag = 'scoped memory for transformer_classifier.1']
    #allocation12 [shape = 'u8[524288]{0}', space=vmem, size = 0x80000, scoped, tag = 'input window, operand 22, single buffered']
    %31 = vsyncpa [#allocation3], 0
    %32 = vsyncpa [#allocation5], 0
    %33 = vsyncpa [#allocation8], 0
    %34 = vsyncpa [#allocation11], 0
    // Predicated region
    $region2: #{transformer_classifier.1} parent=1 // pred_check
      _
    $region3: #{transformer_classifier.1} parent=1 // pred_check_branch
      %36 = sbr.rel (0) target = $region5
    $region4: #{transformer_classifier.1} parent=1 // pred_region
      _
    $region5: #{transformer_classifier.1} parent=1 // pred_fallthru
      _
    // Predicated region
    $region6: #{transformer_classifier.1} parent=1 // pred_check
      _
    $region7: #{transformer_classifier.1} parent=1 // pred_check_branch
      %38 = sbr.rel (0) target = $region9
    $region8: #{transformer_classifier.1} parent=1 // pred_region
      _
    $region9: #{transformer_classifier.1} parent=1 // pred_fallthru
      _
    // Predicated region
    $region10: #{transformer_classifier.1} parent=1 // pred_check
      _
    $region11: #{transformer_classifier.1} parent=1 // pred_check_branch
      %40 = sbr.rel (0) target = $region13
    $region12: #{transformer_classifier.1} parent=1 // pred_region
      %42 = vsyncadd [#allocation3], 0
      %s43 = sshll.u32 %s2, 4
      %s44 = int_to_ptr.hbm [resolvable:$true] %s43
      %s45 = sshll.u32 [#allocation2], 4
      %s46 = int_to_ptr.vmem [resolvable:$true] %s45
      %51 = dma.hbm_to_vmem [thread:$0]  %s44, 3072, %s46, [#allocation3], 192, 192, 12
    $region13: #{transformer_classifier.1} parent=1 // pred_fallthru
      _
    // Predicated region
    $region14: #{transformer_classifier.1} parent=1 // pred_check
      _
    $region15: #{transformer_classifier.1} parent=1 // pred_check_branch
      %53 = sbr.rel (0) target = $region17
    $region16: #{transformer_classifier.1} parent=1 // pred_region
      _
    $region17: #{transformer_classifier.1} parent=1 // pred_fallthru
      _
    // Predicated region
    $region18: #{transformer_classifier.1} parent=1 // pred_check
      _
    $region19: #{transformer_classifier.1} parent=1 // pred_check_branch
      %55 = sbr.rel (0) target = $region21
    $region20: #{transformer_classifier.1} parent=1 // pred_region
      _
    $region21: #{transformer_classifier.1} parent=1 // pred_fallthru
      _
    // Predicated region
    $region22: #{transformer_classifier.1} parent=1 // pred_check
      _
    $region23: #{transformer_classifier.1} parent=1 // pred_check_branch
      %57 = sbr.rel (0) target = $region25
    $region24: #{transformer_classifier.1} parent=1 // pred_region
      _
    $region25: #{transformer_classifier.1} parent=1 // pred_fallthru
      _
    // Predicated region
    $region26: #{transformer_classifier.1} parent=1 // pred_check
      _
    $region27: #{transformer_classifier.1} parent=1 // pred_check_branch
      %59 = sbr.rel (0) target = $region29
    $region28: #{transformer_classifier.1} parent=1 // pred_region
      _
    $region29: #{transformer_classifier.1} parent=1 // pred_fallthru
      _
    // Predicated region
    $region30: #{transformer_classifier.1} parent=1 // pred_check
      _
    $region31: #{transformer_classifier.1} parent=1 // pred_check_branch
      %61 = sbr.rel (0) target = $region33
    $region32: #{transformer_classifier.1} parent=1 // pred_region
      _
    $region33: #{transformer_classifier.1} parent=1 // pred_fallthru
      _
    // Predicated region
    $region34: #{transformer_classifier.1} parent=1 // pred_check
      _
    $region35: #{transformer_classifier.1} parent=1 // pred_check_branch
      %63 = sbr.rel (0) target = $region37
    $region36: #{transformer_classifier.1} parent=1 // pred_region
      %65 = vsyncadd [#allocation5], 0
      %s66 = sshll.u32 %s8, 4
      %s67 = int_to_ptr.hbm [resolvable:$true] %s66
      %s68 = sshll.u32 [#allocation4], 4
      %s69 = int_to_ptr.vmem [resolvable:$true] %s68
      %74 = dma.hbm_to_vmem [thread:$0]  %s67, 16384, %s69, [#allocation5], 1024, 1024, 64
    $region37: #{transformer_classifier.1} parent=1 // pred_fallthru
      _
    // Predicated region
    $region38: #{transformer_classifier.1} parent=1 // pred_check
      _
    $region39: #{transformer_classifier.1} parent=1 // pred_check_branch
      %76 = sbr.rel (0) target = $region41
    $region40: #{transformer_classifier.1} parent=1 // pred_region
      _
    $region41: #{transformer_classifier.1} parent=1 // pred_fallthru
      _
    // Predicated region
    $region42: #{transformer_classifier.1} parent=1 // pred_check
      _
    $region43: #{transformer_classifier.1} parent=1 // pred_check_branch
      %78 = sbr.rel (0) target = $region45
    $region44: #{transformer_classifier.1} parent=1 // pred_region
      %80 = vsyncadd [#allocation5], 0
      %s81 = sshll.u32 %s10, 4
      %s82 = int_to_ptr.hbm [resolvable:$true] %s81
      %s83 = sshll.u32 [#allocation6], 4
      %s84 = int_to_ptr.vmem [resolvable:$true] %s83
      %89 = dma.hbm_to_vmem [thread:$0]  %s82, 16384, %s84, [#allocation5], 64, 64, 4
    $region45: #{transformer_classifier.1} parent=1 // pred_fallthru
      _
    // Predicated region
    $region46: #{transformer_classifier.1} parent=1 // pred_check
      _
    $region47: #{transformer_classifier.1} parent=1 // pred_check_branch
      %91 = sbr.rel (0) target = $region49
    $region48: #{transformer_classifier.1} parent=1 // pred_region
      _
    $region49: #{transformer_classifier.1} parent=1 // pred_fallthru
      _
    // Predicated region
    $region50: #{transformer_classifier.1} parent=1 // pred_check
      _
    $region51: #{transformer_classifier.1} parent=1 // pred_check_branch
      %93 = sbr.rel (0) target = $region53
    $region52: #{transformer_classifier.1} parent=1 // pred_region
      _
    $region53: #{transformer_classifier.1} parent=1 // pred_fallthru
      _
    // Predicated region
    $region54: #{transformer_classifier.1} parent=1 // pred_check
      _
    $region55: #{transformer_classifier.1} parent=1 // pred_check_branch
      %95 = sbr.rel (0) target = $region57
    $region56: #{transformer_classifier.1} parent=1 // pred_region
      _
    $region57: #{transformer_classifier.1} parent=1 // pred_fallthru
      _
    // Predicated region
    $region58: #{transformer_classifier.1} parent=1 // pred_check
      _
    $region59: #{transformer_classifier.1} parent=1 // pred_check_branch
      %97 = sbr.rel (0) target = $region61
    $region60: #{transformer_classifier.1} parent=1 // pred_region
      %99 = vsyncadd [#allocation8], 0
      %s100 = sshll.u32 %s14, 4
      %s101 = int_to_ptr.hbm [resolvable:$true] %s100
      %s102 = sshll.u32 [#allocation7], 4
      %s103 = int_to_ptr.vmem [resolvable:$true] %s102
      %108 = dma.hbm_to_vmem [thread:$0]  %s101, 3072, %s103, [#allocation8], 192, 192, 12
    $region61: #{transformer_classifier.1} parent=1 // pred_fallthru
      _
    // Predicated region
    $region62: #{transformer_classifier.1} parent=1 // pred_check
      _
    $region63: #{transformer_classifier.1} parent=1 // pred_check_branch
      %110 = sbr.rel (0) target = $region65
    $region64: #{transformer_classifier.1} parent=1 // pred_region
      _
    $region65: #{transformer_classifier.1} parent=1 // pred_fallthru
      _
    // Predicated region
    $region66: #{transformer_classifier.1} parent=1 // pred_check
      _
    $region67: #{transformer_classifier.1} parent=1 // pred_check_branch
      %112 = sbr.rel (0) target = $region69
    $region68: #{transformer_classifier.1} parent=1 // pred_region
      %114 = vsyncadd [#allocation8], 0
      %s115 = sshll.u32 %s16, 4
      %s116 = int_to_ptr.hbm [resolvable:$true] %s115
      %s117 = sshll.u32 [#allocation9], 4
      %s118 = int_to_ptr.vmem [resolvable:$true] %s117
      %123 = dma.hbm_to_vmem [thread:$0]  %s116, 1024, %s118, [#allocation8], 64, 64, 4
    $region69: #{transformer_classifier.1} parent=1 // pred_fallthru
      _
    // Predicated region
    $region70: #{transformer_classifier.1} parent=1 // pred_check
      _
    $region71: #{transformer_classifier.1} parent=1 // pred_check_branch
      %125 = sbr.rel (0) target = $region73
    $region72: #{transformer_classifier.1} parent=1 // pred_region
      _
    $region73: #{transformer_classifier.1} parent=1 // pred_fallthru
      _
    // Predicated region
    $region74: #{transformer_classifier.1} parent=1 // pred_check
      _
    $region75: #{transformer_classifier.1} parent=1 // pred_check_branch
      %127 = sbr.rel (0) target = $region77
    $region76: #{transformer_classifier.1} parent=1 // pred_region
      _
    $region77: #{transformer_classifier.1} parent=1 // pred_fallthru
      _
    // Predicated region
    $region78: #{transformer_classifier.1} parent=1 // pred_check
      _
    $region79: #{transformer_classifier.1} parent=1 // pred_check_branch
      %129 = sbr.rel (0) target = $region81
    $region80: #{transformer_classifier.1} parent=1 // pred_region
      _
    $region81: #{transformer_classifier.1} parent=1 // pred_fallthru
      _
    // Predicated region
    $region82: #{transformer_classifier.1} parent=1 // pred_check
      _
    $region83: #{transformer_classifier.1} parent=1 // pred_check_branch
      %131 = sbr.rel (0) target = $region85
    $region84: #{transformer_classifier.1} parent=1 // pred_region
      %133 = vsyncadd [#allocation11], 0
      %s134 = sshll.u32 %s20, 4
      %s135 = int_to_ptr.hbm [resolvable:$true] %s134
      %s136 = sshll.u32 [#allocation10], 4
      %s137 = int_to_ptr.vmem [resolvable:$true] %s136
      %142 = dma.hbm_to_vmem [thread:$0]  %s135, 16384, %s137, [#allocation11], 1024, 1024, 64
    $region85: #{transformer_classifier.1} parent=1 // pred_fallthru
      _
    // Predicated region
    $region86: #{transformer_classifier.1} parent=1 // pred_check
      _
    $region87: #{transformer_classifier.1} parent=1 // pred_check_branch
      %144 = sbr.rel (0) target = $region89
    $region88: #{transformer_classifier.1} parent=1 // pred_region
      _
    $region89: #{transformer_classifier.1} parent=1 // pred_fallthru
      _
    // Predicated region
    $region90: #{transformer_classifier.1} parent=1 // pred_check
      _
    $region91: #{transformer_classifier.1} parent=1 // pred_check_branch
      %146 = sbr.rel (0) target = $region93
    $region92: #{transformer_classifier.1} parent=1 // pred_region
      %148 = vsyncadd [#allocation11], 0
      %s149 = sshll.u32 %s22, 4
      %s150 = int_to_ptr.hbm [resolvable:$true] %s149
      %s151 = sshll.u32 [#allocation12], 4
      %s152 = int_to_ptr.vmem [resolvable:$true] %s151
      %157 = dma.hbm_to_vmem [thread:$0]  %s150, 16384, %s152, [#allocation11], 64, 64, 4
    $region93: #{transformer_classifier.1} parent=1 // pred_fallthru
      _
    // Predicated region
    $region94: #{transformer_classifier.1} parent=1 // pred_check
      _
    $region95: #{transformer_classifier.1} parent=1 // pred_check_branch
      %159 = sbr.rel (0) target = $region97
    $region96: #{transformer_classifier.1} parent=1 // pred_region
      _
    $region97: #{transformer_classifier.1} parent=1 // pred_fallthru
      _
    // Predicated region
    $region98: #{transformer_classifier.1} parent=1 // pred_check
      _
    $region99: #{transformer_classifier.1} parent=1 // pred_check_branch
      %161 = sbr.rel (0) target = $region101
    $region100: #{transformer_classifier.1} parent=1 // pred_region
      _
    $region101: #{transformer_classifier.1} parent=1 // pred_fallthru
      _
    // Predicated region
    $region102: #{transformer_classifier.1} parent=1 // pred_check
      _
    $region103: #{transformer_classifier.1} parent=1 // pred_check_branch
      %163 = sbr.rel (0) target = $region105
    $region104: #{transformer_classifier.1} parent=1 // pred_region
      _
    $region105: #{transformer_classifier.1} parent=1 // pred_fallthru
      _
    // Predicated region
    $region106: #{transformer_classifier.1} parent=1 // pred_check
      _
    $region107: #{transformer_classifier.1} parent=1 // pred_check_branch
      %165 = sbr.rel (0) target = $region109
    $region108: #{transformer_classifier.1} parent=1 // pred_region
      %167 = dma.done [#allocation3], 3072
    $region109: #{transformer_classifier.1} parent=1 // pred_fallthru
      _
    // Predicated region
    $region110: #{transformer_classifier.1} parent=1 // pred_check
      _
    $region111: #{transformer_classifier.1} parent=1 // pred_check_branch
      %169 = sbr.rel (0) target = $region113
    $region112: #{transformer_classifier.1} parent=1 // pred_region
      %171 = dma.done [#allocation5], 16384
    $region113: #{transformer_classifier.1} parent=1 // pred_fallthru
      _
    // Predicated region
    $region114: #{transformer_classifier.1} parent=1 // pred_check
      _
    $region115: #{transformer_classifier.1} parent=1 // pred_check_branch
      %173 = sbr.rel (0) target = $region117
    $region116: #{transformer_classifier.1} parent=1 // pred_region
      %175 = dma.done [#allocation5], 16384
    $region117: #{transformer_classifier.1} parent=1 // pred_fallthru
      _
    // Predicated region
    $region118: #{transformer_classifier.1} parent=1 // pred_check
      _
    $region119: #{transformer_classifier.1} parent=1 // pred_check_branch
      %177 = sbr.rel (0) target = $region121
    $region120: #{transformer_classifier.1} parent=1 // pred_region
      %179 = dma.done [#allocation8], 3072
    $region121: #{transformer_classifier.1} parent=1 // pred_fallthru
      _
    // Predicated region
    $region122: #{transformer_classifier.1} parent=1 // pred_check
      _
    $region123: #{transformer_classifier.1} parent=1 // pred_check_branch
      %181 = sbr.rel (0) target = $region125
    $region124: #{transformer_classifier.1} parent=1 // pred_region
      %183 = dma.done [#allocation8], 1024
    $region125: #{transformer_classifier.1} parent=1 // pred_fallthru
      _
    // Predicated region
    $region126: #{transformer_classifier.1} parent=1 // pred_check
      _
    $region127: #{transformer_classifier.1} parent=1 // pred_check_branch
      %185 = sbr.rel (0) target = $region129
    $region128: #{transformer_classifier.1} parent=1 // pred_region
      %187 = dma.done [#allocation11], 16384
    $region129: #{transformer_classifier.1} parent=1 // pred_fallthru
      _
    // Predicated region
    $region130: #{transformer_classifier.1} parent=1 // pred_check
      _
    $region131: #{transformer_classifier.1} parent=1 // pred_check_branch
      %189 = sbr.rel (0) target = $region133
    $region132: #{transformer_classifier.1} parent=1 // pred_region
      %191 = dma.done [#allocation11], 16384
    $region133: #{transformer_classifier.1} parent=1 // pred_fallthru
      _
    %v193 = vld [vmem:[%s0] sm:$0xf]
    %v194 = vld [vmem:[%s0 + $0x4] sm:$0xf]
    %v195 = vunpack.c.l.bf16 %v193
    %v196 = vunpack.c.l.bf16 %v194
    %v197 = vld [vmem:[%s1] sm:$0x1]
    %v198 = vld [vmem:[%s1 + $0x1] sm:$0x1]
    %v199 = vpack.c.bf16 %v196, %v195
    %v200 = vld [vmem:[#allocation2] sm:$0xff]
    %v201 = vld [vmem:[#allocation2 + $0x8] sm:$0xf]
    %v202 = vld [vmem:[#allocation2 + $0xc] sm:$0xff]
    %v203 = vld [vmem:[#allocation2 + $0x14] sm:$0xf]
    %v204 = vld [vmem:[#allocation2 + $0x18] sm:$0xff]
    %v205 = vld [vmem:[#allocation2 + $0x20] sm:$0xf]
    %v206 = vld [vmem:[#allocation2 + $0x24] sm:$0xff]
    %v207 = vld [vmem:[#allocation2 + $0x2c] sm:$0xf]
    %v208 = vld [vmem:[#allocation2 + $0x30] sm:$0xff]
    %v209 = vld [vmem:[#allocation2 + $0x38] sm:$0xf]
    %v210 = vld [vmem:[#allocation2 + $0x3c] sm:$0xff]
    %v211 = vld [vmem:[#allocation2 + $0x44] sm:$0xf]
    %v212 = vld [vmem:[#allocation2 + $0x48] sm:$0xff]
    %v213 = vld [vmem:[#allocation2 + $0x50] sm:$0xf]
    %v214 = vld [vmem:[#allocation2 + $0x54] sm:$0xff]
    %v215 = vld [vmem:[#allocation2 + $0x5c] sm:$0xf]
    %v216 = vld [vmem:[#allocation2 + $0x60] sm:$0xff]
    %v217 = vld [vmem:[#allocation2 + $0x68] sm:$0xf]
    %v218 = vld [vmem:[#allocation2 + $0x6c] sm:$0xff]
    %v219 = vld [vmem:[#allocation2 + $0x74] sm:$0xf]
    %v220 = vld [vmem:[#allocation2 + $0x78] sm:$0xff]
    %v221 = vld [vmem:[#allocation2 + $0x80] sm:$0xf]
    %v222 = vld [vmem:[#allocation2 + $0x84] sm:$0xff]
    %v223 = vld [vmem:[#allocation2 + $0x8c] sm:$0xf]
    %v224 = vld [vmem:[#allocation2 + $0x90] sm:$0xff]
    %v225 = vld [vmem:[#allocation2 + $0x98] sm:$0xf]
    %v226 = vld [vmem:[#allocation2 + $0x9c] sm:$0xff]
    %v227 = vld [vmem:[#allocation2 + $0xa4] sm:$0xf]
    %v228 = vld [vmem:[#allocation2 + $0xa8] sm:$0xff]
    %v229 = vld [vmem:[#allocation2 + $0xb0] sm:$0xf]
    %v230 = vld [vmem:[#allocation2 + $0xb4] sm:$0xff]
    %v231 = vld [vmem:[#allocation2 + $0xbc] sm:$0xf]
    %v232 = vld [vmem:[%s3] sm:$0x7]
    %v234 = vperm.slane %v232, 0
    %v235 = vperm.slane %v232, 1
    %v236 = vperm.slane %v232, 2
    %v272 = vunpack.c.l.b16 %v200
    %v273 = vunpack.c.h.b16 %v200
    %v274 = vunpack.c.l.b16 %v201
    %v275 = vunpack.c.l.b16 %v202
    %v276 = vunpack.c.h.b16 %v202
    %v277 = vunpack.c.l.b16 %v203
    %v278 = vunpack.c.l.b16 %v204
    %v279 = vunpack.c.h.b16 %v204
    %v280 = vunpack.c.l.b16 %v205
    %v281 = vunpack.c.l.b16 %v206
    %v282 = vunpack.c.h.b16 %v206
    %v283 = vunpack.c.l.b16 %v207
    %v284 = vunpack.c.l.b16 %v208
    %v285 = vunpack.c.h.b16 %v208
    %v286 = vunpack.c.l.b16 %v209
    %v287 = vunpack.c.l.b16 %v210
    %v288 = vunpack.c.h.b16 %v210
    %v289 = vunpack.c.l.b16 %v211
    %v290 = vunpack.c.l.b16 %v212
    %v291 = vunpack.c.h.b16 %v212
    %v292 = vunpack.c.l.b16 %v213
    %v293 = vunpack.c.l.b16 %v214
    %v294 = vunpack.c.h.b16 %v214
    %v295 = vunpack.c.l.b16 %v215
    %v296 = vunpack.c.l.b16 %v216
    %v297 = vunpack.c.h.b16 %v216
    %v298 = vunpack.c.l.b16 %v217
    %v299 = vunpack.c.l.b16 %v218
    %v300 = vunpack.c.h.b16 %v218
    %v301 = vunpack.c.l.b16 %v219
    %v302 = vunpack.c.l.b16 %v220
    %v303 = vunpack.c.h.b16 %v220
    %v304 = vunpack.c.l.b16 %v221
    %v305 = vunpack.c.l.b16 %v222
    %v306 = vunpack.c.h.b16 %v222
    %v307 = vunpack.c.l.b16 %v223
    %v308 = vunpack.c.l.b16 %v224
    %v309 = vunpack.c.h.b16 %v224
    %v310 = vunpack.c.l.b16 %v225
    %v311 = vunpack.c.l.b16 %v226
    %v312 = vunpack.c.h.b16 %v226
    %v313 = vunpack.c.l.b16 %v227
    %v314 = vunpack.c.l.b16 %v228
    %v315 = vunpack.c.h.b16 %v228
    %v316 = vunpack.c.l.b16 %v229
    %v317 = vunpack.c.l.b16 %v230
    %v318 = vunpack.c.h.b16 %v230
    %v319 = vunpack.c.l.b16 %v231
    %v320 = vpack.c.b16 %v275, %v272
    %v321 = vpack.c.b16 %v276, %v273
    %v322 = vpack.c.b16 %v277, %v274
    %v323 = vpack.c.b16 %v281, %v278
    %v324 = vpack.c.b16 %v282, %v279
    %v325 = vpack.c.b16 %v283, %v280
    %v326 = vpack.c.b16 %v287, %v284
    %v327 = vpack.c.b16 %v288, %v285
    %v328 = vpack.c.b16 %v289, %v286
    %v329 = vpack.c.b16 %v293, %v290
    %v330 = vpack.c.b16 %v294, %v291
    %v331 = vpack.c.b16 %v295, %v292
    %v332 = vpack.c.b16 %v299, %v296
    %v333 = vpack.c.b16 %v300, %v297
    %v334 = vpack.c.b16 %v301, %v298
    %v335 = vpack.c.b16 %v305, %v302
    %v336 = vpack.c.b16 %v306, %v303
    %v337 = vpack.c.b16 %v307, %v304
    %v338 = vpack.c.b16 %v311, %v308
    %v339 = vpack.c.b16 %v312, %v309
    %v340 = vpack.c.b16 %v313, %v310
    %v341 = vpack.c.b16 %v317, %v314
    %v342 = vpack.c.b16 %v318, %v315
    %v343 = vpack.c.b16 %v319, %v316
    %368 = vmatpush.bf16.msra.mxu0 %v341
    %369 = vmatpush.bf16.msra.mxu0 %v338
    %370 = vmatpush.bf16.msra.mxu0 %v335
    %371 = vmatpush.bf16.msra.mxu0 %v332
    %372 = vmatpush.bf16.msra.mxu0 %v329
    %373 = vmatpush.bf16.msra.mxu0 %v326
    %374 = vmatpush.bf16.msra.mxu0 %v323
    %375 = vmatpush.bf16.msra.mxu0 %v320
    %376 = vmatmul.bf16.gmra.mxu0 %v199
    %v377 = vpop.f32.mrf.mxu0
    %v378 = vadd.f32 %v234, %v377
    %v379 = vpop.f32.mrf.mxu0
    %v380 = vadd.f32 %v234, %v379
    %381 = vdwg.mxu0
    %382 = vmatpush.bf16.msra.mxu0 %v342
    %383 = vmatpush.bf16.msra.mxu0 %v339
    %384 = vmatpush.bf16.msra.mxu0 %v336
    %385 = vmatpush.bf16.msra.mxu0 %v333
    %386 = vmatpush.bf16.msra.mxu0 %v330
    %387 = vmatpush.bf16.msra.mxu0 %v327
    %388 = vmatpush.bf16.msra.mxu0 %v324
    %389 = vmatpush.bf16.msra.mxu0 %v321
    %390 = vmatmul.bf16.gmra.mxu0 %v199
    %v391 = vpop.f32.mrf.mxu0
    %v392 = vadd.f32 %v235, %v391
    %v393 = vpop.f32.mrf.mxu0
    %v394 = vadd.f32 %v235, %v393
    %395 = vdwg.mxu0
    %396 = vmatpush.bf16.msra.mxu0 %v343
    %397 = vmatpush.bf16.msra.mxu0 %v340
    %398 = vmatpush.bf16.msra.mxu0 %v337
    %399 = vmatpush.bf16.msra.mxu0 %v334
    %400 = vmatpush.bf16.msra.mxu0 %v331
    %401 = vmatpush.bf16.msra.mxu0 %v328
    %402 = vmatpush.bf16.msra.mxu0 %v325
    %403 = vmatpush.bf16.msra.mxu0 %v322
    %404 = vmatmul.bf16.gmra.mxu0 %v199
    %v405 = vpop.f32.mrf.mxu0
    %v406 = vadd.f32 %v236, %v405
    %v407 = vpop.f32.mrf.mxu0
    %v408 = vadd.f32 %v236, %v407
    %409 = vdwg.mxu0
    %v410 = vpack.c.bf16 %v378, %v378
    %v411 = vpack.c.bf16 %v380, %v380
    %v412 = vpack.c.bf16 %v392, %v392
    %v413 = vpack.c.bf16 %v394, %v394
    %v414 = vpack.c.bf16 %v406, %v406
    %v415 = vpack.c.bf16 %v408, %v408
    %v418 = vperm.slane %v197, 0
    %v419 = vperm.slane %v198, 0
    %vm422 = vcmask 261120
    %v424 = vsel %vm422, %v410, 0
    %v427 = vsel %vm422, %v412, 0
    %429 = vmatpush.bf16.xpose.msra.mxu0 0
    %430 = vmatpush.bf16.xpose.msra.mxu0 0
    %431 = vmatpush.bf16.xpose.msra.mxu0 0
    %432 = vmatpush.bf16.xpose.msra.mxu0 0
    %433 = vmatpush.bf16.xpose.msra.mxu0 0
    %434 = vmatpush.bf16.xpose.msra.mxu0 0
    %435 = vmatpush.bf16.xpose.msra.mxu0 0
    %436 = vmatpush.bf16.xpose.msra.mxu0 %v427
    %437 = vmatmul.bf16.gmra.mxu0 %v424
    %v438 = vpop.f32.mrf.mxu0
    %v439 = vadd.f32 %v418, %v438
    %v440 = vpop.f32.mrf.mxu0
    %441 = vdwg.mxu0
    %v443 = vsel %vm422, %v411, 0
    %v446 = vsel %vm422, %v413, 0
    %448 = vmatpush.bf16.xpose.msra.mxu0 0
    %449 = vmatpush.bf16.xpose.msra.mxu0 0
    %450 = vmatpush.bf16.xpose.msra.mxu0 0
    %451 = vmatpush.bf16.xpose.msra.mxu0 0
    %452 = vmatpush.bf16.xpose.msra.mxu0 0
    %453 = vmatpush.bf16.xpose.msra.mxu0 0
    %454 = vmatpush.bf16.xpose.msra.mxu0 0
    %455 = vmatpush.bf16.xpose.msra.mxu0 %v446
    %456 = vmatmul.bf16.gmra.mxu0 %v443
    %v457 = vpop.f32.mrf.mxu0
    %v458 = vadd.f32 %v419, %v457
    %v459 = vpop.f32.mrf.mxu0
    %460 = vdwg.mxu0
    %vm461 = vcmask 64512
    %v462 = vsel %vm461, %v439, -inf
    %463 = vmax.xlane.f32.xlu0 %v462
    %v464 = vpop.xlane.xlu0 %463
    %v465 = vsel %vm461, %v458, -inf
    %466 = vmax.xlane.f32.xlu0 %v465
    %v467 = vpop.xlane.xlu0 %466
    %v468 = vsub.f32 %v439, %v464
    %v469 = vsub.f32 %v458, %v467
    %v470 = vmul.f32 %v468, 1.442695
    %v471 = vpow.pop %v470
    %v472 = vmul.f32 %v469, 1.442695
    %v473 = vpow.pop %v472
    %v474 = vsel %vm461, %v471, 0.0
    %475 = vadd.xlane.f32.xlu0 %v474
    %v476 = vpop.xlane.xlu0 %475
    %v477 = vsel %vm461, %v473, 0.0
    %478 = vadd.xlane.f32.xlu0 %v477
    %v479 = vpop.xlane.xlu0 %478
    %v480 = vrcp.pop %v476
    %v481 = vrcp.pop %v479
    %v482 = vmul.f32 %v471, %v480
    %v483 = vmul.f32 %v473, %v481
    %v484 = vpack.c.bf16 %v482, %v482
    %v485 = vpack.c.bf16 %v483, %v483
    %v487 = vsel %vm461, %v484, 0
    %vm489 = vcmask 1043456
    %v491 = vsel %vm489, %v414, 0
    %493 = vmatpush.bf16.msra.mxu0 0
    %494 = vmatpush.bf16.msra.mxu0 0
    %495 = vmatpush.bf16.msra.mxu0 0
    %496 = vmatpush.bf16.msra.mxu0 0
    %497 = vmatpush.bf16.msra.mxu0 0
    %498 = vmatpush.bf16.msra.mxu0 0
    %499 = vmatpush.bf16.msra.mxu0 0
    %500 = vmatpush.bf16.msra.mxu0 %v491
    %501 = vmatmul.bf16.gmra.mxu0 %v487
    %v502 = vpop.f32.mrf.mxu0
    %v503 = vadd.f32 0.0, %v502
    %v504 = vpop.f32.mrf.mxu0
    %505 = vdwg.mxu0
    %v507 = vsel %vm461, %v485, 0
    %v510 = vsel %vm489, %v415, 0
    %512 = vmatpush.bf16.msra.mxu0 0
    %513 = vmatpush.bf16.msra.mxu0 0
    %514 = vmatpush.bf16.msra.mxu0 0
    %515 = vmatpush.bf16.msra.mxu0 0
    %516 = vmatpush.bf16.msra.mxu0 0
    %517 = vmatpush.bf16.msra.mxu0 0
    %518 = vmatpush.bf16.msra.mxu0 0
    %519 = vmatpush.bf16.msra.mxu0 %v510
    %520 = vmatmul.bf16.gmra.mxu0 %v507
    %v521 = vpop.f32.mrf.mxu0
    %v522 = vadd.f32 0.0, %v521
    %v523 = vpop.f32.mrf.mxu0
    %524 = vdwg.mxu0
    %v526 = vunpack.c.l.b16 %v410
    %v527 = vpack.c.b16 %v526, %v526
    %528 = vrot.lane.b32.xlu0 %v527, 96
    %v529 = vpop.permute.xlu0 %528
    %v531 = vunpack.c.l.b16 %v412
    %v532 = vpack.c.b16 %v531, %v531
    %533 = vrot.lane.b32.xlu0 %v532, 96
    %v534 = vpop.permute.xlu0 %533
    %v536 = vsel %vm422, %v529, 0
    %v539 = vsel %vm422, %v534, 0
    %541 = vmatpush.bf16.xpose.msra.mxu0 0
    %542 = vmatpush.bf16.xpose.msra.mxu0 0
    %543 = vmatpush.bf16.xpose.msra.mxu0 0
    %544 = vmatpush.bf16.xpose.msra.mxu0 0
    %545 = vmatpush.bf16.xpose.msra.mxu0 0
    %546 = vmatpush.bf16.xpose.msra.mxu0 0
    %547 = vmatpush.bf16.xpose.msra.mxu0 0
    %548 = vmatpush.bf16.xpose.msra.mxu0 %v539
    %549 = vmatmul.bf16.gmra.mxu0 %v536
    %v550 = vpop.f32.mrf.mxu0
    %v551 = vadd.f32 %v418, %v550
    %v552 = vpop.f32.mrf.mxu0
    %553 = vdwg.mxu0
    %v555 = vunpack.c.l.b16 %v411
    %v556 = vpack.c.b16 %v555, %v555
    %557 = vrot.lane.b32.xlu0 %v556, 96
    %v558 = vpop.permute.xlu0 %557
    %v560 = vunpack.c.l.b16 %v413
    %v561 = vpack.c.b16 %v560, %v560
    %562 = vrot.lane.b32.xlu0 %v561, 96
    %v563 = vpop.permute.xlu0 %562
    %v565 = vsel %vm422, %v558, 0
    %v568 = vsel %vm422, %v563, 0
    %570 = vmatpush.bf16.xpose.msra.mxu0 0
    %571 = vmatpush.bf16.xpose.msra.mxu0 0
    %572 = vmatpush.bf16.xpose.msra.mxu0 0
    %573 = vmatpush.bf16.xpose.msra.mxu0 0
    %574 = vmatpush.bf16.xpose.msra.mxu0 0
    %575 = vmatpush.bf16.xpose.msra.mxu0 0
    %576 = vmatpush.bf16.xpose.msra.mxu0 0
    %577 = vmatpush.bf16.xpose.msra.mxu0 %v568
    %578 = vmatmul.bf16.gmra.mxu0 %v565
    %v579 = vpop.f32.mrf.mxu0
    %v580 = vadd.f32 %v419, %v579
    %v581 = vpop.f32.mrf.mxu0
    %582 = vdwg.mxu0
    %v583 = vsel %vm461, %v551, -inf
    %584 = vmax.xlane.f32.xlu0 %v583
    %v585 = vpop.xlane.xlu0 %584
    %v586 = vsel %vm461, %v580, -inf
    %587 = vmax.xlane.f32.xlu0 %v586
    %v588 = vpop.xlane.xlu0 %587
    %v589 = vsub.f32 %v551, %v585
    %v590 = vsub.f32 %v580, %v588
    %v591 = vmul.f32 %v589, 1.442695
    %v592 = vpow.pop %v591
    %v593 = vmul.f32 %v590, 1.442695
    %v594 = vpow.pop %v593
    %v595 = vsel %vm461, %v592, 0.0
    %596 = vadd.xlane.f32.xlu0 %v595
    %v597 = vpop.xlane.xlu0 %596
    %v598 = vsel %vm461, %v594, 0.0
    %599 = vadd.xlane.f32.xlu0 %v598
    %v600 = vpop.xlane.xlu0 %599
    %v601 = vrcp.pop %v597
    %v602 = vrcp.pop %v600
    %v603 = vmul.f32 %v592, %v601
    %v604 = vmul.f32 %v594, %v602
    %v605 = vpack.c.bf16 %v603, %v603
    %v606 = vpack.c.bf16 %v604, %v604
    %v608 = vunpack.c.l.b16 %v414
    %v609 = vpack.c.b16 %v608, %v608
    %610 = vrot.lane.b32.xlu0 %v609, 96
    %v611 = vpop.permute.xlu0 %610
    %v613 = vsel %vm461, %v605, 0
    %v616 = vsel %vm489, %v611, 0
    %618 = vmatpush.bf16.msra.mxu0 0
    %619 = vmatpush.bf16.msra.mxu0 0
    %620 = vmatpush.bf16.msra.mxu0 0
    %621 = vmatpush.bf16.msra.mxu0 0
    %622 = vmatpush.bf16.msra.mxu0 0
    %623 = vmatpush.bf16.msra.mxu0 0
    %624 = vmatpush.bf16.msra.mxu0 0
    %625 = vmatpush.bf16.msra.mxu0 %v616
    %626 = vmatmul.bf16.gmra.mxu0 %v613
    %v627 = vpop.f32.mrf.mxu0
    %v628 = vadd.f32 0.0, %v627
    %v629 = vpop.f32.mrf.mxu0
    %630 = vdwg.mxu0
    %v632 = vunpack.c.l.b16 %v415
    %v633 = vpack.c.b16 %v632, %v632
    %634 = vrot.lane.b32.xlu0 %v633, 96
    %v635 = vpop.permute.xlu0 %634
    %v637 = vsel %vm461, %v606, 0
    %v640 = vsel %vm489, %v635, 0
    %642 = vmatpush.bf16.msra.mxu0 0
    %643 = vmatpush.bf16.msra.mxu0 0
    %644 = vmatpush.bf16.msra.mxu0 0
    %645 = vmatpush.bf16.msra.mxu0 0
    %646 = vmatpush.bf16.msra.mxu0 0
    %647 = vmatpush.bf16.msra.mxu0 0
    %648 = vmatpush.bf16.msra.mxu0 0
    %649 = vmatpush.bf16.msra.mxu0 %v640
    %650 = vmatmul.bf16.gmra.mxu0 %v637
    %v651 = vpop.f32.mrf.mxu0
    %v652 = vadd.f32 0.0, %v651
    %v653 = vpop.f32.mrf.mxu0
    %654 = vdwg.mxu0
    %655 = vrot.lane.b32.xlu0 %v527, 64
    %v656 = vpop.permute.xlu0 %655
    %657 = vrot.lane.b32.xlu0 %v532, 64
    %v658 = vpop.permute.xlu0 %657
    %v660 = vsel %vm422, %v656, 0
    %v663 = vsel %vm422, %v658, 0
    %665 = vmatpush.bf16.xpose.msra.mxu0 0
    %666 = vmatpush.bf16.xpose.msra.mxu0 0
    %667 = vmatpush.bf16.xpose.msra.mxu0 0
    %668 = vmatpush.bf16.xpose.msra.mxu0 0
    %669 = vmatpush.bf16.xpose.msra.mxu0 0
    %670 = vmatpush.bf16.xpose.msra.mxu0 0
    %671 = vmatpush.bf16.xpose.msra.mxu0 0
    %672 = vmatpush.bf16.xpose.msra.mxu0 %v663
    %673 = vmatmul.bf16.gmra.mxu0 %v660
    %v674 = vpop.f32.mrf.mxu0
    %v675 = vadd.f32 %v418, %v674
    %v676 = vpop.f32.mrf.mxu0
    %677 = vdwg.mxu0
    %678 = vrot.lane.b32.xlu0 %v556, 64
    %v679 = vpop.permute.xlu0 %678
    %680 = vrot.lane.b32.xlu0 %v561, 64
    %v681 = vpop.permute.xlu0 %680
    %v683 = vsel %vm422, %v679, 0
    %v686 = vsel %vm422, %v681, 0
    %688 = vmatpush.bf16.xpose.msra.mxu0 0
    %689 = vmatpush.bf16.xpose.msra.mxu0 0
    %690 = vmatpush.bf16.xpose.msra.mxu0 0
    %691 = vmatpush.bf16.xpose.msra.mxu0 0
    %692 = vmatpush.bf16.xpose.msra.mxu0 0
    %693 = vmatpush.bf16.xpose.msra.mxu0 0
    %694 = vmatpush.bf16.xpose.msra.mxu0 0
    %695 = vmatpush.bf16.xpose.msra.mxu0 %v686
    %696 = vmatmul.bf16.gmra.mxu0 %v683
    %v697 = vpop.f32.mrf.mxu0
    %v698 = vadd.f32 %v419, %v697
    %v699 = vpop.f32.mrf.mxu0
    %700 = vdwg.mxu0
    %v701 = vsel %vm461, %v675, -inf
    %702 = vmax.xlane.f32.xlu0 %v701
    %v703 = vpop.xlane.xlu0 %702
    %v704 = vsel %vm461, %v698, -inf
    %705 = vmax.xlane.f32.xlu0 %v704
    %v706 = vpop.xlane.xlu0 %705
    %v707 = vsub.f32 %v675, %v703
    %v708 = vsub.f32 %v698, %v706
    %v709 = vmul.f32 %v707, 1.442695
    %v710 = vpow.pop %v709
    %v711 = vmul.f32 %v708, 1.442695
    %v712 = vpow.pop %v711
    %v713 = vsel %vm461, %v710, 0.0
    %714 = vadd.xlane.f32.xlu0 %v713
    %v715 = vpop.xlane.xlu0 %714
    %v716 = vsel %vm461, %v712, 0.0
    %717 = vadd.xlane.f32.xlu0 %v716
    %v718 = vpop.xlane.xlu0 %717
    %v719 = vrcp.pop %v715
    %v720 = vrcp.pop %v718
    %v721 = vmul.f32 %v710, %v719
    %v722 = vmul.f32 %v712, %v720
    %v723 = vpack.c.bf16 %v721, %v721
    %v724 = vpack.c.bf16 %v722, %v722
    %725 = vrot.lane.b32.xlu0 %v609, 64
    %v726 = vpop.permute.xlu0 %725
    %v728 = vsel %vm461, %v723, 0
    %v731 = vsel %vm489, %v726, 0
    %733 = vmatpush.bf16.msra.mxu0 0
    %734 = vmatpush.bf16.msra.mxu0 0
    %735 = vmatpush.bf16.msra.mxu0 0
    %736 = vmatpush.bf16.msra.mxu0 0
    %737 = vmatpush.bf16.msra.mxu0 0
    %738 = vmatpush.bf16.msra.mxu0 0
    %739 = vmatpush.bf16.msra.mxu0 0
    %740 = vmatpush.bf16.msra.mxu0 %v731
    %741 = vmatmul.bf16.gmra.mxu0 %v728
    %v742 = vpop.f32.mrf.mxu0
    %v743 = vadd.f32 0.0, %v742
    %v744 = vpop.f32.mrf.mxu0
    %745 = vdwg.mxu0
    %746 = vrot.lane.b32.xlu0 %v633, 64
    %v747 = vpop.permute.xlu0 %746
    %v749 = vsel %vm461, %v724, 0
    %v752 = vsel %vm489, %v747, 0
    %754 = vmatpush.bf16.msra.mxu0 0
    %755 = vmatpush.bf16.msra.mxu0 0
    %756 = vmatpush.bf16.msra.mxu0 0
    %757 = vmatpush.bf16.msra.mxu0 0
    %758 = vmatpush.bf16.msra.mxu0 0
    %759 = vmatpush.bf16.msra.mxu0 0
    %760 = vmatpush.bf16.msra.mxu0 0
    %761 = vmatpush.bf16.msra.mxu0 %v752
    %762 = vmatmul.bf16.gmra.mxu0 %v749
    %v763 = vpop.f32.mrf.mxu0
    %v764 = vadd.f32 0.0, %v763
    %v765 = vpop.f32.mrf.mxu0
    %766 = vdwg.mxu0
    %767 = vrot.lane.b32.xlu0 %v527, 32
    %v768 = vpop.permute.xlu0 %767
    %769 = vrot.lane.b32.xlu0 %v532, 32
    %v770 = vpop.permute.xlu0 %769
    %v772 = vsel %vm422, %v768, 0
    %v775 = vsel %vm422, %v770, 0
    %777 = vmatpush.bf16.xpose.msra.mxu0 0
    %778 = vmatpush.bf16.xpose.msra.mxu0 0
    %779 = vmatpush.bf16.xpose.msra.mxu0 0
    %780 = vmatpush.bf16.xpose.msra.mxu0 0
    %781 = vmatpush.bf16.xpose.msra.mxu0 0
    %782 = vmatpush.bf16.xpose.msra.mxu0 0
    %783 = vmatpush.bf16.xpose.msra.mxu0 0
    %784 = vmatpush.bf16.xpose.msra.mxu0 %v775
    %785 = vmatmul.bf16.gmra.mxu0 %v772
    %v786 = vpop.f32.mrf.mxu0
    %v787 = vadd.f32 %v418, %v786
    %v788 = vpop.f32.mrf.mxu0
    %789 = vdwg.mxu0
    %790 = vrot.lane.b32.xlu0 %v556, 32
    %v791 = vpop.permute.xlu0 %790
    %792 = vrot.lane.b32.xlu0 %v561, 32
    %v793 = vpop.permute.xlu0 %792
    %v795 = vsel %vm422, %v791, 0
    %v798 = vsel %vm422, %v793, 0
    %800 = vmatpush.bf16.xpose.msra.mxu0 0
    %801 = vmatpush.bf16.xpose.msra.mxu0 0
    %802 = vmatpush.bf16.xpose.msra.mxu0 0
    %803 = vmatpush.bf16.xpose.msra.mxu0 0
    %804 = vmatpush.bf16.xpose.msra.mxu0 0
    %805 = vmatpush.bf16.xpose.msra.mxu0 0
    %806 = vmatpush.bf16.xpose.msra.mxu0 0
    %807 = vmatpush.bf16.xpose.msra.mxu0 %v798
    %808 = vmatmul.bf16.gmra.mxu0 %v795
    %v809 = vpop.f32.mrf.mxu0
    %v810 = vadd.f32 %v419, %v809
    %v811 = vpop.f32.mrf.mxu0
    %812 = vdwg.mxu0
    %v813 = vsel %vm461, %v787, -inf
    %814 = vmax.xlane.f32.xlu0 %v813
    %v815 = vpop.xlane.xlu0 %814
    %v816 = vsel %vm461, %v810, -inf
    %817 = vmax.xlane.f32.xlu0 %v816
    %v818 = vpop.xlane.xlu0 %817
    %v819 = vsub.f32 %v787, %v815
    %v820 = vsub.f32 %v810, %v818
    %v821 = vmul.f32 %v819, 1.442695
    %v822 = vpow.pop %v821
    %v823 = vmul.f32 %v820, 1.442695
    %v824 = vpow.pop %v823
    %v825 = vsel %vm461, %v822, 0.0
    %826 = vadd.xlane.f32.xlu0 %v825
    %v827 = vpop.xlane.xlu0 %826
    %v828 = vsel %vm461, %v824, 0.0
    %829 = vadd.xlane.f32.xlu0 %v828
    %v830 = vpop.xlane.xlu0 %829
    %v831 = vrcp.pop %v827
    %v832 = vrcp.pop %v830
    %v833 = vmul.f32 %v822, %v831
    %v834 = vmul.f32 %v824, %v832
    %v835 = vpack.c.bf16 %v833, %v833
    %v836 = vpack.c.bf16 %v834, %v834
    %837 = vrot.lane.b32.xlu0 %v609, 32
    %v838 = vpop.permute.xlu0 %837
    %v840 = vsel %vm461, %v835, 0
    %v843 = vsel %vm489, %v838, 0
    %845 = vmatpush.bf16.msra.mxu0 0
    %846 = vmatpush.bf16.msra.mxu0 0
    %847 = vmatpush.bf16.msra.mxu0 0
    %848 = vmatpush.bf16.msra.mxu0 0
    %849 = vmatpush.bf16.msra.mxu0 0
    %850 = vmatpush.bf16.msra.mxu0 0
    %851 = vmatpush.bf16.msra.mxu0 0
    %852 = vmatpush.bf16.msra.mxu0 %v843
    %853 = vmatmul.bf16.gmra.mxu0 %v840
    %v854 = vpop.f32.mrf.mxu0
    %v855 = vadd.f32 0.0, %v854
    %v856 = vpop.f32.mrf.mxu0
    %857 = vdwg.mxu0
    %858 = vrot.lane.b32.xlu0 %v633, 32
    %v859 = vpop.permute.xlu0 %858
    %v861 = vsel %vm461, %v836, 0
    %v864 = vsel %vm489, %v859, 0
    %866 = vmatpush.bf16.msra.mxu0 0
    %867 = vmatpush.bf16.msra.mxu0 0
    %868 = vmatpush.bf16.msra.mxu0 0
    %869 = vmatpush.bf16.msra.mxu0 0
    %870 = vmatpush.bf16.msra.mxu0 0
    %871 = vmatpush.bf16.msra.mxu0 0
    %872 = vmatpush.bf16.msra.mxu0 0
    %873 = vmatpush.bf16.msra.mxu0 %v864
    %874 = vmatmul.bf16.gmra.mxu0 %v861
    %v875 = vpop.f32.mrf.mxu0
    %v876 = vadd.f32 0.0, %v875
    %v877 = vpop.f32.mrf.mxu0
    %878 = vdwg.mxu0
    %881 = vrot.lane.b32.xlu0 %v628, 32
    %v882 = vpop.permute.xlu0 %881
    %883 = vrot.lane.b32.xlu0 %v652, 32
    %v884 = vpop.permute.xlu0 %883
    %889 = vrot.lane.b32.xlu0 %v743, 64
    %v890 = vpop.permute.xlu0 %889
    %891 = vrot.lane.b32.xlu0 %v764, 64
    %v892 = vpop.permute.xlu0 %891
    %897 = vrot.lane.b32.xlu0 %v855, 96
    %v898 = vpop.permute.xlu0 %897
    %899 = vrot.lane.b32.xlu0 %v876, 96
    %v900 = vpop.permute.xlu0 %899
    %v903 = vsel %vm422, %v503, %v882
    %v904 = vsel %vm422, %v522, %v884
    %vm905 = vcmask 523264
    %v906 = vsel %vm905, %v903, %v890
    %v907 = vsel %vm905, %v904, %v892
    %vm908 = vcmask 785408
    %v909 = vsel %vm908, %v906, %v898
    %v910 = vsel %vm908, %v907, %v900
    %v911 = vpack.c.bf16 %v910, %v909
    %v912 = vld [vmem:[%s4] sm:$0xf]
    %v913 = vld [vmem:[%s4 + $0x4] sm:$0xf]
    %v914 = vld [vmem:[%s4 + $0x8] sm:$0xf]
    %v915 = vld [vmem:[%s4 + $0xc] sm:$0xf]
    %v916 = vld [vmem:[%s4 + $0x10] sm:$0xf]
    %v917 = vld [vmem:[%s4 + $0x14] sm:$0xf]
    %v918 = vld [vmem:[%s4 + $0x18] sm:$0xf]
    %v919 = vld [vmem:[%s4 + $0x1c] sm:$0xf]
    %v920 = vld [vmem:[%s4 + $0x20] sm:$0xf]
    %v921 = vld [vmem:[%s4 + $0x24] sm:$0xf]
    %v922 = vld [vmem:[%s4 + $0x28] sm:$0xf]
    %v923 = vld [vmem:[%s4 + $0x2c] sm:$0xf]
    %v924 = vld [vmem:[%s4 + $0x30] sm:$0xf]
    %v925 = vld [vmem:[%s4 + $0x34] sm:$0xf]
    %v926 = vld [vmem:[%s4 + $0x38] sm:$0xf]
    %v927 = vld [vmem:[%s4 + $0x3c] sm:$0xf]
    %v928 = vld [vmem:[%s5] sm:$0x1]
    %v930 = vperm.slane %v928, 0
    %v948 = vunpack.c.l.b16 %v912
    %v949 = vunpack.c.l.b16 %v913
    %v950 = vunpack.c.l.b16 %v914
    %v951 = vunpack.c.l.b16 %v915
    %v952 = vunpack.c.l.b16 %v916
    %v953 = vunpack.c.l.b16 %v917
    %v954 = vunpack.c.l.b16 %v918
    %v955 = vunpack.c.l.b16 %v919
    %v956 = vunpack.c.l.b16 %v920
    %v957 = vunpack.c.l.b16 %v921
    %v958 = vunpack.c.l.b16 %v922
    %v959 = vunpack.c.l.b16 %v923
    %v960 = vunpack.c.l.b16 %v924
    %v961 = vunpack.c.l.b16 %v925
    %v962 = vunpack.c.l.b16 %v926
    %v963 = vunpack.c.l.b16 %v927
    %v964 = vpack.c.b16 %v949, %v948
    %v965 = vpack.c.b16 %v951, %v950
    %v966 = vpack.c.b16 %v953, %v952
    %v967 = vpack.c.b16 %v955, %v954
    %v968 = vpack.c.b16 %v957, %v956
    %v969 = vpack.c.b16 %v959, %v958
    %v970 = vpack.c.b16 %v961, %v960
    %v971 = vpack.c.b16 %v963, %v962
    %980 = vmatpush.bf16.msra.mxu0 %v971
    %981 = vmatpush.bf16.msra.mxu0 %v970
    %982 = vmatpush.bf16.msra.mxu0 %v969
    %983 = vmatpush.bf16.msra.mxu0 %v968
    %984 = vmatpush.bf16.msra.mxu0 %v967
    %985 = vmatpush.bf16.msra.mxu0 %v966
    %986 = vmatpush.bf16.msra.mxu0 %v965
    %987 = vmatpush.bf16.msra.mxu0 %v964
    %988 = vmatmul.bf16.gmra.mxu0 %v911
    %v989 = vpop.f32.mrf.mxu0
    %v990 = vadd.f32 %v930, %v989
    %v991 = vpop.f32.mrf.mxu0
    %v992 = vadd.f32 %v930, %v991
    %993 = vdwg.mxu0
    %v994 = vadd.f32 %v195, %v990
    %v995 = vadd.f32 %v196, %v992
    %996 = vadd.xlane.f32.xlu0 %v994
    %v997 = vpop.xlane.xlu0 %996
    %998 = vadd.xlane.f32.xlu0 %v995
    %v999 = vpop.xlane.xlu0 %998
    %v1000 = vrcp.pop 128.0
    %v1001 = vmul.f32 128.0, %v1000
    %v1002 = vsub.f32 1.0, %v1001
    %v1003 = vmul.f32 %v1000, %v1002
    %v1004 = vadd.f32 %v1000, %v1003
    %vm1005 = vweird.f32 %v1000
    %v1006 = vsel %vm1005, %v1000, %v1004
    %v1007 = vmul.f32 %v997, %v1006
    %v1008 = vmul.f32 %v999, %v1006
    %v1009 = vsub.f32 %v994, %v1007
    %v1010 = vsub.f32 %v995, %v1008
    %v1011 = vmul.f32 %v1009, %v1009
    %v1012 = vmul.f32 %v1010, %v1010
    %1013 = vadd.xlane.f32.xlu0 %v1011
    %v1014 = vpop.xlane.xlu0 %1013
    %1015 = vadd.xlane.f32.xlu0 %v1012
    %v1016 = vpop.xlane.xlu0 %1015
    %v1017 = vmul.f32 %v1014, %v1006
    %v1018 = vmul.f32 %v1016, %v1006
    %v1019 = vadd.f32 %v1017, 1e-05
    %v1020 = vadd.f32 %v1018, 1e-05
    %v1021 = vrsqrt.pop %v1019
    %v1022 = vmul.f32 %v1021, %v1019
    %v1023 = vmul.f32 %v1022, %v1021
    %v1024 = vmul.f32 0.5, %v1023
    %v1025 = vsub.f32 1.5, %v1024
    %v1026 = vmul.f32 %v1021, %v1025
    %vm1027 = vweird.f32 %v1019
    %vm1028 = vweird.f32 %v1021
    %vm1029 = vmor %vm1027, %vm1028
    %v1030 = vsel %vm1029, %v1021, %v1026
    %v1031 = vrsqrt.pop %v1020
    %v1032 = vmul.f32 %v1031, %v1020
    %v1033 = vmul.f32 %v1032, %v1031
    %v1034 = vmul.f32 0.5, %v1033
    %v1035 = vsub.f32 1.5, %v1034
    %v1036 = vmul.f32 %v1031, %v1035
    %vm1037 = vweird.f32 %v1020
    %vm1038 = vweird.f32 %v1031
    %vm1039 = vmor %vm1037, %vm1038
    %v1040 = vsel %vm1039, %v1031, %v1036
    %v1041 = vmul.f32 %v1009, %v1030
    %v1042 = vmul.f32 %v1010, %v1040
    %v1043 = vld [vmem:[%s6] sm:$0x1]
    %v1045 = vperm.slane %v1043, 0
    %v1047 = vmul.f32 %v1041, %v1045
    %v1048 = vmul.f32 %v1042, %v1045
    %v1049 = vld [vmem:[%s7] sm:$0x1]
    %v1051 = vperm.slane %v1049, 0
    %v1053 = vadd.f32 %v1047, %v1051
    %v1054 = vadd.f32 %v1048, %v1051
    %v1055 = vpack.c.bf16 %v1054, %v1053
    %v1056 = vld [vmem:[#allocation4] sm:$0xff]
    %v1057 = vld [vmem:[#allocation4 + $0x8] sm:$0xff]
    %v1058 = vld [vmem:[#allocation4 + $0x10] sm:$0xff]
    %v1059 = vld [vmem:[#allocation4 + $0x18] sm:$0xff]
    %v1060 = vld [vmem:[#allocation4 + $0x20] sm:$0xff]
    %v1061 = vld [vmem:[#allocation4 + $0x28] sm:$0xff]
    %v1062 = vld [vmem:[#allocation4 + $0x30] sm:$0xff]
    %v1063 = vld [vmem:[#allocation4 + $0x38] sm:$0xff]
    %v1064 = vld [vmem:[#allocation4 + $0x40] sm:$0xff]
    %v1065 = vld [vmem:[#allocation4 + $0x48] sm:$0xff]
    %v1066 = vld [vmem:[#allocation4 + $0x50] sm:$0xff]
    %v1067 = vld [vmem:[#allocation4 + $0x58] sm:$0xff]
    %v1068 = vld [vmem:[#allocation4 + $0x60] sm:$0xff]
    %v1069 = vld [vmem:[#allocation4 + $0x68] sm:$0xff]
    %v1070 = vld [vmem:[#allocation4 + $0x70] sm:$0xff]
    %v1071 = vld [vmem:[#allocation4 + $0x78] sm:$0xff]
    %v1072 = vld [vmem:[#allocation4 + $0x80] sm:$0xff]
    %v1073 = vld [vmem:[#allocation4 + $0x88] sm:$0xff]
    %v1074 = vld [vmem:[#allocation4 + $0x90] sm:$0xff]
    %v1075 = vld [vmem:[#allocation4 + $0x98] sm:$0xff]
    %v1076 = vld [vmem:[#allocation4 + $0xa0] sm:$0xff]
    %v1077 = vld [vmem:[#allocation4 + $0xa8] sm:$0xff]
    %v1078 = vld [vmem:[#allocation4 + $0xb0] sm:$0xff]
    %v1079 = vld [vmem:[#allocation4 + $0xb8] sm:$0xff]
    %v1080 = vld [vmem:[#allocation4 + $0xc0] sm:$0xff]
    %v1081 = vld [vmem:[#allocation4 + $0xc8] sm:$0xff]
    %v1082 = vld [vmem:[#allocation4 + $0xd0] sm:$0xff]
    %v1083 = vld [vmem:[#allocation4 + $0xd8] sm:$0xff]
    %v1084 = vld [vmem:[#allocation4 + $0xe0] sm:$0xff]
    %v1085 = vld [vmem:[#allocation4 + $0xe8] sm:$0xff]
    %v1086 = vld [vmem:[#allocation4 + $0xf0] sm:$0xff]
    %v1087 = vld [vmem:[#allocation4 + $0xf8] sm:$0xff]
    %v1088 = vld [vmem:[#allocation4 + $0x100] sm:$0xff]
    %v1089 = vld [vmem:[#allocation4 + $0x108] sm:$0xff]
    %v1090 = vld [vmem:[#allocation4 + $0x110] sm:$0xff]
    %v1091 = vld [vmem:[#allocation4 + $0x118] sm:$0xff]
    %v1092 = vld [vmem:[#allocation4 + $0x120] sm:$0xff]
    %v1093 = vld [vmem:[#allocation4 + $0x128] sm:$0xff]
    %v1094 = vld [vmem:[#allocation4 + $0x130] sm:$0xff]
    %v1095 = vld [vmem:[#allocation4 + $0x138] sm:$0xff]
    %v1096 = vld [vmem:[#allocation4 + $0x140] sm:$0xff]
    %v1097 = vld [vmem:[#allocation4 + $0x148] sm:$0xff]
    %v1098 = vld [vmem:[#allocation4 + $0x150] sm:$0xff]
    %v1099 = vld [vmem:[#allocation4 + $0x158] sm:$0xff]
    %v1100 = vld [vmem:[#allocation4 + $0x160] sm:$0xff]
    %v1101 = vld [vmem:[#allocation4 + $0x168] sm:$0xff]
    %v1102 = vld [vmem:[#allocation4 + $0x170] sm:$0xff]
    %v1103 = vld [vmem:[#allocation4 + $0x178] sm:$0xff]
    %v1104 = vld [vmem:[#allocation4 + $0x180] sm:$0xff]
    %v1105 = vld [vmem:[#allocation4 + $0x188] sm:$0xff]
    %v1106 = vld [vmem:[#allocation4 + $0x190] sm:$0xff]
    %v1107 = vld [vmem:[#allocation4 + $0x198] sm:$0xff]
    %v1108 = vld [vmem:[#allocation4 + $0x1a0] sm:$0xff]
    %v1109 = vld [vmem:[#allocation4 + $0x1a8] sm:$0xff]
    %v1110 = vld [vmem:[#allocation4 + $0x1b0] sm:$0xff]
    %v1111 = vld [vmem:[#allocation4 + $0x1b8] sm:$0xff]
    %v1112 = vld [vmem:[#allocation4 + $0x1c0] sm:$0xff]
    %v1113 = vld [vmem:[#allocation4 + $0x1c8] sm:$0xff]
    %v1114 = vld [vmem:[#allocation4 + $0x1d0] sm:$0xff]
    %v1115 = vld [vmem:[#allocation4 + $0x1d8] sm:$0xff]
    %v1116 = vld [vmem:[#allocation4 + $0x1e0] sm:$0xff]
    %v1117 = vld [vmem:[#allocation4 + $0x1e8] sm:$0xff]
    %v1118 = vld [vmem:[#allocation4 + $0x1f0] sm:$0xff]
    %v1119 = vld [vmem:[#allocation4 + $0x1f8] sm:$0xff]
    %v1120 = vld [vmem:[#allocation4 + $0x200] sm:$0xff]
    %v1121 = vld [vmem:[#allocation4 + $0x208] sm:$0xff]
    %v1122 = vld [vmem:[#allocation4 + $0x210] sm:$0xff]
    %v1123 = vld [vmem:[#allocation4 + $0x218] sm:$0xff]
    %v1124 = vld [vmem:[#allocation4 + $0x220] sm:$0xff]
    %v1125 = vld [vmem:[#allocation4 + $0x228] sm:$0xff]
    %v1126 = vld [vmem:[#allocation4 + $0x230] sm:$0xff]
    %v1127 = vld [vmem:[#allocation4 + $0x238] sm:$0xff]
    %v1128 = vld [vmem:[#allocation4 + $0x240] sm:$0xff]
    %v1129 = vld [vmem:[#allocation4 + $0x248] sm:$0xff]
    %v1130 = vld [vmem:[#allocation4 + $0x250] sm:$0xff]
    %v1131 = vld [vmem:[#allocation4 + $0x258] sm:$0xff]
    %v1132 = vld [vmem:[#allocation4 + $0x260] sm:$0xff]
    %v1133 = vld [vmem:[#allocation4 + $0x268] sm:$0xff]
    %v1134 = vld [vmem:[#allocation4 + $0x270] sm:$0xff]
    %v1135 = vld [vmem:[#allocation4 + $0x278] sm:$0xff]
    %v1136 = vld [vmem:[#allocation4 + $0x280] sm:$0xff]
    %v1137 = vld [vmem:[#allocation4 + $0x288] sm:$0xff]
    %v1138 = vld [vmem:[#allocation4 + $0x290] sm:$0xff]
    %v1139 = vld [vmem:[#allocation4 + $0x298] sm:$0xff]
    %v1140 = vld [vmem:[#allocation4 + $0x2a0] sm:$0xff]
    %v1141 = vld [vmem:[#allocation4 + $0x2a8] sm:$0xff]
    %v1142 = vld [vmem:[#allocation4 + $0x2b0] sm:$0xff]
    %v1143 = vld [vmem:[#allocation4 + $0x2b8] sm:$0xff]
    %v1144 = vld [vmem:[#allocation4 + $0x2c0] sm:$0xff]
    %v1145 = vld [vmem:[#allocation4 + $0x2c8] sm:$0xff]
    %v1146 = vld [vmem:[#allocation4 + $0x2d0] sm:$0xff]
    %v1147 = vld [vmem:[#allocation4 + $0x2d8] sm:$0xff]
    %v1148 = vld [vmem:[#allocation4 + $0x2e0] sm:$0xff]
    %v1149 = vld [vmem:[#allocation4 + $0x2e8] sm:$0xff]
    %v1150 = vld [vmem:[#allocation4 + $0x2f0] sm:$0xff]
    %v1151 = vld [vmem:[#allocation4 + $0x2f8] sm:$0xff]
    %v1152 = vld [vmem:[#allocation4 + $0x300] sm:$0xff]
    %v1153 = vld [vmem:[#allocation4 + $0x308] sm:$0xff]
    %v1154 = vld [vmem:[#allocation4 + $0x310] sm:$0xff]
    %v1155 = vld [vmem:[#allocation4 + $0x318] sm:$0xff]
    %v1156 = vld [vmem:[#allocation4 + $0x320] sm:$0xff]
    %v1157 = vld [vmem:[#allocation4 + $0x328] sm:$0xff]
    %v1158 = vld [vmem:[#allocation4 + $0x330] sm:$0xff]
    %v1159 = vld [vmem:[#allocation4 + $0x338] sm:$0xff]
    %v1160 = vld [vmem:[#allocation4 + $0x340] sm:$0xff]
    %v1161 = vld [vmem:[#allocation4 + $0x348] sm:$0xff]
    %v1162 = vld [vmem:[#allocation4 + $0x350] sm:$0xff]
    %v1163 = vld [vmem:[#allocation4 + $0x358] sm:$0xff]
    %v1164 = vld [vmem:[#allocation4 + $0x360] sm:$0xff]
    %v1165 = vld [vmem:[#allocation4 + $0x368] sm:$0xff]
    %v1166 = vld [vmem:[#allocation4 + $0x370] sm:$0xff]
    %v1167 = vld [vmem:[#allocation4 + $0x378] sm:$0xff]
    %v1168 = vld [vmem:[#allocation4 + $0x380] sm:$0xff]
    %v1169 = vld [vmem:[#allocation4 + $0x388] sm:$0xff]
    %v1170 = vld [vmem:[#allocation4 + $0x390] sm:$0xff]
    %v1171 = vld [vmem:[#allocation4 + $0x398] sm:$0xff]
    %v1172 = vld [vmem:[#allocation4 + $0x3a0] sm:$0xff]
    %v1173 = vld [vmem:[#allocation4 + $0x3a8] sm:$0xff]
    %v1174 = vld [vmem:[#allocation4 + $0x3b0] sm:$0xff]
    %v1175 = vld [vmem:[#allocation4 + $0x3b8] sm:$0xff]
    %v1176 = vld [vmem:[#allocation4 + $0x3c0] sm:$0xff]
    %v1177 = vld [vmem:[#allocation4 + $0x3c8] sm:$0xff]
    %v1178 = vld [vmem:[#allocation4 + $0x3d0] sm:$0xff]
    %v1179 = vld [vmem:[#allocation4 + $0x3d8] sm:$0xff]
    %v1180 = vld [vmem:[#allocation4 + $0x3e0] sm:$0xff]
    %v1181 = vld [vmem:[#allocation4 + $0x3e8] sm:$0xff]
    %v1182 = vld [vmem:[#allocation4 + $0x3f0] sm:$0xff]
    %v1183 = vld [vmem:[#allocation4 + $0x3f8] sm:$0xff]
    %v1184 = vld [vmem:[%s9] sm:$0xff]
    %v1185 = vld [vmem:[%s9 + $0x8] sm:$0xff]
    %v1188 = vperm.slane %v1184, 0
    %v1189 = vperm.slane %v1184, 1
    %v1190 = vperm.slane %v1184, 2
    %v1191 = vperm.slane %v1184, 3
    %v1192 = vperm.slane %v1184, 4
    %v1193 = vperm.slane %v1184, 5
    %v1194 = vperm.slane %v1184, 6
    %v1195 = vperm.slane %v1184, 7
    %v1196 = vperm.slane %v1185, 0
    %v1197 = vperm.slane %v1185, 1
    %v1198 = vperm.slane %v1185, 2
    %v1199 = vperm.slane %v1185, 3
    %v1200 = vperm.slane %v1185, 4
    %v1201 = vperm.slane %v1185, 5
    %v1202 = vperm.slane %v1185, 6
    %v1203 = vperm.slane %v1185, 7
    %v1348 = vunpack.c.l.b16 %v1056
    %v1349 = vunpack.c.h.b16 %v1056
    %v1350 = vunpack.c.l.b16 %v1057
    %v1351 = vunpack.c.h.b16 %v1057
    %v1352 = vunpack.c.l.b16 %v1058
    %v1353 = vunpack.c.h.b16 %v1058
    %v1354 = vunpack.c.l.b16 %v1059
    %v1355 = vunpack.c.h.b16 %v1059
    %v1356 = vunpack.c.l.b16 %v1060
    %v1357 = vunpack.c.h.b16 %v1060
    %v1358 = vunpack.c.l.b16 %v1061
    %v1359 = vunpack.c.h.b16 %v1061
    %v1360 = vunpack.c.l.b16 %v1062
    %v1361 = vunpack.c.h.b16 %v1062
    %v1362 = vunpack.c.l.b16 %v1063
    %v1363 = vunpack.c.h.b16 %v1063
    %v1364 = vunpack.c.l.b16 %v1064
    %v1365 = vunpack.c.h.b16 %v1064
    %v1366 = vunpack.c.l.b16 %v1065
    %v1367 = vunpack.c.h.b16 %v1065
    %v1368 = vunpack.c.l.b16 %v1066
    %v1369 = vunpack.c.h.b16 %v1066
    %v1370 = vunpack.c.l.b16 %v1067
    %v1371 = vunpack.c.h.b16 %v1067
    %v1372 = vunpack.c.l.b16 %v1068
    %v1373 = vunpack.c.h.b16 %v1068
    %v1374 = vunpack.c.l.b16 %v1069
    %v1375 = vunpack.c.h.b16 %v1069
    %v1376 = vunpack.c.l.b16 %v1070
    %v1377 = vunpack.c.h.b16 %v1070
    %v1378 = vunpack.c.l.b16 %v1071
    %v1379 = vunpack.c.h.b16 %v1071
    %v1380 = vunpack.c.l.b16 %v1072
    %v1381 = vunpack.c.h.b16 %v1072
    %v1382 = vunpack.c.l.b16 %v1073
    %v1383 = vunpack.c.h.b16 %v1073
    %v1384 = vunpack.c.l.b16 %v1074
    %v1385 = vunpack.c.h.b16 %v1074
    %v1386 = vunpack.c.l.b16 %v1075
    %v1387 = vunpack.c.h.b16 %v1075
    %v1388 = vunpack.c.l.b16 %v1076
    %v1389 = vunpack.c.h.b16 %v1076
    %v1390 = vunpack.c.l.b16 %v1077
    %v1391 = vunpack.c.h.b16 %v1077
    %v1392 = vunpack.c.l.b16 %v1078
    %v1393 = vunpack.c.h.b16 %v1078
    %v1394 = vunpack.c.l.b16 %v1079
    %v1395 = vunpack.c.h.b16 %v1079
    %v1396 = vunpack.c.l.b16 %v1080
    %v1397 = vunpack.c.h.b16 %v1080
    %v1398 = vunpack.c.l.b16 %v1081
    %v1399 = vunpack.c.h.b16 %v1081
    %v1400 = vunpack.c.l.b16 %v1082
    %v1401 = vunpack.c.h.b16 %v1082
    %v1402 = vunpack.c.l.b16 %v1083
    %v1403 = vunpack.c.h.b16 %v1083
    %v1404 = vunpack.c.l.b16 %v1084
    %v1405 = vunpack.c.h.b16 %v1084
    %v1406 = vunpack.c.l.b16 %v1085
    %v1407 = vunpack.c.h.b16 %v1085
    %v1408 = vunpack.c.l.b16 %v1086
    %v1409 = vunpack.c.h.b16 %v1086
    %v1410 = vunpack.c.l.b16 %v1087
    %v1411 = vunpack.c.h.b16 %v1087
    %v1412 = vunpack.c.l.b16 %v1088
    %v1413 = vunpack.c.h.b16 %v1088
    %v1414 = vunpack.c.l.b16 %v1089
    %v1415 = vunpack.c.h.b16 %v1089
    %v1416 = vunpack.c.l.b16 %v1090
    %v1417 = vunpack.c.h.b16 %v1090
    %v1418 = vunpack.c.l.b16 %v1091
    %v1419 = vunpack.c.h.b16 %v1091
    %v1420 = vunpack.c.l.b16 %v1092
    %v1421 = vunpack.c.h.b16 %v1092
    %v1422 = vunpack.c.l.b16 %v1093
    %v1423 = vunpack.c.h.b16 %v1093
    %v1424 = vunpack.c.l.b16 %v1094
    %v1425 = vunpack.c.h.b16 %v1094
    %v1426 = vunpack.c.l.b16 %v1095
    %v1427 = vunpack.c.h.b16 %v1095
    %v1428 = vunpack.c.l.b16 %v1096
    %v1429 = vunpack.c.h.b16 %v1096
    %v1430 = vunpack.c.l.b16 %v1097
    %v1431 = vunpack.c.h.b16 %v1097
    %v1432 = vunpack.c.l.b16 %v1098
    %v1433 = vunpack.c.h.b16 %v1098
    %v1434 = vunpack.c.l.b16 %v1099
    %v1435 = vunpack.c.h.b16 %v1099
    %v1436 = vunpack.c.l.b16 %v1100
    %v1437 = vunpack.c.h.b16 %v1100
    %v1438 = vunpack.c.l.b16 %v1101
    %v1439 = vunpack.c.h.b16 %v1101
    %v1440 = vunpack.c.l.b16 %v1102
    %v1441 = vunpack.c.h.b16 %v1102
    %v1442 = vunpack.c.l.b16 %v1103
    %v1443 = vunpack.c.h.b16 %v1103
    %v1444 = vunpack.c.l.b16 %v1104
    %v1445 = vunpack.c.h.b16 %v1104
    %v1446 = vunpack.c.l.b16 %v1105
    %v1447 = vunpack.c.h.b16 %v1105
    %v1448 = vunpack.c.l.b16 %v1106
    %v1449 = vunpack.c.h.b16 %v1106
    %v1450 = vunpack.c.l.b16 %v1107
    %v1451 = vunpack.c.h.b16 %v1107
    %v1452 = vunpack.c.l.b16 %v1108
    %v1453 = vunpack.c.h.b16 %v1108
    %v1454 = vunpack.c.l.b16 %v1109
    %v1455 = vunpack.c.h.b16 %v1109
    %v1456 = vunpack.c.l.b16 %v1110
    %v1457 = vunpack.c.h.b16 %v1110
    %v1458 = vunpack.c.l.b16 %v1111
    %v1459 = vunpack.c.h.b16 %v1111
    %v1460 = vunpack.c.l.b16 %v1112
    %v1461 = vunpack.c.h.b16 %v1112
    %v1462 = vunpack.c.l.b16 %v1113
    %v1463 = vunpack.c.h.b16 %v1113
    %v1464 = vunpack.c.l.b16 %v1114
    %v1465 = vunpack.c.h.b16 %v1114
    %v1466 = vunpack.c.l.b16 %v1115
    %v1467 = vunpack.c.h.b16 %v1115
    %v1468 = vunpack.c.l.b16 %v1116
    %v1469 = vunpack.c.h.b16 %v1116
    %v1470 = vunpack.c.l.b16 %v1117
    %v1471 = vunpack.c.h.b16 %v1117
    %v1472 = vunpack.c.l.b16 %v1118
    %v1473 = vunpack.c.h.b16 %v1118
    %v1474 = vunpack.c.l.b16 %v1119
    %v1475 = vunpack.c.h.b16 %v1119
    %v1476 = vunpack.c.l.b16 %v1120
    %v1477 = vunpack.c.h.b16 %v1120
    %v1478 = vunpack.c.l.b16 %v1121
    %v1479 = vunpack.c.h.b16 %v1121
    %v1480 = vunpack.c.l.b16 %v1122
    %v1481 = vunpack.c.h.b16 %v1122
    %v1482 = vunpack.c.l.b16 %v1123
    %v1483 = vunpack.c.h.b16 %v1123
    %v1484 = vunpack.c.l.b16 %v1124
    %v1485 = vunpack.c.h.b16 %v1124
    %v1486 = vunpack.c.l.b16 %v1125
    %v1487 = vunpack.c.h.b16 %v1125
    %v1488 = vunpack.c.l.b16 %v1126
    %v1489 = vunpack.c.h.b16 %v1126
    %v1490 = vunpack.c.l.b16 %v1127
    %v1491 = vunpack.c.h.b16 %v1127
    %v1492 = vunpack.c.l.b16 %v1128
    %v1493 = vunpack.c.h.b16 %v1128
    %v1494 = vunpack.c.l.b16 %v1129
    %v1495 = vunpack.c.h.b16 %v1129
    %v1496 = vunpack.c.l.b16 %v1130
    %v1497 = vunpack.c.h.b16 %v1130
    %v1498 = vunpack.c.l.b16 %v1131
    %v1499 = vunpack.c.h.b16 %v1131
    %v1500 = vunpack.c.l.b16 %v1132
    %v1501 = vunpack.c.h.b16 %v1132
    %v1502 = vunpack.c.l.b16 %v1133
    %v1503 = vunpack.c.h.b16 %v1133
    %v1504 = vunpack.c.l.b16 %v1134
    %v1505 = vunpack.c.h.b16 %v1134
    %v1506 = vunpack.c.l.b16 %v1135
    %v1507 = vunpack.c.h.b16 %v1135
    %v1508 = vunpack.c.l.b16 %v1136
    %v1509 = vunpack.c.h.b16 %v1136
    %v1510 = vunpack.c.l.b16 %v1137
    %v1511 = vunpack.c.h.b16 %v1137
    %v1512 = vunpack.c.l.b16 %v1138
    %v1513 = vunpack.c.h.b16 %v1138
    %v1514 = vunpack.c.l.b16 %v1139
    %v1515 = vunpack.c.h.b16 %v1139
    %v1516 = vunpack.c.l.b16 %v1140
    %v1517 = vunpack.c.h.b16 %v1140
    %v1518 = vunpack.c.l.b16 %v1141
    %v1519 = vunpack.c.h.b16 %v1141
    %v1520 = vunpack.c.l.b16 %v1142
    %v1521 = vunpack.c.h.b16 %v1142
    %v1522 = vunpack.c.l.b16 %v1143
    %v1523 = vunpack.c.h.b16 %v1143
    %v1524 = vunpack.c.l.b16 %v1144
    %v1525 = vunpack.c.h.b16 %v1144
    %v1526 = vunpack.c.l.b16 %v1145
    %v1527 = vunpack.c.h.b16 %v1145
    %v1528 = vunpack.c.l.b16 %v1146
    %v1529 = vunpack.c.h.b16 %v1146
    %v1530 = vunpack.c.l.b16 %v1147
    %v1531 = vunpack.c.h.b16 %v1147
    %v1532 = vunpack.c.l.b16 %v1148
    %v1533 = vunpack.c.h.b16 %v1148
    %v1534 = vunpack.c.l.b16 %v1149
    %v1535 = vunpack.c.h.b16 %v1149
    %v1536 = vunpack.c.l.b16 %v1150
    %v1537 = vunpack.c.h.b16 %v1150
    %v1538 = vunpack.c.l.b16 %v1151
    %v1539 = vunpack.c.h.b16 %v1151
    %v1540 = vunpack.c.l.b16 %v1152
    %v1541 = vunpack.c.h.b16 %v1152
    %v1542 = vunpack.c.l.b16 %v1153
    %v1543 = vunpack.c.h.b16 %v1153
    %v1544 = vunpack.c.l.b16 %v1154
    %v1545 = vunpack.c.h.b16 %v1154
    %v1546 = vunpack.c.l.b16 %v1155
    %v1547 = vunpack.c.h.b16 %v1155
    %v1548 = vunpack.c.l.b16 %v1156
    %v1549 = vunpack.c.h.b16 %v1156
    %v1550 = vunpack.c.l.b16 %v1157
    %v1551 = vunpack.c.h.b16 %v1157
    %v1552 = vunpack.c.l.b16 %v1158
    %v1553 = vunpack.c.h.b16 %v1158
    %v1554 = vunpack.c.l.b16 %v1159
    %v1555 = vunpack.c.h.b16 %v1159
    %v1556 = vunpack.c.l.b16 %v1160
    %v1557 = vunpack.c.h.b16 %v1160
    %v1558 = vunpack.c.l.b16 %v1161
    %v1559 = vunpack.c.h.b16 %v1161
    %v1560 = vunpack.c.l.b16 %v1162
    %v1561 = vunpack.c.h.b16 %v1162
    %v1562 = vunpack.c.l.b16 %v1163
    %v1563 = vunpack.c.h.b16 %v1163
    %v1564 = vunpack.c.l.b16 %v1164
    %v1565 = vunpack.c.h.b16 %v1164
    %v1566 = vunpack.c.l.b16 %v1165
    %v1567 = vunpack.c.h.b16 %v1165
    %v1568 = vunpack.c.l.b16 %v1166
    %v1569 = vunpack.c.h.b16 %v1166
    %v1570 = vunpack.c.l.b16 %v1167
    %v1571 = vunpack.c.h.b16 %v1167
    %v1572 = vunpack.c.l.b16 %v1168
    %v1573 = vunpack.c.h.b16 %v1168
    %v1574 = vunpack.c.l.b16 %v1169
    %v1575 = vunpack.c.h.b16 %v1169
    %v1576 = vunpack.c.l.b16 %v1170
    %v1577 = vunpack.c.h.b16 %v1170
    %v1578 = vunpack.c.l.b16 %v1171
    %v1579 = vunpack.c.h.b16 %v1171
    %v1580 = vunpack.c.l.b16 %v1172
    %v1581 = vunpack.c.h.b16 %v1172
    %v1582 = vunpack.c.l.b16 %v1173
    %v1583 = vunpack.c.h.b16 %v1173
    %v1584 = vunpack.c.l.b16 %v1174
    %v1585 = vunpack.c.h.b16 %v1174
    %v1586 = vunpack.c.l.b16 %v1175
    %v1587 = vunpack.c.h.b16 %v1175
    %v1588 = vunpack.c.l.b16 %v1176
    %v1589 = vunpack.c.h.b16 %v1176
    %v1590 = vunpack.c.l.b16 %v1177
    %v1591 = vunpack.c.h.b16 %v1177
    %v1592 = vunpack.c.l.b16 %v1178
    %v1593 = vunpack.c.h.b16 %v1178
    %v1594 = vunpack.c.l.b16 %v1179
    %v1595 = vunpack.c.h.b16 %v1179
    %v1596 = vunpack.c.l.b16 %v1180
    %v1597 = vunpack.c.h.b16 %v1180
    %v1598 = vunpack.c.l.b16 %v1181
    %v1599 = vunpack.c.h.b16 %v1181
    %v1600 = vunpack.c.l.b16 %v1182
    %v1601 = vunpack.c.h.b16 %v1182
    %v1602 = vunpack.c.l.b16 %v1183
    %v1603 = vunpack.c.h.b16 %v1183
    %v1604 = vpack.c.b16 %v1364, %v1348
    %v1605 = vpack.c.b16 %v1365, %v1349
    %v1606 = vpack.c.b16 %v1366, %v1350
    %v1607 = vpack.c.b16 %v1367, %v1351
    %v1608 = vpack.c.b16 %v1368, %v1352
    %v1609 = vpack.c.b16 %v1369, %v1353
    %v1610 = vpack.c.b16 %v1370, %v1354
    %v1611 = vpack.c.b16 %v1371, %v1355
    %v1612 = vpack.c.b16 %v1372, %v1356
    %v1613 = vpack.c.b16 %v1373, %v1357
    %v1614 = vpack.c.b16 %v1374, %v1358
    %v1615 = vpack.c.b16 %v1375, %v1359
    %v1616 = vpack.c.b16 %v1376, %v1360
    %v1617 = vpack.c.b16 %v1377, %v1361
    %v1618 = vpack.c.b16 %v1378, %v1362
    %v1619 = vpack.c.b16 %v1379, %v1363
    %v1620 = vpack.c.b16 %v1396, %v1380
    %v1621 = vpack.c.b16 %v1397, %v1381
    %v1622 = vpack.c.b16 %v1398, %v1382
    %v1623 = vpack.c.b16 %v1399, %v1383
    %v1624 = vpack.c.b16 %v1400, %v1384
    %v1625 = vpack.c.b16 %v1401, %v1385
    %v1626 = vpack.c.b16 %v1402, %v1386
    %v1627 = vpack.c.b16 %v1403, %v1387
    %v1628 = vpack.c.b16 %v1404, %v1388
    %v1629 = vpack.c.b16 %v1405, %v1389
    %v1630 = vpack.c.b16 %v1406, %v1390
    %v1631 = vpack.c.b16 %v1407, %v1391
    %v1632 = vpack.c.b16 %v1408, %v1392
    %v1633 = vpack.c.b16 %v1409, %v1393
    %v1634 = vpack.c.b16 %v1410, %v1394
    %v1635 = vpack.c.b16 %v1411, %v1395
    %v1636 = vpack.c.b16 %v1428, %v1412
    %v1637 = vpack.c.b16 %v1429, %v1413
    %v1638 = vpack.c.b16 %v1430, %v1414
    %v1639 = vpack.c.b16 %v1431, %v1415
    %v1640 = vpack.c.b16 %v1432, %v1416
    %v1641 = vpack.c.b16 %v1433, %v1417
    %v1642 = vpack.c.b16 %v1434, %v1418
    %v1643 = vpack.c.b16 %v1435, %v1419
    %v1644 = vpack.c.b16 %v1436, %v1420
    %v1645 = vpack.c.b16 %v1437, %v1421
    %v1646 = vpack.c.b16 %v1438, %v1422
    %v1647 = vpack.c.b16 %v1439, %v1423
    %v1648 = vpack.c.b16 %v1440, %v1424
    %v1649 = vpack.c.b16 %v1441, %v1425
    %v1650 = vpack.c.b16 %v1442, %v1426
    %v1651 = vpack.c.b16 %v1443, %v1427
    %v1652 = vpack.c.b16 %v1460, %v1444
    %v1653 = vpack.c.b16 %v1461, %v1445
    %v1654 = vpack.c.b16 %v1462, %v1446
    %v1655 = vpack.c.b16 %v1463, %v1447
    %v1656 = vpack.c.b16 %v1464, %v1448
    %v1657 = vpack.c.b16 %v1465, %v1449
    %v1658 = vpack.c.b16 %v1466, %v1450
    %v1659 = vpack.c.b16 %v1467, %v1451
    %v1660 = vpack.c.b16 %v1468, %v1452
    %v1661 = vpack.c.b16 %v1469, %v1453
    %v1662 = vpack.c.b16 %v1470, %v1454
    %v1663 = vpack.c.b16 %v1471, %v1455
    %v1664 = vpack.c.b16 %v1472, %v1456
    %v1665 = vpack.c.b16 %v1473, %v1457
    %v1666 = vpack.c.b16 %v1474, %v1458
    %v1667 = vpack.c.b16 %v1475, %v1459
    %v1668 = vpack.c.b16 %v1492, %v1476
    %v1669 = vpack.c.b16 %v1493, %v1477
    %v1670 = vpack.c.b16 %v1494, %v1478
    %v1671 = vpack.c.b16 %v1495, %v1479
    %v1672 = vpack.c.b16 %v1496, %v1480
    %v1673 = vpack.c.b16 %v1497, %v1481
    %v1674 = vpack.c.b16 %v1498, %v1482
    %v1675 = vpack.c.b16 %v1499, %v1483
    %v1676 = vpack.c.b16 %v1500, %v1484
    %v1677 = vpack.c.b16 %v1501, %v1485
    %v1678 = vpack.c.b16 %v1502, %v1486
    %v1679 = vpack.c.b16 %v1503, %v1487
    %v1680 = vpack.c.b16 %v1504, %v1488
    %v1681 = vpack.c.b16 %v1505, %v1489
    %v1682 = vpack.c.b16 %v1506, %v1490
    %v1683 = vpack.c.b16 %v1507, %v1491
    %v1684 = vpack.c.b16 %v1524, %v1508
    %v1685 = vpack.c.b16 %v1525, %v1509
    %v1686 = vpack.c.b16 %v1526, %v1510
    %v1687 = vpack.c.b16 %v1527, %v1511
    %v1688 = vpack.c.b16 %v1528, %v1512
    %v1689 = vpack.c.b16 %v1529, %v1513
    %v1690 = vpack.c.b16 %v1530, %v1514
    %v1691 = vpack.c.b16 %v1531, %v1515
    %v1692 = vpack.c.b16 %v1532, %v1516
    %v1693 = vpack.c.b16 %v1533, %v1517
    %v1694 = vpack.c.b16 %v1534, %v1518
    %v1695 = vpack.c.b16 %v1535, %v1519
    %v1696 = vpack.c.b16 %v1536, %v1520
    %v1697 = vpack.c.b16 %v1537, %v1521
    %v1698 = vpack.c.b16 %v1538, %v1522
    %v1699 = vpack.c.b16 %v1539, %v1523
    %v1700 = vpack.c.b16 %v1556, %v1540
    %v1701 = vpack.c.b16 %v1557, %v1541
    %v1702 = vpack.c.b16 %v1558, %v1542
    %v1703 = vpack.c.b16 %v1559, %v1543
    %v1704 = vpack.c.b16 %v1560, %v1544
    %v1705 = vpack.c.b16 %v1561, %v1545
    %v1706 = vpack.c.b16 %v1562, %v1546
    %v1707 = vpack.c.b16 %v1563, %v1547
    %v1708 = vpack.c.b16 %v1564, %v1548
    %v1709 = vpack.c.b16 %v1565, %v1549
    %v1710 = vpack.c.b16 %v1566, %v1550
    %v1711 = vpack.c.b16 %v1567, %v1551
    %v1712 = vpack.c.b16 %v1568, %v1552
    %v1713 = vpack.c.b16 %v1569, %v1553
    %v1714 = vpack.c.b16 %v1570, %v1554
    %v1715 = vpack.c.b16 %v1571, %v1555
    %v1716 = vpack.c.b16 %v1588, %v1572
    %v1717 = vpack.c.b16 %v1589, %v1573
    %v1718 = vpack.c.b16 %v1590, %v1574
    %v1719 = vpack.c.b16 %v1591, %v1575
    %v1720 = vpack.c.b16 %v1592, %v1576
    %v1721 = vpack.c.b16 %v1593, %v1577
    %v1722 = vpack.c.b16 %v1594, %v1578
    %v1723 = vpack.c.b16 %v1595, %v1579
    %v1724 = vpack.c.b16 %v1596, %v1580
    %v1725 = vpack.c.b16 %v1597, %v1581
    %v1726 = vpack.c.b16 %v1598, %v1582
    %v1727 = vpack.c.b16 %v1599, %v1583
    %v1728 = vpack.c.b16 %v1600, %v1584
    %v1729 = vpack.c.b16 %v1601, %v1585
    %v1730 = vpack.c.b16 %v1602, %v1586
    %v1731 = vpack.c.b16 %v1603, %v1587
    %1860 = vmatpush.bf16.msra.mxu0 %v1716
    %1861 = vmatpush.bf16.msra.mxu0 %v1700
    %1862 = vmatpush.bf16.msra.mxu0 %v1684
    %1863 = vmatpush.bf16.msra.mxu0 %v1668
    %1864 = vmatpush.bf16.msra.mxu0 %v1652
    %1865 = vmatpush.bf16.msra.mxu0 %v1636
    %1866 = vmatpush.bf16.msra.mxu0 %v1620
    %1867 = vmatpush.bf16.msra.mxu0 %v1604
    %1868 = vmatmul.bf16.gmra.mxu0 %v1055
    %v1869 = vpop.f32.mrf.mxu0
    %v1870 = vadd.f32 %v1188, %v1869
    %v1871 = vpop.f32.mrf.mxu0
    %v1872 = vadd.f32 %v1188, %v1871
    %1873 = vdwg.mxu0
    %1874 = vmatpush.bf16.msra.mxu0 %v1717
    %1875 = vmatpush.bf16.msra.mxu0 %v1701
    %1876 = vmatpush.bf16.msra.mxu0 %v1685
    %1877 = vmatpush.bf16.msra.mxu0 %v1669
    %1878 = vmatpush.bf16.msra.mxu0 %v1653
    %1879 = vmatpush.bf16.msra.mxu0 %v1637
    %1880 = vmatpush.bf16.msra.mxu0 %v1621
    %1881 = vmatpush.bf16.msra.mxu0 %v1605
    %1882 = vmatmul.bf16.gmra.mxu0 %v1055
    %v1883 = vpop.f32.mrf.mxu0
    %v1884 = vadd.f32 %v1189, %v1883
    %v1885 = vpop.f32.mrf.mxu0
    %v1886 = vadd.f32 %v1189, %v1885
    %1887 = vdwg.mxu0
    %1888 = vmatpush.bf16.msra.mxu0 %v1718
    %1889 = vmatpush.bf16.msra.mxu0 %v1702
    %1890 = vmatpush.bf16.msra.mxu0 %v1686
    %1891 = vmatpush.bf16.msra.mxu0 %v1670
    %1892 = vmatpush.bf16.msra.mxu0 %v1654
    %1893 = vmatpush.bf16.msra.mxu0 %v1638
    %1894 = vmatpush.bf16.msra.mxu0 %v1622
    %1895 = vmatpush.bf16.msra.mxu0 %v1606
    %1896 = vmatmul.bf16.gmra.mxu0 %v1055
    %v1897 = vpop.f32.mrf.mxu0
    %v1898 = vadd.f32 %v1190, %v1897
    %v1899 = vpop.f32.mrf.mxu0
    %v1900 = vadd.f32 %v1190, %v1899
    %1901 = vdwg.mxu0
    %1902 = vmatpush.bf16.msra.mxu0 %v1719
    %1903 = vmatpush.bf16.msra.mxu0 %v1703
    %1904 = vmatpush.bf16.msra.mxu0 %v1687
    %1905 = vmatpush.bf16.msra.mxu0 %v1671
    %1906 = vmatpush.bf16.msra.mxu0 %v1655
    %1907 = vmatpush.bf16.msra.mxu0 %v1639
    %1908 = vmatpush.bf16.msra.mxu0 %v1623
    %1909 = vmatpush.bf16.msra.mxu0 %v1607
    %1910 = vmatmul.bf16.gmra.mxu0 %v1055
    %v1911 = vpop.f32.mrf.mxu0
    %v1912 = vadd.f32 %v1191, %v1911
    %v1913 = vpop.f32.mrf.mxu0
    %v1914 = vadd.f32 %v1191, %v1913
    %1915 = vdwg.mxu0
    %1916 = vmatpush.bf16.msra.mxu0 %v1720
    %1917 = vmatpush.bf16.msra.mxu0 %v1704
    %1918 = vmatpush.bf16.msra.mxu0 %v1688
    %1919 = vmatpush.bf16.msra.mxu0 %v1672
    %1920 = vmatpush.bf16.msra.mxu0 %v1656
    %1921 = vmatpush.bf16.msra.mxu0 %v1640
    %1922 = vmatpush.bf16.msra.mxu0 %v1624
    %1923 = vmatpush.bf16.msra.mxu0 %v1608
    %1924 = vmatmul.bf16.gmra.mxu0 %v1055
    %v1925 = vpop.f32.mrf.mxu0
    %v1926 = vadd.f32 %v1192, %v1925
    %v1927 = vpop.f32.mrf.mxu0
    %v1928 = vadd.f32 %v1192, %v1927
    %1929 = vdwg.mxu0
    %1930 = vmatpush.bf16.msra.mxu0 %v1721
    %1931 = vmatpush.bf16.msra.mxu0 %v1705
    %1932 = vmatpush.bf16.msra.mxu0 %v1689
    %1933 = vmatpush.bf16.msra.mxu0 %v1673
    %1934 = vmatpush.bf16.msra.mxu0 %v1657
    %1935 = vmatpush.bf16.msra.mxu0 %v1641
    %1936 = vmatpush.bf16.msra.mxu0 %v1625
    %1937 = vmatpush.bf16.msra.mxu0 %v1609
    %1938 = vmatmul.bf16.gmra.mxu0 %v1055
    %v1939 = vpop.f32.mrf.mxu0
    %v1940 = vadd.f32 %v1193, %v1939
    %v1941 = vpop.f32.mrf.mxu0
    %v1942 = vadd.f32 %v1193, %v1941
    %1943 = vdwg.mxu0
    %1944 = vmatpush.bf16.msra.mxu0 %v1722
    %1945 = vmatpush.bf16.msra.mxu0 %v1706
    %1946 = vmatpush.bf16.msra.mxu0 %v1690
    %1947 = vmatpush.bf16.msra.mxu0 %v1674
    %1948 = vmatpush.bf16.msra.mxu0 %v1658
    %1949 = vmatpush.bf16.msra.mxu0 %v1642
    %1950 = vmatpush.bf16.msra.mxu0 %v1626
    %1951 = vmatpush.bf16.msra.mxu0 %v1610
    %1952 = vmatmul.bf16.gmra.mxu0 %v1055
    %v1953 = vpop.f32.mrf.mxu0
    %v1954 = vadd.f32 %v1194, %v1953
    %v1955 = vpop.f32.mrf.mxu0
    %v1956 = vadd.f32 %v1194, %v1955
    %1957 = vdwg.mxu0
    %1958 = vmatpush.bf16.msra.mxu0 %v1723
    %1959 = vmatpush.bf16.msra.mxu0 %v1707
    %1960 = vmatpush.bf16.msra.mxu0 %v1691
    %1961 = vmatpush.bf16.msra.mxu0 %v1675
    %1962 = vmatpush.bf16.msra.mxu0 %v1659
    %1963 = vmatpush.bf16.msra.mxu0 %v1643
    %1964 = vmatpush.bf16.msra.mxu0 %v1627
    %1965 = vmatpush.bf16.msra.mxu0 %v1611
    %1966 = vmatmul.bf16.gmra.mxu0 %v1055
    %v1967 = vpop.f32.mrf.mxu0
    %v1968 = vadd.f32 %v1195, %v1967
    %v1969 = vpop.f32.mrf.mxu0
    %v1970 = vadd.f32 %v1195, %v1969
    %1971 = vdwg.mxu0
    %1972 = vmatpush.bf16.msra.mxu0 %v1724
    %1973 = vmatpush.bf16.msra.mxu0 %v1708
    %1974 = vmatpush.bf16.msra.mxu0 %v1692
    %1975 = vmatpush.bf16.msra.mxu0 %v1676
    %1976 = vmatpush.bf16.msra.mxu0 %v1660
    %1977 = vmatpush.bf16.msra.mxu0 %v1644
    %1978 = vmatpush.bf16.msra.mxu0 %v1628
    %1979 = vmatpush.bf16.msra.mxu0 %v1612
    %1980 = vmatmul.bf16.gmra.mxu0 %v1055
    %v1981 = vpop.f32.mrf.mxu0
    %v1982 = vadd.f32 %v1196, %v1981
    %v1983 = vpop.f32.mrf.mxu0
    %v1984 = vadd.f32 %v1196, %v1983
    %1985 = vdwg.mxu0
    %1986 = vmatpush.bf16.msra.mxu0 %v1725
    %1987 = vmatpush.bf16.msra.mxu0 %v1709
    %1988 = vmatpush.bf16.msra.mxu0 %v1693
    %1989 = vmatpush.bf16.msra.mxu0 %v1677
    %1990 = vmatpush.bf16.msra.mxu0 %v1661
    %1991 = vmatpush.bf16.msra.mxu0 %v1645
    %1992 = vmatpush.bf16.msra.mxu0 %v1629
    %1993 = vmatpush.bf16.msra.mxu0 %v1613
    %1994 = vmatmul.bf16.gmra.mxu0 %v1055
    %v1995 = vpop.f32.mrf.mxu0
    %v1996 = vadd.f32 %v1197, %v1995
    %v1997 = vpop.f32.mrf.mxu0
    %v1998 = vadd.f32 %v1197, %v1997
    %1999 = vdwg.mxu0
    %2000 = vmatpush.bf16.msra.mxu0 %v1726
    %2001 = vmatpush.bf16.msra.mxu0 %v1710
    %2002 = vmatpush.bf16.msra.mxu0 %v1694
    %2003 = vmatpush.bf16.msra.mxu0 %v1678
    %2004 = vmatpush.bf16.msra.mxu0 %v1662
    %2005 = vmatpush.bf16.msra.mxu0 %v1646
    %2006 = vmatpush.bf16.msra.mxu0 %v1630
    %2007 = vmatpush.bf16.msra.mxu0 %v1614
    %2008 = vmatmul.bf16.gmra.mxu0 %v1055
    %v2009 = vpop.f32.mrf.mxu0
    %v2010 = vadd.f32 %v1198, %v2009
    %v2011 = vpop.f32.mrf.mxu0
    %v2012 = vadd.f32 %v1198, %v2011
    %2013 = vdwg.mxu0
    %2014 = vmatpush.bf16.msra.mxu0 %v1727
    %2015 = vmatpush.bf16.msra.mxu0 %v1711
    %2016 = vmatpush.bf16.msra.mxu0 %v1695
    %2017 = vmatpush.bf16.msra.mxu0 %v1679
    %2018 = vmatpush.bf16.msra.mxu0 %v1663
    %2019 = vmatpush.bf16.msra.mxu0 %v1647
    %2020 = vmatpush.bf16.msra.mxu0 %v1631
    %2021 = vmatpush.bf16.msra.mxu0 %v1615
    %2022 = vmatmul.bf16.gmra.mxu0 %v1055
    %v2023 = vpop.f32.mrf.mxu0
    %v2024 = vadd.f32 %v1199, %v2023
    %v2025 = vpop.f32.mrf.mxu0
    %v2026 = vadd.f32 %v1199, %v2025
    %2027 = vdwg.mxu0
    %2028 = vmatpush.bf16.msra.mxu0 %v1728
    %2029 = vmatpush.bf16.msra.mxu0 %v1712
    %2030 = vmatpush.bf16.msra.mxu0 %v1696
    %2031 = vmatpush.bf16.msra.mxu0 %v1680
    %2032 = vmatpush.bf16.msra.mxu0 %v1664
    %2033 = vmatpush.bf16.msra.mxu0 %v1648
    %2034 = vmatpush.bf16.msra.mxu0 %v1632
    %2035 = vmatpush.bf16.msra.mxu0 %v1616
    %2036 = vmatmul.bf16.gmra.mxu0 %v1055
    %v2037 = vpop.f32.mrf.mxu0
    %v2038 = vadd.f32 %v1200, %v2037
    %v2039 = vpop.f32.mrf.mxu0
    %v2040 = vadd.f32 %v1200, %v2039
    %2041 = vdwg.mxu0
    %2042 = vmatpush.bf16.msra.mxu0 %v1729
    %2043 = vmatpush.bf16.msra.mxu0 %v1713
    %2044 = vmatpush.bf16.msra.mxu0 %v1697
    %2045 = vmatpush.bf16.msra.mxu0 %v1681
    %2046 = vmatpush.bf16.msra.mxu0 %v1665
    %2047 = vmatpush.bf16.msra.mxu0 %v1649
    %2048 = vmatpush.bf16.msra.mxu0 %v1633
    %2049 = vmatpush.bf16.msra.mxu0 %v1617
    %2050 = vmatmul.bf16.gmra.mxu0 %v1055
    %v2051 = vpop.f32.mrf.mxu0
    %v2052 = vadd.f32 %v1201, %v2051
    %v2053 = vpop.f32.mrf.mxu0
    %v2054 = vadd.f32 %v1201, %v2053
    %2055 = vdwg.mxu0
    %2056 = vmatpush.bf16.msra.mxu0 %v1730
    %2057 = vmatpush.bf16.msra.mxu0 %v1714
    %2058 = vmatpush.bf16.msra.mxu0 %v1698
    %2059 = vmatpush.bf16.msra.mxu0 %v1682
    %2060 = vmatpush.bf16.msra.mxu0 %v1666
    %2061 = vmatpush.bf16.msra.mxu0 %v1650
    %2062 = vmatpush.bf16.msra.mxu0 %v1634
    %2063 = vmatpush.bf16.msra.mxu0 %v1618
    %2064 = vmatmul.bf16.gmra.mxu0 %v1055
    %v2065 = vpop.f32.mrf.mxu0
    %v2066 = vadd.f32 %v1202, %v2065
    %v2067 = vpop.f32.mrf.mxu0
    %v2068 = vadd.f32 %v1202, %v2067
    %2069 = vdwg.mxu0
    %2070 = vmatpush.bf16.msra.mxu0 %v1731
    %2071 = vmatpush.bf16.msra.mxu0 %v1715
    %2072 = vmatpush.bf16.msra.mxu0 %v1699
    %2073 = vmatpush.bf16.msra.mxu0 %v1683
    %2074 = vmatpush.bf16.msra.mxu0 %v1667
    %2075 = vmatpush.bf16.msra.mxu0 %v1651
    %2076 = vmatpush.bf16.msra.mxu0 %v1635
    %2077 = vmatpush.bf16.msra.mxu0 %v1619
    %2078 = vmatmul.bf16.gmra.mxu0 %v1055
    %v2079 = vpop.f32.mrf.mxu0
    %v2080 = vadd.f32 %v1203, %v2079
    %v2081 = vpop.f32.mrf.mxu0
    %v2082 = vadd.f32 %v1203, %v2081
    %2083 = vdwg.mxu0
    %v2084 = vmax.f32 %v1870, 0.0
    %v2085 = vmax.f32 %v1884, 0.0
    %v2086 = vmax.f32 %v1898, 0.0
    %v2087 = vmax.f32 %v1912, 0.0
    %v2088 = vmax.f32 %v1926, 0.0
    %v2089 = vmax.f32 %v1940, 0.0
    %v2090 = vmax.f32 %v1954, 0.0
    %v2091 = vmax.f32 %v1968, 0.0
    %v2092 = vmax.f32 %v1982, 0.0
    %v2093 = vmax.f32 %v1996, 0.0
    %v2094 = vmax.f32 %v2010, 0.0
    %v2095 = vmax.f32 %v2024, 0.0
    %v2096 = vmax.f32 %v2038, 0.0
    %v2097 = vmax.f32 %v2052, 0.0
    %v2098 = vmax.f32 %v2066, 0.0
    %v2099 = vmax.f32 %v2080, 0.0
    %v2100 = vmax.f32 %v1872, 0.0
    %v2101 = vmax.f32 %v1886, 0.0
    %v2102 = vmax.f32 %v1900, 0.0
    %v2103 = vmax.f32 %v1914, 0.0
    %v2104 = vmax.f32 %v1928, 0.0
    %v2105 = vmax.f32 %v1942, 0.0
    %v2106 = vmax.f32 %v1956, 0.0
    %v2107 = vmax.f32 %v1970, 0.0
    %v2108 = vmax.f32 %v1984, 0.0
    %v2109 = vmax.f32 %v1998, 0.0
    %v2110 = vmax.f32 %v2012, 0.0
    %v2111 = vmax.f32 %v2026, 0.0
    %v2112 = vmax.f32 %v2040, 0.0
    %v2113 = vmax.f32 %v2054, 0.0
    %v2114 = vmax.f32 %v2068, 0.0
    %v2115 = vmax.f32 %v2082, 0.0
    %v2116 = vpack.c.bf16 %v2100, %v2084
    %v2117 = vpack.c.bf16 %v2101, %v2085
    %v2118 = vpack.c.bf16 %v2102, %v2086
    %v2119 = vpack.c.bf16 %v2103, %v2087
    %v2120 = vpack.c.bf16 %v2104, %v2088
    %v2121 = vpack.c.bf16 %v2105, %v2089
    %v2122 = vpack.c.bf16 %v2106, %v2090
    %v2123 = vpack.c.bf16 %v2107, %v2091
    %v2124 = vpack.c.bf16 %v2108, %v2092
    %v2125 = vpack.c.bf16 %v2109, %v2093
    %v2126 = vpack.c.bf16 %v2110, %v2094
    %v2127 = vpack.c.bf16 %v2111, %v2095
    %v2128 = vpack.c.bf16 %v2112, %v2096
    %v2129 = vpack.c.bf16 %v2113, %v2097
    %v2130 = vpack.c.bf16 %v2114, %v2098
    %v2131 = vpack.c.bf16 %v2115, %v2099
    %v2132 = vld [vmem:[#allocation6] sm:$0xf]
    %v2133 = vld [vmem:[#allocation6 + $0x4] sm:$0xf]
    %v2134 = vld [vmem:[#allocation6 + $0x8] sm:$0xf]
    %v2135 = vld [vmem:[#allocation6 + $0xc] sm:$0xf]
    %v2136 = vld [vmem:[#allocation6 + $0x10] sm:$0xf]
    %v2137 = vld [vmem:[#allocation6 + $0x14] sm:$0xf]
    %v2138 = vld [vmem:[#allocation6 + $0x18] sm:$0xf]
    %v2139 = vld [vmem:[#allocation6 + $0x1c] sm:$0xf]
    %v2140 = vld [vmem:[#allocation6 + $0x20] sm:$0xf]
    %v2141 = vld [vmem:[#allocation6 + $0x24] sm:$0xf]
    %v2142 = vld [vmem:[#allocation6 + $0x28] sm:$0xf]
    %v2143 = vld [vmem:[#allocation6 + $0x2c] sm:$0xf]
    %v2144 = vld [vmem:[#allocation6 + $0x30] sm:$0xf]
    %v2145 = vld [vmem:[#allocation6 + $0x34] sm:$0xf]
    %v2146 = vld [vmem:[#allocation6 + $0x38] sm:$0xf]
    %v2147 = vld [vmem:[#allocation6 + $0x3c] sm:$0xf]
    %v2148 = vld [vmem:[#allocation6 + $0x40] sm:$0xf]
    %v2149 = vld [vmem:[#allocation6 + $0x44] sm:$0xf]
    %v2150 = vld [vmem:[#allocation6 + $0x48] sm:$0xf]
    %v2151 = vld [vmem:[#allocation6 + $0x4c] sm:$0xf]
    %v2152 = vld [vmem:[#allocation6 + $0x50] sm:$0xf]
    %v2153 = vld [vmem:[#allocation6 + $0x54] sm:$0xf]
    %v2154 = vld [vmem:[#allocation6 + $0x58] sm:$0xf]
    %v2155 = vld [vmem:[#allocation6 + $0x5c] sm:$0xf]
    %v2156 = vld [vmem:[#allocation6 + $0x60] sm:$0xf]
    %v2157 = vld [vmem:[#allocation6 + $0x64] sm:$0xf]
    %v2158 = vld [vmem:[#allocation6 + $0x68] sm:$0xf]
    %v2159 = vld [vmem:[#allocation6 + $0x6c] sm:$0xf]
    %v2160 = vld [vmem:[#allocation6 + $0x70] sm:$0xf]
    %v2161 = vld [vmem:[#allocation6 + $0x74] sm:$0xf]
    %v2162 = vld [vmem:[#allocation6 + $0x78] sm:$0xf]
    %v2163 = vld [vmem:[#allocation6 + $0x7c] sm:$0xf]
    %v2164 = vld [vmem:[#allocation6 + $0x80] sm:$0xf]
    %v2165 = vld [vmem:[#allocation6 + $0x84] sm:$0xf]
    %v2166 = vld [vmem:[#allocation6 + $0x88] sm:$0xf]
    %v2167 = vld [vmem:[#allocation6 + $0x8c] sm:$0xf]
    %v2168 = vld [vmem:[#allocation6 + $0x90] sm:$0xf]
    %v2169 = vld [vmem:[#allocation6 + $0x94] sm:$0xf]
    %v2170 = vld [vmem:[#allocation6 + $0x98] sm:$0xf]
    %v2171 = vld [vmem:[#allocation6 + $0x9c] sm:$0xf]
    %v2172 = vld [vmem:[#allocation6 + $0xa0] sm:$0xf]
    %v2173 = vld [vmem:[#allocation6 + $0xa4] sm:$0xf]
    %v2174 = vld [vmem:[#allocation6 + $0xa8] sm:$0xf]
    %v2175 = vld [vmem:[#allocation6 + $0xac] sm:$0xf]
    %v2176 = vld [vmem:[#allocation6 + $0xb0] sm:$0xf]
    %v2177 = vld [vmem:[#allocation6 + $0xb4] sm:$0xf]
    %v2178 = vld [vmem:[#allocation6 + $0xb8] sm:$0xf]
    %v2179 = vld [vmem:[#allocation6 + $0xbc] sm:$0xf]
    %v2180 = vld [vmem:[#allocation6 + $0xc0] sm:$0xf]
    %v2181 = vld [vmem:[#allocation6 + $0xc4] sm:$0xf]
    %v2182 = vld [vmem:[#allocation6 + $0xc8] sm:$0xf]
    %v2183 = vld [vmem:[#allocation6 + $0xcc] sm:$0xf]
    %v2184 = vld [vmem:[#allocation6 + $0xd0] sm:$0xf]
    %v2185 = vld [vmem:[#allocation6 + $0xd4] sm:$0xf]
    %v2186 = vld [vmem:[#allocation6 + $0xd8] sm:$0xf]
    %v2187 = vld [vmem:[#allocation6 + $0xdc] sm:$0xf]
    %v2188 = vld [vmem:[#allocation6 + $0xe0] sm:$0xf]
    %v2189 = vld [vmem:[#allocation6 + $0xe4] sm:$0xf]
    %v2190 = vld [vmem:[#allocation6 + $0xe8] sm:$0xf]
    %v2191 = vld [vmem:[#allocation6 + $0xec] sm:$0xf]
    %v2192 = vld [vmem:[#allocation6 + $0xf0] sm:$0xf]
    %v2193 = vld [vmem:[#allocation6 + $0xf4] sm:$0xf]
    %v2194 = vld [vmem:[#allocation6 + $0xf8] sm:$0xf]
    %v2195 = vld [vmem:[#allocation6 + $0xfc] sm:$0xf]
    %v2196 = vld [vmem:[#allocation6 + $0x100] sm:$0xf]
    %v2197 = vld [vmem:[#allocation6 + $0x104] sm:$0xf]
    %v2198 = vld [vmem:[#allocation6 + $0x108] sm:$0xf]
    %v2199 = vld [vmem:[#allocation6 + $0x10c] sm:$0xf]
    %v2200 = vld [vmem:[#allocation6 + $0x110] sm:$0xf]
    %v2201 = vld [vmem:[#allocation6 + $0x114] sm:$0xf]
    %v2202 = vld [vmem:[#allocation6 + $0x118] sm:$0xf]
    %v2203 = vld [vmem:[#allocation6 + $0x11c] sm:$0xf]
    %v2204 = vld [vmem:[#allocation6 + $0x120] sm:$0xf]
    %v2205 = vld [vmem:[#allocation6 + $0x124] sm:$0xf]
    %v2206 = vld [vmem:[#allocation6 + $0x128] sm:$0xf]
    %v2207 = vld [vmem:[#allocation6 + $0x12c] sm:$0xf]
    %v2208 = vld [vmem:[#allocation6 + $0x130] sm:$0xf]
    %v2209 = vld [vmem:[#allocation6 + $0x134] sm:$0xf]
    %v2210 = vld [vmem:[#allocation6 + $0x138] sm:$0xf]
    %v2211 = vld [vmem:[#allocation6 + $0x13c] sm:$0xf]
    %v2212 = vld [vmem:[#allocation6 + $0x140] sm:$0xf]
    %v2213 = vld [vmem:[#allocation6 + $0x144] sm:$0xf]
    %v2214 = vld [vmem:[#allocation6 + $0x148] sm:$0xf]
    %v2215 = vld [vmem:[#allocation6 + $0x14c] sm:$0xf]
    %v2216 = vld [vmem:[#allocation6 + $0x150] sm:$0xf]
    %v2217 = vld [vmem:[#allocation6 + $0x154] sm:$0xf]
    %v2218 = vld [vmem:[#allocation6 + $0x158] sm:$0xf]
    %v2219 = vld [vmem:[#allocation6 + $0x15c] sm:$0xf]
    %v2220 = vld [vmem:[#allocation6 + $0x160] sm:$0xf]
    %v2221 = vld [vmem:[#allocation6 + $0x164] sm:$0xf]
    %v2222 = vld [vmem:[#allocation6 + $0x168] sm:$0xf]
    %v2223 = vld [vmem:[#allocation6 + $0x16c] sm:$0xf]
    %v2224 = vld [vmem:[#allocation6 + $0x170] sm:$0xf]
    %v2225 = vld [vmem:[#allocation6 + $0x174] sm:$0xf]
    %v2226 = vld [vmem:[#allocation6 + $0x178] sm:$0xf]
    %v2227 = vld [vmem:[#allocation6 + $0x17c] sm:$0xf]
    %v2228 = vld [vmem:[#allocation6 + $0x180] sm:$0xf]
    %v2229 = vld [vmem:[#allocation6 + $0x184] sm:$0xf]
    %v2230 = vld [vmem:[#allocation6 + $0x188] sm:$0xf]
    %v2231 = vld [vmem:[#allocation6 + $0x18c] sm:$0xf]
    %v2232 = vld [vmem:[#allocation6 + $0x190] sm:$0xf]
    %v2233 = vld [vmem:[#allocation6 + $0x194] sm:$0xf]
    %v2234 = vld [vmem:[#allocation6 + $0x198] sm:$0xf]
    %v2235 = vld [vmem:[#allocation6 + $0x19c] sm:$0xf]
    %v2236 = vld [vmem:[#allocation6 + $0x1a0] sm:$0xf]
    %v2237 = vld [vmem:[#allocation6 + $0x1a4] sm:$0xf]
    %v2238 = vld [vmem:[#allocation6 + $0x1a8] sm:$0xf]
    %v2239 = vld [vmem:[#allocation6 + $0x1ac] sm:$0xf]
    %v2240 = vld [vmem:[#allocation6 + $0x1b0] sm:$0xf]
    %v2241 = vld [vmem:[#allocation6 + $0x1b4] sm:$0xf]
    %v2242 = vld [vmem:[#allocation6 + $0x1b8] sm:$0xf]
    %v2243 = vld [vmem:[#allocation6 + $0x1bc] sm:$0xf]
    %v2244 = vld [vmem:[#allocation6 + $0x1c0] sm:$0xf]
    %v2245 = vld [vmem:[#allocation6 + $0x1c4] sm:$0xf]
    %v2246 = vld [vmem:[#allocation6 + $0x1c8] sm:$0xf]
    %v2247 = vld [vmem:[#allocation6 + $0x1cc] sm:$0xf]
    %v2248 = vld [vmem:[#allocation6 + $0x1d0] sm:$0xf]
    %v2249 = vld [vmem:[#allocation6 + $0x1d4] sm:$0xf]
    %v2250 = vld [vmem:[#allocation6 + $0x1d8] sm:$0xf]
    %v2251 = vld [vmem:[#allocation6 + $0x1dc] sm:$0xf]
    %v2252 = vld [vmem:[#allocation6 + $0x1e0] sm:$0xf]
    %v2253 = vld [vmem:[#allocation6 + $0x1e4] sm:$0xf]
    %v2254 = vld [vmem:[#allocation6 + $0x1e8] sm:$0xf]
    %v2255 = vld [vmem:[#allocation6 + $0x1ec] sm:$0xf]
    %v2256 = vld [vmem:[#allocation6 + $0x1f0] sm:$0xf]
    %v2257 = vld [vmem:[#allocation6 + $0x1f4] sm:$0xf]
    %v2258 = vld [vmem:[#allocation6 + $0x1f8] sm:$0xf]
    %v2259 = vld [vmem:[#allocation6 + $0x1fc] sm:$0xf]
    %v2260 = vld [vmem:[#allocation6 + $0x200] sm:$0xf]
    %v2261 = vld [vmem:[#allocation6 + $0x204] sm:$0xf]
    %v2262 = vld [vmem:[#allocation6 + $0x208] sm:$0xf]
    %v2263 = vld [vmem:[#allocation6 + $0x20c] sm:$0xf]
    %v2264 = vld [vmem:[#allocation6 + $0x210] sm:$0xf]
    %v2265 = vld [vmem:[#allocation6 + $0x214] sm:$0xf]
    %v2266 = vld [vmem:[#allocation6 + $0x218] sm:$0xf]
    %v2267 = vld [vmem:[#allocation6 + $0x21c] sm:$0xf]
    %v2268 = vld [vmem:[#allocation6 + $0x220] sm:$0xf]
    %v2269 = vld [vmem:[#allocation6 + $0x224] sm:$0xf]
    %v2270 = vld [vmem:[#allocation6 + $0x228] sm:$0xf]
    %v2271 = vld [vmem:[#allocation6 + $0x22c] sm:$0xf]
    %v2272 = vld [vmem:[#allocation6 + $0x230] sm:$0xf]
    %v2273 = vld [vmem:[#allocation6 + $0x234] sm:$0xf]
    %v2274 = vld [vmem:[#allocation6 + $0x238] sm:$0xf]
    %v2275 = vld [vmem:[#allocation6 + $0x23c] sm:$0xf]
    %v2276 = vld [vmem:[#allocation6 + $0x240] sm:$0xf]
    %v2277 = vld [vmem:[#allocation6 + $0x244] sm:$0xf]
    %v2278 = vld [vmem:[#allocation6 + $0x248] sm:$0xf]
    %v2279 = vld [vmem:[#allocation6 + $0x24c] sm:$0xf]
    %v2280 = vld [vmem:[#allocation6 + $0x250] sm:$0xf]
    %v2281 = vld [vmem:[#allocation6 + $0x254] sm:$0xf]
    %v2282 = vld [vmem:[#allocation6 + $0x258] sm:$0xf]
    %v2283 = vld [vmem:[#allocation6 + $0x25c] sm:$0xf]
    %v2284 = vld [vmem:[#allocation6 + $0x260] sm:$0xf]
    %v2285 = vld [vmem:[#allocation6 + $0x264] sm:$0xf]
    %v2286 = vld [vmem:[#allocation6 + $0x268] sm:$0xf]
    %v2287 = vld [vmem:[#allocation6 + $0x26c] sm:$0xf]
    %v2288 = vld [vmem:[#allocation6 + $0x270] sm:$0xf]
    %v2289 = vld [vmem:[#allocation6 + $0x274] sm:$0xf]
    %v2290 = vld [vmem:[#allocation6 + $0x278] sm:$0xf]
    %v2291 = vld [vmem:[#allocation6 + $0x27c] sm:$0xf]
    %v2292 = vld [vmem:[#allocation6 + $0x280] sm:$0xf]
    %v2293 = vld [vmem:[#allocation6 + $0x284] sm:$0xf]
    %v2294 = vld [vmem:[#allocation6 + $0x288] sm:$0xf]
    %v2295 = vld [vmem:[#allocation6 + $0x28c] sm:$0xf]
    %v2296 = vld [vmem:[#allocation6 + $0x290] sm:$0xf]
    %v2297 = vld [vmem:[#allocation6 + $0x294] sm:$0xf]
    %v2298 = vld [vmem:[#allocation6 + $0x298] sm:$0xf]
    %v2299 = vld [vmem:[#allocation6 + $0x29c] sm:$0xf]
    %v2300 = vld [vmem:[#allocation6 + $0x2a0] sm:$0xf]
    %v2301 = vld [vmem:[#allocation6 + $0x2a4] sm:$0xf]
    %v2302 = vld [vmem:[#allocation6 + $0x2a8] sm:$0xf]
    %v2303 = vld [vmem:[#allocation6 + $0x2ac] sm:$0xf]
    %v2304 = vld [vmem:[#allocation6 + $0x2b0] sm:$0xf]
    %v2305 = vld [vmem:[#allocation6 + $0x2b4] sm:$0xf]
    %v2306 = vld [vmem:[#allocation6 + $0x2b8] sm:$0xf]
    %v2307 = vld [vmem:[#allocation6 + $0x2bc] sm:$0xf]
    %v2308 = vld [vmem:[#allocation6 + $0x2c0] sm:$0xf]
    %v2309 = vld [vmem:[#allocation6 + $0x2c4] sm:$0xf]
    %v2310 = vld [vmem:[#allocation6 + $0x2c8] sm:$0xf]
    %v2311 = vld [vmem:[#allocation6 + $0x2cc] sm:$0xf]
    %v2312 = vld [vmem:[#allocation6 + $0x2d0] sm:$0xf]
    %v2313 = vld [vmem:[#allocation6 + $0x2d4] sm:$0xf]
    %v2314 = vld [vmem:[#allocation6 + $0x2d8] sm:$0xf]
    %v2315 = vld [vmem:[#allocation6 + $0x2dc] sm:$0xf]
    %v2316 = vld [vmem:[#allocation6 + $0x2e0] sm:$0xf]
    %v2317 = vld [vmem:[#allocation6 + $0x2e4] sm:$0xf]
    %v2318 = vld [vmem:[#allocation6 + $0x2e8] sm:$0xf]
    %v2319 = vld [vmem:[#allocation6 + $0x2ec] sm:$0xf]
    %v2320 = vld [vmem:[#allocation6 + $0x2f0] sm:$0xf]
    %v2321 = vld [vmem:[#allocation6 + $0x2f4] sm:$0xf]
    %v2322 = vld [vmem:[#allocation6 + $0x2f8] sm:$0xf]
    %v2323 = vld [vmem:[#allocation6 + $0x2fc] sm:$0xf]
    %v2324 = vld [vmem:[#allocation6 + $0x300] sm:$0xf]
    %v2325 = vld [vmem:[#allocation6 + $0x304] sm:$0xf]
    %v2326 = vld [vmem:[#allocation6 + $0x308] sm:$0xf]
    %v2327 = vld [vmem:[#allocation6 + $0x30c] sm:$0xf]
    %v2328 = vld [vmem:[#allocation6 + $0x310] sm:$0xf]
    %v2329 = vld [vmem:[#allocation6 + $0x314] sm:$0xf]
    %v2330 = vld [vmem:[#allocation6 + $0x318] sm:$0xf]
    %v2331 = vld [vmem:[#allocation6 + $0x31c] sm:$0xf]
    %v2332 = vld [vmem:[#allocation6 + $0x320] sm:$0xf]
    %v2333 = vld [vmem:[#allocation6 + $0x324] sm:$0xf]
    %v2334 = vld [vmem:[#allocation6 + $0x328] sm:$0xf]
    %v2335 = vld [vmem:[#allocation6 + $0x32c] sm:$0xf]
    %v2336 = vld [vmem:[#allocation6 + $0x330] sm:$0xf]
    %v2337 = vld [vmem:[#allocation6 + $0x334] sm:$0xf]
    %v2338 = vld [vmem:[#allocation6 + $0x338] sm:$0xf]
    %v2339 = vld [vmem:[#allocation6 + $0x33c] sm:$0xf]
    %v2340 = vld [vmem:[#allocation6 + $0x340] sm:$0xf]
    %v2341 = vld [vmem:[#allocation6 + $0x344] sm:$0xf]
    %v2342 = vld [vmem:[#allocation6 + $0x348] sm:$0xf]
    %v2343 = vld [vmem:[#allocation6 + $0x34c] sm:$0xf]
    %v2344 = vld [vmem:[#allocation6 + $0x350] sm:$0xf]
    %v2345 = vld [vmem:[#allocation6 + $0x354] sm:$0xf]
    %v2346 = vld [vmem:[#allocation6 + $0x358] sm:$0xf]
    %v2347 = vld [vmem:[#allocation6 + $0x35c] sm:$0xf]
    %v2348 = vld [vmem:[#allocation6 + $0x360] sm:$0xf]
    %v2349 = vld [vmem:[#allocation6 + $0x364] sm:$0xf]
    %v2350 = vld [vmem:[#allocation6 + $0x368] sm:$0xf]
    %v2351 = vld [vmem:[#allocation6 + $0x36c] sm:$0xf]
    %v2352 = vld [vmem:[#allocation6 + $0x370] sm:$0xf]
    %v2353 = vld [vmem:[#allocation6 + $0x374] sm:$0xf]
    %v2354 = vld [vmem:[#allocation6 + $0x378] sm:$0xf]
    %v2355 = vld [vmem:[#allocation6 + $0x37c] sm:$0xf]
    %v2356 = vld [vmem:[#allocation6 + $0x380] sm:$0xf]
    %v2357 = vld [vmem:[#allocation6 + $0x384] sm:$0xf]
    %v2358 = vld [vmem:[#allocation6 + $0x388] sm:$0xf]
    %v2359 = vld [vmem:[#allocation6 + $0x38c] sm:$0xf]
    %v2360 = vld [vmem:[#allocation6 + $0x390] sm:$0xf]
    %v2361 = vld [vmem:[#allocation6 + $0x394] sm:$0xf]
    %v2362 = vld [vmem:[#allocation6 + $0x398] sm:$0xf]
    %v2363 = vld [vmem:[#allocation6 + $0x39c] sm:$0xf]
    %v2364 = vld [vmem:[#allocation6 + $0x3a0] sm:$0xf]
    %v2365 = vld [vmem:[#allocation6 + $0x3a4] sm:$0xf]
    %v2366 = vld [vmem:[#allocation6 + $0x3a8] sm:$0xf]
    %v2367 = vld [vmem:[#allocation6 + $0x3ac] sm:$0xf]
    %v2368 = vld [vmem:[#allocation6 + $0x3b0] sm:$0xf]
    %v2369 = vld [vmem:[#allocation6 + $0x3b4] sm:$0xf]
    %v2370 = vld [vmem:[#allocation6 + $0x3b8] sm:$0xf]
    %v2371 = vld [vmem:[#allocation6 + $0x3bc] sm:$0xf]
    %v2372 = vld [vmem:[#allocation6 + $0x3c0] sm:$0xf]
    %v2373 = vld [vmem:[#allocation6 + $0x3c4] sm:$0xf]
    %v2374 = vld [vmem:[#allocation6 + $0x3c8] sm:$0xf]
    %v2375 = vld [vmem:[#allocation6 + $0x3cc] sm:$0xf]
    %v2376 = vld [vmem:[#allocation6 + $0x3d0] sm:$0xf]
    %v2377 = vld [vmem:[#allocation6 + $0x3d4] sm:$0xf]
    %v2378 = vld [vmem:[#allocation6 + $0x3d8] sm:$0xf]
    %v2379 = vld [vmem:[#allocation6 + $0x3dc] sm:$0xf]
    %v2380 = vld [vmem:[#allocation6 + $0x3e0] sm:$0xf]
    %v2381 = vld [vmem:[#allocation6 + $0x3e4] sm:$0xf]
    %v2382 = vld [vmem:[#allocation6 + $0x3e8] sm:$0xf]
    %v2383 = vld [vmem:[#allocation6 + $0x3ec] sm:$0xf]
    %v2384 = vld [vmem:[#allocation6 + $0x3f0] sm:$0xf]
    %v2385 = vld [vmem:[#allocation6 + $0x3f4] sm:$0xf]
    %v2386 = vld [vmem:[#allocation6 + $0x3f8] sm:$0xf]
    %v2387 = vld [vmem:[#allocation6 + $0x3fc] sm:$0xf]
    %v2388 = vld [vmem:[%s11] sm:$0x1]
    %v2390 = vperm.slane %v2388, 0
    %v2648 = vunpack.c.l.b16 %v2132
    %v2649 = vunpack.c.l.b16 %v2133
    %v2650 = vunpack.c.l.b16 %v2134
    %v2651 = vunpack.c.l.b16 %v2135
    %v2652 = vunpack.c.l.b16 %v2136
    %v2653 = vunpack.c.l.b16 %v2137
    %v2654 = vunpack.c.l.b16 %v2138
    %v2655 = vunpack.c.l.b16 %v2139
    %v2656 = vunpack.c.l.b16 %v2140
    %v2657 = vunpack.c.l.b16 %v2141
    %v2658 = vunpack.c.l.b16 %v2142
    %v2659 = vunpack.c.l.b16 %v2143
    %v2660 = vunpack.c.l.b16 %v2144
    %v2661 = vunpack.c.l.b16 %v2145
    %v2662 = vunpack.c.l.b16 %v2146
    %v2663 = vunpack.c.l.b16 %v2147
    %v2664 = vunpack.c.l.b16 %v2148
    %v2665 = vunpack.c.l.b16 %v2149
    %v2666 = vunpack.c.l.b16 %v2150
    %v2667 = vunpack.c.l.b16 %v2151
    %v2668 = vunpack.c.l.b16 %v2152
    %v2669 = vunpack.c.l.b16 %v2153
    %v2670 = vunpack.c.l.b16 %v2154
    %v2671 = vunpack.c.l.b16 %v2155
    %v2672 = vunpack.c.l.b16 %v2156
    %v2673 = vunpack.c.l.b16 %v2157
    %v2674 = vunpack.c.l.b16 %v2158
    %v2675 = vunpack.c.l.b16 %v2159
    %v2676 = vunpack.c.l.b16 %v2160
    %v2677 = vunpack.c.l.b16 %v2161
    %v2678 = vunpack.c.l.b16 %v2162
    %v2679 = vunpack.c.l.b16 %v2163
    %v2680 = vunpack.c.l.b16 %v2164
    %v2681 = vunpack.c.l.b16 %v2165
    %v2682 = vunpack.c.l.b16 %v2166
    %v2683 = vunpack.c.l.b16 %v2167
    %v2684 = vunpack.c.l.b16 %v2168
    %v2685 = vunpack.c.l.b16 %v2169
    %v2686 = vunpack.c.l.b16 %v2170
    %v2687 = vunpack.c.l.b16 %v2171
    %v2688 = vunpack.c.l.b16 %v2172
    %v2689 = vunpack.c.l.b16 %v2173
    %v2690 = vunpack.c.l.b16 %v2174
    %v2691 = vunpack.c.l.b16 %v2175
    %v2692 = vunpack.c.l.b16 %v2176
    %v2693 = vunpack.c.l.b16 %v2177
    %v2694 = vunpack.c.l.b16 %v2178
    %v2695 = vunpack.c.l.b16 %v2179
    %v2696 = vunpack.c.l.b16 %v2180
    %v2697 = vunpack.c.l.b16 %v2181
    %v2698 = vunpack.c.l.b16 %v2182
    %v2699 = vunpack.c.l.b16 %v2183
    %v2700 = vunpack.c.l.b16 %v2184
    %v2701 = vunpack.c.l.b16 %v2185
    %v2702 = vunpack.c.l.b16 %v2186
    %v2703 = vunpack.c.l.b16 %v2187
    %v2704 = vunpack.c.l.b16 %v2188
    %v2705 = vunpack.c.l.b16 %v2189
    %v2706 = vunpack.c.l.b16 %v2190
    %v2707 = vunpack.c.l.b16 %v2191
    %v2708 = vunpack.c.l.b16 %v2192
    %v2709 = vunpack.c.l.b16 %v2193
    %v2710 = vunpack.c.l.b16 %v2194
    %v2711 = vunpack.c.l.b16 %v2195
    %v2712 = vunpack.c.l.b16 %v2196
    %v2713 = vunpack.c.l.b16 %v2197
    %v2714 = vunpack.c.l.b16 %v2198
    %v2715 = vunpack.c.l.b16 %v2199
    %v2716 = vunpack.c.l.b16 %v2200
    %v2717 = vunpack.c.l.b16 %v2201
    %v2718 = vunpack.c.l.b16 %v2202
    %v2719 = vunpack.c.l.b16 %v2203
    %v2720 = vunpack.c.l.b16 %v2204
    %v2721 = vunpack.c.l.b16 %v2205
    %v2722 = vunpack.c.l.b16 %v2206
    %v2723 = vunpack.c.l.b16 %v2207
    %v2724 = vunpack.c.l.b16 %v2208
    %v2725 = vunpack.c.l.b16 %v2209
    %v2726 = vunpack.c.l.b16 %v2210
    %v2727 = vunpack.c.l.b16 %v2211
    %v2728 = vunpack.c.l.b16 %v2212
    %v2729 = vunpack.c.l.b16 %v2213
    %v2730 = vunpack.c.l.b16 %v2214
    %v2731 = vunpack.c.l.b16 %v2215
    %v2732 = vunpack.c.l.b16 %v2216
    %v2733 = vunpack.c.l.b16 %v2217
    %v2734 = vunpack.c.l.b16 %v2218
    %v2735 = vunpack.c.l.b16 %v2219
    %v2736 = vunpack.c.l.b16 %v2220
    %v2737 = vunpack.c.l.b16 %v2221
    %v2738 = vunpack.c.l.b16 %v2222
    %v2739 = vunpack.c.l.b16 %v2223
    %v2740 = vunpack.c.l.b16 %v2224
    %v2741 = vunpack.c.l.b16 %v2225
    %v2742 = vunpack.c.l.b16 %v2226
    %v2743 = vunpack.c.l.b16 %v2227
    %v2744 = vunpack.c.l.b16 %v2228
    %v2745 = vunpack.c.l.b16 %v2229
    %v2746 = vunpack.c.l.b16 %v2230
    %v2747 = vunpack.c.l.b16 %v2231
    %v2748 = vunpack.c.l.b16 %v2232
    %v2749 = vunpack.c.l.b16 %v2233
    %v2750 = vunpack.c.l.b16 %v2234
    %v2751 = vunpack.c.l.b16 %v2235
    %v2752 = vunpack.c.l.b16 %v2236
    %v2753 = vunpack.c.l.b16 %v2237
    %v2754 = vunpack.c.l.b16 %v2238
    %v2755 = vunpack.c.l.b16 %v2239
    %v2756 = vunpack.c.l.b16 %v2240
    %v2757 = vunpack.c.l.b16 %v2241
    %v2758 = vunpack.c.l.b16 %v2242
    %v2759 = vunpack.c.l.b16 %v2243
    %v2760 = vunpack.c.l.b16 %v2244
    %v2761 = vunpack.c.l.b16 %v2245
    %v2762 = vunpack.c.l.b16 %v2246
    %v2763 = vunpack.c.l.b16 %v2247
    %v2764 = vunpack.c.l.b16 %v2248
    %v2765 = vunpack.c.l.b16 %v2249
    %v2766 = vunpack.c.l.b16 %v2250
    %v2767 = vunpack.c.l.b16 %v2251
    %v2768 = vunpack.c.l.b16 %v2252
    %v2769 = vunpack.c.l.b16 %v2253
    %v2770 = vunpack.c.l.b16 %v2254
    %v2771 = vunpack.c.l.b16 %v2255
    %v2772 = vunpack.c.l.b16 %v2256
    %v2773 = vunpack.c.l.b16 %v2257
    %v2774 = vunpack.c.l.b16 %v2258
    %v2775 = vunpack.c.l.b16 %v2259
    %v2776 = vunpack.c.l.b16 %v2260
    %v2777 = vunpack.c.l.b16 %v2261
    %v2778 = vunpack.c.l.b16 %v2262
    %v2779 = vunpack.c.l.b16 %v2263
    %v2780 = vunpack.c.l.b16 %v2264
    %v2781 = vunpack.c.l.b16 %v2265
    %v2782 = vunpack.c.l.b16 %v2266
    %v2783 = vunpack.c.l.b16 %v2267
    %v2784 = vunpack.c.l.b16 %v2268
    %v2785 = vunpack.c.l.b16 %v2269
    %v2786 = vunpack.c.l.b16 %v2270
    %v2787 = vunpack.c.l.b16 %v2271
    %v2788 = vunpack.c.l.b16 %v2272
    %v2789 = vunpack.c.l.b16 %v2273
    %v2790 = vunpack.c.l.b16 %v2274
    %v2791 = vunpack.c.l.b16 %v2275
    %v2792 = vunpack.c.l.b16 %v2276
    %v2793 = vunpack.c.l.b16 %v2277
    %v2794 = vunpack.c.l.b16 %v2278
    %v2795 = vunpack.c.l.b16 %v2279
    %v2796 = vunpack.c.l.b16 %v2280
    %v2797 = vunpack.c.l.b16 %v2281
    %v2798 = vunpack.c.l.b16 %v2282
    %v2799 = vunpack.c.l.b16 %v2283
    %v2800 = vunpack.c.l.b16 %v2284
    %v2801 = vunpack.c.l.b16 %v2285
    %v2802 = vunpack.c.l.b16 %v2286
    %v2803 = vunpack.c.l.b16 %v2287
    %v2804 = vunpack.c.l.b16 %v2288
    %v2805 = vunpack.c.l.b16 %v2289
    %v2806 = vunpack.c.l.b16 %v2290
    %v2807 = vunpack.c.l.b16 %v2291
    %v2808 = vunpack.c.l.b16 %v2292
    %v2809 = vunpack.c.l.b16 %v2293
    %v2810 = vunpack.c.l.b16 %v2294
    %v2811 = vunpack.c.l.b16 %v2295
    %v2812 = vunpack.c.l.b16 %v2296
    %v2813 = vunpack.c.l.b16 %v2297
    %v2814 = vunpack.c.l.b16 %v2298
    %v2815 = vunpack.c.l.b16 %v2299
    %v2816 = vunpack.c.l.b16 %v2300
    %v2817 = vunpack.c.l.b16 %v2301
    %v2818 = vunpack.c.l.b16 %v2302
    %v2819 = vunpack.c.l.b16 %v2303
    %v2820 = vunpack.c.l.b16 %v2304
    %v2821 = vunpack.c.l.b16 %v2305
    %v2822 = vunpack.c.l.b16 %v2306
    %v2823 = vunpack.c.l.b16 %v2307
    %v2824 = vunpack.c.l.b16 %v2308
    %v2825 = vunpack.c.l.b16 %v2309
    %v2826 = vunpack.c.l.b16 %v2310
    %v2827 = vunpack.c.l.b16 %v2311
    %v2828 = vunpack.c.l.b16 %v2312
    %v2829 = vunpack.c.l.b16 %v2313
    %v2830 = vunpack.c.l.b16 %v2314
    %v2831 = vunpack.c.l.b16 %v2315
    %v2832 = vunpack.c.l.b16 %v2316
    %v2833 = vunpack.c.l.b16 %v2317
    %v2834 = vunpack.c.l.b16 %v2318
    %v2835 = vunpack.c.l.b16 %v2319
    %v2836 = vunpack.c.l.b16 %v2320
    %v2837 = vunpack.c.l.b16 %v2321
    %v2838 = vunpack.c.l.b16 %v2322
    %v2839 = vunpack.c.l.b16 %v2323
    %v2840 = vunpack.c.l.b16 %v2324
    %v2841 = vunpack.c.l.b16 %v2325
    %v2842 = vunpack.c.l.b16 %v2326
    %v2843 = vunpack.c.l.b16 %v2327
    %v2844 = vunpack.c.l.b16 %v2328
    %v2845 = vunpack.c.l.b16 %v2329
    %v2846 = vunpack.c.l.b16 %v2330
    %v2847 = vunpack.c.l.b16 %v2331
    %v2848 = vunpack.c.l.b16 %v2332
    %v2849 = vunpack.c.l.b16 %v2333
    %v2850 = vunpack.c.l.b16 %v2334
    %v2851 = vunpack.c.l.b16 %v2335
    %v2852 = vunpack.c.l.b16 %v2336
    %v2853 = vunpack.c.l.b16 %v2337
    %v2854 = vunpack.c.l.b16 %v2338
    %v2855 = vunpack.c.l.b16 %v2339
    %v2856 = vunpack.c.l.b16 %v2340
    %v2857 = vunpack.c.l.b16 %v2341
    %v2858 = vunpack.c.l.b16 %v2342
    %v2859 = vunpack.c.l.b16 %v2343
    %v2860 = vunpack.c.l.b16 %v2344
    %v2861 = vunpack.c.l.b16 %v2345
    %v2862 = vunpack.c.l.b16 %v2346
    %v2863 = vunpack.c.l.b16 %v2347
    %v2864 = vunpack.c.l.b16 %v2348
    %v2865 = vunpack.c.l.b16 %v2349
    %v2866 = vunpack.c.l.b16 %v2350
    %v2867 = vunpack.c.l.b16 %v2351
    %v2868 = vunpack.c.l.b16 %v2352
    %v2869 = vunpack.c.l.b16 %v2353
    %v2870 = vunpack.c.l.b16 %v2354
    %v2871 = vunpack.c.l.b16 %v2355
    %v2872 = vunpack.c.l.b16 %v2356
    %v2873 = vunpack.c.l.b16 %v2357
    %v2874 = vunpack.c.l.b16 %v2358
    %v2875 = vunpack.c.l.b16 %v2359
    %v2876 = vunpack.c.l.b16 %v2360
    %v2877 = vunpack.c.l.b16 %v2361
    %v2878 = vunpack.c.l.b16 %v2362
    %v2879 = vunpack.c.l.b16 %v2363
    %v2880 = vunpack.c.l.b16 %v2364
    %v2881 = vunpack.c.l.b16 %v2365
    %v2882 = vunpack.c.l.b16 %v2366
    %v2883 = vunpack.c.l.b16 %v2367
    %v2884 = vunpack.c.l.b16 %v2368
    %v2885 = vunpack.c.l.b16 %v2369
    %v2886 = vunpack.c.l.b16 %v2370
    %v2887 = vunpack.c.l.b16 %v2371
    %v2888 = vunpack.c.l.b16 %v2372
    %v2889 = vunpack.c.l.b16 %v2373
    %v2890 = vunpack.c.l.b16 %v2374
    %v2891 = vunpack.c.l.b16 %v2375
    %v2892 = vunpack.c.l.b16 %v2376
    %v2893 = vunpack.c.l.b16 %v2377
    %v2894 = vunpack.c.l.b16 %v2378
    %v2895 = vunpack.c.l.b16 %v2379
    %v2896 = vunpack.c.l.b16 %v2380
    %v2897 = vunpack.c.l.b16 %v2381
    %v2898 = vunpack.c.l.b16 %v2382
    %v2899 = vunpack.c.l.b16 %v2383
    %v2900 = vunpack.c.l.b16 %v2384
    %v2901 = vunpack.c.l.b16 %v2385
    %v2902 = vunpack.c.l.b16 %v2386
    %v2903 = vunpack.c.l.b16 %v2387
    %v2904 = vpack.c.b16 %v2649, %v2648
    %v2905 = vpack.c.b16 %v2651, %v2650
    %v2906 = vpack.c.b16 %v2653, %v2652
    %v2907 = vpack.c.b16 %v2655, %v2654
    %v2908 = vpack.c.b16 %v2657, %v2656
    %v2909 = vpack.c.b16 %v2659, %v2658
    %v2910 = vpack.c.b16 %v2661, %v2660
    %v2911 = vpack.c.b16 %v2663, %v2662
    %v2912 = vpack.c.b16 %v2665, %v2664
    %v2913 = vpack.c.b16 %v2667, %v2666
    %v2914 = vpack.c.b16 %v2669, %v2668
    %v2915 = vpack.c.b16 %v2671, %v2670
    %v2916 = vpack.c.b16 %v2673, %v2672
    %v2917 = vpack.c.b16 %v2675, %v2674
    %v2918 = vpack.c.b16 %v2677, %v2676
    %v2919 = vpack.c.b16 %v2679, %v2678
    %v2920 = vpack.c.b16 %v2681, %v2680
    %v2921 = vpack.c.b16 %v2683, %v2682
    %v2922 = vpack.c.b16 %v2685, %v2684
    %v2923 = vpack.c.b16 %v2687, %v2686
    %v2924 = vpack.c.b16 %v2689, %v2688
    %v2925 = vpack.c.b16 %v2691, %v2690
    %v2926 = vpack.c.b16 %v2693, %v2692
    %v2927 = vpack.c.b16 %v2695, %v2694
    %v2928 = vpack.c.b16 %v2697, %v2696
    %v2929 = vpack.c.b16 %v2699, %v2698
    %v2930 = vpack.c.b16 %v2701, %v2700
    %v2931 = vpack.c.b16 %v2703, %v2702
    %v2932 = vpack.c.b16 %v2705, %v2704
    %v2933 = vpack.c.b16 %v2707, %v2706
    %v2934 = vpack.c.b16 %v2709, %v2708
    %v2935 = vpack.c.b16 %v2711, %v2710
    %v2936 = vpack.c.b16 %v2713, %v2712
    %v2937 = vpack.c.b16 %v2715, %v2714
    %v2938 = vpack.c.b16 %v2717, %v2716
    %v2939 = vpack.c.b16 %v2719, %v2718
    %v2940 = vpack.c.b16 %v2721, %v2720
    %v2941 = vpack.c.b16 %v2723, %v2722
    %v2942 = vpack.c.b16 %v2725, %v2724
    %v2943 = vpack.c.b16 %v2727, %v2726
    %v2944 = vpack.c.b16 %v2729, %v2728
    %v2945 = vpack.c.b16 %v2731, %v2730
    %v2946 = vpack.c.b16 %v2733, %v2732
    %v2947 = vpack.c.b16 %v2735, %v2734
    %v2948 = vpack.c.b16 %v2737, %v2736
    %v2949 = vpack.c.b16 %v2739, %v2738
    %v2950 = vpack.c.b16 %v2741, %v2740
    %v2951 = vpack.c.b16 %v2743, %v2742
    %v2952 = vpack.c.b16 %v2745, %v2744
    %v2953 = vpack.c.b16 %v2747, %v2746
    %v2954 = vpack.c.b16 %v2749, %v2748
    %v2955 = vpack.c.b16 %v2751, %v2750
    %v2956 = vpack.c.b16 %v2753, %v2752
    %v2957 = vpack.c.b16 %v2755, %v2754
    %v2958 = vpack.c.b16 %v2757, %v2756
    %v2959 = vpack.c.b16 %v2759, %v2758
    %v2960 = vpack.c.b16 %v2761, %v2760
    %v2961 = vpack.c.b16 %v2763, %v2762
    %v2962 = vpack.c.b16 %v2765, %v2764
    %v2963 = vpack.c.b16 %v2767, %v2766
    %v2964 = vpack.c.b16 %v2769, %v2768
    %v2965 = vpack.c.b16 %v2771, %v2770
    %v2966 = vpack.c.b16 %v2773, %v2772
    %v2967 = vpack.c.b16 %v2775, %v2774
    %v2968 = vpack.c.b16 %v2777, %v2776
    %v2969 = vpack.c.b16 %v2779, %v2778
    %v2970 = vpack.c.b16 %v2781, %v2780
    %v2971 = vpack.c.b16 %v2783, %v2782
    %v2972 = vpack.c.b16 %v2785, %v2784
    %v2973 = vpack.c.b16 %v2787, %v2786
    %v2974 = vpack.c.b16 %v2789, %v2788
    %v2975 = vpack.c.b16 %v2791, %v2790
    %v2976 = vpack.c.b16 %v2793, %v2792
    %v2977 = vpack.c.b16 %v2795, %v2794
    %v2978 = vpack.c.b16 %v2797, %v2796
    %v2979 = vpack.c.b16 %v2799, %v2798
    %v2980 = vpack.c.b16 %v2801, %v2800
    %v2981 = vpack.c.b16 %v2803, %v2802
    %v2982 = vpack.c.b16 %v2805, %v2804
    %v2983 = vpack.c.b16 %v2807, %v2806
    %v2984 = vpack.c.b16 %v2809, %v2808
    %v2985 = vpack.c.b16 %v2811, %v2810
    %v2986 = vpack.c.b16 %v2813, %v2812
    %v2987 = vpack.c.b16 %v2815, %v2814
    %v2988 = vpack.c.b16 %v2817, %v2816
    %v2989 = vpack.c.b16 %v2819, %v2818
    %v2990 = vpack.c.b16 %v2821, %v2820
    %v2991 = vpack.c.b16 %v2823, %v2822
    %v2992 = vpack.c.b16 %v2825, %v2824
    %v2993 = vpack.c.b16 %v2827, %v2826
    %v2994 = vpack.c.b16 %v2829, %v2828
    %v2995 = vpack.c.b16 %v2831, %v2830
    %v2996 = vpack.c.b16 %v2833, %v2832
    %v2997 = vpack.c.b16 %v2835, %v2834
    %v2998 = vpack.c.b16 %v2837, %v2836
    %v2999 = vpack.c.b16 %v2839, %v2838
    %v3000 = vpack.c.b16 %v2841, %v2840
    %v3001 = vpack.c.b16 %v2843, %v2842
    %v3002 = vpack.c.b16 %v2845, %v2844
    %v3003 = vpack.c.b16 %v2847, %v2846
    %v3004 = vpack.c.b16 %v2849, %v2848
    %v3005 = vpack.c.b16 %v2851, %v2850
    %v3006 = vpack.c.b16 %v2853, %v2852
    %v3007 = vpack.c.b16 %v2855, %v2854
    %v3008 = vpack.c.b16 %v2857, %v2856
    %v3009 = vpack.c.b16 %v2859, %v2858
    %v3010 = vpack.c.b16 %v2861, %v2860
    %v3011 = vpack.c.b16 %v2863, %v2862
    %v3012 = vpack.c.b16 %v2865, %v2864
    %v3013 = vpack.c.b16 %v2867, %v2866
    %v3014 = vpack.c.b16 %v2869, %v2868
    %v3015 = vpack.c.b16 %v2871, %v2870
    %v3016 = vpack.c.b16 %v2873, %v2872
    %v3017 = vpack.c.b16 %v2875, %v2874
    %v3018 = vpack.c.b16 %v2877, %v2876
    %v3019 = vpack.c.b16 %v2879, %v2878
    %v3020 = vpack.c.b16 %v2881, %v2880
    %v3021 = vpack.c.b16 %v2883, %v2882
    %v3022 = vpack.c.b16 %v2885, %v2884
    %v3023 = vpack.c.b16 %v2887, %v2886
    %v3024 = vpack.c.b16 %v2889, %v2888
    %v3025 = vpack.c.b16 %v2891, %v2890
    %v3026 = vpack.c.b16 %v2893, %v2892
    %v3027 = vpack.c.b16 %v2895, %v2894
    %v3028 = vpack.c.b16 %v2897, %v2896
    %v3029 = vpack.c.b16 %v2899, %v2898
    %v3030 = vpack.c.b16 %v2901, %v2900
    %v3031 = vpack.c.b16 %v2903, %v2902
    %3160 = vmatpush.bf16.msra.mxu0 %v2911
    %3161 = vmatpush.bf16.msra.mxu0 %v2910
    %3162 = vmatpush.bf16.msra.mxu0 %v2909
    %3163 = vmatpush.bf16.msra.mxu0 %v2908
    %3164 = vmatpush.bf16.msra.mxu0 %v2907
    %3165 = vmatpush.bf16.msra.mxu0 %v2906
    %3166 = vmatpush.bf16.msra.mxu0 %v2905
    %3167 = vmatpush.bf16.msra.mxu0 %v2904
    %3168 = vmatmul.bf16.gmra.mxu0 %v2116
    %v3169 = vpop.f32.mrf.mxu0
    %v3170 = vadd.f32 %v2390, %v3169
    %v3171 = vpop.f32.mrf.mxu0
    %v3172 = vadd.f32 %v2390, %v3171
    %3173 = vdwg.mxu0
    %3174 = vmatpush.bf16.msra.mxu0 %v2919
    %3175 = vmatpush.bf16.msra.mxu0 %v2918
    %3176 = vmatpush.bf16.msra.mxu0 %v2917
    %3177 = vmatpush.bf16.msra.mxu0 %v2916
    %3178 = vmatpush.bf16.msra.mxu0 %v2915
    %3179 = vmatpush.bf16.msra.mxu0 %v2914
    %3180 = vmatpush.bf16.msra.mxu0 %v2913
    %3181 = vmatpush.bf16.msra.mxu0 %v2912
    %3182 = vmatmul.bf16.gmra.mxu0 %v2117
    %v3183 = vpop.f32.mrf.mxu0
    %v3184 = vadd.f32 %v3170, %v3183
    %v3185 = vpop.f32.mrf.mxu0
    %v3186 = vadd.f32 %v3172, %v3185
    %3187 = vdwg.mxu0
    %3188 = vmatpush.bf16.msra.mxu0 %v2927
    %3189 = vmatpush.bf16.msra.mxu0 %v2926
    %3190 = vmatpush.bf16.msra.mxu0 %v2925
    %3191 = vmatpush.bf16.msra.mxu0 %v2924
    %3192 = vmatpush.bf16.msra.mxu0 %v2923
    %3193 = vmatpush.bf16.msra.mxu0 %v2922
    %3194 = vmatpush.bf16.msra.mxu0 %v2921
    %3195 = vmatpush.bf16.msra.mxu0 %v2920
    %3196 = vmatmul.bf16.gmra.mxu0 %v2118
    %v3197 = vpop.f32.mrf.mxu0
    %v3198 = vadd.f32 %v3184, %v3197
    %v3199 = vpop.f32.mrf.mxu0
    %v3200 = vadd.f32 %v3186, %v3199
    %3201 = vdwg.mxu0
    %3202 = vmatpush.bf16.msra.mxu0 %v2935
    %3203 = vmatpush.bf16.msra.mxu0 %v2934
    %3204 = vmatpush.bf16.msra.mxu0 %v2933
    %3205 = vmatpush.bf16.msra.mxu0 %v2932
    %3206 = vmatpush.bf16.msra.mxu0 %v2931
    %3207 = vmatpush.bf16.msra.mxu0 %v2930
    %3208 = vmatpush.bf16.msra.mxu0 %v2929
    %3209 = vmatpush.bf16.msra.mxu0 %v2928
    %3210 = vmatmul.bf16.gmra.mxu0 %v2119
    %v3211 = vpop.f32.mrf.mxu0
    %v3212 = vadd.f32 %v3198, %v3211
    %v3213 = vpop.f32.mrf.mxu0
    %v3214 = vadd.f32 %v3200, %v3213
    %3215 = vdwg.mxu0
    %3216 = vmatpush.bf16.msra.mxu0 %v2943
    %3217 = vmatpush.bf16.msra.mxu0 %v2942
    %3218 = vmatpush.bf16.msra.mxu0 %v2941
    %3219 = vmatpush.bf16.msra.mxu0 %v2940
    %3220 = vmatpush.bf16.msra.mxu0 %v2939
    %3221 = vmatpush.bf16.msra.mxu0 %v2938
    %3222 = vmatpush.bf16.msra.mxu0 %v2937
    %3223 = vmatpush.bf16.msra.mxu0 %v2936
    %3224 = vmatmul.bf16.gmra.mxu0 %v2120
    %v3225 = vpop.f32.mrf.mxu0
    %v3226 = vadd.f32 %v3212, %v3225
    %v3227 = vpop.f32.mrf.mxu0
    %v3228 = vadd.f32 %v3214, %v3227
    %3229 = vdwg.mxu0
    %3230 = vmatpush.bf16.msra.mxu0 %v2951
    %3231 = vmatpush.bf16.msra.mxu0 %v2950
    %3232 = vmatpush.bf16.msra.mxu0 %v2949
    %3233 = vmatpush.bf16.msra.mxu0 %v2948
    %3234 = vmatpush.bf16.msra.mxu0 %v2947
    %3235 = vmatpush.bf16.msra.mxu0 %v2946
    %3236 = vmatpush.bf16.msra.mxu0 %v2945
    %3237 = vmatpush.bf16.msra.mxu0 %v2944
    %3238 = vmatmul.bf16.gmra.mxu0 %v2121
    %v3239 = vpop.f32.mrf.mxu0
    %v3240 = vadd.f32 %v3226, %v3239
    %v3241 = vpop.f32.mrf.mxu0
    %v3242 = vadd.f32 %v3228, %v3241
    %3243 = vdwg.mxu0
    %3244 = vmatpush.bf16.msra.mxu0 %v2959
    %3245 = vmatpush.bf16.msra.mxu0 %v2958
    %3246 = vmatpush.bf16.msra.mxu0 %v2957
    %3247 = vmatpush.bf16.msra.mxu0 %v2956
    %3248 = vmatpush.bf16.msra.mxu0 %v2955
    %3249 = vmatpush.bf16.msra.mxu0 %v2954
    %3250 = vmatpush.bf16.msra.mxu0 %v2953
    %3251 = vmatpush.bf16.msra.mxu0 %v2952
    %3252 = vmatmul.bf16.gmra.mxu0 %v2122
    %v3253 = vpop.f32.mrf.mxu0
    %v3254 = vadd.f32 %v3240, %v3253
    %v3255 = vpop.f32.mrf.mxu0
    %v3256 = vadd.f32 %v3242, %v3255
    %3257 = vdwg.mxu0
    %3258 = vmatpush.bf16.msra.mxu0 %v2967
    %3259 = vmatpush.bf16.msra.mxu0 %v2966
    %3260 = vmatpush.bf16.msra.mxu0 %v2965
    %3261 = vmatpush.bf16.msra.mxu0 %v2964
    %3262 = vmatpush.bf16.msra.mxu0 %v2963
    %3263 = vmatpush.bf16.msra.mxu0 %v2962
    %3264 = vmatpush.bf16.msra.mxu0 %v2961
    %3265 = vmatpush.bf16.msra.mxu0 %v2960
    %3266 = vmatmul.bf16.gmra.mxu0 %v2123
    %v3267 = vpop.f32.mrf.mxu0
    %v3268 = vadd.f32 %v3254, %v3267
    %v3269 = vpop.f32.mrf.mxu0
    %v3270 = vadd.f32 %v3256, %v3269
    %3271 = vdwg.mxu0
    %3272 = vmatpush.bf16.msra.mxu0 %v2975
    %3273 = vmatpush.bf16.msra.mxu0 %v2974
    %3274 = vmatpush.bf16.msra.mxu0 %v2973
    %3275 = vmatpush.bf16.msra.mxu0 %v2972
    %3276 = vmatpush.bf16.msra.mxu0 %v2971
    %3277 = vmatpush.bf16.msra.mxu0 %v2970
    %3278 = vmatpush.bf16.msra.mxu0 %v2969
    %3279 = vmatpush.bf16.msra.mxu0 %v2968
    %3280 = vmatmul.bf16.gmra.mxu0 %v2124
    %v3281 = vpop.f32.mrf.mxu0
    %v3282 = vadd.f32 %v3268, %v3281
    %v3283 = vpop.f32.mrf.mxu0
    %v3284 = vadd.f32 %v3270, %v3283
    %3285 = vdwg.mxu0
    %3286 = vmatpush.bf16.msra.mxu0 %v2983
    %3287 = vmatpush.bf16.msra.mxu0 %v2982
    %3288 = vmatpush.bf16.msra.mxu0 %v2981
    %3289 = vmatpush.bf16.msra.mxu0 %v2980
    %3290 = vmatpush.bf16.msra.mxu0 %v2979
    %3291 = vmatpush.bf16.msra.mxu0 %v2978
    %3292 = vmatpush.bf16.msra.mxu0 %v2977
    %3293 = vmatpush.bf16.msra.mxu0 %v2976
    %3294 = vmatmul.bf16.gmra.mxu0 %v2125
    %v3295 = vpop.f32.mrf.mxu0
    %v3296 = vadd.f32 %v3282, %v3295
    %v3297 = vpop.f32.mrf.mxu0
    %v3298 = vadd.f32 %v3284, %v3297
    %3299 = vdwg.mxu0
    %3300 = vmatpush.bf16.msra.mxu0 %v2991
    %3301 = vmatpush.bf16.msra.mxu0 %v2990
    %3302 = vmatpush.bf16.msra.mxu0 %v2989
    %3303 = vmatpush.bf16.msra.mxu0 %v2988
    %3304 = vmatpush.bf16.msra.mxu0 %v2987
    %3305 = vmatpush.bf16.msra.mxu0 %v2986
    %3306 = vmatpush.bf16.msra.mxu0 %v2985
    %3307 = vmatpush.bf16.msra.mxu0 %v2984
    %3308 = vmatmul.bf16.gmra.mxu0 %v2126
    %v3309 = vpop.f32.mrf.mxu0
    %v3310 = vadd.f32 %v3296, %v3309
    %v3311 = vpop.f32.mrf.mxu0
    %v3312 = vadd.f32 %v3298, %v3311
    %3313 = vdwg.mxu0
    %3314 = vmatpush.bf16.msra.mxu0 %v2999
    %3315 = vmatpush.bf16.msra.mxu0 %v2998
    %3316 = vmatpush.bf16.msra.mxu0 %v2997
    %3317 = vmatpush.bf16.msra.mxu0 %v2996
    %3318 = vmatpush.bf16.msra.mxu0 %v2995
    %3319 = vmatpush.bf16.msra.mxu0 %v2994
    %3320 = vmatpush.bf16.msra.mxu0 %v2993
    %3321 = vmatpush.bf16.msra.mxu0 %v2992
    %3322 = vmatmul.bf16.gmra.mxu0 %v2127
    %v3323 = vpop.f32.mrf.mxu0
    %v3324 = vadd.f32 %v3310, %v3323
    %v3325 = vpop.f32.mrf.mxu0
    %v3326 = vadd.f32 %v3312, %v3325
    %3327 = vdwg.mxu0
    %3328 = vmatpush.bf16.msra.mxu0 %v3007
    %3329 = vmatpush.bf16.msra.mxu0 %v3006
    %3330 = vmatpush.bf16.msra.mxu0 %v3005
    %3331 = vmatpush.bf16.msra.mxu0 %v3004
    %3332 = vmatpush.bf16.msra.mxu0 %v3003
    %3333 = vmatpush.bf16.msra.mxu0 %v3002
    %3334 = vmatpush.bf16.msra.mxu0 %v3001
    %3335 = vmatpush.bf16.msra.mxu0 %v3000
    %3336 = vmatmul.bf16.gmra.mxu0 %v2128
    %v3337 = vpop.f32.mrf.mxu0
    %v3338 = vadd.f32 %v3324, %v3337
    %v3339 = vpop.f32.mrf.mxu0
    %v3340 = vadd.f32 %v3326, %v3339
    %3341 = vdwg.mxu0
    %3342 = vmatpush.bf16.msra.mxu0 %v3015
    %3343 = vmatpush.bf16.msra.mxu0 %v3014
    %3344 = vmatpush.bf16.msra.mxu0 %v3013
    %3345 = vmatpush.bf16.msra.mxu0 %v3012
    %3346 = vmatpush.bf16.msra.mxu0 %v3011
    %3347 = vmatpush.bf16.msra.mxu0 %v3010
    %3348 = vmatpush.bf16.msra.mxu0 %v3009
    %3349 = vmatpush.bf16.msra.mxu0 %v3008
    %3350 = vmatmul.bf16.gmra.mxu0 %v2129
    %v3351 = vpop.f32.mrf.mxu0
    %v3352 = vadd.f32 %v3338, %v3351
    %v3353 = vpop.f32.mrf.mxu0
    %v3354 = vadd.f32 %v3340, %v3353
    %3355 = vdwg.mxu0
    %3356 = vmatpush.bf16.msra.mxu0 %v3023
    %3357 = vmatpush.bf16.msra.mxu0 %v3022
    %3358 = vmatpush.bf16.msra.mxu0 %v3021
    %3359 = vmatpush.bf16.msra.mxu0 %v3020
    %3360 = vmatpush.bf16.msra.mxu0 %v3019
    %3361 = vmatpush.bf16.msra.mxu0 %v3018
    %3362 = vmatpush.bf16.msra.mxu0 %v3017
    %3363 = vmatpush.bf16.msra.mxu0 %v3016
    %3364 = vmatmul.bf16.gmra.mxu0 %v2130
    %v3365 = vpop.f32.mrf.mxu0
    %v3366 = vadd.f32 %v3352, %v3365
    %v3367 = vpop.f32.mrf.mxu0
    %v3368 = vadd.f32 %v3354, %v3367
    %3369 = vdwg.mxu0
    %3370 = vmatpush.bf16.msra.mxu0 %v3031
    %3371 = vmatpush.bf16.msra.mxu0 %v3030
    %3372 = vmatpush.bf16.msra.mxu0 %v3029
    %3373 = vmatpush.bf16.msra.mxu0 %v3028
    %3374 = vmatpush.bf16.msra.mxu0 %v3027
    %3375 = vmatpush.bf16.msra.mxu0 %v3026
    %3376 = vmatpush.bf16.msra.mxu0 %v3025
    %3377 = vmatpush.bf16.msra.mxu0 %v3024
    %3378 = vmatmul.bf16.gmra.mxu0 %v2131
    %v3379 = vpop.f32.mrf.mxu0
    %v3380 = vadd.f32 %v3366, %v3379
    %v3381 = vpop.f32.mrf.mxu0
    %v3382 = vadd.f32 %v3368, %v3381
    %3383 = vdwg.mxu0
    %v3384 = vadd.f32 %v1053, %v3380
    %v3385 = vadd.f32 %v1054, %v3382
    %3386 = vadd.xlane.f32.xlu0 %v3384
    %v3387 = vpop.xlane.xlu0 %3386
    %3388 = vadd.xlane.f32.xlu0 %v3385
    %v3389 = vpop.xlane.xlu0 %3388
    %v3390 = vmul.f32 %v3387, %v1006
    %v3391 = vmul.f32 %v3389, %v1006
    %v3392 = vsub.f32 %v3384, %v3390
    %v3393 = vsub.f32 %v3385, %v3391
    %v3394 = vmul.f32 %v3392, %v3392
    %v3395 = vmul.f32 %v3393, %v3393
    %3396 = vadd.xlane.f32.xlu0 %v3394
    %v3397 = vpop.xlane.xlu0 %3396
    %3398 = vadd.xlane.f32.xlu0 %v3395
    %v3399 = vpop.xlane.xlu0 %3398
    %v3400 = vmul.f32 %v3397, %v1006
    %v3401 = vmul.f32 %v3399, %v1006
    %v3402 = vadd.f32 %v3400, 1e-05
    %v3403 = vadd.f32 %v3401, 1e-05
    %v3404 = vrsqrt.pop %v3402
    %v3405 = vmul.f32 %v3404, %v3402
    %v3406 = vmul.f32 %v3405, %v3404
    %v3407 = vmul.f32 0.5, %v3406
    %v3408 = vsub.f32 1.5, %v3407
    %v3409 = vmul.f32 %v3404, %v3408
    %vm3410 = vweird.f32 %v3402
    %vm3411 = vweird.f32 %v3404
    %vm3412 = vmor %vm3410, %vm3411
    %v3413 = vsel %vm3412, %v3404, %v3409
    %v3414 = vrsqrt.pop %v3403
    %v3415 = vmul.f32 %v3414, %v3403
    %v3416 = vmul.f32 %v3415, %v3414
    %v3417 = vmul.f32 0.5, %v3416
    %v3418 = vsub.f32 1.5, %v3417
    %v3419 = vmul.f32 %v3414, %v3418
    %vm3420 = vweird.f32 %v3403
    %vm3421 = vweird.f32 %v3414
    %vm3422 = vmor %vm3420, %vm3421
    %v3423 = vsel %vm3422, %v3414, %v3419
    %v3424 = vmul.f32 %v3392, %v3413
    %v3425 = vmul.f32 %v3393, %v3423
    %v3426 = vld [vmem:[%s12] sm:$0x1]
    %v3428 = vperm.slane %v3426, 0
    %v3430 = vmul.f32 %v3424, %v3428
    %v3431 = vmul.f32 %v3425, %v3428
    %v3432 = vld [vmem:[%s13] sm:$0x1]
    %v3434 = vperm.slane %v3432, 0
    %v3436 = vadd.f32 %v3430, %v3434
    %v3437 = vadd.f32 %v3431, %v3434
    %v3438 = vpack.c.bf16 %v3437, %v3436
    %v3439 = vld [vmem:[#allocation7] sm:$0xff]
    %v3440 = vld [vmem:[#allocation7 + $0x8] sm:$0xf]
    %v3441 = vld [vmem:[#allocation7 + $0xc] sm:$0xff]
    %v3442 = vld [vmem:[#allocation7 + $0x14] sm:$0xf]
    %v3443 = vld [vmem:[#allocation7 + $0x18] sm:$0xff]
    %v3444 = vld [vmem:[#allocation7 + $0x20] sm:$0xf]
    %v3445 = vld [vmem:[#allocation7 + $0x24] sm:$0xff]
    %v3446 = vld [vmem:[#allocation7 + $0x2c] sm:$0xf]
    %v3447 = vld [vmem:[#allocation7 + $0x30] sm:$0xff]
    %v3448 = vld [vmem:[#allocation7 + $0x38] sm:$0xf]
    %v3449 = vld [vmem:[#allocation7 + $0x3c] sm:$0xff]
    %v3450 = vld [vmem:[#allocation7 + $0x44] sm:$0xf]
    %v3451 = vld [vmem:[#allocation7 + $0x48] sm:$0xff]
    %v3452 = vld [vmem:[#allocation7 + $0x50] sm:$0xf]
    %v3453 = vld [vmem:[#allocation7 + $0x54] sm:$0xff]
    %v3454 = vld [vmem:[#allocation7 + $0x5c] sm:$0xf]
    %v3455 = vld [vmem:[#allocation7 + $0x60] sm:$0xff]
    %v3456 = vld [vmem:[#allocation7 + $0x68] sm:$0xf]
    %v3457 = vld [vmem:[#allocation7 + $0x6c] sm:$0xff]
    %v3458 = vld [vmem:[#allocation7 + $0x74] sm:$0xf]
    %v3459 = vld [vmem:[#allocation7 + $0x78] sm:$0xff]
    %v3460 = vld [vmem:[#allocation7 + $0x80] sm:$0xf]
    %v3461 = vld [vmem:[#allocation7 + $0x84] sm:$0xff]
    %v3462 = vld [vmem:[#allocation7 + $0x8c] sm:$0xf]
    %v3463 = vld [vmem:[#allocation7 + $0x90] sm:$0xff]
    %v3464 = vld [vmem:[#allocation7 + $0x98] sm:$0xf]
    %v3465 = vld [vmem:[#allocation7 + $0x9c] sm:$0xff]
    %v3466 = vld [vmem:[#allocation7 + $0xa4] sm:$0xf]
    %v3467 = vld [vmem:[#allocation7 + $0xa8] sm:$0xff]
    %v3468 = vld [vmem:[#allocation7 + $0xb0] sm:$0xf]
    %v3469 = vld [vmem:[#allocation7 + $0xb4] sm:$0xff]
    %v3470 = vld [vmem:[#allocation7 + $0xbc] sm:$0xf]
    %v3471 = vld [vmem:[%s15] sm:$0x7]
    %v3473 = vperm.slane %v3471, 0
    %v3474 = vperm.slane %v3471, 1
    %v3475 = vperm.slane %v3471, 2
    %v3511 = vunpack.c.l.b16 %v3439
    %v3512 = vunpack.c.h.b16 %v3439
    %v3513 = vunpack.c.l.b16 %v3440
    %v3514 = vunpack.c.l.b16 %v3441
    %v3515 = vunpack.c.h.b16 %v3441
    %v3516 = vunpack.c.l.b16 %v3442
    %v3517 = vunpack.c.l.b16 %v3443
    %v3518 = vunpack.c.h.b16 %v3443
    %v3519 = vunpack.c.l.b16 %v3444
    %v3520 = vunpack.c.l.b16 %v3445
    %v3521 = vunpack.c.h.b16 %v3445
    %v3522 = vunpack.c.l.b16 %v3446
    %v3523 = vunpack.c.l.b16 %v3447
    %v3524 = vunpack.c.h.b16 %v3447
    %v3525 = vunpack.c.l.b16 %v3448
    %v3526 = vunpack.c.l.b16 %v3449
    %v3527 = vunpack.c.h.b16 %v3449
    %v3528 = vunpack.c.l.b16 %v3450
    %v3529 = vunpack.c.l.b16 %v3451
    %v3530 = vunpack.c.h.b16 %v3451
    %v3531 = vunpack.c.l.b16 %v3452
    %v3532 = vunpack.c.l.b16 %v3453
    %v3533 = vunpack.c.h.b16 %v3453
    %v3534 = vunpack.c.l.b16 %v3454
    %v3535 = vunpack.c.l.b16 %v3455
    %v3536 = vunpack.c.h.b16 %v3455
    %v3537 = vunpack.c.l.b16 %v3456
    %v3538 = vunpack.c.l.b16 %v3457
    %v3539 = vunpack.c.h.b16 %v3457
    %v3540 = vunpack.c.l.b16 %v3458
    %v3541 = vunpack.c.l.b16 %v3459
    %v3542 = vunpack.c.h.b16 %v3459
    %v3543 = vunpack.c.l.b16 %v3460
    %v3544 = vunpack.c.l.b16 %v3461
    %v3545 = vunpack.c.h.b16 %v3461
    %v3546 = vunpack.c.l.b16 %v3462
    %v3547 = vunpack.c.l.b16 %v3463
    %v3548 = vunpack.c.h.b16 %v3463
    %v3549 = vunpack.c.l.b16 %v3464
    %v3550 = vunpack.c.l.b16 %v3465
    %v3551 = vunpack.c.h.b16 %v3465
    %v3552 = vunpack.c.l.b16 %v3466
    %v3553 = vunpack.c.l.b16 %v3467
    %v3554 = vunpack.c.h.b16 %v3467
    %v3555 = vunpack.c.l.b16 %v3468
    %v3556 = vunpack.c.l.b16 %v3469
    %v3557 = vunpack.c.h.b16 %v3469
    %v3558 = vunpack.c.l.b16 %v3470
    %v3559 = vpack.c.b16 %v3514, %v3511
    %v3560 = vpack.c.b16 %v3515, %v3512
    %v3561 = vpack.c.b16 %v3516, %v3513
    %v3562 = vpack.c.b16 %v3520, %v3517
    %v3563 = vpack.c.b16 %v3521, %v3518
    %v3564 = vpack.c.b16 %v3522, %v3519
    %v3565 = vpack.c.b16 %v3526, %v3523
    %v3566 = vpack.c.b16 %v3527, %v3524
    %v3567 = vpack.c.b16 %v3528, %v3525
    %v3568 = vpack.c.b16 %v3532, %v3529
    %v3569 = vpack.c.b16 %v3533, %v3530
    %v3570 = vpack.c.b16 %v3534, %v3531
    %v3571 = vpack.c.b16 %v3538, %v3535
    %v3572 = vpack.c.b16 %v3539, %v3536
    %v3573 = vpack.c.b16 %v3540, %v3537
    %v3574 = vpack.c.b16 %v3544, %v3541
    %v3575 = vpack.c.b16 %v3545, %v3542
    %v3576 = vpack.c.b16 %v3546, %v3543
    %v3577 = vpack.c.b16 %v3550, %v3547
    %v3578 = vpack.c.b16 %v3551, %v3548
    %v3579 = vpack.c.b16 %v3552, %v3549
    %v3580 = vpack.c.b16 %v3556, %v3553
    %v3581 = vpack.c.b16 %v3557, %v3554
    %v3582 = vpack.c.b16 %v3558, %v3555
    %3607 = vmatpush.bf16.msra.mxu0 %v3580
    %3608 = vmatpush.bf16.msra.mxu0 %v3577
    %3609 = vmatpush.bf16.msra.mxu0 %v3574
    %3610 = vmatpush.bf16.msra.mxu0 %v3571
    %3611 = vmatpush.bf16.msra.mxu0 %v3568
    %3612 = vmatpush.bf16.msra.mxu0 %v3565
    %3613 = vmatpush.bf16.msra.mxu0 %v3562
    %3614 = vmatpush.bf16.msra.mxu0 %v3559
    %3615 = vmatmul.bf16.gmra.mxu0 %v3438
    %v3616 = vpop.f32.mrf.mxu0
    %v3617 = vadd.f32 %v3473, %v3616
    %v3618 = vpop.f32.mrf.mxu0
    %v3619 = vadd.f32 %v3473, %v3618
    %3620 = vdwg.mxu0
    %3621 = vmatpush.bf16.msra.mxu0 %v3581
    %3622 = vmatpush.bf16.msra.mxu0 %v3578
    %3623 = vmatpush.bf16.msra.mxu0 %v3575
    %3624 = vmatpush.bf16.msra.mxu0 %v3572
    %3625 = vmatpush.bf16.msra.mxu0 %v3569
    %3626 = vmatpush.bf16.msra.mxu0 %v3566
    %3627 = vmatpush.bf16.msra.mxu0 %v3563
    %3628 = vmatpush.bf16.msra.mxu0 %v3560
    %3629 = vmatmul.bf16.gmra.mxu0 %v3438
    %v3630 = vpop.f32.mrf.mxu0
    %v3631 = vadd.f32 %v3474, %v3630
    %v3632 = vpop.f32.mrf.mxu0
    %v3633 = vadd.f32 %v3474, %v3632
    %3634 = vdwg.mxu0
    %3635 = vmatpush.bf16.msra.mxu0 %v3582
    %3636 = vmatpush.bf16.msra.mxu0 %v3579
    %3637 = vmatpush.bf16.msra.mxu0 %v3576
    %3638 = vmatpush.bf16.msra.mxu0 %v3573
    %3639 = vmatpush.bf16.msra.mxu0 %v3570
    %3640 = vmatpush.bf16.msra.mxu0 %v3567
    %3641 = vmatpush.bf16.msra.mxu0 %v3564
    %3642 = vmatpush.bf16.msra.mxu0 %v3561
    %3643 = vmatmul.bf16.gmra.mxu0 %v3438
    %v3644 = vpop.f32.mrf.mxu0
    %v3645 = vadd.f32 %v3475, %v3644
    %v3646 = vpop.f32.mrf.mxu0
    %v3647 = vadd.f32 %v3475, %v3646
    %3648 = vdwg.mxu0
    %v3649 = vpack.c.bf16 %v3617, %v3617
    %v3650 = vpack.c.bf16 %v3619, %v3619
    %v3651 = vpack.c.bf16 %v3631, %v3631
    %v3652 = vpack.c.bf16 %v3633, %v3633
    %v3653 = vpack.c.bf16 %v3645, %v3645
    %v3654 = vpack.c.bf16 %v3647, %v3647
    %v3656 = vsel %vm422, %v3649, 0
    %v3659 = vsel %vm422, %v3651, 0
    %3661 = vmatpush.bf16.xpose.msra.mxu0 0
    %3662 = vmatpush.bf16.xpose.msra.mxu0 0
    %3663 = vmatpush.bf16.xpose.msra.mxu0 0
    %3664 = vmatpush.bf16.xpose.msra.mxu0 0
    %3665 = vmatpush.bf16.xpose.msra.mxu0 0
    %3666 = vmatpush.bf16.xpose.msra.mxu0 0
    %3667 = vmatpush.bf16.xpose.msra.mxu0 0
    %3668 = vmatpush.bf16.xpose.msra.mxu0 %v3659
    %3669 = vmatmul.bf16.gmra.mxu0 %v3656
    %v3670 = vpop.f32.mrf.mxu0
    %v3671 = vadd.f32 %v418, %v3670
    %v3672 = vpop.f32.mrf.mxu0
    %3673 = vdwg.mxu0
    %v3675 = vsel %vm422, %v3650, 0
    %v3678 = vsel %vm422, %v3652, 0
    %3680 = vmatpush.bf16.xpose.msra.mxu0 0
    %3681 = vmatpush.bf16.xpose.msra.mxu0 0
    %3682 = vmatpush.bf16.xpose.msra.mxu0 0
    %3683 = vmatpush.bf16.xpose.msra.mxu0 0
    %3684 = vmatpush.bf16.xpose.msra.mxu0 0
    %3685 = vmatpush.bf16.xpose.msra.mxu0 0
    %3686 = vmatpush.bf16.xpose.msra.mxu0 0
    %3687 = vmatpush.bf16.xpose.msra.mxu0 %v3678
    %3688 = vmatmul.bf16.gmra.mxu0 %v3675
    %v3689 = vpop.f32.mrf.mxu0
    %v3690 = vadd.f32 %v419, %v3689
    %v3691 = vpop.f32.mrf.mxu0
    %3692 = vdwg.mxu0
    %v3693 = vsel %vm461, %v3671, -inf
    %3694 = vmax.xlane.f32.xlu0 %v3693
    %v3695 = vpop.xlane.xlu0 %3694
    %v3696 = vsel %vm461, %v3690, -inf
    %3697 = vmax.xlane.f32.xlu0 %v3696
    %v3698 = vpop.xlane.xlu0 %3697
    %v3699 = vsub.f32 %v3671, %v3695
    %v3700 = vsub.f32 %v3690, %v3698
    %v3701 = vmul.f32 %v3699, 1.442695
    %v3702 = vpow.pop %v3701
    %v3703 = vmul.f32 %v3700, 1.442695
    %v3704 = vpow.pop %v3703
    %v3705 = vsel %vm461, %v3702, 0.0
    %3706 = vadd.xlane.f32.xlu0 %v3705
    %v3707 = vpop.xlane.xlu0 %3706
    %v3708 = vsel %vm461, %v3704, 0.0
    %3709 = vadd.xlane.f32.xlu0 %v3708
    %v3710 = vpop.xlane.xlu0 %3709
    %v3711 = vrcp.pop %v3707
    %v3712 = vrcp.pop %v3710
    %v3713 = vmul.f32 %v3702, %v3711
    %v3714 = vmul.f32 %v3704, %v3712
    %v3715 = vpack.c.bf16 %v3713, %v3713
    %v3716 = vpack.c.bf16 %v3714, %v3714
    %v3718 = vsel %vm461, %v3715, 0
    %v3721 = vsel %vm489, %v3653, 0
    %3723 = vmatpush.bf16.msra.mxu0 0
    %3724 = vmatpush.bf16.msra.mxu0 0
    %3725 = vmatpush.bf16.msra.mxu0 0
    %3726 = vmatpush.bf16.msra.mxu0 0
    %3727 = vmatpush.bf16.msra.mxu0 0
    %3728 = vmatpush.bf16.msra.mxu0 0
    %3729 = vmatpush.bf16.msra.mxu0 0
    %3730 = vmatpush.bf16.msra.mxu0 %v3721
    %3731 = vmatmul.bf16.gmra.mxu0 %v3718
    %v3732 = vpop.f32.mrf.mxu0
    %v3733 = vadd.f32 0.0, %v3732
    %v3734 = vpop.f32.mrf.mxu0
    %3735 = vdwg.mxu0
    %v3737 = vsel %vm461, %v3716, 0
    %v3740 = vsel %vm489, %v3654, 0
    %3742 = vmatpush.bf16.msra.mxu0 0
    %3743 = vmatpush.bf16.msra.mxu0 0
    %3744 = vmatpush.bf16.msra.mxu0 0
    %3745 = vmatpush.bf16.msra.mxu0 0
    %3746 = vmatpush.bf16.msra.mxu0 0
    %3747 = vmatpush.bf16.msra.mxu0 0
    %3748 = vmatpush.bf16.msra.mxu0 0
    %3749 = vmatpush.bf16.msra.mxu0 %v3740
    %3750 = vmatmul.bf16.gmra.mxu0 %v3737
    %v3751 = vpop.f32.mrf.mxu0
    %v3752 = vadd.f32 0.0, %v3751
    %v3753 = vpop.f32.mrf.mxu0
    %3754 = vdwg.mxu0
    %v3756 = vunpack.c.l.b16 %v3649
    %v3757 = vpack.c.b16 %v3756, %v3756
    %3758 = vrot.lane.b32.xlu0 %v3757, 96
    %v3759 = vpop.permute.xlu0 %3758
    %v3761 = vunpack.c.l.b16 %v3651
    %v3762 = vpack.c.b16 %v3761, %v3761
    %3763 = vrot.lane.b32.xlu0 %v3762, 96
    %v3764 = vpop.permute.xlu0 %3763
    %v3766 = vsel %vm422, %v3759, 0
    %v3769 = vsel %vm422, %v3764, 0
    %3771 = vmatpush.bf16.xpose.msra.mxu0 0
    %3772 = vmatpush.bf16.xpose.msra.mxu0 0
    %3773 = vmatpush.bf16.xpose.msra.mxu0 0
    %3774 = vmatpush.bf16.xpose.msra.mxu0 0
    %3775 = vmatpush.bf16.xpose.msra.mxu0 0
    %3776 = vmatpush.bf16.xpose.msra.mxu0 0
    %3777 = vmatpush.bf16.xpose.msra.mxu0 0
    %3778 = vmatpush.bf16.xpose.msra.mxu0 %v3769
    %3779 = vmatmul.bf16.gmra.mxu0 %v3766
    %v3780 = vpop.f32.mrf.mxu0
    %v3781 = vadd.f32 %v418, %v3780
    %v3782 = vpop.f32.mrf.mxu0
    %3783 = vdwg.mxu0
    %v3785 = vunpack.c.l.b16 %v3650
    %v3786 = vpack.c.b16 %v3785, %v3785
    %3787 = vrot.lane.b32.xlu0 %v3786, 96
    %v3788 = vpop.permute.xlu0 %3787
    %v3790 = vunpack.c.l.b16 %v3652
    %v3791 = vpack.c.b16 %v3790, %v3790
    %3792 = vrot.lane.b32.xlu0 %v3791, 96
    %v3793 = vpop.permute.xlu0 %3792
    %v3795 = vsel %vm422, %v3788, 0
    %v3798 = vsel %vm422, %v3793, 0
    %3800 = vmatpush.bf16.xpose.msra.mxu0 0
    %3801 = vmatpush.bf16.xpose.msra.mxu0 0
    %3802 = vmatpush.bf16.xpose.msra.mxu0 0
    %3803 = vmatpush.bf16.xpose.msra.mxu0 0
    %3804 = vmatpush.bf16.xpose.msra.mxu0 0
    %3805 = vmatpush.bf16.xpose.msra.mxu0 0
    %3806 = vmatpush.bf16.xpose.msra.mxu0 0
    %3807 = vmatpush.bf16.xpose.msra.mxu0 %v3798
    %3808 = vmatmul.bf16.gmra.mxu0 %v3795
    %v3809 = vpop.f32.mrf.mxu0
    %v3810 = vadd.f32 %v419, %v3809
    %v3811 = vpop.f32.mrf.mxu0
    %3812 = vdwg.mxu0
    %v3813 = vsel %vm461, %v3781, -inf
    %3814 = vmax.xlane.f32.xlu0 %v3813
    %v3815 = vpop.xlane.xlu0 %3814
    %v3816 = vsel %vm461, %v3810, -inf
    %3817 = vmax.xlane.f32.xlu0 %v3816
    %v3818 = vpop.xlane.xlu0 %3817
    %v3819 = vsub.f32 %v3781, %v3815
    %v3820 = vsub.f32 %v3810, %v3818
    %v3821 = vmul.f32 %v3819, 1.442695
    %v3822 = vpow.pop %v3821
    %v3823 = vmul.f32 %v3820, 1.442695
    %v3824 = vpow.pop %v3823
    %v3825 = vsel %vm461, %v3822, 0.0
    %3826 = vadd.xlane.f32.xlu0 %v3825
    %v3827 = vpop.xlane.xlu0 %3826
    %v3828 = vsel %vm461, %v3824, 0.0
    %3829 = vadd.xlane.f32.xlu0 %v3828
    %v3830 = vpop.xlane.xlu0 %3829
    %v3831 = vrcp.pop %v3827
    %v3832 = vrcp.pop %v3830
    %v3833 = vmul.f32 %v3822, %v3831
    %v3834 = vmul.f32 %v3824, %v3832
    %v3835 = vpack.c.bf16 %v3833, %v3833
    %v3836 = vpack.c.bf16 %v3834, %v3834
    %v3838 = vunpack.c.l.b16 %v3653
    %v3839 = vpack.c.b16 %v3838, %v3838
    %3840 = vrot.lane.b32.xlu0 %v3839, 96
    %v3841 = vpop.permute.xlu0 %3840
    %v3843 = vsel %vm461, %v3835, 0
    %v3846 = vsel %vm489, %v3841, 0
    %3848 = vmatpush.bf16.msra.mxu0 0
    %3849 = vmatpush.bf16.msra.mxu0 0
    %3850 = vmatpush.bf16.msra.mxu0 0
    %3851 = vmatpush.bf16.msra.mxu0 0
    %3852 = vmatpush.bf16.msra.mxu0 0
    %3853 = vmatpush.bf16.msra.mxu0 0
    %3854 = vmatpush.bf16.msra.mxu0 0
    %3855 = vmatpush.bf16.msra.mxu0 %v3846
    %3856 = vmatmul.bf16.gmra.mxu0 %v3843
    %v3857 = vpop.f32.mrf.mxu0
    %v3858 = vadd.f32 0.0, %v3857
    %v3859 = vpop.f32.mrf.mxu0
    %3860 = vdwg.mxu0
    %v3862 = vunpack.c.l.b16 %v3654
    %v3863 = vpack.c.b16 %v3862, %v3862
    %3864 = vrot.lane.b32.xlu0 %v3863, 96
    %v3865 = vpop.permute.xlu0 %3864
    %v3867 = vsel %vm461, %v3836, 0
    %v3870 = vsel %vm489, %v3865, 0
    %3872 = vmatpush.bf16.msra.mxu0 0
    %3873 = vmatpush.bf16.msra.mxu0 0
    %3874 = vmatpush.bf16.msra.mxu0 0
    %3875 = vmatpush.bf16.msra.mxu0 0
    %3876 = vmatpush.bf16.msra.mxu0 0
    %3877 = vmatpush.bf16.msra.mxu0 0
    %3878 = vmatpush.bf16.msra.mxu0 0
    %3879 = vmatpush.bf16.msra.mxu0 %v3870
    %3880 = vmatmul.bf16.gmra.mxu0 %v3867
    %v3881 = vpop.f32.mrf.mxu0
    %v3882 = vadd.f32 0.0, %v3881
    %v3883 = vpop.f32.mrf.mxu0
    %3884 = vdwg.mxu0
    %3885 = vrot.lane.b32.xlu0 %v3757, 64
    %v3886 = vpop.permute.xlu0 %3885
    %3887 = vrot.lane.b32.xlu0 %v3762, 64
    %v3888 = vpop.permute.xlu0 %3887
    %v3890 = vsel %vm422, %v3886, 0
    %v3893 = vsel %vm422, %v3888, 0
    %3895 = vmatpush.bf16.xpose.msra.mxu0 0
    %3896 = vmatpush.bf16.xpose.msra.mxu0 0
    %3897 = vmatpush.bf16.xpose.msra.mxu0 0
    %3898 = vmatpush.bf16.xpose.msra.mxu0 0
    %3899 = vmatpush.bf16.xpose.msra.mxu0 0
    %3900 = vmatpush.bf16.xpose.msra.mxu0 0
    %3901 = vmatpush.bf16.xpose.msra.mxu0 0
    %3902 = vmatpush.bf16.xpose.msra.mxu0 %v3893
    %3903 = vmatmul.bf16.gmra.mxu0 %v3890
    %v3904 = vpop.f32.mrf.mxu0
    %v3905 = vadd.f32 %v418, %v3904
    %v3906 = vpop.f32.mrf.mxu0
    %3907 = vdwg.mxu0
    %3908 = vrot.lane.b32.xlu0 %v3786, 64
    %v3909 = vpop.permute.xlu0 %3908
    %3910 = vrot.lane.b32.xlu0 %v3791, 64
    %v3911 = vpop.permute.xlu0 %3910
    %v3913 = vsel %vm422, %v3909, 0
    %v3916 = vsel %vm422, %v3911, 0
    %3918 = vmatpush.bf16.xpose.msra.mxu0 0
    %3919 = vmatpush.bf16.xpose.msra.mxu0 0
    %3920 = vmatpush.bf16.xpose.msra.mxu0 0
    %3921 = vmatpush.bf16.xpose.msra.mxu0 0
    %3922 = vmatpush.bf16.xpose.msra.mxu0 0
    %3923 = vmatpush.bf16.xpose.msra.mxu0 0
    %3924 = vmatpush.bf16.xpose.msra.mxu0 0
    %3925 = vmatpush.bf16.xpose.msra.mxu0 %v3916
    %3926 = vmatmul.bf16.gmra.mxu0 %v3913
    %v3927 = vpop.f32.mrf.mxu0
    %v3928 = vadd.f32 %v419, %v3927
    %v3929 = vpop.f32.mrf.mxu0
    %3930 = vdwg.mxu0
    %v3931 = vsel %vm461, %v3905, -inf
    %3932 = vmax.xlane.f32.xlu0 %v3931
    %v3933 = vpop.xlane.xlu0 %3932
    %v3934 = vsel %vm461, %v3928, -inf
    %3935 = vmax.xlane.f32.xlu0 %v3934
    %v3936 = vpop.xlane.xlu0 %3935
    %v3937 = vsub.f32 %v3905, %v3933
    %v3938 = vsub.f32 %v3928, %v3936
    %v3939 = vmul.f32 %v3937, 1.442695
    %v3940 = vpow.pop %v3939
    %v3941 = vmul.f32 %v3938, 1.442695
    %v3942 = vpow.pop %v3941
    %v3943 = vsel %vm461, %v3940, 0.0
    %3944 = vadd.xlane.f32.xlu0 %v3943
    %v3945 = vpop.xlane.xlu0 %3944
    %v3946 = vsel %vm461, %v3942, 0.0
    %3947 = vadd.xlane.f32.xlu0 %v3946
    %v3948 = vpop.xlane.xlu0 %3947
    %v3949 = vrcp.pop %v3945
    %v3950 = vrcp.pop %v3948
    %v3951 = vmul.f32 %v3940, %v3949
    %v3952 = vmul.f32 %v3942, %v3950
    %v3953 = vpack.c.bf16 %v3951, %v3951
    %v3954 = vpack.c.bf16 %v3952, %v3952
    %3955 = vrot.lane.b32.xlu0 %v3839, 64
    %v3956 = vpop.permute.xlu0 %3955
    %v3958 = vsel %vm461, %v3953, 0
    %v3961 = vsel %vm489, %v3956, 0
    %3963 = vmatpush.bf16.msra.mxu0 0
    %3964 = vmatpush.bf16.msra.mxu0 0
    %3965 = vmatpush.bf16.msra.mxu0 0
    %3966 = vmatpush.bf16.msra.mxu0 0
    %3967 = vmatpush.bf16.msra.mxu0 0
    %3968 = vmatpush.bf16.msra.mxu0 0
    %3969 = vmatpush.bf16.msra.mxu0 0
    %3970 = vmatpush.bf16.msra.mxu0 %v3961
    %3971 = vmatmul.bf16.gmra.mxu0 %v3958
    %v3972 = vpop.f32.mrf.mxu0
    %v3973 = vadd.f32 0.0, %v3972
    %v3974 = vpop.f32.mrf.mxu0
    %3975 = vdwg.mxu0
    %3976 = vrot.lane.b32.xlu0 %v3863, 64
    %v3977 = vpop.permute.xlu0 %3976
    %v3979 = vsel %vm461, %v3954, 0
    %v3982 = vsel %vm489, %v3977, 0
    %3984 = vmatpush.bf16.msra.mxu0 0
    %3985 = vmatpush.bf16.msra.mxu0 0
    %3986 = vmatpush.bf16.msra.mxu0 0
    %3987 = vmatpush.bf16.msra.mxu0 0
    %3988 = vmatpush.bf16.msra.mxu0 0
    %3989 = vmatpush.bf16.msra.mxu0 0
    %3990 = vmatpush.bf16.msra.mxu0 0
    %3991 = vmatpush.bf16.msra.mxu0 %v3982
    %3992 = vmatmul.bf16.gmra.mxu0 %v3979
    %v3993 = vpop.f32.mrf.mxu0
    %v3994 = vadd.f32 0.0, %v3993
    %v3995 = vpop.f32.mrf.mxu0
    %3996 = vdwg.mxu0
    %3997 = vrot.lane.b32.xlu0 %v3757, 32
    %v3998 = vpop.permute.xlu0 %3997
    %3999 = vrot.lane.b32.xlu0 %v3762, 32
    %v4000 = vpop.permute.xlu0 %3999
    %v4002 = vsel %vm422, %v3998, 0
    %v4005 = vsel %vm422, %v4000, 0
    %4007 = vmatpush.bf16.xpose.msra.mxu0 0
    %4008 = vmatpush.bf16.xpose.msra.mxu0 0
    %4009 = vmatpush.bf16.xpose.msra.mxu0 0
    %4010 = vmatpush.bf16.xpose.msra.mxu0 0
    %4011 = vmatpush.bf16.xpose.msra.mxu0 0
    %4012 = vmatpush.bf16.xpose.msra.mxu0 0
    %4013 = vmatpush.bf16.xpose.msra.mxu0 0
    %4014 = vmatpush.bf16.xpose.msra.mxu0 %v4005
    %4015 = vmatmul.bf16.gmra.mxu0 %v4002
    %v4016 = vpop.f32.mrf.mxu0
    %v4017 = vadd.f32 %v418, %v4016
    %v4018 = vpop.f32.mrf.mxu0
    %4019 = vdwg.mxu0
    %4020 = vrot.lane.b32.xlu0 %v3786, 32
    %v4021 = vpop.permute.xlu0 %4020
    %4022 = vrot.lane.b32.xlu0 %v3791, 32
    %v4023 = vpop.permute.xlu0 %4022
    %v4025 = vsel %vm422, %v4021, 0
    %v4028 = vsel %vm422, %v4023, 0
    %4030 = vmatpush.bf16.xpose.msra.mxu0 0
    %4031 = vmatpush.bf16.xpose.msra.mxu0 0
    %4032 = vmatpush.bf16.xpose.msra.mxu0 0
    %4033 = vmatpush.bf16.xpose.msra.mxu0 0
    %4034 = vmatpush.bf16.xpose.msra.mxu0 0
    %4035 = vmatpush.bf16.xpose.msra.mxu0 0
    %4036 = vmatpush.bf16.xpose.msra.mxu0 0
    %4037 = vmatpush.bf16.xpose.msra.mxu0 %v4028
    %4038 = vmatmul.bf16.gmra.mxu0 %v4025
    %v4039 = vpop.f32.mrf.mxu0
    %v4040 = vadd.f32 %v419, %v4039
    %v4041 = vpop.f32.mrf.mxu0
    %4042 = vdwg.mxu0
    %v4043 = vsel %vm461, %v4017, -inf
    %4044 = vmax.xlane.f32.xlu0 %v4043
    %v4045 = vpop.xlane.xlu0 %4044
    %v4046 = vsel %vm461, %v4040, -inf
    %4047 = vmax.xlane.f32.xlu0 %v4046
    %v4048 = vpop.xlane.xlu0 %4047
    %v4049 = vsub.f32 %v4017, %v4045
    %v4050 = vsub.f32 %v4040, %v4048
    %v4051 = vmul.f32 %v4049, 1.442695
    %v4052 = vpow.pop %v4051
    %v4053 = vmul.f32 %v4050, 1.442695
    %v4054 = vpow.pop %v4053
    %v4055 = vsel %vm461, %v4052, 0.0
    %4056 = vadd.xlane.f32.xlu0 %v4055
    %v4057 = vpop.xlane.xlu0 %4056
    %v4058 = vsel %vm461, %v4054, 0.0
    %4059 = vadd.xlane.f32.xlu0 %v4058
    %v4060 = vpop.xlane.xlu0 %4059
    %v4061 = vrcp.pop %v4057
    %v4062 = vrcp.pop %v4060
    %v4063 = vmul.f32 %v4052, %v4061
    %v4064 = vmul.f32 %v4054, %v4062
    %v4065 = vpack.c.bf16 %v4063, %v4063
    %v4066 = vpack.c.bf16 %v4064, %v4064
    %4067 = vrot.lane.b32.xlu0 %v3839, 32
    %v4068 = vpop.permute.xlu0 %4067
    %v4070 = vsel %vm461, %v4065, 0
    %v4073 = vsel %vm489, %v4068, 0
    %4075 = vmatpush.bf16.msra.mxu0 0
    %4076 = vmatpush.bf16.msra.mxu0 0
    %4077 = vmatpush.bf16.msra.mxu0 0
    %4078 = vmatpush.bf16.msra.mxu0 0
    %4079 = vmatpush.bf16.msra.mxu0 0
    %4080 = vmatpush.bf16.msra.mxu0 0
    %4081 = vmatpush.bf16.msra.mxu0 0
    %4082 = vmatpush.bf16.msra.mxu0 %v4073
    %4083 = vmatmul.bf16.gmra.mxu0 %v4070
    %v4084 = vpop.f32.mrf.mxu0
    %v4085 = vadd.f32 0.0, %v4084
    %v4086 = vpop.f32.mrf.mxu0
    %4087 = vdwg.mxu0
    %4088 = vrot.lane.b32.xlu0 %v3863, 32
    %v4089 = vpop.permute.xlu0 %4088
    %v4091 = vsel %vm461, %v4066, 0
    %v4094 = vsel %vm489, %v4089, 0
    %4096 = vmatpush.bf16.msra.mxu0 0
    %4097 = vmatpush.bf16.msra.mxu0 0
    %4098 = vmatpush.bf16.msra.mxu0 0
    %4099 = vmatpush.bf16.msra.mxu0 0
    %4100 = vmatpush.bf16.msra.mxu0 0
    %4101 = vmatpush.bf16.msra.mxu0 0
    %4102 = vmatpush.bf16.msra.mxu0 0
    %4103 = vmatpush.bf16.msra.mxu0 %v4094
    %4104 = vmatmul.bf16.gmra.mxu0 %v4091
    %v4105 = vpop.f32.mrf.mxu0
    %v4106 = vadd.f32 0.0, %v4105
    %v4107 = vpop.f32.mrf.mxu0
    %4108 = vdwg.mxu0
    %4111 = vrot.lane.b32.xlu0 %v3858, 32
    %v4112 = vpop.permute.xlu0 %4111
    %4113 = vrot.lane.b32.xlu0 %v3882, 32
    %v4114 = vpop.permute.xlu0 %4113
    %4119 = vrot.lane.b32.xlu0 %v3973, 64
    %v4120 = vpop.permute.xlu0 %4119
    %4121 = vrot.lane.b32.xlu0 %v3994, 64
    %v4122 = vpop.permute.xlu0 %4121
    %4127 = vrot.lane.b32.xlu0 %v4085, 96
    %v4128 = vpop.permute.xlu0 %4127
    %4129 = vrot.lane.b32.xlu0 %v4106, 96
    %v4130 = vpop.permute.xlu0 %4129
    %v4133 = vsel %vm422, %v3733, %v4112
    %v4134 = vsel %vm422, %v3752, %v4114
    %v4135 = vsel %vm905, %v4133, %v4120
    %v4136 = vsel %vm905, %v4134, %v4122
    %v4137 = vsel %vm908, %v4135, %v4128
    %v4138 = vsel %vm908, %v4136, %v4130
    %v4139 = vpack.c.bf16 %v4138, %v4137
    %v4140 = vld [vmem:[#allocation9] sm:$0xf]
    %v4141 = vld [vmem:[#allocation9 + $0x4] sm:$0xf]
    %v4142 = vld [vmem:[#allocation9 + $0x8] sm:$0xf]
    %v4143 = vld [vmem:[#allocation9 + $0xc] sm:$0xf]
    %v4144 = vld [vmem:[#allocation9 + $0x10] sm:$0xf]
    %v4145 = vld [vmem:[#allocation9 + $0x14] sm:$0xf]
    %v4146 = vld [vmem:[#allocation9 + $0x18] sm:$0xf]
    %v4147 = vld [vmem:[#allocation9 + $0x1c] sm:$0xf]
    %v4148 = vld [vmem:[#allocation9 + $0x20] sm:$0xf]
    %v4149 = vld [vmem:[#allocation9 + $0x24] sm:$0xf]
    %v4150 = vld [vmem:[#allocation9 + $0x28] sm:$0xf]
    %v4151 = vld [vmem:[#allocation9 + $0x2c] sm:$0xf]
    %v4152 = vld [vmem:[#allocation9 + $0x30] sm:$0xf]
    %v4153 = vld [vmem:[#allocation9 + $0x34] sm:$0xf]
    %v4154 = vld [vmem:[#allocation9 + $0x38] sm:$0xf]
    %v4155 = vld [vmem:[#allocation9 + $0x3c] sm:$0xf]
    %v4156 = vld [vmem:[%s17] sm:$0x1]
    %v4158 = vperm.slane %v4156, 0
    %v4176 = vunpack.c.l.b16 %v4140
    %v4177 = vunpack.c.l.b16 %v4141
    %v4178 = vunpack.c.l.b16 %v4142
    %v4179 = vunpack.c.l.b16 %v4143
    %v4180 = vunpack.c.l.b16 %v4144
    %v4181 = vunpack.c.l.b16 %v4145
    %v4182 = vunpack.c.l.b16 %v4146
    %v4183 = vunpack.c.l.b16 %v4147
    %v4184 = vunpack.c.l.b16 %v4148
    %v4185 = vunpack.c.l.b16 %v4149
    %v4186 = vunpack.c.l.b16 %v4150
    %v4187 = vunpack.c.l.b16 %v4151
    %v4188 = vunpack.c.l.b16 %v4152
    %v4189 = vunpack.c.l.b16 %v4153
    %v4190 = vunpack.c.l.b16 %v4154
    %v4191 = vunpack.c.l.b16 %v4155
    %v4192 = vpack.c.b16 %v4177, %v4176
    %v4193 = vpack.c.b16 %v4179, %v4178
    %v4194 = vpack.c.b16 %v4181, %v4180
    %v4195 = vpack.c.b16 %v4183, %v4182
    %v4196 = vpack.c.b16 %v4185, %v4184
    %v4197 = vpack.c.b16 %v4187, %v4186
    %v4198 = vpack.c.b16 %v4189, %v4188
    %v4199 = vpack.c.b16 %v4191, %v4190
    %4208 = vmatpush.bf16.msra.mxu0 %v4199
    %4209 = vmatpush.bf16.msra.mxu0 %v4198
    %4210 = vmatpush.bf16.msra.mxu0 %v4197
    %4211 = vmatpush.bf16.msra.mxu0 %v4196
    %4212 = vmatpush.bf16.msra.mxu0 %v4195
    %4213 = vmatpush.bf16.msra.mxu0 %v4194
    %4214 = vmatpush.bf16.msra.mxu0 %v4193
    %4215 = vmatpush.bf16.msra.mxu0 %v4192
    %4216 = vmatmul.bf16.gmra.mxu0 %v4139
    %v4217 = vpop.f32.mrf.mxu0
    %v4218 = vadd.f32 %v4158, %v4217
    %v4219 = vpop.f32.mrf.mxu0
    %v4220 = vadd.f32 %v4158, %v4219
    %4221 = vdwg.mxu0
    %v4222 = vadd.f32 %v3436, %v4218
    %v4223 = vadd.f32 %v3437, %v4220
    %4224 = vadd.xlane.f32.xlu0 %v4222
    %v4225 = vpop.xlane.xlu0 %4224
    %4226 = vadd.xlane.f32.xlu0 %v4223
    %v4227 = vpop.xlane.xlu0 %4226
    %v4228 = vmul.f32 %v4225, %v1006
    %v4229 = vmul.f32 %v4227, %v1006
    %v4230 = vsub.f32 %v4222, %v4228
    %v4231 = vsub.f32 %v4223, %v4229
    %v4232 = vmul.f32 %v4230, %v4230
    %v4233 = vmul.f32 %v4231, %v4231
    %4234 = vadd.xlane.f32.xlu0 %v4232
    %v4235 = vpop.xlane.xlu0 %4234
    %4236 = vadd.xlane.f32.xlu0 %v4233
    %v4237 = vpop.xlane.xlu0 %4236
    %v4238 = vmul.f32 %v4235, %v1006
    %v4239 = vmul.f32 %v4237, %v1006
    %v4240 = vadd.f32 %v4238, 1e-05
    %v4241 = vadd.f32 %v4239, 1e-05
    %v4242 = vrsqrt.pop %v4240
    %v4243 = vmul.f32 %v4242, %v4240
    %v4244 = vmul.f32 %v4243, %v4242
    %v4245 = vmul.f32 0.5, %v4244
    %v4246 = vsub.f32 1.5, %v4245
    %v4247 = vmul.f32 %v4242, %v4246
    %vm4248 = vweird.f32 %v4240
    %vm4249 = vweird.f32 %v4242
    %vm4250 = vmor %vm4248, %vm4249
    %v4251 = vsel %vm4250, %v4242, %v4247
    %v4252 = vrsqrt.pop %v4241
    %v4253 = vmul.f32 %v4252, %v4241
    %v4254 = vmul.f32 %v4253, %v4252
    %v4255 = vmul.f32 0.5, %v4254
    %v4256 = vsub.f32 1.5, %v4255
    %v4257 = vmul.f32 %v4252, %v4256
    %vm4258 = vweird.f32 %v4241
    %vm4259 = vweird.f32 %v4252
    %vm4260 = vmor %vm4258, %vm4259
    %v4261 = vsel %vm4260, %v4252, %v4257
    %v4262 = vmul.f32 %v4230, %v4251
    %v4263 = vmul.f32 %v4231, %v4261
    %v4264 = vld [vmem:[%s18] sm:$0x1]
    %v4266 = vperm.slane %v4264, 0
    %v4268 = vmul.f32 %v4262, %v4266
    %v4269 = vmul.f32 %v4263, %v4266
    %v4270 = vld [vmem:[%s19] sm:$0x1]
    %v4272 = vperm.slane %v4270, 0
    %v4274 = vadd.f32 %v4268, %v4272
    %v4275 = vadd.f32 %v4269, %v4272
    %v4276 = vpack.c.bf16 %v4275, %v4274
    %v4277 = vld [vmem:[#allocation10] sm:$0xff]
    %v4278 = vld [vmem:[#allocation10 + $0x8] sm:$0xff]
    %v4279 = vld [vmem:[#allocation10 + $0x10] sm:$0xff]
    %v4280 = vld [vmem:[#allocation10 + $0x18] sm:$0xff]
    %v4281 = vld [vmem:[#allocation10 + $0x20] sm:$0xff]
    %v4282 = vld [vmem:[#allocation10 + $0x28] sm:$0xff]
    %v4283 = vld [vmem:[#allocation10 + $0x30] sm:$0xff]
    %v4284 = vld [vmem:[#allocation10 + $0x38] sm:$0xff]
    %v4285 = vld [vmem:[#allocation10 + $0x40] sm:$0xff]
    %v4286 = vld [vmem:[#allocation10 + $0x48] sm:$0xff]
    %v4287 = vld [vmem:[#allocation10 + $0x50] sm:$0xff]
    %v4288 = vld [vmem:[#allocation10 + $0x58] sm:$0xff]
    %v4289 = vld [vmem:[#allocation10 + $0x60] sm:$0xff]
    %v4290 = vld [vmem:[#allocation10 + $0x68] sm:$0xff]
    %v4291 = vld [vmem:[#allocation10 + $0x70] sm:$0xff]
    %v4292 = vld [vmem:[#allocation10 + $0x78] sm:$0xff]
    %v4293 = vld [vmem:[#allocation10 + $0x80] sm:$0xff]
    %v4294 = vld [vmem:[#allocation10 + $0x88] sm:$0xff]
    %v4295 = vld [vmem:[#allocation10 + $0x90] sm:$0xff]
    %v4296 = vld [vmem:[#allocation10 + $0x98] sm:$0xff]
    %v4297 = vld [vmem:[#allocation10 + $0xa0] sm:$0xff]
    %v4298 = vld [vmem:[#allocation10 + $0xa8] sm:$0xff]
    %v4299 = vld [vmem:[#allocation10 + $0xb0] sm:$0xff]
    %v4300 = vld [vmem:[#allocation10 + $0xb8] sm:$0xff]
    %v4301 = vld [vmem:[#allocation10 + $0xc0] sm:$0xff]
    %v4302 = vld [vmem:[#allocation10 + $0xc8] sm:$0xff]
    %v4303 = vld [vmem:[#allocation10 + $0xd0] sm:$0xff]
    %v4304 = vld [vmem:[#allocation10 + $0xd8] sm:$0xff]
    %v4305 = vld [vmem:[#allocation10 + $0xe0] sm:$0xff]
    %v4306 = vld [vmem:[#allocation10 + $0xe8] sm:$0xff]
    %v4307 = vld [vmem:[#allocation10 + $0xf0] sm:$0xff]
    %v4308 = vld [vmem:[#allocation10 + $0xf8] sm:$0xff]
    %v4309 = vld [vmem:[#allocation10 + $0x100] sm:$0xff]
    %v4310 = vld [vmem:[#allocation10 + $0x108] sm:$0xff]
    %v4311 = vld [vmem:[#allocation10 + $0x110] sm:$0xff]
    %v4312 = vld [vmem:[#allocation10 + $0x118] sm:$0xff]
    %v4313 = vld [vmem:[#allocation10 + $0x120] sm:$0xff]
    %v4314 = vld [vmem:[#allocation10 + $0x128] sm:$0xff]
    %v4315 = vld [vmem:[#allocation10 + $0x130] sm:$0xff]
    %v4316 = vld [vmem:[#allocation10 + $0x138] sm:$0xff]
    %v4317 = vld [vmem:[#allocation10 + $0x140] sm:$0xff]
    %v4318 = vld [vmem:[#allocation10 + $0x148] sm:$0xff]
    %v4319 = vld [vmem:[#allocation10 + $0x150] sm:$0xff]
    %v4320 = vld [vmem:[#allocation10 + $0x158] sm:$0xff]
    %v4321 = vld [vmem:[#allocation10 + $0x160] sm:$0xff]
    %v4322 = vld [vmem:[#allocation10 + $0x168] sm:$0xff]
    %v4323 = vld [vmem:[#allocation10 + $0x170] sm:$0xff]
    %v4324 = vld [vmem:[#allocation10 + $0x178] sm:$0xff]
    %v4325 = vld [vmem:[#allocation10 + $0x180] sm:$0xff]
    %v4326 = vld [vmem:[#allocation10 + $0x188] sm:$0xff]
    %v4327 = vld [vmem:[#allocation10 + $0x190] sm:$0xff]
    %v4328 = vld [vmem:[#allocation10 + $0x198] sm:$0xff]
    %v4329 = vld [vmem:[#allocation10 + $0x1a0] sm:$0xff]
    %v4330 = vld [vmem:[#allocation10 + $0x1a8] sm:$0xff]
    %v4331 = vld [vmem:[#allocation10 + $0x1b0] sm:$0xff]
    %v4332 = vld [vmem:[#allocation10 + $0x1b8] sm:$0xff]
    %v4333 = vld [vmem:[#allocation10 + $0x1c0] sm:$0xff]
    %v4334 = vld [vmem:[#allocation10 + $0x1c8] sm:$0xff]
    %v4335 = vld [vmem:[#allocation10 + $0x1d0] sm:$0xff]
    %v4336 = vld [vmem:[#allocation10 + $0x1d8] sm:$0xff]
    %v4337 = vld [vmem:[#allocation10 + $0x1e0] sm:$0xff]
    %v4338 = vld [vmem:[#allocation10 + $0x1e8] sm:$0xff]
    %v4339 = vld [vmem:[#allocation10 + $0x1f0] sm:$0xff]
    %v4340 = vld [vmem:[#allocation10 + $0x1f8] sm:$0xff]
    %v4341 = vld [vmem:[#allocation10 + $0x200] sm:$0xff]
    %v4342 = vld [vmem:[#allocation10 + $0x208] sm:$0xff]
    %v4343 = vld [vmem:[#allocation10 + $0x210] sm:$0xff]
    %v4344 = vld [vmem:[#allocation10 + $0x218] sm:$0xff]
    %v4345 = vld [vmem:[#allocation10 + $0x220] sm:$0xff]
    %v4346 = vld [vmem:[#allocation10 + $0x228] sm:$0xff]
    %v4347 = vld [vmem:[#allocation10 + $0x230] sm:$0xff]
    %v4348 = vld [vmem:[#allocation10 + $0x238] sm:$0xff]
    %v4349 = vld [vmem:[#allocation10 + $0x240] sm:$0xff]
    %v4350 = vld [vmem:[#allocation10 + $0x248] sm:$0xff]
    %v4351 = vld [vmem:[#allocation10 + $0x250] sm:$0xff]
    %v4352 = vld [vmem:[#allocation10 + $0x258] sm:$0xff]
    %v4353 = vld [vmem:[#allocation10 + $0x260] sm:$0xff]
    %v4354 = vld [vmem:[#allocation10 + $0x268] sm:$0xff]
    %v4355 = vld [vmem:[#allocation10 + $0x270] sm:$0xff]
    %v4356 = vld [vmem:[#allocation10 + $0x278] sm:$0xff]
    %v4357 = vld [vmem:[#allocation10 + $0x280] sm:$0xff]
    %v4358 = vld [vmem:[#allocation10 + $0x288] sm:$0xff]
    %v4359 = vld [vmem:[#allocation10 + $0x290] sm:$0xff]
    %v4360 = vld [vmem:[#allocation10 + $0x298] sm:$0xff]
    %v4361 = vld [vmem:[#allocation10 + $0x2a0] sm:$0xff]
    %v4362 = vld [vmem:[#allocation10 + $0x2a8] sm:$0xff]
    %v4363 = vld [vmem:[#allocation10 + $0x2b0] sm:$0xff]
    %v4364 = vld [vmem:[#allocation10 + $0x2b8] sm:$0xff]
    %v4365 = vld [vmem:[#allocation10 + $0x2c0] sm:$0xff]
    %v4366 = vld [vmem:[#allocation10 + $0x2c8] sm:$0xff]
    %v4367 = vld [vmem:[#allocation10 + $0x2d0] sm:$0xff]
    %v4368 = vld [vmem:[#allocation10 + $0x2d8] sm:$0xff]
    %v4369 = vld [vmem:[#allocation10 + $0x2e0] sm:$0xff]
    %v4370 = vld [vmem:[#allocation10 + $0x2e8] sm:$0xff]
    %v4371 = vld [vmem:[#allocation10 + $0x2f0] sm:$0xff]
    %v4372 = vld [vmem:[#allocation10 + $0x2f8] sm:$0xff]
    %v4373 = vld [vmem:[#allocation10 + $0x300] sm:$0xff]
    %v4374 = vld [vmem:[#allocation10 + $0x308] sm:$0xff]
    %v4375 = vld [vmem:[#allocation10 + $0x310] sm:$0xff]
    %v4376 = vld [vmem:[#allocation10 + $0x318] sm:$0xff]
    %v4377 = vld [vmem:[#allocation10 + $0x320] sm:$0xff]
    %v4378 = vld [vmem:[#allocation10 + $0x328] sm:$0xff]
    %v4379 = vld [vmem:[#allocation10 + $0x330] sm:$0xff]
    %v4380 = vld [vmem:[#allocation10 + $0x338] sm:$0xff]
    %v4381 = vld [vmem:[#allocation10 + $0x340] sm:$0xff]
    %v4382 = vld [vmem:[#allocation10 + $0x348] sm:$0xff]
    %v4383 = vld [vmem:[#allocation10 + $0x350] sm:$0xff]
    %v4384 = vld [vmem:[#allocation10 + $0x358] sm:$0xff]
    %v4385 = vld [vmem:[#allocation10 + $0x360] sm:$0xff]
    %v4386 = vld [vmem:[#allocation10 + $0x368] sm:$0xff]
    %v4387 = vld [vmem:[#allocation10 + $0x370] sm:$0xff]
    %v4388 = vld [vmem:[#allocation10 + $0x378] sm:$0xff]
    %v4389 = vld [vmem:[#allocation10 + $0x380] sm:$0xff]
    %v4390 = vld [vmem:[#allocation10 + $0x388] sm:$0xff]
    %v4391 = vld [vmem:[#allocation10 + $0x390] sm:$0xff]
    %v4392 = vld [vmem:[#allocation10 + $0x398] sm:$0xff]
    %v4393 = vld [vmem:[#allocation10 + $0x3a0] sm:$0xff]
    %v4394 = vld [vmem:[#allocation10 + $0x3a8] sm:$0xff]
    %v4395 = vld [vmem:[#allocation10 + $0x3b0] sm:$0xff]
    %v4396 = vld [vmem:[#allocation10 + $0x3b8] sm:$0xff]
    %v4397 = vld [vmem:[#allocation10 + $0x3c0] sm:$0xff]
    %v4398 = vld [vmem:[#allocation10 + $0x3c8] sm:$0xff]
    %v4399 = vld [vmem:[#allocation10 + $0x3d0] sm:$0xff]
    %v4400 = vld [vmem:[#allocation10 + $0x3d8] sm:$0xff]
    %v4401 = vld [vmem:[#allocation10 + $0x3e0] sm:$0xff]
    %v4402 = vld [vmem:[#allocation10 + $0x3e8] sm:$0xff]
    %v4403 = vld [vmem:[#allocation10 + $0x3f0] sm:$0xff]
    %v4404 = vld [vmem:[#allocation10 + $0x3f8] sm:$0xff]
    %v4405 = vld [vmem:[%s21] sm:$0xff]
    %v4406 = vld [vmem:[%s21 + $0x8] sm:$0xff]
    %v4409 = vperm.slane %v4405, 0
    %v4410 = vperm.slane %v4405, 1
    %v4411 = vperm.slane %v4405, 2
    %v4412 = vperm.slane %v4405, 3
    %v4413 = vperm.slane %v4405, 4
    %v4414 = vperm.slane %v4405, 5
    %v4415 = vperm.slane %v4405, 6
    %v4416 = vperm.slane %v4405, 7
    %v4417 = vperm.slane %v4406, 0
    %v4418 = vperm.slane %v4406, 1
    %v4419 = vperm.slane %v4406, 2
    %v4420 = vperm.slane %v4406, 3
    %v4421 = vperm.slane %v4406, 4
    %v4422 = vperm.slane %v4406, 5
    %v4423 = vperm.slane %v4406, 6
    %v4424 = vperm.slane %v4406, 7
    %v4569 = vunpack.c.l.b16 %v4277
    %v4570 = vunpack.c.h.b16 %v4277
    %v4571 = vunpack.c.l.b16 %v4278
    %v4572 = vunpack.c.h.b16 %v4278
    %v4573 = vunpack.c.l.b16 %v4279
    %v4574 = vunpack.c.h.b16 %v4279
    %v4575 = vunpack.c.l.b16 %v4280
    %v4576 = vunpack.c.h.b16 %v4280
    %v4577 = vunpack.c.l.b16 %v4281
    %v4578 = vunpack.c.h.b16 %v4281
    %v4579 = vunpack.c.l.b16 %v4282
    %v4580 = vunpack.c.h.b16 %v4282
    %v4581 = vunpack.c.l.b16 %v4283
    %v4582 = vunpack.c.h.b16 %v4283
    %v4583 = vunpack.c.l.b16 %v4284
    %v4584 = vunpack.c.h.b16 %v4284
    %v4585 = vunpack.c.l.b16 %v4285
    %v4586 = vunpack.c.h.b16 %v4285
    %v4587 = vunpack.c.l.b16 %v4286
    %v4588 = vunpack.c.h.b16 %v4286
    %v4589 = vunpack.c.l.b16 %v4287
    %v4590 = vunpack.c.h.b16 %v4287
    %v4591 = vunpack.c.l.b16 %v4288
    %v4592 = vunpack.c.h.b16 %v4288
    %v4593 = vunpack.c.l.b16 %v4289
    %v4594 = vunpack.c.h.b16 %v4289
    %v4595 = vunpack.c.l.b16 %v4290
    %v4596 = vunpack.c.h.b16 %v4290
    %v4597 = vunpack.c.l.b16 %v4291
    %v4598 = vunpack.c.h.b16 %v4291
    %v4599 = vunpack.c.l.b16 %v4292
    %v4600 = vunpack.c.h.b16 %v4292
    %v4601 = vunpack.c.l.b16 %v4293
    %v4602 = vunpack.c.h.b16 %v4293
    %v4603 = vunpack.c.l.b16 %v4294
    %v4604 = vunpack.c.h.b16 %v4294
    %v4605 = vunpack.c.l.b16 %v4295
    %v4606 = vunpack.c.h.b16 %v4295
    %v4607 = vunpack.c.l.b16 %v4296
    %v4608 = vunpack.c.h.b16 %v4296
    %v4609 = vunpack.c.l.b16 %v4297
    %v4610 = vunpack.c.h.b16 %v4297
    %v4611 = vunpack.c.l.b16 %v4298
    %v4612 = vunpack.c.h.b16 %v4298
    %v4613 = vunpack.c.l.b16 %v4299
    %v4614 = vunpack.c.h.b16 %v4299
    %v4615 = vunpack.c.l.b16 %v4300
    %v4616 = vunpack.c.h.b16 %v4300
    %v4617 = vunpack.c.l.b16 %v4301
    %v4618 = vunpack.c.h.b16 %v4301
    %v4619 = vunpack.c.l.b16 %v4302
    %v4620 = vunpack.c.h.b16 %v4302
    %v4621 = vunpack.c.l.b16 %v4303
    %v4622 = vunpack.c.h.b16 %v4303
    %v4623 = vunpack.c.l.b16 %v4304
    %v4624 = vunpack.c.h.b16 %v4304
    %v4625 = vunpack.c.l.b16 %v4305
    %v4626 = vunpack.c.h.b16 %v4305
    %v4627 = vunpack.c.l.b16 %v4306
    %v4628 = vunpack.c.h.b16 %v4306
    %v4629 = vunpack.c.l.b16 %v4307
    %v4630 = vunpack.c.h.b16 %v4307
    %v4631 = vunpack.c.l.b16 %v4308
    %v4632 = vunpack.c.h.b16 %v4308
    %v4633 = vunpack.c.l.b16 %v4309
    %v4634 = vunpack.c.h.b16 %v4309
    %v4635 = vunpack.c.l.b16 %v4310
    %v4636 = vunpack.c.h.b16 %v4310
    %v4637 = vunpack.c.l.b16 %v4311
    %v4638 = vunpack.c.h.b16 %v4311
    %v4639 = vunpack.c.l.b16 %v4312
    %v4640 = vunpack.c.h.b16 %v4312
    %v4641 = vunpack.c.l.b16 %v4313
    %v4642 = vunpack.c.h.b16 %v4313
    %v4643 = vunpack.c.l.b16 %v4314
    %v4644 = vunpack.c.h.b16 %v4314
    %v4645 = vunpack.c.l.b16 %v4315
    %v4646 = vunpack.c.h.b16 %v4315
    %v4647 = vunpack.c.l.b16 %v4316
    %v4648 = vunpack.c.h.b16 %v4316
    %v4649 = vunpack.c.l.b16 %v4317
    %v4650 = vunpack.c.h.b16 %v4317
    %v4651 = vunpack.c.l.b16 %v4318
    %v4652 = vunpack.c.h.b16 %v4318
    %v4653 = vunpack.c.l.b16 %v4319
    %v4654 = vunpack.c.h.b16 %v4319
    %v4655 = vunpack.c.l.b16 %v4320
    %v4656 = vunpack.c.h.b16 %v4320
    %v4657 = vunpack.c.l.b16 %v4321
    %v4658 = vunpack.c.h.b16 %v4321
    %v4659 = vunpack.c.l.b16 %v4322
    %v4660 = vunpack.c.h.b16 %v4322
    %v4661 = vunpack.c.l.b16 %v4323
    %v4662 = vunpack.c.h.b16 %v4323
    %v4663 = vunpack.c.l.b16 %v4324
    %v4664 = vunpack.c.h.b16 %v4324
    %v4665 = vunpack.c.l.b16 %v4325
    %v4666 = vunpack.c.h.b16 %v4325
    %v4667 = vunpack.c.l.b16 %v4326
    %v4668 = vunpack.c.h.b16 %v4326
    %v4669 = vunpack.c.l.b16 %v4327
    %v4670 = vunpack.c.h.b16 %v4327
    %v4671 = vunpack.c.l.b16 %v4328
    %v4672 = vunpack.c.h.b16 %v4328
    %v4673 = vunpack.c.l.b16 %v4329
    %v4674 = vunpack.c.h.b16 %v4329
    %v4675 = vunpack.c.l.b16 %v4330
    %v4676 = vunpack.c.h.b16 %v4330
    %v4677 = vunpack.c.l.b16 %v4331
    %v4678 = vunpack.c.h.b16 %v4331
    %v4679 = vunpack.c.l.b16 %v4332
    %v4680 = vunpack.c.h.b16 %v4332
    %v4681 = vunpack.c.l.b16 %v4333
    %v4682 = vunpack.c.h.b16 %v4333
    %v4683 = vunpack.c.l.b16 %v4334
    %v4684 = vunpack.c.h.b16 %v4334
    %v4685 = vunpack.c.l.b16 %v4335
    %v4686 = vunpack.c.h.b16 %v4335
    %v4687 = vunpack.c.l.b16 %v4336
    %v4688 = vunpack.c.h.b16 %v4336
    %v4689 = vunpack.c.l.b16 %v4337
    %v4690 = vunpack.c.h.b16 %v4337
    %v4691 = vunpack.c.l.b16 %v4338
    %v4692 = vunpack.c.h.b16 %v4338
    %v4693 = vunpack.c.l.b16 %v4339
    %v4694 = vunpack.c.h.b16 %v4339
    %v4695 = vunpack.c.l.b16 %v4340
    %v4696 = vunpack.c.h.b16 %v4340
    %v4697 = vunpack.c.l.b16 %v4341
    %v4698 = vunpack.c.h.b16 %v4341
    %v4699 = vunpack.c.l.b16 %v4342
    %v4700 = vunpack.c.h.b16 %v4342
    %v4701 = vunpack.c.l.b16 %v4343
    %v4702 = vunpack.c.h.b16 %v4343
    %v4703 = vunpack.c.l.b16 %v4344
    %v4704 = vunpack.c.h.b16 %v4344
    %v4705 = vunpack.c.l.b16 %v4345
    %v4706 = vunpack.c.h.b16 %v4345
    %v4707 = vunpack.c.l.b16 %v4346
    %v4708 = vunpack.c.h.b16 %v4346
    %v4709 = vunpack.c.l.b16 %v4347
    %v4710 = vunpack.c.h.b16 %v4347
    %v4711 = vunpack.c.l.b16 %v4348
    %v4712 = vunpack.c.h.b16 %v4348
    %v4713 = vunpack.c.l.b16 %v4349
    %v4714 = vunpack.c.h.b16 %v4349
    %v4715 = vunpack.c.l.b16 %v4350
    %v4716 = vunpack.c.h.b16 %v4350
    %v4717 = vunpack.c.l.b16 %v4351
    %v4718 = vunpack.c.h.b16 %v4351
    %v4719 = vunpack.c.l.b16 %v4352
    %v4720 = vunpack.c.h.b16 %v4352
    %v4721 = vunpack.c.l.b16 %v4353
    %v4722 = vunpack.c.h.b16 %v4353
    %v4723 = vunpack.c.l.b16 %v4354
    %v4724 = vunpack.c.h.b16 %v4354
    %v4725 = vunpack.c.l.b16 %v4355
    %v4726 = vunpack.c.h.b16 %v4355
    %v4727 = vunpack.c.l.b16 %v4356
    %v4728 = vunpack.c.h.b16 %v4356
    %v4729 = vunpack.c.l.b16 %v4357
    %v4730 = vunpack.c.h.b16 %v4357
    %v4731 = vunpack.c.l.b16 %v4358
    %v4732 = vunpack.c.h.b16 %v4358
    %v4733 = vunpack.c.l.b16 %v4359
    %v4734 = vunpack.c.h.b16 %v4359
    %v4735 = vunpack.c.l.b16 %v4360
    %v4736 = vunpack.c.h.b16 %v4360
    %v4737 = vunpack.c.l.b16 %v4361
    %v4738 = vunpack.c.h.b16 %v4361
    %v4739 = vunpack.c.l.b16 %v4362
    %v4740 = vunpack.c.h.b16 %v4362
    %v4741 = vunpack.c.l.b16 %v4363
    %v4742 = vunpack.c.h.b16 %v4363
    %v4743 = vunpack.c.l.b16 %v4364
    %v4744 = vunpack.c.h.b16 %v4364
    %v4745 = vunpack.c.l.b16 %v4365
    %v4746 = vunpack.c.h.b16 %v4365
    %v4747 = vunpack.c.l.b16 %v4366
    %v4748 = vunpack.c.h.b16 %v4366
    %v4749 = vunpack.c.l.b16 %v4367
    %v4750 = vunpack.c.h.b16 %v4367
    %v4751 = vunpack.c.l.b16 %v4368
    %v4752 = vunpack.c.h.b16 %v4368
    %v4753 = vunpack.c.l.b16 %v4369
    %v4754 = vunpack.c.h.b16 %v4369
    %v4755 = vunpack.c.l.b16 %v4370
    %v4756 = vunpack.c.h.b16 %v4370
    %v4757 = vunpack.c.l.b16 %v4371
    %v4758 = vunpack.c.h.b16 %v4371
    %v4759 = vunpack.c.l.b16 %v4372
    %v4760 = vunpack.c.h.b16 %v4372
    %v4761 = vunpack.c.l.b16 %v4373
    %v4762 = vunpack.c.h.b16 %v4373
    %v4763 = vunpack.c.l.b16 %v4374
    %v4764 = vunpack.c.h.b16 %v4374
    %v4765 = vunpack.c.l.b16 %v4375
    %v4766 = vunpack.c.h.b16 %v4375
    %v4767 = vunpack.c.l.b16 %v4376
    %v4768 = vunpack.c.h.b16 %v4376
    %v4769 = vunpack.c.l.b16 %v4377
    %v4770 = vunpack.c.h.b16 %v4377
    %v4771 = vunpack.c.l.b16 %v4378
    %v4772 = vunpack.c.h.b16 %v4378
    %v4773 = vunpack.c.l.b16 %v4379
    %v4774 = vunpack.c.h.b16 %v4379
    %v4775 = vunpack.c.l.b16 %v4380
    %v4776 = vunpack.c.h.b16 %v4380
    %v4777 = vunpack.c.l.b16 %v4381
    %v4778 = vunpack.c.h.b16 %v4381
    %v4779 = vunpack.c.l.b16 %v4382
    %v4780 = vunpack.c.h.b16 %v4382
    %v4781 = vunpack.c.l.b16 %v4383
    %v4782 = vunpack.c.h.b16 %v4383
    %v4783 = vunpack.c.l.b16 %v4384
    %v4784 = vunpack.c.h.b16 %v4384
    %v4785 = vunpack.c.l.b16 %v4385
    %v4786 = vunpack.c.h.b16 %v4385
    %v4787 = vunpack.c.l.b16 %v4386
    %v4788 = vunpack.c.h.b16 %v4386
    %v4789 = vunpack.c.l.b16 %v4387
    %v4790 = vunpack.c.h.b16 %v4387
    %v4791 = vunpack.c.l.b16 %v4388
    %v4792 = vunpack.c.h.b16 %v4388
    %v4793 = vunpack.c.l.b16 %v4389
    %v4794 = vunpack.c.h.b16 %v4389
    %v4795 = vunpack.c.l.b16 %v4390
    %v4796 = vunpack.c.h.b16 %v4390
    %v4797 = vunpack.c.l.b16 %v4391
    %v4798 = vunpack.c.h.b16 %v4391
    %v4799 = vunpack.c.l.b16 %v4392
    %v4800 = vunpack.c.h.b16 %v4392
    %v4801 = vunpack.c.l.b16 %v4393
    %v4802 = vunpack.c.h.b16 %v4393
    %v4803 = vunpack.c.l.b16 %v4394
    %v4804 = vunpack.c.h.b16 %v4394
    %v4805 = vunpack.c.l.b16 %v4395
    %v4806 = vunpack.c.h.b16 %v4395
    %v4807 = vunpack.c.l.b16 %v4396
    %v4808 = vunpack.c.h.b16 %v4396
    %v4809 = vunpack.c.l.b16 %v4397
    %v4810 = vunpack.c.h.b16 %v4397
    %v4811 = vunpack.c.l.b16 %v4398
    %v4812 = vunpack.c.h.b16 %v4398
    %v4813 = vunpack.c.l.b16 %v4399
    %v4814 = vunpack.c.h.b16 %v4399
    %v4815 = vunpack.c.l.b16 %v4400
    %v4816 = vunpack.c.h.b16 %v4400
    %v4817 = vunpack.c.l.b16 %v4401
    %v4818 = vunpack.c.h.b16 %v4401
    %v4819 = vunpack.c.l.b16 %v4402
    %v4820 = vunpack.c.h.b16 %v4402
    %v4821 = vunpack.c.l.b16 %v4403
    %v4822 = vunpack.c.h.b16 %v4403
    %v4823 = vunpack.c.l.b16 %v4404
    %v4824 = vunpack.c.h.b16 %v4404
    %v4825 = vpack.c.b16 %v4585, %v4569
    %v4826 = vpack.c.b16 %v4586, %v4570
    %v4827 = vpack.c.b16 %v4587, %v4571
    %v4828 = vpack.c.b16 %v4588, %v4572
    %v4829 = vpack.c.b16 %v4589, %v4573
    %v4830 = vpack.c.b16 %v4590, %v4574
    %v4831 = vpack.c.b16 %v4591, %v4575
    %v4832 = vpack.c.b16 %v4592, %v4576
    %v4833 = vpack.c.b16 %v4593, %v4577
    %v4834 = vpack.c.b16 %v4594, %v4578
    %v4835 = vpack.c.b16 %v4595, %v4579
    %v4836 = vpack.c.b16 %v4596, %v4580
    %v4837 = vpack.c.b16 %v4597, %v4581
    %v4838 = vpack.c.b16 %v4598, %v4582
    %v4839 = vpack.c.b16 %v4599, %v4583
    %v4840 = vpack.c.b16 %v4600, %v4584
    %v4841 = vpack.c.b16 %v4617, %v4601
    %v4842 = vpack.c.b16 %v4618, %v4602
    %v4843 = vpack.c.b16 %v4619, %v4603
    %v4844 = vpack.c.b16 %v4620, %v4604
    %v4845 = vpack.c.b16 %v4621, %v4605
    %v4846 = vpack.c.b16 %v4622, %v4606
    %v4847 = vpack.c.b16 %v4623, %v4607
    %v4848 = vpack.c.b16 %v4624, %v4608
    %v4849 = vpack.c.b16 %v4625, %v4609
    %v4850 = vpack.c.b16 %v4626, %v4610
    %v4851 = vpack.c.b16 %v4627, %v4611
    %v4852 = vpack.c.b16 %v4628, %v4612
    %v4853 = vpack.c.b16 %v4629, %v4613
    %v4854 = vpack.c.b16 %v4630, %v4614
    %v4855 = vpack.c.b16 %v4631, %v4615
    %v4856 = vpack.c.b16 %v4632, %v4616
    %v4857 = vpack.c.b16 %v4649, %v4633
    %v4858 = vpack.c.b16 %v4650, %v4634
    %v4859 = vpack.c.b16 %v4651, %v4635
    %v4860 = vpack.c.b16 %v4652, %v4636
    %v4861 = vpack.c.b16 %v4653, %v4637
    %v4862 = vpack.c.b16 %v4654, %v4638
    %v4863 = vpack.c.b16 %v4655, %v4639
    %v4864 = vpack.c.b16 %v4656, %v4640
    %v4865 = vpack.c.b16 %v4657, %v4641
    %v4866 = vpack.c.b16 %v4658, %v4642
    %v4867 = vpack.c.b16 %v4659, %v4643
    %v4868 = vpack.c.b16 %v4660, %v4644
    %v4869 = vpack.c.b16 %v4661, %v4645
    %v4870 = vpack.c.b16 %v4662, %v4646
    %v4871 = vpack.c.b16 %v4663, %v4647
    %v4872 = vpack.c.b16 %v4664, %v4648
    %v4873 = vpack.c.b16 %v4681, %v4665
    %v4874 = vpack.c.b16 %v4682, %v4666
    %v4875 = vpack.c.b16 %v4683, %v4667
    %v4876 = vpack.c.b16 %v4684, %v4668
    %v4877 = vpack.c.b16 %v4685, %v4669
    %v4878 = vpack.c.b16 %v4686, %v4670
    %v4879 = vpack.c.b16 %v4687, %v4671
    %v4880 = vpack.c.b16 %v4688, %v4672
    %v4881 = vpack.c.b16 %v4689, %v4673
    %v4882 = vpack.c.b16 %v4690, %v4674
    %v4883 = vpack.c.b16 %v4691, %v4675
    %v4884 = vpack.c.b16 %v4692, %v4676
    %v4885 = vpack.c.b16 %v4693, %v4677
    %v4886 = vpack.c.b16 %v4694, %v4678
    %v4887 = vpack.c.b16 %v4695, %v4679
    %v4888 = vpack.c.b16 %v4696, %v4680
    %v4889 = vpack.c.b16 %v4713, %v4697
    %v4890 = vpack.c.b16 %v4714, %v4698
    %v4891 = vpack.c.b16 %v4715, %v4699
    %v4892 = vpack.c.b16 %v4716, %v4700
    %v4893 = vpack.c.b16 %v4717, %v4701
    %v4894 = vpack.c.b16 %v4718, %v4702
    %v4895 = vpack.c.b16 %v4719, %v4703
    %v4896 = vpack.c.b16 %v4720, %v4704
    %v4897 = vpack.c.b16 %v4721, %v4705
    %v4898 = vpack.c.b16 %v4722, %v4706
    %v4899 = vpack.c.b16 %v4723, %v4707
    %v4900 = vpack.c.b16 %v4724, %v4708
    %v4901 = vpack.c.b16 %v4725, %v4709
    %v4902 = vpack.c.b16 %v4726, %v4710
    %v4903 = vpack.c.b16 %v4727, %v4711
    %v4904 = vpack.c.b16 %v4728, %v4712
    %v4905 = vpack.c.b16 %v4745, %v4729
    %v4906 = vpack.c.b16 %v4746, %v4730
    %v4907 = vpack.c.b16 %v4747, %v4731
    %v4908 = vpack.c.b16 %v4748, %v4732
    %v4909 = vpack.c.b16 %v4749, %v4733
    %v4910 = vpack.c.b16 %v4750, %v4734
    %v4911 = vpack.c.b16 %v4751, %v4735
    %v4912 = vpack.c.b16 %v4752, %v4736
    %v4913 = vpack.c.b16 %v4753, %v4737
    %v4914 = vpack.c.b16 %v4754, %v4738
    %v4915 = vpack.c.b16 %v4755, %v4739
    %v4916 = vpack.c.b16 %v4756, %v4740
    %v4917 = vpack.c.b16 %v4757, %v4741
    %v4918 = vpack.c.b16 %v4758, %v4742
    %v4919 = vpack.c.b16 %v4759, %v4743
    %v4920 = vpack.c.b16 %v4760, %v4744
    %v4921 = vpack.c.b16 %v4777, %v4761
    %v4922 = vpack.c.b16 %v4778, %v4762
    %v4923 = vpack.c.b16 %v4779, %v4763
    %v4924 = vpack.c.b16 %v4780, %v4764
    %v4925 = vpack.c.b16 %v4781, %v4765
    %v4926 = vpack.c.b16 %v4782, %v4766
    %v4927 = vpack.c.b16 %v4783, %v4767
    %v4928 = vpack.c.b16 %v4784, %v4768
    %v4929 = vpack.c.b16 %v4785, %v4769
    %v4930 = vpack.c.b16 %v4786, %v4770
    %v4931 = vpack.c.b16 %v4787, %v4771
    %v4932 = vpack.c.b16 %v4788, %v4772
    %v4933 = vpack.c.b16 %v4789, %v4773
    %v4934 = vpack.c.b16 %v4790, %v4774
    %v4935 = vpack.c.b16 %v4791, %v4775
    %v4936 = vpack.c.b16 %v4792, %v4776
    %v4937 = vpack.c.b16 %v4809, %v4793
    %v4938 = vpack.c.b16 %v4810, %v4794
    %v4939 = vpack.c.b16 %v4811, %v4795
    %v4940 = vpack.c.b16 %v4812, %v4796
    %v4941 = vpack.c.b16 %v4813, %v4797
    %v4942 = vpack.c.b16 %v4814, %v4798
    %v4943 = vpack.c.b16 %v4815, %v4799
    %v4944 = vpack.c.b16 %v4816, %v4800
    %v4945 = vpack.c.b16 %v4817, %v4801
    %v4946 = vpack.c.b16 %v4818, %v4802
    %v4947 = vpack.c.b16 %v4819, %v4803
    %v4948 = vpack.c.b16 %v4820, %v4804
    %v4949 = vpack.c.b16 %v4821, %v4805
    %v4950 = vpack.c.b16 %v4822, %v4806
    %v4951 = vpack.c.b16 %v4823, %v4807
    %v4952 = vpack.c.b16 %v4824, %v4808
    %5081 = vmatpush.bf16.msra.mxu0 %v4937
    %5082 = vmatpush.bf16.msra.mxu0 %v4921
    %5083 = vmatpush.bf16.msra.mxu0 %v4905
    %5084 = vmatpush.bf16.msra.mxu0 %v4889
    %5085 = vmatpush.bf16.msra.mxu0 %v4873
    %5086 = vmatpush.bf16.msra.mxu0 %v4857
    %5087 = vmatpush.bf16.msra.mxu0 %v4841
    %5088 = vmatpush.bf16.msra.mxu0 %v4825
    %5089 = vmatmul.bf16.gmra.mxu0 %v4276
    %v5090 = vpop.f32.mrf.mxu0
    %v5091 = vadd.f32 %v4409, %v5090
    %v5092 = vpop.f32.mrf.mxu0
    %v5093 = vadd.f32 %v4409, %v5092
    %5094 = vdwg.mxu0
    %5095 = vmatpush.bf16.msra.mxu0 %v4938
    %5096 = vmatpush.bf16.msra.mxu0 %v4922
    %5097 = vmatpush.bf16.msra.mxu0 %v4906
    %5098 = vmatpush.bf16.msra.mxu0 %v4890
    %5099 = vmatpush.bf16.msra.mxu0 %v4874
    %5100 = vmatpush.bf16.msra.mxu0 %v4858
    %5101 = vmatpush.bf16.msra.mxu0 %v4842
    %5102 = vmatpush.bf16.msra.mxu0 %v4826
    %5103 = vmatmul.bf16.gmra.mxu0 %v4276
    %v5104 = vpop.f32.mrf.mxu0
    %v5105 = vadd.f32 %v4410, %v5104
    %v5106 = vpop.f32.mrf.mxu0
    %v5107 = vadd.f32 %v4410, %v5106
    %5108 = vdwg.mxu0
    %5109 = vmatpush.bf16.msra.mxu0 %v4939
    %5110 = vmatpush.bf16.msra.mxu0 %v4923
    %5111 = vmatpush.bf16.msra.mxu0 %v4907
    %5112 = vmatpush.bf16.msra.mxu0 %v4891
    %5113 = vmatpush.bf16.msra.mxu0 %v4875
    %5114 = vmatpush.bf16.msra.mxu0 %v4859
    %5115 = vmatpush.bf16.msra.mxu0 %v4843
    %5116 = vmatpush.bf16.msra.mxu0 %v4827
    %5117 = vmatmul.bf16.gmra.mxu0 %v4276
    %v5118 = vpop.f32.mrf.mxu0
    %v5119 = vadd.f32 %v4411, %v5118
    %v5120 = vpop.f32.mrf.mxu0
    %v5121 = vadd.f32 %v4411, %v5120
    %5122 = vdwg.mxu0
    %5123 = vmatpush.bf16.msra.mxu0 %v4940
    %5124 = vmatpush.bf16.msra.mxu0 %v4924
    %5125 = vmatpush.bf16.msra.mxu0 %v4908
    %5126 = vmatpush.bf16.msra.mxu0 %v4892
    %5127 = vmatpush.bf16.msra.mxu0 %v4876
    %5128 = vmatpush.bf16.msra.mxu0 %v4860
    %5129 = vmatpush.bf16.msra.mxu0 %v4844
    %5130 = vmatpush.bf16.msra.mxu0 %v4828
    %5131 = vmatmul.bf16.gmra.mxu0 %v4276
    %v5132 = vpop.f32.mrf.mxu0
    %v5133 = vadd.f32 %v4412, %v5132
    %v5134 = vpop.f32.mrf.mxu0
    %v5135 = vadd.f32 %v4412, %v5134
    %5136 = vdwg.mxu0
    %5137 = vmatpush.bf16.msra.mxu0 %v4941
    %5138 = vmatpush.bf16.msra.mxu0 %v4925
    %5139 = vmatpush.bf16.msra.mxu0 %v4909
    %5140 = vmatpush.bf16.msra.mxu0 %v4893
    %5141 = vmatpush.bf16.msra.mxu0 %v4877
    %5142 = vmatpush.bf16.msra.mxu0 %v4861
    %5143 = vmatpush.bf16.msra.mxu0 %v4845
    %5144 = vmatpush.bf16.msra.mxu0 %v4829
    %5145 = vmatmul.bf16.gmra.mxu0 %v4276
    %v5146 = vpop.f32.mrf.mxu0
    %v5147 = vadd.f32 %v4413, %v5146
    %v5148 = vpop.f32.mrf.mxu0
    %v5149 = vadd.f32 %v4413, %v5148
    %5150 = vdwg.mxu0
    %5151 = vmatpush.bf16.msra.mxu0 %v4942
    %5152 = vmatpush.bf16.msra.mxu0 %v4926
    %5153 = vmatpush.bf16.msra.mxu0 %v4910
    %5154 = vmatpush.bf16.msra.mxu0 %v4894
    %5155 = vmatpush.bf16.msra.mxu0 %v4878
    %5156 = vmatpush.bf16.msra.mxu0 %v4862
    %5157 = vmatpush.bf16.msra.mxu0 %v4846
    %5158 = vmatpush.bf16.msra.mxu0 %v4830
    %5159 = vmatmul.bf16.gmra.mxu0 %v4276
    %v5160 = vpop.f32.mrf.mxu0
    %v5161 = vadd.f32 %v4414, %v5160
    %v5162 = vpop.f32.mrf.mxu0
    %v5163 = vadd.f32 %v4414, %v5162
    %5164 = vdwg.mxu0
    %5165 = vmatpush.bf16.msra.mxu0 %v4943
    %5166 = vmatpush.bf16.msra.mxu0 %v4927
    %5167 = vmatpush.bf16.msra.mxu0 %v4911
    %5168 = vmatpush.bf16.msra.mxu0 %v4895
    %5169 = vmatpush.bf16.msra.mxu0 %v4879
    %5170 = vmatpush.bf16.msra.mxu0 %v4863
    %5171 = vmatpush.bf16.msra.mxu0 %v4847
    %5172 = vmatpush.bf16.msra.mxu0 %v4831
    %5173 = vmatmul.bf16.gmra.mxu0 %v4276
    %v5174 = vpop.f32.mrf.mxu0
    %v5175 = vadd.f32 %v4415, %v5174
    %v5176 = vpop.f32.mrf.mxu0
    %v5177 = vadd.f32 %v4415, %v5176
    %5178 = vdwg.mxu0
    %5179 = vmatpush.bf16.msra.mxu0 %v4944
    %5180 = vmatpush.bf16.msra.mxu0 %v4928
    %5181 = vmatpush.bf16.msra.mxu0 %v4912
    %5182 = vmatpush.bf16.msra.mxu0 %v4896
    %5183 = vmatpush.bf16.msra.mxu0 %v4880
    %5184 = vmatpush.bf16.msra.mxu0 %v4864
    %5185 = vmatpush.bf16.msra.mxu0 %v4848
    %5186 = vmatpush.bf16.msra.mxu0 %v4832
    %5187 = vmatmul.bf16.gmra.mxu0 %v4276
    %v5188 = vpop.f32.mrf.mxu0
    %v5189 = vadd.f32 %v4416, %v5188
    %v5190 = vpop.f32.mrf.mxu0
    %v5191 = vadd.f32 %v4416, %v5190
    %5192 = vdwg.mxu0
    %5193 = vmatpush.bf16.msra.mxu0 %v4945
    %5194 = vmatpush.bf16.msra.mxu0 %v4929
    %5195 = vmatpush.bf16.msra.mxu0 %v4913
    %5196 = vmatpush.bf16.msra.mxu0 %v4897
    %5197 = vmatpush.bf16.msra.mxu0 %v4881
    %5198 = vmatpush.bf16.msra.mxu0 %v4865
    %5199 = vmatpush.bf16.msra.mxu0 %v4849
    %5200 = vmatpush.bf16.msra.mxu0 %v4833
    %5201 = vmatmul.bf16.gmra.mxu0 %v4276
    %v5202 = vpop.f32.mrf.mxu0
    %v5203 = vadd.f32 %v4417, %v5202
    %v5204 = vpop.f32.mrf.mxu0
    %v5205 = vadd.f32 %v4417, %v5204
    %5206 = vdwg.mxu0
    %5207 = vmatpush.bf16.msra.mxu0 %v4946
    %5208 = vmatpush.bf16.msra.mxu0 %v4930
    %5209 = vmatpush.bf16.msra.mxu0 %v4914
    %5210 = vmatpush.bf16.msra.mxu0 %v4898
    %5211 = vmatpush.bf16.msra.mxu0 %v4882
    %5212 = vmatpush.bf16.msra.mxu0 %v4866
    %5213 = vmatpush.bf16.msra.mxu0 %v4850
    %5214 = vmatpush.bf16.msra.mxu0 %v4834
    %5215 = vmatmul.bf16.gmra.mxu0 %v4276
    %v5216 = vpop.f32.mrf.mxu0
    %v5217 = vadd.f32 %v4418, %v5216
    %v5218 = vpop.f32.mrf.mxu0
    %v5219 = vadd.f32 %v4418, %v5218
    %5220 = vdwg.mxu0
    %5221 = vmatpush.bf16.msra.mxu0 %v4947
    %5222 = vmatpush.bf16.msra.mxu0 %v4931
    %5223 = vmatpush.bf16.msra.mxu0 %v4915
    %5224 = vmatpush.bf16.msra.mxu0 %v4899
    %5225 = vmatpush.bf16.msra.mxu0 %v4883
    %5226 = vmatpush.bf16.msra.mxu0 %v4867
    %5227 = vmatpush.bf16.msra.mxu0 %v4851
    %5228 = vmatpush.bf16.msra.mxu0 %v4835
    %5229 = vmatmul.bf16.gmra.mxu0 %v4276
    %v5230 = vpop.f32.mrf.mxu0
    %v5231 = vadd.f32 %v4419, %v5230
    %v5232 = vpop.f32.mrf.mxu0
    %v5233 = vadd.f32 %v4419, %v5232
    %5234 = vdwg.mxu0
    %5235 = vmatpush.bf16.msra.mxu0 %v4948
    %5236 = vmatpush.bf16.msra.mxu0 %v4932
    %5237 = vmatpush.bf16.msra.mxu0 %v4916
    %5238 = vmatpush.bf16.msra.mxu0 %v4900
    %5239 = vmatpush.bf16.msra.mxu0 %v4884
    %5240 = vmatpush.bf16.msra.mxu0 %v4868
    %5241 = vmatpush.bf16.msra.mxu0 %v4852
    %5242 = vmatpush.bf16.msra.mxu0 %v4836
    %5243 = vmatmul.bf16.gmra.mxu0 %v4276
    %v5244 = vpop.f32.mrf.mxu0
    %v5245 = vadd.f32 %v4420, %v5244
    %v5246 = vpop.f32.mrf.mxu0
    %v5247 = vadd.f32 %v4420, %v5246
    %5248 = vdwg.mxu0
    %5249 = vmatpush.bf16.msra.mxu0 %v4949
    %5250 = vmatpush.bf16.msra.mxu0 %v4933
    %5251 = vmatpush.bf16.msra.mxu0 %v4917
    %5252 = vmatpush.bf16.msra.mxu0 %v4901
    %5253 = vmatpush.bf16.msra.mxu0 %v4885
    %5254 = vmatpush.bf16.msra.mxu0 %v4869
    %5255 = vmatpush.bf16.msra.mxu0 %v4853
    %5256 = vmatpush.bf16.msra.mxu0 %v4837
    %5257 = vmatmul.bf16.gmra.mxu0 %v4276
    %v5258 = vpop.f32.mrf.mxu0
    %v5259 = vadd.f32 %v4421, %v5258
    %v5260 = vpop.f32.mrf.mxu0
    %v5261 = vadd.f32 %v4421, %v5260
    %5262 = vdwg.mxu0
    %5263 = vmatpush.bf16.msra.mxu0 %v4950
    %5264 = vmatpush.bf16.msra.mxu0 %v4934
    %5265 = vmatpush.bf16.msra.mxu0 %v4918
    %5266 = vmatpush.bf16.msra.mxu0 %v4902
    %5267 = vmatpush.bf16.msra.mxu0 %v4886
    %5268 = vmatpush.bf16.msra.mxu0 %v4870
    %5269 = vmatpush.bf16.msra.mxu0 %v4854
    %5270 = vmatpush.bf16.msra.mxu0 %v4838
    %5271 = vmatmul.bf16.gmra.mxu0 %v4276
    %v5272 = vpop.f32.mrf.mxu0
    %v5273 = vadd.f32 %v4422, %v5272
    %v5274 = vpop.f32.mrf.mxu0
    %v5275 = vadd.f32 %v4422, %v5274
    %5276 = vdwg.mxu0
    %5277 = vmatpush.bf16.msra.mxu0 %v4951
    %5278 = vmatpush.bf16.msra.mxu0 %v4935
    %5279 = vmatpush.bf16.msra.mxu0 %v4919
    %5280 = vmatpush.bf16.msra.mxu0 %v4903
    %5281 = vmatpush.bf16.msra.mxu0 %v4887
    %5282 = vmatpush.bf16.msra.mxu0 %v4871
    %5283 = vmatpush.bf16.msra.mxu0 %v4855
    %5284 = vmatpush.bf16.msra.mxu0 %v4839
    %5285 = vmatmul.bf16.gmra.mxu0 %v4276
    %v5286 = vpop.f32.mrf.mxu0
    %v5287 = vadd.f32 %v4423, %v5286
    %v5288 = vpop.f32.mrf.mxu0
    %v5289 = vadd.f32 %v4423, %v5288
    %5290 = vdwg.mxu0
    %5291 = vmatpush.bf16.msra.mxu0 %v4952
    %5292 = vmatpush.bf16.msra.mxu0 %v4936
    %5293 = vmatpush.bf16.msra.mxu0 %v4920
    %5294 = vmatpush.bf16.msra.mxu0 %v4904
    %5295 = vmatpush.bf16.msra.mxu0 %v4888
    %5296 = vmatpush.bf16.msra.mxu0 %v4872
    %5297 = vmatpush.bf16.msra.mxu0 %v4856
    %5298 = vmatpush.bf16.msra.mxu0 %v4840
    %5299 = vmatmul.bf16.gmra.mxu0 %v4276
    %v5300 = vpop.f32.mrf.mxu0
    %v5301 = vadd.f32 %v4424, %v5300
    %v5302 = vpop.f32.mrf.mxu0
    %v5303 = vadd.f32 %v4424, %v5302
    %5304 = vdwg.mxu0
    %v5305 = vmax.f32 %v5091, 0.0
    %v5306 = vmax.f32 %v5105, 0.0
    %v5307 = vmax.f32 %v5119, 0.0
    %v5308 = vmax.f32 %v5133, 0.0
    %v5309 = vmax.f32 %v5147, 0.0
    %v5310 = vmax.f32 %v5161, 0.0
    %v5311 = vmax.f32 %v5175, 0.0
    %v5312 = vmax.f32 %v5189, 0.0
    %v5313 = vmax.f32 %v5203, 0.0
    %v5314 = vmax.f32 %v5217, 0.0
    %v5315 = vmax.f32 %v5231, 0.0
    %v5316 = vmax.f32 %v5245, 0.0
    %v5317 = vmax.f32 %v5259, 0.0
    %v5318 = vmax.f32 %v5273, 0.0
    %v5319 = vmax.f32 %v5287, 0.0
    %v5320 = vmax.f32 %v5301, 0.0
    %v5321 = vmax.f32 %v5093, 0.0
    %v5322 = vmax.f32 %v5107, 0.0
    %v5323 = vmax.f32 %v5121, 0.0
    %v5324 = vmax.f32 %v5135, 0.0
    %v5325 = vmax.f32 %v5149, 0.0
    %v5326 = vmax.f32 %v5163, 0.0
    %v5327 = vmax.f32 %v5177, 0.0
    %v5328 = vmax.f32 %v5191, 0.0
    %v5329 = vmax.f32 %v5205, 0.0
    %v5330 = vmax.f32 %v5219, 0.0
    %v5331 = vmax.f32 %v5233, 0.0
    %v5332 = vmax.f32 %v5247, 0.0
    %v5333 = vmax.f32 %v5261, 0.0
    %v5334 = vmax.f32 %v5275, 0.0
    %v5335 = vmax.f32 %v5289, 0.0
    %v5336 = vmax.f32 %v5303, 0.0
    %v5337 = vpack.c.bf16 %v5321, %v5305
    %v5338 = vpack.c.bf16 %v5322, %v5306
    %v5339 = vpack.c.bf16 %v5323, %v5307
    %v5340 = vpack.c.bf16 %v5324, %v5308
    %v5341 = vpack.c.bf16 %v5325, %v5309
    %v5342 = vpack.c.bf16 %v5326, %v5310
    %v5343 = vpack.c.bf16 %v5327, %v5311
    %v5344 = vpack.c.bf16 %v5328, %v5312
    %v5345 = vpack.c.bf16 %v5329, %v5313
    %v5346 = vpack.c.bf16 %v5330, %v5314
    %v5347 = vpack.c.bf16 %v5331, %v5315
    %v5348 = vpack.c.bf16 %v5332, %v5316
    %v5349 = vpack.c.bf16 %v5333, %v5317
    %v5350 = vpack.c.bf16 %v5334, %v5318
    %v5351 = vpack.c.bf16 %v5335, %v5319
    %v5352 = vpack.c.bf16 %v5336, %v5320
    %v5353 = vld [vmem:[#allocation12] sm:$0xf]
    %v5354 = vld [vmem:[#allocation12 + $0x4] sm:$0xf]
    %v5355 = vld [vmem:[#allocation12 + $0x8] sm:$0xf]
    %v5356 = vld [vmem:[#allocation12 + $0xc] sm:$0xf]
    %v5357 = vld [vmem:[#allocation12 + $0x10] sm:$0xf]
    %v5358 = vld [vmem:[#allocation12 + $0x14] sm:$0xf]
    %v5359 = vld [vmem:[#allocation12 + $0x18] sm:$0xf]
    %v5360 = vld [vmem:[#allocation12 + $0x1c] sm:$0xf]
    %v5361 = vld [vmem:[#allocation12 + $0x20] sm:$0xf]
    %v5362 = vld [vmem:[#allocation12 + $0x24] sm:$0xf]
    %v5363 = vld [vmem:[#allocation12 + $0x28] sm:$0xf]
    %v5364 = vld [vmem:[#allocation12 + $0x2c] sm:$0xf]
    %v5365 = vld [vmem:[#allocation12 + $0x30] sm:$0xf]
    %v5366 = vld [vmem:[#allocation12 + $0x34] sm:$0xf]
    %v5367 = vld [vmem:[#allocation12 + $0x38] sm:$0xf]
    %v5368 = vld [vmem:[#allocation12 + $0x3c] sm:$0xf]
    %v5369 = vld [vmem:[#allocation12 + $0x40] sm:$0xf]
    %v5370 = vld [vmem:[#allocation12 + $0x44] sm:$0xf]
    %v5371 = vld [vmem:[#allocation12 + $0x48] sm:$0xf]
    %v5372 = vld [vmem:[#allocation12 + $0x4c] sm:$0xf]
    %v5373 = vld [vmem:[#allocation12 + $0x50] sm:$0xf]
    %v5374 = vld [vmem:[#allocation12 + $0x54] sm:$0xf]
    %v5375 = vld [vmem:[#allocation12 + $0x58] sm:$0xf]
    %v5376 = vld [vmem:[#allocation12 + $0x5c] sm:$0xf]
    %v5377 = vld [vmem:[#allocation12 + $0x60] sm:$0xf]
    %v5378 = vld [vmem:[#allocation12 + $0x64] sm:$0xf]
    %v5379 = vld [vmem:[#allocation12 + $0x68] sm:$0xf]
    %v5380 = vld [vmem:[#allocation12 + $0x6c] sm:$0xf]
    %v5381 = vld [vmem:[#allocation12 + $0x70] sm:$0xf]
    %v5382 = vld [vmem:[#allocation12 + $0x74] sm:$0xf]
    %v5383 = vld [vmem:[#allocation12 + $0x78] sm:$0xf]
    %v5384 = vld [vmem:[#allocation12 + $0x7c] sm:$0xf]
    %v5385 = vld [vmem:[#allocation12 + $0x80] sm:$0xf]
    %v5386 = vld [vmem:[#allocation12 + $0x84] sm:$0xf]
    %v5387 = vld [vmem:[#allocation12 + $0x88] sm:$0xf]
    %v5388 = vld [vmem:[#allocation12 + $0x8c] sm:$0xf]
    %v5389 = vld [vmem:[#allocation12 + $0x90] sm:$0xf]
    %v5390 = vld [vmem:[#allocation12 + $0x94] sm:$0xf]
    %v5391 = vld [vmem:[#allocation12 + $0x98] sm:$0xf]
    %v5392 = vld [vmem:[#allocation12 + $0x9c] sm:$0xf]
    %v5393 = vld [vmem:[#allocation12 + $0xa0] sm:$0xf]
    %v5394 = vld [vmem:[#allocation12 + $0xa4] sm:$0xf]
    %v5395 = vld [vmem:[#allocation12 + $0xa8] sm:$0xf]
    %v5396 = vld [vmem:[#allocation12 + $0xac] sm:$0xf]
    %v5397 = vld [vmem:[#allocation12 + $0xb0] sm:$0xf]
    %v5398 = vld [vmem:[#allocation12 + $0xb4] sm:$0xf]
    %v5399 = vld [vmem:[#allocation12 + $0xb8] sm:$0xf]
    %v5400 = vld [vmem:[#allocation12 + $0xbc] sm:$0xf]
    %v5401 = vld [vmem:[#allocation12 + $0xc0] sm:$0xf]
    %v5402 = vld [vmem:[#allocation12 + $0xc4] sm:$0xf]
    %v5403 = vld [vmem:[#allocation12 + $0xc8] sm:$0xf]
    %v5404 = vld [vmem:[#allocation12 + $0xcc] sm:$0xf]
    %v5405 = vld [vmem:[#allocation12 + $0xd0] sm:$0xf]
    %v5406 = vld [vmem:[#allocation12 + $0xd4] sm:$0xf]
    %v5407 = vld [vmem:[#allocation12 + $0xd8] sm:$0xf]
    %v5408 = vld [vmem:[#allocation12 + $0xdc] sm:$0xf]
    %v5409 = vld [vmem:[#allocation12 + $0xe0] sm:$0xf]
    %v5410 = vld [vmem:[#allocation12 + $0xe4] sm:$0xf]
    %v5411 = vld [vmem:[#allocation12 + $0xe8] sm:$0xf]
    %v5412 = vld [vmem:[#allocation12 + $0xec] sm:$0xf]
    %v5413 = vld [vmem:[#allocation12 + $0xf0] sm:$0xf]
    %v5414 = vld [vmem:[#allocation12 + $0xf4] sm:$0xf]
    %v5415 = vld [vmem:[#allocation12 + $0xf8] sm:$0xf]
    %v5416 = vld [vmem:[#allocation12 + $0xfc] sm:$0xf]
    %v5417 = vld [vmem:[#allocation12 + $0x100] sm:$0xf]
    %v5418 = vld [vmem:[#allocation12 + $0x104] sm:$0xf]
    %v5419 = vld [vmem:[#allocation12 + $0x108] sm:$0xf]
    %v5420 = vld [vmem:[#allocation12 + $0x10c] sm:$0xf]
    %v5421 = vld [vmem:[#allocation12 + $0x110] sm:$0xf]
    %v5422 = vld [vmem:[#allocation12 + $0x114] sm:$0xf]
    %v5423 = vld [vmem:[#allocation12 + $0x118] sm:$0xf]
    %v5424 = vld [vmem:[#allocation12 + $0x11c] sm:$0xf]
    %v5425 = vld [vmem:[#allocation12 + $0x120] sm:$0xf]
    %v5426 = vld [vmem:[#allocation12 + $0x124] sm:$0xf]
    %v5427 = vld [vmem:[#allocation12 + $0x128] sm:$0xf]
    %v5428 = vld [vmem:[#allocation12 + $0x12c] sm:$0xf]
    %v5429 = vld [vmem:[#allocation12 + $0x130] sm:$0xf]
    %v5430 = vld [vmem:[#allocation12 + $0x134] sm:$0xf]
    %v5431 = vld [vmem:[#allocation12 + $0x138] sm:$0xf]
    %v5432 = vld [vmem:[#allocation12 + $0x13c] sm:$0xf]
    %v5433 = vld [vmem:[#allocation12 + $0x140] sm:$0xf]
    %v5434 = vld [vmem:[#allocation12 + $0x144] sm:$0xf]
    %v5435 = vld [vmem:[#allocation12 + $0x148] sm:$0xf]
    %v5436 = vld [vmem:[#allocation12 + $0x14c] sm:$0xf]
    %v5437 = vld [vmem:[#allocation12 + $0x150] sm:$0xf]
    %v5438 = vld [vmem:[#allocation12 + $0x154] sm:$0xf]
    %v5439 = vld [vmem:[#allocation12 + $0x158] sm:$0xf]
    %v5440 = vld [vmem:[#allocation12 + $0x15c] sm:$0xf]
    %v5441 = vld [vmem:[#allocation12 + $0x160] sm:$0xf]
    %v5442 = vld [vmem:[#allocation12 + $0x164] sm:$0xf]
    %v5443 = vld [vmem:[#allocation12 + $0x168] sm:$0xf]
    %v5444 = vld [vmem:[#allocation12 + $0x16c] sm:$0xf]
    %v5445 = vld [vmem:[#allocation12 + $0x170] sm:$0xf]
    %v5446 = vld [vmem:[#allocation12 + $0x174] sm:$0xf]
    %v5447 = vld [vmem:[#allocation12 + $0x178] sm:$0xf]
    %v5448 = vld [vmem:[#allocation12 + $0x17c] sm:$0xf]
    %v5449 = vld [vmem:[#allocation12 + $0x180] sm:$0xf]
    %v5450 = vld [vmem:[#allocation12 + $0x184] sm:$0xf]
    %v5451 = vld [vmem:[#allocation12 + $0x188] sm:$0xf]
    %v5452 = vld [vmem:[#allocation12 + $0x18c] sm:$0xf]
    %v5453 = vld [vmem:[#allocation12 + $0x190] sm:$0xf]
    %v5454 = vld [vmem:[#allocation12 + $0x194] sm:$0xf]
    %v5455 = vld [vmem:[#allocation12 + $0x198] sm:$0xf]
    %v5456 = vld [vmem:[#allocation12 + $0x19c] sm:$0xf]
    %v5457 = vld [vmem:[#allocation12 + $0x1a0] sm:$0xf]
    %v5458 = vld [vmem:[#allocation12 + $0x1a4] sm:$0xf]
    %v5459 = vld [vmem:[#allocation12 + $0x1a8] sm:$0xf]
    %v5460 = vld [vmem:[#allocation12 + $0x1ac] sm:$0xf]
    %v5461 = vld [vmem:[#allocation12 + $0x1b0] sm:$0xf]
    %v5462 = vld [vmem:[#allocation12 + $0x1b4] sm:$0xf]
    %v5463 = vld [vmem:[#allocation12 + $0x1b8] sm:$0xf]
    %v5464 = vld [vmem:[#allocation12 + $0x1bc] sm:$0xf]
    %v5465 = vld [vmem:[#allocation12 + $0x1c0] sm:$0xf]
    %v5466 = vld [vmem:[#allocation12 + $0x1c4] sm:$0xf]
    %v5467 = vld [vmem:[#allocation12 + $0x1c8] sm:$0xf]
    %v5468 = vld [vmem:[#allocation12 + $0x1cc] sm:$0xf]
    %v5469 = vld [vmem:[#allocation12 + $0x1d0] sm:$0xf]
    %v5470 = vld [vmem:[#allocation12 + $0x1d4] sm:$0xf]
    %v5471 = vld [vmem:[#allocation12 + $0x1d8] sm:$0xf]
    %v5472 = vld [vmem:[#allocation12 + $0x1dc] sm:$0xf]
    %v5473 = vld [vmem:[#allocation12 + $0x1e0] sm:$0xf]
    %v5474 = vld [vmem:[#allocation12 + $0x1e4] sm:$0xf]
    %v5475 = vld [vmem:[#allocation12 + $0x1e8] sm:$0xf]
    %v5476 = vld [vmem:[#allocation12 + $0x1ec] sm:$0xf]
    %v5477 = vld [vmem:[#allocation12 + $0x1f0] sm:$0xf]
    %v5478 = vld [vmem:[#allocation12 + $0x1f4] sm:$0xf]
    %v5479 = vld [vmem:[#allocation12 + $0x1f8] sm:$0xf]
    %v5480 = vld [vmem:[#allocation12 + $0x1fc] sm:$0xf]
    %v5481 = vld [vmem:[#allocation12 + $0x200] sm:$0xf]
    %v5482 = vld [vmem:[#allocation12 + $0x204] sm:$0xf]
    %v5483 = vld [vmem:[#allocation12 + $0x208] sm:$0xf]
    %v5484 = vld [vmem:[#allocation12 + $0x20c] sm:$0xf]
    %v5485 = vld [vmem:[#allocation12 + $0x210] sm:$0xf]
    %v5486 = vld [vmem:[#allocation12 + $0x214] sm:$0xf]
    %v5487 = vld [vmem:[#allocation12 + $0x218] sm:$0xf]
    %v5488 = vld [vmem:[#allocation12 + $0x21c] sm:$0xf]
    %v5489 = vld [vmem:[#allocation12 + $0x220] sm:$0xf]
    %v5490 = vld [vmem:[#allocation12 + $0x224] sm:$0xf]
    %v5491 = vld [vmem:[#allocation12 + $0x228] sm:$0xf]
    %v5492 = vld [vmem:[#allocation12 + $0x22c] sm:$0xf]
    %v5493 = vld [vmem:[#allocation12 + $0x230] sm:$0xf]
    %v5494 = vld [vmem:[#allocation12 + $0x234] sm:$0xf]
    %v5495 = vld [vmem:[#allocation12 + $0x238] sm:$0xf]
    %v5496 = vld [vmem:[#allocation12 + $0x23c] sm:$0xf]
    %v5497 = vld [vmem:[#allocation12 + $0x240] sm:$0xf]
    %v5498 = vld [vmem:[#allocation12 + $0x244] sm:$0xf]
    %v5499 = vld [vmem:[#allocation12 + $0x248] sm:$0xf]
    %v5500 = vld [vmem:[#allocation12 + $0x24c] sm:$0xf]
    %v5501 = vld [vmem:[#allocation12 + $0x250] sm:$0xf]
    %v5502 = vld [vmem:[#allocation12 + $0x254] sm:$0xf]
    %v5503 = vld [vmem:[#allocation12 + $0x258] sm:$0xf]
    %v5504 = vld [vmem:[#allocation12 + $0x25c] sm:$0xf]
    %v5505 = vld [vmem:[#allocation12 + $0x260] sm:$0xf]
    %v5506 = vld [vmem:[#allocation12 + $0x264] sm:$0xf]
    %v5507 = vld [vmem:[#allocation12 + $0x268] sm:$0xf]
    %v5508 = vld [vmem:[#allocation12 + $0x26c] sm:$0xf]
    %v5509 = vld [vmem:[#allocation12 + $0x270] sm:$0xf]
    %v5510 = vld [vmem:[#allocation12 + $0x274] sm:$0xf]
    %v5511 = vld [vmem:[#allocation12 + $0x278] sm:$0xf]
    %v5512 = vld [vmem:[#allocation12 + $0x27c] sm:$0xf]
    %v5513 = vld [vmem:[#allocation12 + $0x280] sm:$0xf]
    %v5514 = vld [vmem:[#allocation12 + $0x284] sm:$0xf]
    %v5515 = vld [vmem:[#allocation12 + $0x288] sm:$0xf]
    %v5516 = vld [vmem:[#allocation12 + $0x28c] sm:$0xf]
    %v5517 = vld [vmem:[#allocation12 + $0x290] sm:$0xf]
    %v5518 = vld [vmem:[#allocation12 + $0x294] sm:$0xf]
    %v5519 = vld [vmem:[#allocation12 + $0x298] sm:$0xf]
    %v5520 = vld [vmem:[#allocation12 + $0x29c] sm:$0xf]
    %v5521 = vld [vmem:[#allocation12 + $0x2a0] sm:$0xf]
    %v5522 = vld [vmem:[#allocation12 + $0x2a4] sm:$0xf]
    %v5523 = vld [vmem:[#allocation12 + $0x2a8] sm:$0xf]
    %v5524 = vld [vmem:[#allocation12 + $0x2ac] sm:$0xf]
    %v5525 = vld [vmem:[#allocation12 + $0x2b0] sm:$0xf]
    %v5526 = vld [vmem:[#allocation12 + $0x2b4] sm:$0xf]
    %v5527 = vld [vmem:[#allocation12 + $0x2b8] sm:$0xf]
    %v5528 = vld [vmem:[#allocation12 + $0x2bc] sm:$0xf]
    %v5529 = vld [vmem:[#allocation12 + $0x2c0] sm:$0xf]
    %v5530 = vld [vmem:[#allocation12 + $0x2c4] sm:$0xf]
    %v5531 = vld [vmem:[#allocation12 + $0x2c8] sm:$0xf]
    %v5532 = vld [vmem:[#allocation12 + $0x2cc] sm:$0xf]
    %v5533 = vld [vmem:[#allocation12 + $0x2d0] sm:$0xf]
    %v5534 = vld [vmem:[#allocation12 + $0x2d4] sm:$0xf]
    %v5535 = vld [vmem:[#allocation12 + $0x2d8] sm:$0xf]
    %v5536 = vld [vmem:[#allocation12 + $0x2dc] sm:$0xf]
    %v5537 = vld [vmem:[#allocation12 + $0x2e0] sm:$0xf]
    %v5538 = vld [vmem:[#allocation12 + $0x2e4] sm:$0xf]
    %v5539 = vld [vmem:[#allocation12 + $0x2e8] sm:$0xf]
    %v5540 = vld [vmem:[#allocation12 + $0x2ec] sm:$0xf]
    %v5541 = vld [vmem:[#allocation12 + $0x2f0] sm:$0xf]
    %v5542 = vld [vmem:[#allocation12 + $0x2f4] sm:$0xf]
    %v5543 = vld [vmem:[#allocation12 + $0x2f8] sm:$0xf]
    %v5544 = vld [vmem:[#allocation12 + $0x2fc] sm:$0xf]
    %v5545 = vld [vmem:[#allocation12 + $0x300] sm:$0xf]
    %v5546 = vld [vmem:[#allocation12 + $0x304] sm:$0xf]
    %v5547 = vld [vmem:[#allocation12 + $0x308] sm:$0xf]
    %v5548 = vld [vmem:[#allocation12 + $0x30c] sm:$0xf]
    %v5549 = vld [vmem:[#allocation12 + $0x310] sm:$0xf]
    %v5550 = vld [vmem:[#allocation12 + $0x314] sm:$0xf]
    %v5551 = vld [vmem:[#allocation12 + $0x318] sm:$0xf]
    %v5552 = vld [vmem:[#allocation12 + $0x31c] sm:$0xf]
    %v5553 = vld [vmem:[#allocation12 + $0x320] sm:$0xf]
    %v5554 = vld [vmem:[#allocation12 + $0x324] sm:$0xf]
    %v5555 = vld [vmem:[#allocation12 + $0x328] sm:$0xf]
    %v5556 = vld [vmem:[#allocation12 + $0x32c] sm:$0xf]
    %v5557 = vld [vmem:[#allocation12 + $0x330] sm:$0xf]
    %v5558 = vld [vmem:[#allocation12 + $0x334] sm:$0xf]
    %v5559 = vld [vmem:[#allocation12 + $0x338] sm:$0xf]
    %v5560 = vld [vmem:[#allocation12 + $0x33c] sm:$0xf]
    %v5561 = vld [vmem:[#allocation12 + $0x340] sm:$0xf]
    %v5562 = vld [vmem:[#allocation12 + $0x344] sm:$0xf]
    %v5563 = vld [vmem:[#allocation12 + $0x348] sm:$0xf]
    %v5564 = vld [vmem:[#allocation12 + $0x34c] sm:$0xf]
    %v5565 = vld [vmem:[#allocation12 + $0x350] sm:$0xf]
    %v5566 = vld [vmem:[#allocation12 + $0x354] sm:$0xf]
    %v5567 = vld [vmem:[#allocation12 + $0x358] sm:$0xf]
    %v5568 = vld [vmem:[#allocation12 + $0x35c] sm:$0xf]
    %v5569 = vld [vmem:[#allocation12 + $0x360] sm:$0xf]
    %v5570 = vld [vmem:[#allocation12 + $0x364] sm:$0xf]
    %v5571 = vld [vmem:[#allocation12 + $0x368] sm:$0xf]
    %v5572 = vld [vmem:[#allocation12 + $0x36c] sm:$0xf]
    %v5573 = vld [vmem:[#allocation12 + $0x370] sm:$0xf]
    %v5574 = vld [vmem:[#allocation12 + $0x374] sm:$0xf]
    %v5575 = vld [vmem:[#allocation12 + $0x378] sm:$0xf]
    %v5576 = vld [vmem:[#allocation12 + $0x37c] sm:$0xf]
    %v5577 = vld [vmem:[#allocation12 + $0x380] sm:$0xf]
    %v5578 = vld [vmem:[#allocation12 + $0x384] sm:$0xf]
    %v5579 = vld [vmem:[#allocation12 + $0x388] sm:$0xf]
    %v5580 = vld [vmem:[#allocation12 + $0x38c] sm:$0xf]
    %v5581 = vld [vmem:[#allocation12 + $0x390] sm:$0xf]
    %v5582 = vld [vmem:[#allocation12 + $0x394] sm:$0xf]
    %v5583 = vld [vmem:[#allocation12 + $0x398] sm:$0xf]
    %v5584 = vld [vmem:[#allocation12 + $0x39c] sm:$0xf]
    %v5585 = vld [vmem:[#allocation12 + $0x3a0] sm:$0xf]
    %v5586 = vld [vmem:[#allocation12 + $0x3a4] sm:$0xf]
    %v5587 = vld [vmem:[#allocation12 + $0x3a8] sm:$0xf]
    %v5588 = vld [vmem:[#allocation12 + $0x3ac] sm:$0xf]
    %v5589 = vld [vmem:[#allocation12 + $0x3b0] sm:$0xf]
    %v5590 = vld [vmem:[#allocation12 + $0x3b4] sm:$0xf]
    %v5591 = vld [vmem:[#allocation12 + $0x3b8] sm:$0xf]
    %v5592 = vld [vmem:[#allocation12 + $0x3bc] sm:$0xf]
    %v5593 = vld [vmem:[#allocation12 + $0x3c0] sm:$0xf]
    %v5594 = vld [vmem:[#allocation12 + $0x3c4] sm:$0xf]
    %v5595 = vld [vmem:[#allocation12 + $0x3c8] sm:$0xf]
    %v5596 = vld [vmem:[#allocation12 + $0x3cc] sm:$0xf]
    %v5597 = vld [vmem:[#allocation12 + $0x3d0] sm:$0xf]
    %v5598 = vld [vmem:[#allocation12 + $0x3d4] sm:$0xf]
    %v5599 = vld [vmem:[#allocation12 + $0x3d8] sm:$0xf]
    %v5600 = vld [vmem:[#allocation12 + $0x3dc] sm:$0xf]
    %v5601 = vld [vmem:[#allocation12 + $0x3e0] sm:$0xf]
    %v5602 = vld [vmem:[#allocation12 + $0x3e4] sm:$0xf]
    %v5603 = vld [vmem:[#allocation12 + $0x3e8] sm:$0xf]
    %v5604 = vld [vmem:[#allocation12 + $0x3ec] sm:$0xf]
    %v5605 = vld [vmem:[#allocation12 + $0x3f0] sm:$0xf]
    %v5606 = vld [vmem:[#allocation12 + $0x3f4] sm:$0xf]
    %v5607 = vld [vmem:[#allocation12 + $0x3f8] sm:$0xf]
    %v5608 = vld [vmem:[#allocation12 + $0x3fc] sm:$0xf]
    %v5609 = vld [vmem:[%s23] sm:$0x1]
    %v5611 = vperm.slane %v5609, 0
    %v5869 = vunpack.c.l.b16 %v5353
    %v5870 = vunpack.c.l.b16 %v5354
    %v5871 = vunpack.c.l.b16 %v5355
    %v5872 = vunpack.c.l.b16 %v5356
    %v5873 = vunpack.c.l.b16 %v5357
    %v5874 = vunpack.c.l.b16 %v5358
    %v5875 = vunpack.c.l.b16 %v5359
    %v5876 = vunpack.c.l.b16 %v5360
    %v5877 = vunpack.c.l.b16 %v5361
    %v5878 = vunpack.c.l.b16 %v5362
    %v5879 = vunpack.c.l.b16 %v5363
    %v5880 = vunpack.c.l.b16 %v5364
    %v5881 = vunpack.c.l.b16 %v5365
    %v5882 = vunpack.c.l.b16 %v5366
    %v5883 = vunpack.c.l.b16 %v5367
    %v5884 = vunpack.c.l.b16 %v5368
    %v5885 = vunpack.c.l.b16 %v5369
    %v5886 = vunpack.c.l.b16 %v5370
    %v5887 = vunpack.c.l.b16 %v5371
    %v5888 = vunpack.c.l.b16 %v5372
    %v5889 = vunpack.c.l.b16 %v5373
    %v5890 = vunpack.c.l.b16 %v5374
    %v5891 = vunpack.c.l.b16 %v5375
    %v5892 = vunpack.c.l.b16 %v5376
    %v5893 = vunpack.c.l.b16 %v5377
    %v5894 = vunpack.c.l.b16 %v5378
    %v5895 = vunpack.c.l.b16 %v5379
    %v5896 = vunpack.c.l.b16 %v5380
    %v5897 = vunpack.c.l.b16 %v5381
    %v5898 = vunpack.c.l.b16 %v5382
    %v5899 = vunpack.c.l.b16 %v5383
    %v5900 = vunpack.c.l.b16 %v5384
    %v5901 = vunpack.c.l.b16 %v5385
    %v5902 = vunpack.c.l.b16 %v5386
    %v5903 = vunpack.c.l.b16 %v5387
    %v5904 = vunpack.c.l.b16 %v5388
    %v5905 = vunpack.c.l.b16 %v5389
    %v5906 = vunpack.c.l.b16 %v5390
    %v5907 = vunpack.c.l.b16 %v5391
    %v5908 = vunpack.c.l.b16 %v5392
    %v5909 = vunpack.c.l.b16 %v5393
    %v5910 = vunpack.c.l.b16 %v5394
    %v5911 = vunpack.c.l.b16 %v5395
    %v5912 = vunpack.c.l.b16 %v5396
    %v5913 = vunpack.c.l.b16 %v5397
    %v5914 = vunpack.c.l.b16 %v5398
    %v5915 = vunpack.c.l.b16 %v5399
    %v5916 = vunpack.c.l.b16 %v5400
    %v5917 = vunpack.c.l.b16 %v5401
    %v5918 = vunpack.c.l.b16 %v5402
    %v5919 = vunpack.c.l.b16 %v5403
    %v5920 = vunpack.c.l.b16 %v5404
    %v5921 = vunpack.c.l.b16 %v5405
    %v5922 = vunpack.c.l.b16 %v5406
    %v5923 = vunpack.c.l.b16 %v5407
    %v5924 = vunpack.c.l.b16 %v5408
    %v5925 = vunpack.c.l.b16 %v5409
    %v5926 = vunpack.c.l.b16 %v5410
    %v5927 = vunpack.c.l.b16 %v5411
    %v5928 = vunpack.c.l.b16 %v5412
    %v5929 = vunpack.c.l.b16 %v5413
    %v5930 = vunpack.c.l.b16 %v5414
    %v5931 = vunpack.c.l.b16 %v5415
    %v5932 = vunpack.c.l.b16 %v5416
    %v5933 = vunpack.c.l.b16 %v5417
    %v5934 = vunpack.c.l.b16 %v5418
    %v5935 = vunpack.c.l.b16 %v5419
    %v5936 = vunpack.c.l.b16 %v5420
    %v5937 = vunpack.c.l.b16 %v5421
    %v5938 = vunpack.c.l.b16 %v5422
    %v5939 = vunpack.c.l.b16 %v5423
    %v5940 = vunpack.c.l.b16 %v5424
    %v5941 = vunpack.c.l.b16 %v5425
    %v5942 = vunpack.c.l.b16 %v5426
    %v5943 = vunpack.c.l.b16 %v5427
    %v5944 = vunpack.c.l.b16 %v5428
    %v5945 = vunpack.c.l.b16 %v5429
    %v5946 = vunpack.c.l.b16 %v5430
    %v5947 = vunpack.c.l.b16 %v5431
    %v5948 = vunpack.c.l.b16 %v5432
    %v5949 = vunpack.c.l.b16 %v5433
    %v5950 = vunpack.c.l.b16 %v5434
    %v5951 = vunpack.c.l.b16 %v5435
    %v5952 = vunpack.c.l.b16 %v5436
    %v5953 = vunpack.c.l.b16 %v5437
    %v5954 = vunpack.c.l.b16 %v5438
    %v5955 = vunpack.c.l.b16 %v5439
    %v5956 = vunpack.c.l.b16 %v5440
    %v5957 = vunpack.c.l.b16 %v5441
    %v5958 = vunpack.c.l.b16 %v5442
    %v5959 = vunpack.c.l.b16 %v5443
    %v5960 = vunpack.c.l.b16 %v5444
    %v5961 = vunpack.c.l.b16 %v5445
    %v5962 = vunpack.c.l.b16 %v5446
    %v5963 = vunpack.c.l.b16 %v5447
    %v5964 = vunpack.c.l.b16 %v5448
    %v5965 = vunpack.c.l.b16 %v5449
    %v5966 = vunpack.c.l.b16 %v5450
    %v5967 = vunpack.c.l.b16 %v5451
    %v5968 = vunpack.c.l.b16 %v5452
    %v5969 = vunpack.c.l.b16 %v5453
    %v5970 = vunpack.c.l.b16 %v5454
    %v5971 = vunpack.c.l.b16 %v5455
    %v5972 = vunpack.c.l.b16 %v5456
    %v5973 = vunpack.c.l.b16 %v5457
    %v5974 = vunpack.c.l.b16 %v5458
    %v5975 = vunpack.c.l.b16 %v5459
    %v5976 = vunpack.c.l.b16 %v5460
    %v5977 = vunpack.c.l.b16 %v5461
    %v5978 = vunpack.c.l.b16 %v5462
    %v5979 = vunpack.c.l.b16 %v5463
    %v5980 = vunpack.c.l.b16 %v5464
    %v5981 = vunpack.c.l.b16 %v5465
    %v5982 = vunpack.c.l.b16 %v5466
    %v5983 = vunpack.c.l.b16 %v5467
    %v5984 = vunpack.c.l.b16 %v5468
    %v5985 = vunpack.c.l.b16 %v5469
    %v5986 = vunpack.c.l.b16 %v5470
    %v5987 = vunpack.c.l.b16 %v5471
    %v5988 = vunpack.c.l.b16 %v5472
    %v5989 = vunpack.c.l.b16 %v5473
    %v5990 = vunpack.c.l.b16 %v5474
    %v5991 = vunpack.c.l.b16 %v5475
    %v5992 = vunpack.c.l.b16 %v5476
    %v5993 = vunpack.c.l.b16 %v5477
    %v5994 = vunpack.c.l.b16 %v5478
    %v5995 = vunpack.c.l.b16 %v5479
    %v5996 = vunpack.c.l.b16 %v5480
    %v5997 = vunpack.c.l.b16 %v5481
    %v5998 = vunpack.c.l.b16 %v5482
    %v5999 = vunpack.c.l.b16 %v5483
    %v6000 = vunpack.c.l.b16 %v5484
    %v6001 = vunpack.c.l.b16 %v5485
    %v6002 = vunpack.c.l.b16 %v5486
    %v6003 = vunpack.c.l.b16 %v5487
    %v6004 = vunpack.c.l.b16 %v5488
    %v6005 = vunpack.c.l.b16 %v5489
    %v6006 = vunpack.c.l.b16 %v5490
    %v6007 = vunpack.c.l.b16 %v5491
    %v6008 = vunpack.c.l.b16 %v5492
    %v6009 = vunpack.c.l.b16 %v5493
    %v6010 = vunpack.c.l.b16 %v5494
    %v6011 = vunpack.c.l.b16 %v5495
    %v6012 = vunpack.c.l.b16 %v5496
    %v6013 = vunpack.c.l.b16 %v5497
    %v6014 = vunpack.c.l.b16 %v5498
    %v6015 = vunpack.c.l.b16 %v5499
    %v6016 = vunpack.c.l.b16 %v5500
    %v6017 = vunpack.c.l.b16 %v5501
    %v6018 = vunpack.c.l.b16 %v5502
    %v6019 = vunpack.c.l.b16 %v5503
    %v6020 = vunpack.c.l.b16 %v5504
    %v6021 = vunpack.c.l.b16 %v5505
    %v6022 = vunpack.c.l.b16 %v5506
    %v6023 = vunpack.c.l.b16 %v5507
    %v6024 = vunpack.c.l.b16 %v5508
    %v6025 = vunpack.c.l.b16 %v5509
    %v6026 = vunpack.c.l.b16 %v5510
    %v6027 = vunpack.c.l.b16 %v5511
    %v6028 = vunpack.c.l.b16 %v5512
    %v6029 = vunpack.c.l.b16 %v5513
    %v6030 = vunpack.c.l.b16 %v5514
    %v6031 = vunpack.c.l.b16 %v5515
    %v6032 = vunpack.c.l.b16 %v5516
    %v6033 = vunpack.c.l.b16 %v5517
    %v6034 = vunpack.c.l.b16 %v5518
    %v6035 = vunpack.c.l.b16 %v5519
    %v6036 = vunpack.c.l.b16 %v5520
    %v6037 = vunpack.c.l.b16 %v5521
    %v6038 = vunpack.c.l.b16 %v5522
    %v6039 = vunpack.c.l.b16 %v5523
    %v6040 = vunpack.c.l.b16 %v5524
    %v6041 = vunpack.c.l.b16 %v5525
    %v6042 = vunpack.c.l.b16 %v5526
    %v6043 = vunpack.c.l.b16 %v5527
    %v6044 = vunpack.c.l.b16 %v5528
    %v6045 = vunpack.c.l.b16 %v5529
    %v6046 = vunpack.c.l.b16 %v5530
    %v6047 = vunpack.c.l.b16 %v5531
    %v6048 = vunpack.c.l.b16 %v5532
    %v6049 = vunpack.c.l.b16 %v5533
    %v6050 = vunpack.c.l.b16 %v5534
    %v6051 = vunpack.c.l.b16 %v5535
    %v6052 = vunpack.c.l.b16 %v5536
    %v6053 = vunpack.c.l.b16 %v5537
    %v6054 = vunpack.c.l.b16 %v5538
    %v6055 = vunpack.c.l.b16 %v5539
    %v6056 = vunpack.c.l.b16 %v5540
    %v6057 = vunpack.c.l.b16 %v5541
    %v6058 = vunpack.c.l.b16 %v5542
    %v6059 = vunpack.c.l.b16 %v5543
    %v6060 = vunpack.c.l.b16 %v5544
    %v6061 = vunpack.c.l.b16 %v5545
    %v6062 = vunpack.c.l.b16 %v5546
    %v6063 = vunpack.c.l.b16 %v5547
    %v6064 = vunpack.c.l.b16 %v5548
    %v6065 = vunpack.c.l.b16 %v5549
    %v6066 = vunpack.c.l.b16 %v5550
    %v6067 = vunpack.c.l.b16 %v5551
    %v6068 = vunpack.c.l.b16 %v5552
    %v6069 = vunpack.c.l.b16 %v5553
    %v6070 = vunpack.c.l.b16 %v5554
    %v6071 = vunpack.c.l.b16 %v5555
    %v6072 = vunpack.c.l.b16 %v5556
    %v6073 = vunpack.c.l.b16 %v5557
    %v6074 = vunpack.c.l.b16 %v5558
    %v6075 = vunpack.c.l.b16 %v5559
    %v6076 = vunpack.c.l.b16 %v5560
    %v6077 = vunpack.c.l.b16 %v5561
    %v6078 = vunpack.c.l.b16 %v5562
    %v6079 = vunpack.c.l.b16 %v5563
    %v6080 = vunpack.c.l.b16 %v5564
    %v6081 = vunpack.c.l.b16 %v5565
    %v6082 = vunpack.c.l.b16 %v5566
    %v6083 = vunpack.c.l.b16 %v5567
    %v6084 = vunpack.c.l.b16 %v5568
    %v6085 = vunpack.c.l.b16 %v5569
    %v6086 = vunpack.c.l.b16 %v5570
    %v6087 = vunpack.c.l.b16 %v5571
    %v6088 = vunpack.c.l.b16 %v5572
    %v6089 = vunpack.c.l.b16 %v5573
    %v6090 = vunpack.c.l.b16 %v5574
    %v6091 = vunpack.c.l.b16 %v5575
    %v6092 = vunpack.c.l.b16 %v5576
    %v6093 = vunpack.c.l.b16 %v5577
    %v6094 = vunpack.c.l.b16 %v5578
    %v6095 = vunpack.c.l.b16 %v5579
    %v6096 = vunpack.c.l.b16 %v5580
    %v6097 = vunpack.c.l.b16 %v5581
    %v6098 = vunpack.c.l.b16 %v5582
    %v6099 = vunpack.c.l.b16 %v5583
    %v6100 = vunpack.c.l.b16 %v5584
    %v6101 = vunpack.c.l.b16 %v5585
    %v6102 = vunpack.c.l.b16 %v5586
    %v6103 = vunpack.c.l.b16 %v5587
    %v6104 = vunpack.c.l.b16 %v5588
    %v6105 = vunpack.c.l.b16 %v5589
    %v6106 = vunpack.c.l.b16 %v5590
    %v6107 = vunpack.c.l.b16 %v5591
    %v6108 = vunpack.c.l.b16 %v5592
    %v6109 = vunpack.c.l.b16 %v5593
    %v6110 = vunpack.c.l.b16 %v5594
    %v6111 = vunpack.c.l.b16 %v5595
    %v6112 = vunpack.c.l.b16 %v5596
    %v6113 = vunpack.c.l.b16 %v5597
    %v6114 = vunpack.c.l.b16 %v5598
    %v6115 = vunpack.c.l.b16 %v5599
    %v6116 = vunpack.c.l.b16 %v5600
    %v6117 = vunpack.c.l.b16 %v5601
    %v6118 = vunpack.c.l.b16 %v5602
    %v6119 = vunpack.c.l.b16 %v5603
    %v6120 = vunpack.c.l.b16 %v5604
    %v6121 = vunpack.c.l.b16 %v5605
    %v6122 = vunpack.c.l.b16 %v5606
    %v6123 = vunpack.c.l.b16 %v5607
    %v6124 = vunpack.c.l.b16 %v5608
    %v6125 = vpack.c.b16 %v5870, %v5869
    %v6126 = vpack.c.b16 %v5872, %v5871
    %v6127 = vpack.c.b16 %v5874, %v5873
    %v6128 = vpack.c.b16 %v5876, %v5875
    %v6129 = vpack.c.b16 %v5878, %v5877
    %v6130 = vpack.c.b16 %v5880, %v5879
    %v6131 = vpack.c.b16 %v5882, %v5881
    %v6132 = vpack.c.b16 %v5884, %v5883
    %v6133 = vpack.c.b16 %v5886, %v5885
    %v6134 = vpack.c.b16 %v5888, %v5887
    %v6135 = vpack.c.b16 %v5890, %v5889
    %v6136 = vpack.c.b16 %v5892, %v5891
    %v6137 = vpack.c.b16 %v5894, %v5893
    %v6138 = vpack.c.b16 %v5896, %v5895
    %v6139 = vpack.c.b16 %v5898, %v5897
    %v6140 = vpack.c.b16 %v5900, %v5899
    %v6141 = vpack.c.b16 %v5902, %v5901
    %v6142 = vpack.c.b16 %v5904, %v5903
    %v6143 = vpack.c.b16 %v5906, %v5905
    %v6144 = vpack.c.b16 %v5908, %v5907
    %v6145 = vpack.c.b16 %v5910, %v5909
    %v6146 = vpack.c.b16 %v5912, %v5911
    %v6147 = vpack.c.b16 %v5914, %v5913
    %v6148 = vpack.c.b16 %v5916, %v5915
    %v6149 = vpack.c.b16 %v5918, %v5917
    %v6150 = vpack.c.b16 %v5920, %v5919
    %v6151 = vpack.c.b16 %v5922, %v5921
    %v6152 = vpack.c.b16 %v5924, %v5923
    %v6153 = vpack.c.b16 %v5926, %v5925
    %v6154 = vpack.c.b16 %v5928, %v5927
    %v6155 = vpack.c.b16 %v5930, %v5929
    %v6156 = vpack.c.b16 %v5932, %v5931
    %v6157 = vpack.c.b16 %v5934, %v5933
    %v6158 = vpack.c.b16 %v5936, %v5935
    %v6159 = vpack.c.b16 %v5938, %v5937
    %v6160 = vpack.c.b16 %v5940, %v5939
    %v6161 = vpack.c.b16 %v5942, %v5941
    %v6162 = vpack.c.b16 %v5944, %v5943
    %v6163 = vpack.c.b16 %v5946, %v5945
    %v6164 = vpack.c.b16 %v5948, %v5947
    %v6165 = vpack.c.b16 %v5950, %v5949
    %v6166 = vpack.c.b16 %v5952, %v5951
    %v6167 = vpack.c.b16 %v5954, %v5953
    %v6168 = vpack.c.b16 %v5956, %v5955
    %v6169 = vpack.c.b16 %v5958, %v5957
    %v6170 = vpack.c.b16 %v5960, %v5959
    %v6171 = vpack.c.b16 %v5962, %v5961
    %v6172 = vpack.c.b16 %v5964, %v5963
    %v6173 = vpack.c.b16 %v5966, %v5965
    %v6174 = vpack.c.b16 %v5968, %v5967
    %v6175 = vpack.c.b16 %v5970, %v5969
    %v6176 = vpack.c.b16 %v5972, %v5971
    %v6177 = vpack.c.b16 %v5974, %v5973
    %v6178 = vpack.c.b16 %v5976, %v5975
    %v6179 = vpack.c.b16 %v5978, %v5977
    %v6180 = vpack.c.b16 %v5980, %v5979
    %v6181 = vpack.c.b16 %v5982, %v5981
    %v6182 = vpack.c.b16 %v5984, %v5983
    %v6183 = vpack.c.b16 %v5986, %v5985
    %v6184 = vpack.c.b16 %v5988, %v5987
    %v6185 = vpack.c.b16 %v5990, %v5989
    %v6186 = vpack.c.b16 %v5992, %v5991
    %v6187 = vpack.c.b16 %v5994, %v5993
    %v6188 = vpack.c.b16 %v5996, %v5995
    %v6189 = vpack.c.b16 %v5998, %v5997
    %v6190 = vpack.c.b16 %v6000, %v5999
    %v6191 = vpack.c.b16 %v6002, %v6001
    %v6192 = vpack.c.b16 %v6004, %v6003
    %v6193 = vpack.c.b16 %v6006, %v6005
    %v6194 = vpack.c.b16 %v6008, %v6007
    %v6195 = vpack.c.b16 %v6010, %v6009
    %v6196 = vpack.c.b16 %v6012, %v6011
    %v6197 = vpack.c.b16 %v6014, %v6013
    %v6198 = vpack.c.b16 %v6016, %v6015
    %v6199 = vpack.c.b16 %v6018, %v6017
    %v6200 = vpack.c.b16 %v6020, %v6019
    %v6201 = vpack.c.b16 %v6022, %v6021
    %v6202 = vpack.c.b16 %v6024, %v6023
    %v6203 = vpack.c.b16 %v6026, %v6025
    %v6204 = vpack.c.b16 %v6028, %v6027
    %v6205 = vpack.c.b16 %v6030, %v6029
    %v6206 = vpack.c.b16 %v6032, %v6031
    %v6207 = vpack.c.b16 %v6034, %v6033
    %v6208 = vpack.c.b16 %v6036, %v6035
    %v6209 = vpack.c.b16 %v6038, %v6037
    %v6210 = vpack.c.b16 %v6040, %v6039
    %v6211 = vpack.c.b16 %v6042, %v6041
    %v6212 = vpack.c.b16 %v6044, %v6043
    %v6213 = vpack.c.b16 %v6046, %v6045
    %v6214 = vpack.c.b16 %v6048, %v6047
    %v6215 = vpack.c.b16 %v6050, %v6049
    %v6216 = vpack.c.b16 %v6052, %v6051
    %v6217 = vpack.c.b16 %v6054, %v6053
    %v6218 = vpack.c.b16 %v6056, %v6055
    %v6219 = vpack.c.b16 %v6058, %v6057
    %v6220 = vpack.c.b16 %v6060, %v6059
    %v6221 = vpack.c.b16 %v6062, %v6061
    %v6222 = vpack.c.b16 %v6064, %v6063
    %v6223 = vpack.c.b16 %v6066, %v6065
    %v6224 = vpack.c.b16 %v6068, %v6067
    %v6225 = vpack.c.b16 %v6070, %v6069
    %v6226 = vpack.c.b16 %v6072, %v6071
    %v6227 = vpack.c.b16 %v6074, %v6073
    %v6228 = vpack.c.b16 %v6076, %v6075
    %v6229 = vpack.c.b16 %v6078, %v6077
    %v6230 = vpack.c.b16 %v6080, %v6079
    %v6231 = vpack.c.b16 %v6082, %v6081
    %v6232 = vpack.c.b16 %v6084, %v6083
    %v6233 = vpack.c.b16 %v6086, %v6085
    %v6234 = vpack.c.b16 %v6088, %v6087
    %v6235 = vpack.c.b16 %v6090, %v6089
    %v6236 = vpack.c.b16 %v6092, %v6091
    %v6237 = vpack.c.b16 %v6094, %v6093
    %v6238 = vpack.c.b16 %v6096, %v6095
    %v6239 = vpack.c.b16 %v6098, %v6097
    %v6240 = vpack.c.b16 %v6100, %v6099
    %v6241 = vpack.c.b16 %v6102, %v6101
    %v6242 = vpack.c.b16 %v6104, %v6103
    %v6243 = vpack.c.b16 %v6106, %v6105
    %v6244 = vpack.c.b16 %v6108, %v6107
    %v6245 = vpack.c.b16 %v6110, %v6109
    %v6246 = vpack.c.b16 %v6112, %v6111
    %v6247 = vpack.c.b16 %v6114, %v6113
    %v6248 = vpack.c.b16 %v6116, %v6115
    %v6249 = vpack.c.b16 %v6118, %v6117
    %v6250 = vpack.c.b16 %v6120, %v6119
    %v6251 = vpack.c.b16 %v6122, %v6121
    %v6252 = vpack.c.b16 %v6124, %v6123
    %6381 = vmatpush.bf16.msra.mxu0 %v6132
    %6382 = vmatpush.bf16.msra.mxu0 %v6131
    %6383 = vmatpush.bf16.msra.mxu0 %v6130
    %6384 = vmatpush.bf16.msra.mxu0 %v6129
    %6385 = vmatpush.bf16.msra.mxu0 %v6128
    %6386 = vmatpush.bf16.msra.mxu0 %v6127
    %6387 = vmatpush.bf16.msra.mxu0 %v6126
    %6388 = vmatpush.bf16.msra.mxu0 %v6125
    %6389 = vmatmul.bf16.gmra.mxu0 %v5337
    %v6390 = vpop.f32.mrf.mxu0
    %v6391 = vadd.f32 %v5611, %v6390
    %v6392 = vpop.f32.mrf.mxu0
    %v6393 = vadd.f32 %v5611, %v6392
    %6394 = vdwg.mxu0
    %6395 = vmatpush.bf16.msra.mxu0 %v6140
    %6396 = vmatpush.bf16.msra.mxu0 %v6139
    %6397 = vmatpush.bf16.msra.mxu0 %v6138
    %6398 = vmatpush.bf16.msra.mxu0 %v6137
    %6399 = vmatpush.bf16.msra.mxu0 %v6136
    %6400 = vmatpush.bf16.msra.mxu0 %v6135
    %6401 = vmatpush.bf16.msra.mxu0 %v6134
    %6402 = vmatpush.bf16.msra.mxu0 %v6133
    %6403 = vmatmul.bf16.gmra.mxu0 %v5338
    %v6404 = vpop.f32.mrf.mxu0
    %v6405 = vadd.f32 %v6391, %v6404
    %v6406 = vpop.f32.mrf.mxu0
    %v6407 = vadd.f32 %v6393, %v6406
    %6408 = vdwg.mxu0
    %6409 = vmatpush.bf16.msra.mxu0 %v6148
    %6410 = vmatpush.bf16.msra.mxu0 %v6147
    %6411 = vmatpush.bf16.msra.mxu0 %v6146
    %6412 = vmatpush.bf16.msra.mxu0 %v6145
    %6413 = vmatpush.bf16.msra.mxu0 %v6144
    %6414 = vmatpush.bf16.msra.mxu0 %v6143
    %6415 = vmatpush.bf16.msra.mxu0 %v6142
    %6416 = vmatpush.bf16.msra.mxu0 %v6141
    %6417 = vmatmul.bf16.gmra.mxu0 %v5339
    %v6418 = vpop.f32.mrf.mxu0
    %v6419 = vadd.f32 %v6405, %v6418
    %v6420 = vpop.f32.mrf.mxu0
    %v6421 = vadd.f32 %v6407, %v6420
    %6422 = vdwg.mxu0
    %6423 = vmatpush.bf16.msra.mxu0 %v6156
    %6424 = vmatpush.bf16.msra.mxu0 %v6155
    %6425 = vmatpush.bf16.msra.mxu0 %v6154
    %6426 = vmatpush.bf16.msra.mxu0 %v6153
    %6427 = vmatpush.bf16.msra.mxu0 %v6152
    %6428 = vmatpush.bf16.msra.mxu0 %v6151
    %6429 = vmatpush.bf16.msra.mxu0 %v6150
    %6430 = vmatpush.bf16.msra.mxu0 %v6149
    %6431 = vmatmul.bf16.gmra.mxu0 %v5340
    %v6432 = vpop.f32.mrf.mxu0
    %v6433 = vadd.f32 %v6419, %v6432
    %v6434 = vpop.f32.mrf.mxu0
    %v6435 = vadd.f32 %v6421, %v6434
    %6436 = vdwg.mxu0
    %6437 = vmatpush.bf16.msra.mxu0 %v6164
    %6438 = vmatpush.bf16.msra.mxu0 %v6163
    %6439 = vmatpush.bf16.msra.mxu0 %v6162
    %6440 = vmatpush.bf16.msra.mxu0 %v6161
    %6441 = vmatpush.bf16.msra.mxu0 %v6160
    %6442 = vmatpush.bf16.msra.mxu0 %v6159
    %6443 = vmatpush.bf16.msra.mxu0 %v6158
    %6444 = vmatpush.bf16.msra.mxu0 %v6157
    %6445 = vmatmul.bf16.gmra.mxu0 %v5341
    %v6446 = vpop.f32.mrf.mxu0
    %v6447 = vadd.f32 %v6433, %v6446
    %v6448 = vpop.f32.mrf.mxu0
    %v6449 = vadd.f32 %v6435, %v6448
    %6450 = vdwg.mxu0
    %6451 = vmatpush.bf16.msra.mxu0 %v6172
    %6452 = vmatpush.bf16.msra.mxu0 %v6171
    %6453 = vmatpush.bf16.msra.mxu0 %v6170
    %6454 = vmatpush.bf16.msra.mxu0 %v6169
    %6455 = vmatpush.bf16.msra.mxu0 %v6168
    %6456 = vmatpush.bf16.msra.mxu0 %v6167
    %6457 = vmatpush.bf16.msra.mxu0 %v6166
    %6458 = vmatpush.bf16.msra.mxu0 %v6165
    %6459 = vmatmul.bf16.gmra.mxu0 %v5342
    %v6460 = vpop.f32.mrf.mxu0
    %v6461 = vadd.f32 %v6447, %v6460
    %v6462 = vpop.f32.mrf.mxu0
    %v6463 = vadd.f32 %v6449, %v6462
    %6464 = vdwg.mxu0
    %6465 = vmatpush.bf16.msra.mxu0 %v6180
    %6466 = vmatpush.bf16.msra.mxu0 %v6179
    %6467 = vmatpush.bf16.msra.mxu0 %v6178
    %6468 = vmatpush.bf16.msra.mxu0 %v6177
    %6469 = vmatpush.bf16.msra.mxu0 %v6176
    %6470 = vmatpush.bf16.msra.mxu0 %v6175
    %6471 = vmatpush.bf16.msra.mxu0 %v6174
    %6472 = vmatpush.bf16.msra.mxu0 %v6173
    %6473 = vmatmul.bf16.gmra.mxu0 %v5343
    %v6474 = vpop.f32.mrf.mxu0
    %v6475 = vadd.f32 %v6461, %v6474
    %v6476 = vpop.f32.mrf.mxu0
    %v6477 = vadd.f32 %v6463, %v6476
    %6478 = vdwg.mxu0
    %6479 = vmatpush.bf16.msra.mxu0 %v6188
    %6480 = vmatpush.bf16.msra.mxu0 %v6187
    %6481 = vmatpush.bf16.msra.mxu0 %v6186
    %6482 = vmatpush.bf16.msra.mxu0 %v6185
    %6483 = vmatpush.bf16.msra.mxu0 %v6184
    %6484 = vmatpush.bf16.msra.mxu0 %v6183
    %6485 = vmatpush.bf16.msra.mxu0 %v6182
    %6486 = vmatpush.bf16.msra.mxu0 %v6181
    %6487 = vmatmul.bf16.gmra.mxu0 %v5344
    %v6488 = vpop.f32.mrf.mxu0
    %v6489 = vadd.f32 %v6475, %v6488
    %v6490 = vpop.f32.mrf.mxu0
    %v6491 = vadd.f32 %v6477, %v6490
    %6492 = vdwg.mxu0
    %6493 = vmatpush.bf16.msra.mxu0 %v6196
    %6494 = vmatpush.bf16.msra.mxu0 %v6195
    %6495 = vmatpush.bf16.msra.mxu0 %v6194
    %6496 = vmatpush.bf16.msra.mxu0 %v6193
    %6497 = vmatpush.bf16.msra.mxu0 %v6192
    %6498 = vmatpush.bf16.msra.mxu0 %v6191
    %6499 = vmatpush.bf16.msra.mxu0 %v6190
    %6500 = vmatpush.bf16.msra.mxu0 %v6189
    %6501 = vmatmul.bf16.gmra.mxu0 %v5345
    %v6502 = vpop.f32.mrf.mxu0
    %v6503 = vadd.f32 %v6489, %v6502
    %v6504 = vpop.f32.mrf.mxu0
    %v6505 = vadd.f32 %v6491, %v6504
    %6506 = vdwg.mxu0
    %6507 = vmatpush.bf16.msra.mxu0 %v6204
    %6508 = vmatpush.bf16.msra.mxu0 %v6203
    %6509 = vmatpush.bf16.msra.mxu0 %v6202
    %6510 = vmatpush.bf16.msra.mxu0 %v6201
    %6511 = vmatpush.bf16.msra.mxu0 %v6200
    %6512 = vmatpush.bf16.msra.mxu0 %v6199
    %6513 = vmatpush.bf16.msra.mxu0 %v6198
    %6514 = vmatpush.bf16.msra.mxu0 %v6197
    %6515 = vmatmul.bf16.gmra.mxu0 %v5346
    %v6516 = vpop.f32.mrf.mxu0
    %v6517 = vadd.f32 %v6503, %v6516
    %v6518 = vpop.f32.mrf.mxu0
    %v6519 = vadd.f32 %v6505, %v6518
    %6520 = vdwg.mxu0
    %6521 = vmatpush.bf16.msra.mxu0 %v6212
    %6522 = vmatpush.bf16.msra.mxu0 %v6211
    %6523 = vmatpush.bf16.msra.mxu0 %v6210
    %6524 = vmatpush.bf16.msra.mxu0 %v6209
    %6525 = vmatpush.bf16.msra.mxu0 %v6208
    %6526 = vmatpush.bf16.msra.mxu0 %v6207
    %6527 = vmatpush.bf16.msra.mxu0 %v6206
    %6528 = vmatpush.bf16.msra.mxu0 %v6205
    %6529 = vmatmul.bf16.gmra.mxu0 %v5347
    %v6530 = vpop.f32.mrf.mxu0
    %v6531 = vadd.f32 %v6517, %v6530
    %v6532 = vpop.f32.mrf.mxu0
    %v6533 = vadd.f32 %v6519, %v6532
    %6534 = vdwg.mxu0
    %6535 = vmatpush.bf16.msra.mxu0 %v6220
    %6536 = vmatpush.bf16.msra.mxu0 %v6219
    %6537 = vmatpush.bf16.msra.mxu0 %v6218
    %6538 = vmatpush.bf16.msra.mxu0 %v6217
    %6539 = vmatpush.bf16.msra.mxu0 %v6216
    %6540 = vmatpush.bf16.msra.mxu0 %v6215
    %6541 = vmatpush.bf16.msra.mxu0 %v6214
    %6542 = vmatpush.bf16.msra.mxu0 %v6213
    %6543 = vmatmul.bf16.gmra.mxu0 %v5348
    %v6544 = vpop.f32.mrf.mxu0
    %v6545 = vadd.f32 %v6531, %v6544
    %v6546 = vpop.f32.mrf.mxu0
    %v6547 = vadd.f32 %v6533, %v6546
    %6548 = vdwg.mxu0
    %6549 = vmatpush.bf16.msra.mxu0 %v6228
    %6550 = vmatpush.bf16.msra.mxu0 %v6227
    %6551 = vmatpush.bf16.msra.mxu0 %v6226
    %6552 = vmatpush.bf16.msra.mxu0 %v6225
    %6553 = vmatpush.bf16.msra.mxu0 %v6224
    %6554 = vmatpush.bf16.msra.mxu0 %v6223
    %6555 = vmatpush.bf16.msra.mxu0 %v6222
    %6556 = vmatpush.bf16.msra.mxu0 %v6221
    %6557 = vmatmul.bf16.gmra.mxu0 %v5349
    %v6558 = vpop.f32.mrf.mxu0
    %v6559 = vadd.f32 %v6545, %v6558
    %v6560 = vpop.f32.mrf.mxu0
    %v6561 = vadd.f32 %v6547, %v6560
    %6562 = vdwg.mxu0
    %6563 = vmatpush.bf16.msra.mxu0 %v6236
    %6564 = vmatpush.bf16.msra.mxu0 %v6235
    %6565 = vmatpush.bf16.msra.mxu0 %v6234
    %6566 = vmatpush.bf16.msra.mxu0 %v6233
    %6567 = vmatpush.bf16.msra.mxu0 %v6232
    %6568 = vmatpush.bf16.msra.mxu0 %v6231
    %6569 = vmatpush.bf16.msra.mxu0 %v6230
    %6570 = vmatpush.bf16.msra.mxu0 %v6229
    %6571 = vmatmul.bf16.gmra.mxu0 %v5350
    %v6572 = vpop.f32.mrf.mxu0
    %v6573 = vadd.f32 %v6559, %v6572
    %v6574 = vpop.f32.mrf.mxu0
    %v6575 = vadd.f32 %v6561, %v6574
    %6576 = vdwg.mxu0
    %6577 = vmatpush.bf16.msra.mxu0 %v6244
    %6578 = vmatpush.bf16.msra.mxu0 %v6243
    %6579 = vmatpush.bf16.msra.mxu0 %v6242
    %6580 = vmatpush.bf16.msra.mxu0 %v6241
    %6581 = vmatpush.bf16.msra.mxu0 %v6240
    %6582 = vmatpush.bf16.msra.mxu0 %v6239
    %6583 = vmatpush.bf16.msra.mxu0 %v6238
    %6584 = vmatpush.bf16.msra.mxu0 %v6237
    %6585 = vmatmul.bf16.gmra.mxu0 %v5351
    %v6586 = vpop.f32.mrf.mxu0
    %v6587 = vadd.f32 %v6573, %v6586
    %v6588 = vpop.f32.mrf.mxu0
    %v6589 = vadd.f32 %v6575, %v6588
    %6590 = vdwg.mxu0
    %6591 = vmatpush.bf16.msra.mxu0 %v6252
    %6592 = vmatpush.bf16.msra.mxu0 %v6251
    %6593 = vmatpush.bf16.msra.mxu0 %v6250
    %6594 = vmatpush.bf16.msra.mxu0 %v6249
    %6595 = vmatpush.bf16.msra.mxu0 %v6248
    %6596 = vmatpush.bf16.msra.mxu0 %v6247
    %6597 = vmatpush.bf16.msra.mxu0 %v6246
    %6598 = vmatpush.bf16.msra.mxu0 %v6245
    %6599 = vmatmul.bf16.gmra.mxu0 %v5352
    %v6600 = vpop.f32.mrf.mxu0
    %v6601 = vadd.f32 %v6587, %v6600
    %v6602 = vpop.f32.mrf.mxu0
    %v6603 = vadd.f32 %v6589, %v6602
    %6604 = vdwg.mxu0
    %v6605 = vadd.f32 %v4274, %v6601
    %v6606 = vadd.f32 %v4275, %v6603
    %6607 = vadd.xlane.f32.xlu0 %v6605
    %v6608 = vpop.xlane.xlu0 %6607
    %6609 = vadd.xlane.f32.xlu0 %v6606
    %v6610 = vpop.xlane.xlu0 %6609
    %v6611 = vmul.f32 %v6608, %v1006
    %v6612 = vmul.f32 %v6610, %v1006
    %v6613 = vsub.f32 %v6605, %v6611
    %v6614 = vsub.f32 %v6606, %v6612
    %v6615 = vmul.f32 %v6613, %v6613
    %v6616 = vmul.f32 %v6614, %v6614
    %6617 = vadd.xlane.f32.xlu0 %v6615
    %v6618 = vpop.xlane.xlu0 %6617
    %6619 = vadd.xlane.f32.xlu0 %v6616
    %v6620 = vpop.xlane.xlu0 %6619
    %v6621 = vmul.f32 %v6618, %v1006
    %v6622 = vmul.f32 %v6620, %v1006
    %v6623 = vadd.f32 %v6621, 1e-05
    %v6624 = vadd.f32 %v6622, 1e-05
    %v6625 = vrsqrt.pop %v6623
    %v6626 = vmul.f32 %v6625, %v6623
    %v6627 = vmul.f32 %v6626, %v6625
    %v6628 = vmul.f32 0.5, %v6627
    %v6629 = vsub.f32 1.5, %v6628
    %v6630 = vmul.f32 %v6625, %v6629
    %vm6631 = vweird.f32 %v6623
    %vm6632 = vweird.f32 %v6625
    %vm6633 = vmor %vm6631, %vm6632
    %v6634 = vsel %vm6633, %v6625, %v6630
    %v6635 = vrsqrt.pop %v6624
    %v6636 = vmul.f32 %v6635, %v6624
    %v6637 = vmul.f32 %v6636, %v6635
    %v6638 = vmul.f32 0.5, %v6637
    %v6639 = vsub.f32 1.5, %v6638
    %v6640 = vmul.f32 %v6635, %v6639
    %vm6641 = vweird.f32 %v6624
    %vm6642 = vweird.f32 %v6635
    %vm6643 = vmor %vm6641, %vm6642
    %v6644 = vsel %vm6643, %v6635, %v6640
    %v6645 = vmul.f32 %v6613, %v6634
    %v6646 = vmul.f32 %v6614, %v6644
    %v6647 = vld [vmem:[%s24] sm:$0x1]
    %v6649 = vperm.slane %v6647, 0
    %v6651 = vmul.f32 %v6645, %v6649
    %v6652 = vmul.f32 %v6646, %v6649
    %v6653 = vld [vmem:[%s25] sm:$0x1]
    %v6655 = vperm.slane %v6653, 0
    %v6657 = vadd.f32 %v6651, %v6655
    %v6658 = vadd.f32 %v6652, %v6655
    %v6659 = vrot.slane %v6657, 4
    %v6660 = vadd.f32 %v6657, %v6659
    %v6661 = vrot.slane %v6660, 2
    %v6662 = vadd.f32 %v6660, %v6661
    %v6663 = vrot.slane %v6662, 1
    %v6664 = vadd.f32 %v6662, %v6663
    %v6665 = vrot.slane %v6658, 4
    %v6666 = vadd.f32 %v6658, %v6665
    %v6667 = vrot.slane %v6666, 2
    %v6668 = vadd.f32 %v6666, %v6667
    %v6669 = vrot.slane %v6668, 1
    %v6670 = vadd.f32 %v6668, %v6669
    %v6671 = vrcp.pop 8.0
    %v6672 = vmul.f32 8.0, %v6671
    %v6673 = vsub.f32 1.0, %v6672
    %v6674 = vmul.f32 %v6671, %v6673
    %v6675 = vadd.f32 %v6671, %v6674
    %vm6676 = vweird.f32 %v6671
    %v6677 = vsel %vm6676, %v6671, %v6675
    %v6678 = vmul.f32 %v6664, %v6677
    %v6679 = vmul.f32 %v6670, %v6677
    %6680 = vst [vmem:[%s26] sm:$0x1] %v6678
    %6681 = vst [vmem:[%s26 + $0x1] sm:$0x1] %v6679
    // Predicated region
    $region134: #{transformer_classifier.1} parent=1 // pred_check
      _
    $region135: #{transformer_classifier.1} parent=1 // pred_check_branch
      %6683 = sbr.rel (0) target = $region137
    $region136: #{transformer_classifier.1} parent=1 // pred_region
      _
    $region137: #{transformer_classifier.1} parent=1 // pred_fallthru
      _
    // Predicated region
    $region138: #{transformer_classifier.1} parent=1 // pred_check
      _
    $region139: #{transformer_classifier.1} parent=1 // pred_check_branch
      %6685 = sbr.rel (0) target = $region141
    $region140: #{transformer_classifier.1} parent=1 // pred_region
      _
    $region141: #{transformer_classifier.1} parent=1 // pred_fallthru
      _
    %6686 = vsyncpa [#allocation3], 1
    %6687 = vsyncpa [#allocation5], 1
    %6688 = vsyncpa [#allocation8], 1
    %6689 = vsyncpa [#allocation11], 1

</llo_original>
